<compile_context>
chip_gen: v6e
topology: v6e:2x2x1
jax: 0.10.0
libtpu: 0.0.40
codegen_flags: <defaults>
</compile_context>

<pallas_src>
import functools

import jax
import jax.numpy as jnp
import numpy as np
from jax import lax
from jax.experimental import pallas as pl
from jax.experimental.pallas import tpu as pltpu


def make_coff(level: int, in_features: int) -> jnp.ndarray:
    """Deterministic coefficient matrix, identical to the PyTorch __init__ (reference only)."""
    c = [2.0 ** i for i in range(level)]
    zero = [0.0 for _ in range(level)]
    coff = []
    for i in range(in_features):
        row = []
        for j in range(in_features):
            row += c if i == j else zero
        coff.append(row)
    return jnp.asarray(np.array(coff, dtype=np.float32))


def _round_up(x: int, m: int) -> int:
    return ((x + m - 1) // m) * m


def _pos_emb_kernel(x_ref, o_ref, *, level: int, in_features: int, include_input: bool):
    """x_ref: (block_n, F) input tile; o_ref: (block_n, out_features) output tile.

    Output columns: [0, L*F)       -> sin(x_i * 2^j)   (column i*L + j)
                    [L*F, 2*L*F)   -> cos(x_i * 2^j)
                    [2*L*F, +F)    -> x                 (if include_input)
    This matches torch.cat([sin(x @ coff), cos(x @ coff), x], -1) with the
    block-diagonal power-of-two coff matrix.
    """
    F = in_features
    LF = level * F

    x = x_ref[...].astype(jnp.float32)                       # (bn, F)

    # Per-level scales 2^j, built in-kernel (no captured array constants),
    # hoisted out of the per-feature loop.
    j = lax.broadcasted_iota(jnp.int32, (1, level), 1)       # (1, level): 0..level-1
    srow = jnp.exp2(j.astype(jnp.float32))                   # (1, level): 2^j

    # One merged (bn, L*F) slab: tmp[:, i*level + j] = x[:, i] * 2^j  (== x @ coff).
    cols = [x[:, i:i + 1] * srow for i in range(F)]          # F pieces of (bn, level)
    tmp = jnp.concatenate(cols, axis=-1)                     # (bn, LF)

    # Three large slab stores into the row-major output tile.
    o_ref[:, 0:LF] = jnp.sin(tmp).astype(o_ref.dtype)
    o_ref[:, LF:2 * LF] = jnp.cos(tmp).astype(o_ref.dtype)
    if include_input:
        o_ref[:, 2 * LF:2 * LF + F] = x.astype(o_ref.dtype)


def positional_embedding(x: jnp.ndarray,
                         level: int = 6,
                         include_input: bool = True,
                         block_n: int | None = None,
                         out_dtype=None) -> jnp.ndarray:
    """Matches PyTorch PositionalEmbedding.forward: cat([sin(x@coff), cos(x@coff), x], -1)."""
    N, F = x.shape
    out_dtype = x.dtype if out_dtype is None else out_dtype
    out_features = 2 * level * F + (F if include_input else 0)

    if block_n is None:
        if N <= 2048:
            # Small inputs: a single block covering the array.
            block_n = max(8, _round_up(N, 8))
        else:
            # Large tiles to amortize the ~0.35 us per-grid-step overhead, while
            # keeping >=2 grid steps so the 'parallel' axis splits across v7x's
            # two TensorCores.  Cap keeps double-buffered, lane-padded VMEM
            # tiles well inside every generation's budget.
            block_n = min(8192, _round_up(pl.cdiv(N, 2), 512))
    assert block_n % 8 == 0, "block_n must be a multiple of 8 (sublane width)"

    n_blocks = pl.cdiv(N, block_n)

    kernel = functools.partial(_pos_emb_kernel, level=level, in_features=F,
                               include_input=include_input)

    return pl.pallas_call(
        kernel,
        out_shape=jax.ShapeDtypeStruct((N, out_features), out_dtype),
        grid_spec=pltpu.PrefetchScalarGridSpec(
            num_scalar_prefetch=0,
            grid=(n_blocks,),
            in_specs=[
                pl.BlockSpec((block_n, F), lambda i: (i, 0)),
            ],
            # Row-major output written directly by the kernel: no XLA transpose,
            # no extra HBM round-trip of the full result.
            out_specs=pl.BlockSpec((block_n, out_features), lambda i: (i, 0)),
        ),
        compiler_params=pltpu.CompilerParams(
            dimension_semantics=("parallel",),
            vmem_limit_bytes=48 * 1024 * 1024),
    )(x)


if __name__ == "__main__":
    level = 6
    in_features = 3
    include_input = True
    N = 1024  # small demo shape; block_n below is deliberately small so the
              # grid has 4 pipelined steps — production default is up to 8192.

    key = jax.random.PRNGKey(0)
    x = jax.random.normal(key, (N, in_features), dtype=jnp.float32)

    pe = jax.jit(functools.partial(positional_embedding,
                                   level=level,
                                   include_input=include_input,
                                   block_n=256))
    out = jax.block_until_ready(pe(x))

    # Reference check against plain JAX (same math as the PyTorch forward).
    coff = make_coff(level, in_features)
    tmp = x @ coff
    ref = jnp.concatenate([jnp.sin(tmp), jnp.cos(tmp), x], axis=-1)
    assert out.shape == (N, level * in_features * 2 + in_features)
    np.testing.assert_allclose(np.asarray(out), np.asarray(ref), rtol=1e-5, atol=1e-5)

    print("KERNEL_OK")
</pallas_src>

<mosaic_0001>
module attributes {stable_mosaic.version = 11 : i64} {
  func.func @_pos_emb_kernel(%arg0: i32, %arg1: memref<256x3xf32, #tpu.memory_space<vmem>>, %arg2: memref<256x39xf32, #tpu.memory_space<vmem>>) attributes {dimension_semantics = [#tpu.dimension_semantics<parallel>], iteration_bounds = array<i64: 4>, scalar_prefetch = 0 : i64, scratch_operands = 0 : i64, tpu.core_type = #tpu.core_type<tc>, window_params = [{transform_indices = @transform_0, window_bounds = array<i64: 256, 3>}, {transform_indices = @transform_1, window_bounds = array<i64: 256, 39>}]} {
    %c0 = arith.constant 0 : index
    %c0_0 = arith.constant 0 : index
    %0 = vector.load %arg1[%c0, %c0_0] : memref<256x3xf32, #tpu.memory_space<vmem>>, vector<256x3xf32>
    %1 = tpu.iota {dimensions = array<i32: 1>} : vector<1x6xi32>
    %2 = arith.sitofp %1 : vector<1x6xi32> to vector<1x6xf32>
    %3 = math.exp2 %2 : vector<1x6xf32>
    %4 = vector.extract_strided_slice %0 {offsets = [0, 0], sizes = [256, 1], strides = [1, 1]} : vector<256x3xf32> to vector<256x1xf32>
    %5 = vector.broadcast %4 : vector<256x1xf32> to vector<256x6xf32>
    %6 = vector.broadcast %3 : vector<1x6xf32> to vector<256x6xf32>
    %7 = arith.mulf %5, %6 : vector<256x6xf32>
    %8 = vector.extract_strided_slice %0 {offsets = [0, 1], sizes = [256, 1], strides = [1, 1]} : vector<256x3xf32> to vector<256x1xf32>
    %9 = vector.broadcast %8 : vector<256x1xf32> to vector<256x6xf32>
    %10 = vector.broadcast %3 : vector<1x6xf32> to vector<256x6xf32>
    %11 = arith.mulf %9, %10 : vector<256x6xf32>
    %12 = vector.extract_strided_slice %0 {offsets = [0, 2], sizes = [256, 1], strides = [1, 1]} : vector<256x3xf32> to vector<256x1xf32>
    %13 = vector.broadcast %12 : vector<256x1xf32> to vector<256x6xf32>
    %14 = vector.broadcast %3 : vector<1x6xf32> to vector<256x6xf32>
    %15 = arith.mulf %13, %14 : vector<256x6xf32>
    %16 = tpu.concatenate %7, %11, %15 in 1 : vector<256x6xf32>, vector<256x6xf32>, vector<256x6xf32> -> vector<256x18xf32>
    %17 = math.sin %16 : vector<256x18xf32>
    %c0_1 = arith.constant 0 : index
    %c0_2 = arith.constant 0 : index
    %18 = vector.load %arg2[%c0_1, %c0_2] : memref<256x39xf32, #tpu.memory_space<vmem>>, vector<256x18xf32>
    tpu.vector_store %arg2[%c0_1, %c0_2], %17 {strides = array<i32>} : memref<256x39xf32, #tpu.memory_space<vmem>>, vector<256x18xf32>,
    %19 = math.cos %16 : vector<256x18xf32>
    %c0_3 = arith.constant 0 : index
    %c18 = arith.constant 18 : index
    %20 = vector.load %arg2[%c0_3, %c18] : memref<256x39xf32, #tpu.memory_space<vmem>>, vector<256x18xf32>
    tpu.vector_store %arg2[%c0_3, %c18], %19 {strides = array<i32>} : memref<256x39xf32, #tpu.memory_space<vmem>>, vector<256x18xf32>,
    %c0_4 = arith.constant 0 : index
    %c36 = arith.constant 36 : index
    %21 = vector.load %arg2[%c0_4, %c36] : memref<256x39xf32, #tpu.memory_space<vmem>>, vector<256x3xf32>
    tpu.vector_store %arg2[%c0_4, %c36], %0 {strides = array<i32>} : memref<256x39xf32, #tpu.memory_space<vmem>>, vector<256x3xf32>,
    return
  }
  func.func @transform_0(%arg0: i32) -> (i32, i32) {
    %c0_i32 = arith.constant 0 : i32
    %c0_i32_0 = arith.constant 0 : i32
    return %arg0, %c0_i32 : i32, i32
  }
  func.func @transform_1(%arg0: i32) -> (i32, i32) {
    %c0_i32 = arith.constant 0 : i32
    %c0_i32_0 = arith.constant 0 : i32
    return %arg0, %c0_i32 : i32, i32
  }
}

</mosaic_0001>

<llo_original>
// kernel: positional_embedding.1
$region0: #{positional_embedding.1}
  #allocation0 [shape = 'u32[]', space=smem, size = 0x4, offset = 0x4, fixed_abs, tag = 'smem constant byte address 0x4 - core index']
  #allocation1 [shape = 'u32[144,128]{1,0:T(1,128)}', space=vmem, size = 0x12000, scoped, tag = 'internal scratch']
  %s0 = inlined_call_operand.vmem [shape: f32[1024,3], index: 0, kind: input, shape index: {}]
  %s1 = inlined_call_operand.vmem [shape: f32[1024,39], index: 1, kind: output, shape index: {}]
  %s2 = sld [smem:[#allocation0]]
  $region37: #{positional_embedding.1} parent=0
    _
  %s4 = ssub.s32 1, %s2
  %s5 = scalar_select 0, %s4, %s2
  loop: start=0, step=1, limit=6
  $region2: #{positional_embedding.1} parent=0 // loop_pre_header
    _
  $region3: #{positional_embedding.1} parent=0 // loop_header
    %s7 = sphi 0, %s11
    %p8 = scmp.ge.s32.totalorder %s7, 6
    %s17 = sphi 0, %s19
    %s20 = sphi 0, %s17
    %s21 = sphi 0, %s20
    %s37 = sphi 0, %s21
    %s43 = sphi 0, %s45
    %s46 = sphi 0, %s43
    %s47 = sphi 0, %s46
    %s63 = sphi 0, %s47
  $region4: #{positional_embedding.1} parent=0 // loop_header_branch
    %10 = sbr.rel (%p8) target = $region8
  $region5: #{positional_embedding.1} parent=0 // loop_body
    %s12 = ssub.s32 %s7, 1
    %s13 = ssub.s32 %s7, 2
    %s14 = sadd.s32 %s7, 1
    %s15 = ssub.s32 %s7, %s14
    %p16 = scmp.eq.s32.totalorder %s15, 0
    %s18 = sadd.s32 %s17, 1
    %s19 = scalar_select %p16, %s17, %s18
    %p22 = pneg %p16
    %p23 = scmp.eq.s32.totalorder %s7, 3
    %p24 = por %p22, %p23
    %p25 = scmp.ne.s32.totalorder %s17, %s20
    %p26 = scmp.eq.s32.totalorder %s7, 0
    %p27 = por %p25, %p26
    %p28 = scmp.ne.s32.totalorder %s17, %s20
    %p29 = scmp.eq.s32.totalorder %s12, 3
    %p30 = por %p28, %p29
    %p31 = scmp.ne.s32.totalorder %s20, %s21
    %p32 = scmp.eq.s32.totalorder %s12, 0
    %p33 = por %p31, %p32
    %p34 = scmp.ne.s32.totalorder %s20, %s21
    %p35 = scmp.eq.s32.totalorder %s13, 3
    %p36 = por %p34, %p35
    %p38 = scmp.ne.s32.totalorder %s21, %s37
    %p39 = scmp.eq.s32.totalorder %s13, 0
    %p40 = por %p38, %p39
    %s41 = ssub.s32 %s7, %s14
    %p42 = scmp.eq.s32.totalorder %s41, 0
    %s44 = sadd.s32 %s43, 1
    %s45 = scalar_select %p42, %s43, %s44
    %p48 = pneg %p42
    %p49 = scmp.eq.s32.totalorder %s7, 3
    %p50 = por %p48, %p49
    %p51 = scmp.ne.s32.totalorder %s43, %s46
    %p52 = scmp.eq.s32.totalorder %s7, 0
    %p53 = por %p51, %p52
    %p54 = scmp.ne.s32.totalorder %s43, %s46
    %p55 = scmp.eq.s32.totalorder %s12, 3
    %p56 = por %p54, %p55
    %p57 = scmp.ne.s32.totalorder %s46, %s47
    %p58 = scmp.eq.s32.totalorder %s12, 0
    %p59 = por %p57, %p58
    %p60 = scmp.ne.s32.totalorder %s46, %s47
    %p61 = scmp.eq.s32.totalorder %s13, 3
    %p62 = por %p60, %p61
    %p64 = scmp.ne.s32.totalorder %s47, %s63
    %p65 = scmp.eq.s32.totalorder %s13, 0
    %p66 = por %p64, %p65
    %p67 = scmp.le.s32.totalorder 1, %s7
    %p68 = scmp.lt.s32.totalorder %s7, 5
    %p69 = pnand %p67, %p68
    %p70 = pneg %p69
    // Predicated region
    $region9: #{positional_embedding.1} parent=5 // pred_check
      _
    $region10: #{positional_embedding.1} parent=5 // pred_check_branch
      %72 = sbr.rel (%p69) target = $region12
    $region11: #{positional_embedding.1} parent=5 // pred_region
      %s73 = ssub.s32 %s7, 1
    $region12: #{positional_embedding.1} parent=5 // pred_fallthru
      _
    %p74 = scmp.lt.s32.totalorder %s7, 4
    // Predicated region
    $region13: #{positional_embedding.1} parent=5 // pred_check
      %p75 = pneg %p74
    $region14: #{positional_embedding.1} parent=5 // pred_check_branch
      %77 = sbr.rel (%p75) target = $region16
    $region15: #{positional_embedding.1} parent=5 // pred_region
      // Predicated region
      $region17: #{positional_embedding.1} parent=15 // pred_check
        %p78 = pneg %p27
      $region18: #{positional_embedding.1} parent=15 // pred_check_branch
        %80 = sbr.rel (%p78) target = $region20
      $region19: #{positional_embedding.1} parent=15 // pred_region
        %s81 = smul.u32 32, %s7
        %p82 = scmp.lt.s32.totalorder %s81, 127
        %s83 = scalar_select %p82, %s81, 127
        %s84 = smul.addr %s83, 8
        %s85 = scalar_lea.vmem %s0, %s84
        %s86 = smul.u32 32, %s7
      $region20: #{positional_embedding.1} parent=15 // pred_fallthru
        _
    $region16: #{positional_embedding.1} parent=5 // pred_fallthru
      _
    %p87 = scmp.le.s32.totalorder 1, %s7
    %p88 = scmp.lt.s32.totalorder %s7, 5
    %p89 = pnand %p87, %p88
    %p90 = pneg %p89
    // Predicated region
    $region21: #{positional_embedding.1} parent=5 // pred_check
      _
    $region22: #{positional_embedding.1} parent=5 // pred_check_branch
      %92 = sbr.rel (%p89) target = $region24
    $region23: #{positional_embedding.1} parent=5 // pred_region
      %s93 = ssub.s32 %s7, 1
      %s94 = smul.u32 32, %s12
      %p95 = scmp.lt.s32.totalorder %s94, 127
      %s96 = scalar_select %p95, %s94, 127
      %s97 = smul.addr %s96, 8
      %s98 = scalar_lea.vmem %s0, %s97
      %p99 = pneg %p33
      %p100 = pneg %p30
      %p101 = pneg %p59
      %p102 = pneg %p56
      %s103 = smul.u32 32, %s12
      %p104 = scmp.lt.s32.totalorder %s103, 127
      %s105 = scalar_select %p104, %s103, 127
      %s106 = smul.addr %s105, 8
      %s107 = scalar_lea.vmem %s1, %s106
      %s108 = smul.u32 32, %s12
      %p109 = scmp.lt.s32.totalorder %s108, 127
      %s110 = scalar_select %p109, %s108, 127
      %s111 = smul.addr %s110, 8
      %s112 = scalar_lea.vmem %s0, %s111
      %s113 = smul.u32 32, %s12
      %s114 = smul.u32 32, %s12
      %p115 = scmp.lt.s32.totalorder %s114, 127
      %s116 = scalar_select %p115, %s114, 127
      %s117 = smul.addr %s116, 8
      %s118 = scalar_lea.vmem %s1, %s117
      %s119 = smul.u32 32, %s12
      %v120 = vld [vmem:[%s112] sm:$0xff]
      %v121 = vld [vmem:[%s112 + $0x8] sm:$0xff]
      %v122 = vld [vmem:[%s112 + $0x10] sm:$0xff]
      %v123 = vld [vmem:[%s112 + $0x18] sm:$0xff]
      %v124 = vld [vmem:[%s112 + $0x20] sm:$0xff]
      %v125 = vld [vmem:[%s112 + $0x28] sm:$0xff]
      %v126 = vld [vmem:[%s112 + $0x30] sm:$0xff]
      %v127 = vld [vmem:[%s112 + $0x38] sm:$0xff]
      %v128 = vld [vmem:[%s112 + $0x40] sm:$0xff]
      %v129 = vld [vmem:[%s112 + $0x48] sm:$0xff]
      %v130 = vld [vmem:[%s112 + $0x50] sm:$0xff]
      %v131 = vld [vmem:[%s112 + $0x58] sm:$0xff]
      %v132 = vld [vmem:[%s112 + $0x60] sm:$0xff]
      %v133 = vld [vmem:[%s112 + $0x68] sm:$0xff]
      %v134 = vld [vmem:[%s112 + $0x70] sm:$0xff]
      %v135 = vld [vmem:[%s112 + $0x78] sm:$0xff]
      %v136 = vld [vmem:[%s112 + $0x80] sm:$0xff]
      %v137 = vld [vmem:[%s112 + $0x88] sm:$0xff]
      %v138 = vld [vmem:[%s112 + $0x90] sm:$0xff]
      %v139 = vld [vmem:[%s112 + $0x98] sm:$0xff]
      %v140 = vld [vmem:[%s112 + $0xa0] sm:$0xff]
      %v141 = vld [vmem:[%s112 + $0xa8] sm:$0xff]
      %v142 = vld [vmem:[%s112 + $0xb0] sm:$0xff]
      %v143 = vld [vmem:[%s112 + $0xb8] sm:$0xff]
      %v144 = vld [vmem:[%s112 + $0xc0] sm:$0xff]
      %v145 = vld [vmem:[%s112 + $0xc8] sm:$0xff]
      %v146 = vld [vmem:[%s112 + $0xd0] sm:$0xff]
      %v147 = vld [vmem:[%s112 + $0xd8] sm:$0xff]
      %v148 = vld [vmem:[%s112 + $0xe0] sm:$0xff]
      %v149 = vld [vmem:[%s112 + $0xe8] sm:$0xff]
      %v150 = vld [vmem:[%s112 + $0xf0] sm:$0xff]
      %v151 = vld [vmem:[%s112 + $0xf8] sm:$0xff]
      %v152 = vlaneseq
      %v153 = vand.u32 %v152, 127
      %v154 = vcvt.s32.f32 %v153
      %v155 = vpow.pop %v154
      %157 = vset.pattern.permute.xlu0 0
      %158 = vperm.xlu0 %157, %v120
      %v159 = vpop.permute.xlu0 %158
      %162 = vset.pattern.permute.xlu0 0
      %163 = vperm.xlu0 %162, %v121
      %v164 = vpop.permute.xlu0 %163
      %167 = vset.pattern.permute.xlu0 0
      %168 = vperm.xlu0 %167, %v122
      %v169 = vpop.permute.xlu0 %168
      %172 = vset.pattern.permute.xlu0 0
      %173 = vperm.xlu0 %172, %v123
      %v174 = vpop.permute.xlu0 %173
      %177 = vset.pattern.permute.xlu0 0
      %178 = vperm.xlu0 %177, %v124
      %v179 = vpop.permute.xlu0 %178
      %182 = vset.pattern.permute.xlu0 0
      %183 = vperm.xlu0 %182, %v125
      %v184 = vpop.permute.xlu0 %183
      %187 = vset.pattern.permute.xlu0 0
      %188 = vperm.xlu0 %187, %v126
      %v189 = vpop.permute.xlu0 %188
      %192 = vset.pattern.permute.xlu0 0
      %193 = vperm.xlu0 %192, %v127
      %v194 = vpop.permute.xlu0 %193
      %197 = vset.pattern.permute.xlu0 0
      %198 = vperm.xlu0 %197, %v128
      %v199 = vpop.permute.xlu0 %198
      %202 = vset.pattern.permute.xlu0 0
      %203 = vperm.xlu0 %202, %v129
      %v204 = vpop.permute.xlu0 %203
      %207 = vset.pattern.permute.xlu0 0
      %208 = vperm.xlu0 %207, %v130
      %v209 = vpop.permute.xlu0 %208
      %212 = vset.pattern.permute.xlu0 0
      %213 = vperm.xlu0 %212, %v131
      %v214 = vpop.permute.xlu0 %213
      %217 = vset.pattern.permute.xlu0 0
      %218 = vperm.xlu0 %217, %v132
      %v219 = vpop.permute.xlu0 %218
      %222 = vset.pattern.permute.xlu0 0
      %223 = vperm.xlu0 %222, %v133
      %v224 = vpop.permute.xlu0 %223
      %227 = vset.pattern.permute.xlu0 0
      %228 = vperm.xlu0 %227, %v134
      %v229 = vpop.permute.xlu0 %228
      %232 = vset.pattern.permute.xlu0 0
      %233 = vperm.xlu0 %232, %v135
      %v234 = vpop.permute.xlu0 %233
      %237 = vset.pattern.permute.xlu0 0
      %238 = vperm.xlu0 %237, %v136
      %v239 = vpop.permute.xlu0 %238
      %242 = vset.pattern.permute.xlu0 0
      %243 = vperm.xlu0 %242, %v137
      %v244 = vpop.permute.xlu0 %243
      %247 = vset.pattern.permute.xlu0 0
      %248 = vperm.xlu0 %247, %v138
      %v249 = vpop.permute.xlu0 %248
      %252 = vset.pattern.permute.xlu0 0
      %253 = vperm.xlu0 %252, %v139
      %v254 = vpop.permute.xlu0 %253
      %257 = vset.pattern.permute.xlu0 0
      %258 = vperm.xlu0 %257, %v140
      %v259 = vpop.permute.xlu0 %258
      %262 = vset.pattern.permute.xlu0 0
      %263 = vperm.xlu0 %262, %v141
      %v264 = vpop.permute.xlu0 %263
      %267 = vset.pattern.permute.xlu0 0
      %268 = vperm.xlu0 %267, %v142
      %v269 = vpop.permute.xlu0 %268
      %272 = vset.pattern.permute.xlu0 0
      %273 = vperm.xlu0 %272, %v143
      %v274 = vpop.permute.xlu0 %273
      %277 = vset.pattern.permute.xlu0 0
      %278 = vperm.xlu0 %277, %v144
      %v279 = vpop.permute.xlu0 %278
      %282 = vset.pattern.permute.xlu0 0
      %283 = vperm.xlu0 %282, %v145
      %v284 = vpop.permute.xlu0 %283
      %287 = vset.pattern.permute.xlu0 0
      %288 = vperm.xlu0 %287, %v146
      %v289 = vpop.permute.xlu0 %288
      %292 = vset.pattern.permute.xlu0 0
      %293 = vperm.xlu0 %292, %v147
      %v294 = vpop.permute.xlu0 %293
      %297 = vset.pattern.permute.xlu0 0
      %298 = vperm.xlu0 %297, %v148
      %v299 = vpop.permute.xlu0 %298
      %302 = vset.pattern.permute.xlu0 0
      %303 = vperm.xlu0 %302, %v149
      %v304 = vpop.permute.xlu0 %303
      %307 = vset.pattern.permute.xlu0 0
      %308 = vperm.xlu0 %307, %v150
      %v309 = vpop.permute.xlu0 %308
      %312 = vset.pattern.permute.xlu0 0
      %313 = vperm.xlu0 %312, %v151
      %v314 = vpop.permute.xlu0 %313
      %v316 = vmul.f32 %v159, %v155
      %v317 = vmul.f32 %v164, %v155
      %v318 = vmul.f32 %v169, %v155
      %v319 = vmul.f32 %v174, %v155
      %v320 = vmul.f32 %v179, %v155
      %v321 = vmul.f32 %v184, %v155
      %v322 = vmul.f32 %v189, %v155
      %v323 = vmul.f32 %v194, %v155
      %v324 = vmul.f32 %v199, %v155
      %v325 = vmul.f32 %v204, %v155
      %v326 = vmul.f32 %v209, %v155
      %v327 = vmul.f32 %v214, %v155
      %v328 = vmul.f32 %v219, %v155
      %v329 = vmul.f32 %v224, %v155
      %v330 = vmul.f32 %v229, %v155
      %v331 = vmul.f32 %v234, %v155
      %v332 = vmul.f32 %v239, %v155
      %v333 = vmul.f32 %v244, %v155
      %v334 = vmul.f32 %v249, %v155
      %v335 = vmul.f32 %v254, %v155
      %v336 = vmul.f32 %v259, %v155
      %v337 = vmul.f32 %v264, %v155
      %v338 = vmul.f32 %v269, %v155
      %v339 = vmul.f32 %v274, %v155
      %v340 = vmul.f32 %v279, %v155
      %v341 = vmul.f32 %v284, %v155
      %v342 = vmul.f32 %v289, %v155
      %v343 = vmul.f32 %v294, %v155
      %v344 = vmul.f32 %v299, %v155
      %v345 = vmul.f32 %v304, %v155
      %v346 = vmul.f32 %v309, %v155
      %v347 = vmul.f32 %v314, %v155
      %348 = vset.pattern.permute.xlu0 1
      %349 = vperm.xlu0 %348, %v120
      %v350 = vpop.permute.xlu0 %349
      %352 = vset.pattern.permute.xlu0 1
      %353 = vperm.xlu0 %352, %v121
      %v354 = vpop.permute.xlu0 %353
      %356 = vset.pattern.permute.xlu0 1
      %357 = vperm.xlu0 %356, %v122
      %v358 = vpop.permute.xlu0 %357
      %360 = vset.pattern.permute.xlu0 1
      %361 = vperm.xlu0 %360, %v123
      %v362 = vpop.permute.xlu0 %361
      %364 = vset.pattern.permute.xlu0 1
      %365 = vperm.xlu0 %364, %v124
      %v366 = vpop.permute.xlu0 %365
      %368 = vset.pattern.permute.xlu0 1
      %369 = vperm.xlu0 %368, %v125
      %v370 = vpop.permute.xlu0 %369
      %372 = vset.pattern.permute.xlu0 1
      %373 = vperm.xlu0 %372, %v126
      %v374 = vpop.permute.xlu0 %373
      %376 = vset.pattern.permute.xlu0 1
      %377 = vperm.xlu0 %376, %v127
      %v378 = vpop.permute.xlu0 %377
      %380 = vset.pattern.permute.xlu0 1
      %381 = vperm.xlu0 %380, %v128
      %v382 = vpop.permute.xlu0 %381
      %384 = vset.pattern.permute.xlu0 1
      %385 = vperm.xlu0 %384, %v129
      %v386 = vpop.permute.xlu0 %385
      %388 = vset.pattern.permute.xlu0 1
      %389 = vperm.xlu0 %388, %v130
      %v390 = vpop.permute.xlu0 %389
      %392 = vset.pattern.permute.xlu0 1
      %393 = vperm.xlu0 %392, %v131
      %v394 = vpop.permute.xlu0 %393
      %396 = vset.pattern.permute.xlu0 1
      %397 = vperm.xlu0 %396, %v132
      %v398 = vpop.permute.xlu0 %397
      %400 = vset.pattern.permute.xlu0 1
      %401 = vperm.xlu0 %400, %v133
      %v402 = vpop.permute.xlu0 %401
      %404 = vset.pattern.permute.xlu0 1
      %405 = vperm.xlu0 %404, %v134
      %v406 = vpop.permute.xlu0 %405
      %408 = vset.pattern.permute.xlu0 1
      %409 = vperm.xlu0 %408, %v135
      %v410 = vpop.permute.xlu0 %409
      %412 = vset.pattern.permute.xlu0 1
      %413 = vperm.xlu0 %412, %v136
      %v414 = vpop.permute.xlu0 %413
      %416 = vset.pattern.permute.xlu0 1
      %417 = vperm.xlu0 %416, %v137
      %v418 = vpop.permute.xlu0 %417
      %420 = vset.pattern.permute.xlu0 1
      %421 = vperm.xlu0 %420, %v138
      %v422 = vpop.permute.xlu0 %421
      %424 = vset.pattern.permute.xlu0 1
      %425 = vperm.xlu0 %424, %v139
      %v426 = vpop.permute.xlu0 %425
      %428 = vset.pattern.permute.xlu0 1
      %429 = vperm.xlu0 %428, %v140
      %v430 = vpop.permute.xlu0 %429
      %432 = vset.pattern.permute.xlu0 1
      %433 = vperm.xlu0 %432, %v141
      %v434 = vpop.permute.xlu0 %433
      %436 = vset.pattern.permute.xlu0 1
      %437 = vperm.xlu0 %436, %v142
      %v438 = vpop.permute.xlu0 %437
      %440 = vset.pattern.permute.xlu0 1
      %441 = vperm.xlu0 %440, %v143
      %v442 = vpop.permute.xlu0 %441
      %444 = vset.pattern.permute.xlu0 1
      %445 = vperm.xlu0 %444, %v144
      %v446 = vpop.permute.xlu0 %445
      %448 = vset.pattern.permute.xlu0 1
      %449 = vperm.xlu0 %448, %v145
      %v450 = vpop.permute.xlu0 %449
      %452 = vset.pattern.permute.xlu0 1
      %453 = vperm.xlu0 %452, %v146
      %v454 = vpop.permute.xlu0 %453
      %456 = vset.pattern.permute.xlu0 1
      %457 = vperm.xlu0 %456, %v147
      %v458 = vpop.permute.xlu0 %457
      %460 = vset.pattern.permute.xlu0 1
      %461 = vperm.xlu0 %460, %v148
      %v462 = vpop.permute.xlu0 %461
      %464 = vset.pattern.permute.xlu0 1
      %465 = vperm.xlu0 %464, %v149
      %v466 = vpop.permute.xlu0 %465
      %468 = vset.pattern.permute.xlu0 1
      %469 = vperm.xlu0 %468, %v150
      %v470 = vpop.permute.xlu0 %469
      %472 = vset.pattern.permute.xlu0 1
      %473 = vperm.xlu0 %472, %v151
      %v474 = vpop.permute.xlu0 %473
      %v476 = vmul.f32 %v350, %v155
      %v477 = vmul.f32 %v354, %v155
      %v478 = vmul.f32 %v358, %v155
      %v479 = vmul.f32 %v362, %v155
      %v480 = vmul.f32 %v366, %v155
      %v481 = vmul.f32 %v370, %v155
      %v482 = vmul.f32 %v374, %v155
      %v483 = vmul.f32 %v378, %v155
      %v484 = vmul.f32 %v382, %v155
      %v485 = vmul.f32 %v386, %v155
      %v486 = vmul.f32 %v390, %v155
      %v487 = vmul.f32 %v394, %v155
      %v488 = vmul.f32 %v398, %v155
      %v489 = vmul.f32 %v402, %v155
      %v490 = vmul.f32 %v406, %v155
      %v491 = vmul.f32 %v410, %v155
      %v492 = vmul.f32 %v414, %v155
      %v493 = vmul.f32 %v418, %v155
      %v494 = vmul.f32 %v422, %v155
      %v495 = vmul.f32 %v426, %v155
      %v496 = vmul.f32 %v430, %v155
      %v497 = vmul.f32 %v434, %v155
      %v498 = vmul.f32 %v438, %v155
      %v499 = vmul.f32 %v442, %v155
      %v500 = vmul.f32 %v446, %v155
      %v501 = vmul.f32 %v450, %v155
      %v502 = vmul.f32 %v454, %v155
      %v503 = vmul.f32 %v458, %v155
      %v504 = vmul.f32 %v462, %v155
      %v505 = vmul.f32 %v466, %v155
      %v506 = vmul.f32 %v470, %v155
      %v507 = vmul.f32 %v474, %v155
      %508 = vset.pattern.permute.xlu0 2
      %509 = vperm.xlu0 %508, %v120
      %v510 = vpop.permute.xlu0 %509
      %512 = vset.pattern.permute.xlu0 2
      %513 = vperm.xlu0 %512, %v121
      %v514 = vpop.permute.xlu0 %513
      %516 = vset.pattern.permute.xlu0 2
      %517 = vperm.xlu0 %516, %v122
      %v518 = vpop.permute.xlu0 %517
      %520 = vset.pattern.permute.xlu0 2
      %521 = vperm.xlu0 %520, %v123
      %v522 = vpop.permute.xlu0 %521
      %524 = vset.pattern.permute.xlu0 2
      %525 = vperm.xlu0 %524, %v124
      %v526 = vpop.permute.xlu0 %525
      %528 = vset.pattern.permute.xlu0 2
      %529 = vperm.xlu0 %528, %v125
      %v530 = vpop.permute.xlu0 %529
      %532 = vset.pattern.permute.xlu0 2
      %533 = vperm.xlu0 %532, %v126
      %v534 = vpop.permute.xlu0 %533
      %536 = vset.pattern.permute.xlu0 2
      %537 = vperm.xlu0 %536, %v127
      %v538 = vpop.permute.xlu0 %537
      %540 = vset.pattern.permute.xlu0 2
      %541 = vperm.xlu0 %540, %v128
      %v542 = vpop.permute.xlu0 %541
      %544 = vset.pattern.permute.xlu0 2
      %545 = vperm.xlu0 %544, %v129
      %v546 = vpop.permute.xlu0 %545
      %548 = vset.pattern.permute.xlu0 2
      %549 = vperm.xlu0 %548, %v130
      %v550 = vpop.permute.xlu0 %549
      %552 = vset.pattern.permute.xlu0 2
      %553 = vperm.xlu0 %552, %v131
      %v554 = vpop.permute.xlu0 %553
      %556 = vset.pattern.permute.xlu0 2
      %557 = vperm.xlu0 %556, %v132
      %v558 = vpop.permute.xlu0 %557
      %560 = vset.pattern.permute.xlu0 2
      %561 = vperm.xlu0 %560, %v133
      %v562 = vpop.permute.xlu0 %561
      %564 = vset.pattern.permute.xlu0 2
      %565 = vperm.xlu0 %564, %v134
      %v566 = vpop.permute.xlu0 %565
      %568 = vset.pattern.permute.xlu0 2
      %569 = vperm.xlu0 %568, %v135
      %v570 = vpop.permute.xlu0 %569
      %572 = vset.pattern.permute.xlu0 2
      %573 = vperm.xlu0 %572, %v136
      %v574 = vpop.permute.xlu0 %573
      %576 = vset.pattern.permute.xlu0 2
      %577 = vperm.xlu0 %576, %v137
      %v578 = vpop.permute.xlu0 %577
      %580 = vset.pattern.permute.xlu0 2
      %581 = vperm.xlu0 %580, %v138
      %v582 = vpop.permute.xlu0 %581
      %584 = vset.pattern.permute.xlu0 2
      %585 = vperm.xlu0 %584, %v139
      %v586 = vpop.permute.xlu0 %585
      %588 = vset.pattern.permute.xlu0 2
      %589 = vperm.xlu0 %588, %v140
      %v590 = vpop.permute.xlu0 %589
      %592 = vset.pattern.permute.xlu0 2
      %593 = vperm.xlu0 %592, %v141
      %v594 = vpop.permute.xlu0 %593
      %596 = vset.pattern.permute.xlu0 2
      %597 = vperm.xlu0 %596, %v142
      %v598 = vpop.permute.xlu0 %597
      %600 = vset.pattern.permute.xlu0 2
      %601 = vperm.xlu0 %600, %v143
      %v602 = vpop.permute.xlu0 %601
      %604 = vset.pattern.permute.xlu0 2
      %605 = vperm.xlu0 %604, %v144
      %v606 = vpop.permute.xlu0 %605
      %608 = vset.pattern.permute.xlu0 2
      %609 = vperm.xlu0 %608, %v145
      %v610 = vpop.permute.xlu0 %609
      %612 = vset.pattern.permute.xlu0 2
      %613 = vperm.xlu0 %612, %v146
      %v614 = vpop.permute.xlu0 %613
      %616 = vset.pattern.permute.xlu0 2
      %617 = vperm.xlu0 %616, %v147
      %v618 = vpop.permute.xlu0 %617
      %620 = vset.pattern.permute.xlu0 2
      %621 = vperm.xlu0 %620, %v148
      %v622 = vpop.permute.xlu0 %621
      %624 = vset.pattern.permute.xlu0 2
      %625 = vperm.xlu0 %624, %v149
      %v626 = vpop.permute.xlu0 %625
      %628 = vset.pattern.permute.xlu0 2
      %629 = vperm.xlu0 %628, %v150
      %v630 = vpop.permute.xlu0 %629
      %632 = vset.pattern.permute.xlu0 2
      %633 = vperm.xlu0 %632, %v151
      %v634 = vpop.permute.xlu0 %633
      %v636 = vmul.f32 %v510, %v155
      %v637 = vmul.f32 %v514, %v155
      %v638 = vmul.f32 %v518, %v155
      %v639 = vmul.f32 %v522, %v155
      %v640 = vmul.f32 %v526, %v155
      %v641 = vmul.f32 %v530, %v155
      %v642 = vmul.f32 %v534, %v155
      %v643 = vmul.f32 %v538, %v155
      %v644 = vmul.f32 %v542, %v155
      %v645 = vmul.f32 %v546, %v155
      %v646 = vmul.f32 %v550, %v155
      %v647 = vmul.f32 %v554, %v155
      %v648 = vmul.f32 %v558, %v155
      %v649 = vmul.f32 %v562, %v155
      %v650 = vmul.f32 %v566, %v155
      %v651 = vmul.f32 %v570, %v155
      %v652 = vmul.f32 %v574, %v155
      %v653 = vmul.f32 %v578, %v155
      %v654 = vmul.f32 %v582, %v155
      %v655 = vmul.f32 %v586, %v155
      %v656 = vmul.f32 %v590, %v155
      %v657 = vmul.f32 %v594, %v155
      %v658 = vmul.f32 %v598, %v155
      %v659 = vmul.f32 %v602, %v155
      %v660 = vmul.f32 %v606, %v155
      %v661 = vmul.f32 %v610, %v155
      %v662 = vmul.f32 %v614, %v155
      %v663 = vmul.f32 %v618, %v155
      %v664 = vmul.f32 %v622, %v155
      %v665 = vmul.f32 %v626, %v155
      %v666 = vmul.f32 %v630, %v155
      %v667 = vmul.f32 %v634, %v155
      %700 = vrot.lane.b32.xlu0 %v476, 6
      %v701 = vpop.permute.xlu0 %700
      %702 = vrot.lane.b32.xlu0 %v477, 6
      %v703 = vpop.permute.xlu0 %702
      %704 = vrot.lane.b32.xlu0 %v478, 6
      %v705 = vpop.permute.xlu0 %704
      %706 = vrot.lane.b32.xlu0 %v479, 6
      %v707 = vpop.permute.xlu0 %706
      %708 = vrot.lane.b32.xlu0 %v480, 6
      %v709 = vpop.permute.xlu0 %708
      %710 = vrot.lane.b32.xlu0 %v481, 6
      %v711 = vpop.permute.xlu0 %710
      %712 = vrot.lane.b32.xlu0 %v482, 6
      %v713 = vpop.permute.xlu0 %712
      %714 = vrot.lane.b32.xlu0 %v483, 6
      %v715 = vpop.permute.xlu0 %714
      %716 = vrot.lane.b32.xlu0 %v484, 6
      %v717 = vpop.permute.xlu0 %716
      %718 = vrot.lane.b32.xlu0 %v485, 6
      %v719 = vpop.permute.xlu0 %718
      %720 = vrot.lane.b32.xlu0 %v486, 6
      %v721 = vpop.permute.xlu0 %720
      %722 = vrot.lane.b32.xlu0 %v487, 6
      %v723 = vpop.permute.xlu0 %722
      %724 = vrot.lane.b32.xlu0 %v488, 6
      %v725 = vpop.permute.xlu0 %724
      %726 = vrot.lane.b32.xlu0 %v489, 6
      %v727 = vpop.permute.xlu0 %726
      %728 = vrot.lane.b32.xlu0 %v490, 6
      %v729 = vpop.permute.xlu0 %728
      %730 = vrot.lane.b32.xlu0 %v491, 6
      %v731 = vpop.permute.xlu0 %730
      %732 = vrot.lane.b32.xlu0 %v492, 6
      %v733 = vpop.permute.xlu0 %732
      %734 = vrot.lane.b32.xlu0 %v493, 6
      %v735 = vpop.permute.xlu0 %734
      %736 = vrot.lane.b32.xlu0 %v494, 6
      %v737 = vpop.permute.xlu0 %736
      %738 = vrot.lane.b32.xlu0 %v495, 6
      %v739 = vpop.permute.xlu0 %738
      %740 = vrot.lane.b32.xlu0 %v496, 6
      %v741 = vpop.permute.xlu0 %740
      %742 = vrot.lane.b32.xlu0 %v497, 6
      %v743 = vpop.permute.xlu0 %742
      %744 = vrot.lane.b32.xlu0 %v498, 6
      %v745 = vpop.permute.xlu0 %744
      %746 = vrot.lane.b32.xlu0 %v499, 6
      %v747 = vpop.permute.xlu0 %746
      %748 = vrot.lane.b32.xlu0 %v500, 6
      %v749 = vpop.permute.xlu0 %748
      %750 = vrot.lane.b32.xlu0 %v501, 6
      %v751 = vpop.permute.xlu0 %750
      %752 = vrot.lane.b32.xlu0 %v502, 6
      %v753 = vpop.permute.xlu0 %752
      %754 = vrot.lane.b32.xlu0 %v503, 6
      %v755 = vpop.permute.xlu0 %754
      %756 = vrot.lane.b32.xlu0 %v504, 6
      %v757 = vpop.permute.xlu0 %756
      %758 = vrot.lane.b32.xlu0 %v505, 6
      %v759 = vpop.permute.xlu0 %758
      %760 = vrot.lane.b32.xlu0 %v506, 6
      %v761 = vpop.permute.xlu0 %760
      %762 = vrot.lane.b32.xlu0 %v507, 6
      %v763 = vpop.permute.xlu0 %762
      %828 = vrot.lane.b32.xlu0 %v636, 12
      %v829 = vpop.permute.xlu0 %828
      %830 = vrot.lane.b32.xlu0 %v637, 12
      %v831 = vpop.permute.xlu0 %830
      %832 = vrot.lane.b32.xlu0 %v638, 12
      %v833 = vpop.permute.xlu0 %832
      %834 = vrot.lane.b32.xlu0 %v639, 12
      %v835 = vpop.permute.xlu0 %834
      %836 = vrot.lane.b32.xlu0 %v640, 12
      %v837 = vpop.permute.xlu0 %836
      %838 = vrot.lane.b32.xlu0 %v641, 12
      %v839 = vpop.permute.xlu0 %838
      %840 = vrot.lane.b32.xlu0 %v642, 12
      %v841 = vpop.permute.xlu0 %840
      %842 = vrot.lane.b32.xlu0 %v643, 12
      %v843 = vpop.permute.xlu0 %842
      %844 = vrot.lane.b32.xlu0 %v644, 12
      %v845 = vpop.permute.xlu0 %844
      %846 = vrot.lane.b32.xlu0 %v645, 12
      %v847 = vpop.permute.xlu0 %846
      %848 = vrot.lane.b32.xlu0 %v646, 12
      %v849 = vpop.permute.xlu0 %848
      %850 = vrot.lane.b32.xlu0 %v647, 12
      %v851 = vpop.permute.xlu0 %850
      %852 = vrot.lane.b32.xlu0 %v648, 12
      %v853 = vpop.permute.xlu0 %852
      %854 = vrot.lane.b32.xlu0 %v649, 12
      %v855 = vpop.permute.xlu0 %854
      %856 = vrot.lane.b32.xlu0 %v650, 12
      %v857 = vpop.permute.xlu0 %856
      %858 = vrot.lane.b32.xlu0 %v651, 12
      %v859 = vpop.permute.xlu0 %858
      %860 = vrot.lane.b32.xlu0 %v652, 12
      %v861 = vpop.permute.xlu0 %860
      %862 = vrot.lane.b32.xlu0 %v653, 12
      %v863 = vpop.permute.xlu0 %862
      %864 = vrot.lane.b32.xlu0 %v654, 12
      %v865 = vpop.permute.xlu0 %864
      %866 = vrot.lane.b32.xlu0 %v655, 12
      %v867 = vpop.permute.xlu0 %866
      %868 = vrot.lane.b32.xlu0 %v656, 12
      %v869 = vpop.permute.xlu0 %868
      %870 = vrot.lane.b32.xlu0 %v657, 12
      %v871 = vpop.permute.xlu0 %870
      %872 = vrot.lane.b32.xlu0 %v658, 12
      %v873 = vpop.permute.xlu0 %872
      %874 = vrot.lane.b32.xlu0 %v659, 12
      %v875 = vpop.permute.xlu0 %874
      %876 = vrot.lane.b32.xlu0 %v660, 12
      %v877 = vpop.permute.xlu0 %876
      %878 = vrot.lane.b32.xlu0 %v661, 12
      %v879 = vpop.permute.xlu0 %878
      %880 = vrot.lane.b32.xlu0 %v662, 12
      %v881 = vpop.permute.xlu0 %880
      %882 = vrot.lane.b32.xlu0 %v663, 12
      %v883 = vpop.permute.xlu0 %882
      %884 = vrot.lane.b32.xlu0 %v664, 12
      %v885 = vpop.permute.xlu0 %884
      %886 = vrot.lane.b32.xlu0 %v665, 12
      %v887 = vpop.permute.xlu0 %886
      %888 = vrot.lane.b32.xlu0 %v666, 12
      %v889 = vpop.permute.xlu0 %888
      %890 = vrot.lane.b32.xlu0 %v667, 12
      %v891 = vpop.permute.xlu0 %890
      %vm924 = vcmask 48128
      %v925 = vsel %vm924, %v316, %v701
      %v926 = vsel %vm924, %v317, %v703
      %v927 = vsel %vm924, %v318, %v705
      %v928 = vsel %vm924, %v319, %v707
      %v929 = vsel %vm924, %v320, %v709
      %v930 = vsel %vm924, %v321, %v711
      %v931 = vsel %vm924, %v322, %v713
      %v932 = vsel %vm924, %v323, %v715
      %v933 = vsel %vm924, %v324, %v717
      %v934 = vsel %vm924, %v325, %v719
      %v935 = vsel %vm924, %v326, %v721
      %v936 = vsel %vm924, %v327, %v723
      %v937 = vsel %vm924, %v328, %v725
      %v938 = vsel %vm924, %v329, %v727
      %v939 = vsel %vm924, %v330, %v729
      %v940 = vsel %vm924, %v331, %v731
      %v941 = vsel %vm924, %v332, %v733
      %v942 = vsel %vm924, %v333, %v735
      %v943 = vsel %vm924, %v334, %v737
      %v944 = vsel %vm924, %v335, %v739
      %v945 = vsel %vm924, %v336, %v741
      %v946 = vsel %vm924, %v337, %v743
      %v947 = vsel %vm924, %v338, %v745
      %v948 = vsel %vm924, %v339, %v747
      %v949 = vsel %vm924, %v340, %v749
      %v950 = vsel %vm924, %v341, %v751
      %v951 = vsel %vm924, %v342, %v753
      %v952 = vsel %vm924, %v343, %v755
      %v953 = vsel %vm924, %v344, %v757
      %v954 = vsel %vm924, %v345, %v759
      %v955 = vsel %vm924, %v346, %v761
      %v956 = vsel %vm924, %v347, %v763
      %vm957 = vcmask 97280
      %v958 = vsel %vm957, %v925, %v829
      %v959 = vsel %vm957, %v926, %v831
      %v960 = vsel %vm957, %v927, %v833
      %v961 = vsel %vm957, %v928, %v835
      %v962 = vsel %vm957, %v929, %v837
      %v963 = vsel %vm957, %v930, %v839
      %v964 = vsel %vm957, %v931, %v841
      %v965 = vsel %vm957, %v932, %v843
      %v966 = vsel %vm957, %v933, %v845
      %v967 = vsel %vm957, %v934, %v847
      %v968 = vsel %vm957, %v935, %v849
      %v969 = vsel %vm957, %v936, %v851
      %v970 = vsel %vm957, %v937, %v853
      %v971 = vsel %vm957, %v938, %v855
      %v972 = vsel %vm957, %v939, %v857
      %v973 = vsel %vm957, %v940, %v859
      %v974 = vsel %vm957, %v941, %v861
      %v975 = vsel %vm957, %v942, %v863
      %v976 = vsel %vm957, %v943, %v865
      %v977 = vsel %vm957, %v944, %v867
      %v978 = vsel %vm957, %v945, %v869
      %v979 = vsel %vm957, %v946, %v871
      %v980 = vsel %vm957, %v947, %v873
      %v981 = vsel %vm957, %v948, %v875
      %v982 = vsel %vm957, %v949, %v877
      %v983 = vsel %vm957, %v950, %v879
      %v984 = vsel %vm957, %v951, %v881
      %v985 = vsel %vm957, %v952, %v883
      %v986 = vsel %vm957, %v953, %v885
      %v987 = vsel %vm957, %v954, %v887
      %v988 = vsel %vm957, %v955, %v889
      %v989 = vsel %vm957, %v956, %v891
      %v990 = vand.u32 2147483647, %v958
      %vm991 = vcmp.le.f32.partialorder %v990, 0.7853982
      %vm992 = vcmp.lt.s32.totalorder %v958, 0
      %v993 = vand.u32 %v958, 2139095040
      %v994 = vshrl.u32 %v993, 23
      %v995 = vsub.s32 %v994, 127
      %v996 = vand.u32 2147483647, %v958
      %v997 = vand.u32 %v996, 8388607
      %v998 = vor.u32 %v997, 8388608
      %v999 = vsub.s32 0, %v998
      %v1000 = vadd.s32 %v995, 1
      %vm1001 = vcmp.gt.s32.totalorder %v1000, 0
      %v1002 = vsel %vm1001, %v1000, 0
      %v1003 = vshrl.u32 %v1002, 5
      %v1004 = vand.u32 %v1002, 31
      %v1005 = vsub.s32 32, %v1004
      %v1006 = vshrl.u32 683565275, %v1005
      %v1007 = vshll.u32 683565275, %v1004
      %v1008 = vshrl.u32 2475754826, %v1005
      %v1009 = vor.u32 %v1007, %v1008
      %v1010 = vshll.u32 2475754826, %v1004
      %v1011 = vshrl.u32 2131351028, %v1005
      %v1012 = vor.u32 %v1010, %v1011
      %v1013 = vshll.u32 2131351028, %v1004
      %v1014 = vshrl.u32 2102212464, %v1005
      %v1015 = vor.u32 %v1013, %v1014
      %v1016 = vshll.u32 2102212464, %v1004
      %v1017 = vshrl.u32 920167782, %v1005
      %v1018 = vor.u32 %v1016, %v1017
      %v1019 = vshll.u32 920167782, %v1004
      %v1020 = vshrl.u32 1326507024, %v1005
      %v1021 = vor.u32 %v1019, %v1020
      %vm1022 = vcmp.lt.s32.totalorder %v1003, 1
      %vm1023 = vcmp.lt.s32.totalorder %v1003, 2
      %vm1024 = vcmp.lt.s32.totalorder %v1003, 3
      %vm1025 = vcmp.lt.s32.totalorder %v1003, 4
      %v1026 = vsel %vm1022, %v1006, %v1009
      %v1027 = vsel %vm1025, %v1015, 2102212464
      %v1028 = vsel %vm1024, %v1012, %v1027
      %v1029 = vsel %vm1023, %v1026, %v1028
      %v1030 = vsel %vm1022, %v1009, %v1012
      %v1031 = vsel %vm1025, %v1018, 920167782
      %v1032 = vsel %vm1024, %v1015, %v1031
      %v1033 = vsel %vm1023, %v1030, %v1032
      %v1034 = vsel %vm1022, %v1012, %v1015
      %v1035 = vsel %vm1025, %v1021, 1326507024
      %v1036 = vsel %vm1024, %v1018, %v1035
      %v1037 = vsel %vm1023, %v1034, %v1036
      %v1038 = vshll.u32 %v998, 8
      %v1039 = vmul.u32.u64.compose %v1038, %v1037
      %v1040 = vextract.low.u32 %v1039
      %v1041 = vextract.high.u32 %v1039
      %v1042 = vmul.u32.u64.compose %v1038, %v1033
      %v1043 = vextract.low.u32 %v1042
      %v1044 = vextract.high.u32 %v1042
      %v1045 = vmul.u32 %v1038, %v1029
      %v1046 = vadd.s32 %v1041, %v1043
      %vm1047 = vc.u32 %v1041, %v1043
      %v1048 = vadd.s32 %v1044, 1
      %v1049 = vsel %vm1047, %v1048, %v1044
      %v1050 = vadd.s32 %v1045, %v1049
      %v1051 = vadd.s32 %v1050, 536870912
      %v1052 = vshrl.u32 %v1051, 30
      %v1053 = vshll.u32 %v1052, 30
      %v1054 = vsub.s32 %v1050, %v1053
      %vm1055 = vcmp.lt.s32.totalorder %v1054, 0
      %v1056 = vsub.s32 0, %v1054
      %v1057 = vsel %vm1055, %v1056, %v1054
      %v1058 = vclz %v1057
      %v1059 = vsub.s32 %v1058, 2
      %vm1060 = vcmp.gt.s32.totalorder 0, %v1059
      %v1061 = vsel %vm1060, 0, %v1059
      %v1062 = vsub.s32 32, %v1061
      %v1063 = vshll.u32 %v1054, %v1061
      %v1064 = vshrl.u32 %v1046, %v1062
      %v1065 = vor.u32 %v1063, %v1064
      %v1066 = vsub.s32 4294967266, %v1061
      %v1067 = vadd.s32 %v1066, 127
      %v1068 = vshll.u32 %v1067, 23
      %v1069 = vor.u32 4788187, %v1068
      %v1070 = vand.u32 2147483647, %v1069
      %v1072 = vcvt.s32.f32 %v1065
      %v1073 = vmul.f32 %v1072, %v1070
      %v1074 = vxor.u32 %v1073, 2147483648
      %v1075 = vsel %vm992, %v1074, %v1073
      %v1076 = vsub.s32 4, %v1052
      %v1077 = vsel %vm992, %v1076, %v1052
      %v1078 = vsel %vm991, %v958, %v1075
      %v1079 = vsel %vm991, 0, %v1077
      %v1080 = vcosq.f32.pop %v1078
      %v1081 = vsinq.f32.pop %v1078
      %vm1082 = vweird.f32 %v958
      %v1083 = vadd.s32 %v1079, 3
      %v1084 = vand.u32 %v1083, 3
      %vm1085 = vcmp.lt.s32.totalorder %v1084, 2
      %vm1086 = vcmp.eq.s32.totalorder %v1084, 0
      %v1087 = vxor.u32 %v1081, 2147483648
      %v1088 = vsel %vm1086, %v1080, %v1087
      %vm1089 = vcmp.eq.s32.totalorder %v1084, 2
      %v1090 = vxor.u32 %v1080, 2147483648
      %v1091 = vsel %vm1089, %v1090, %v1081
      %v1092 = vsel %vm1085, %v1088, %v1091
      %v1093 = vsel %vm1082, nan, %v1092
      %v1094 = vand.u32 2147483647, %v959
      %vm1095 = vcmp.le.f32.partialorder %v1094, 0.7853982
      %vm1096 = vcmp.lt.s32.totalorder %v959, 0
      %v1097 = vand.u32 %v959, 2139095040
      %v1098 = vshrl.u32 %v1097, 23
      %v1099 = vsub.s32 %v1098, 127
      %v1100 = vand.u32 2147483647, %v959
      %v1101 = vand.u32 %v1100, 8388607
      %v1102 = vor.u32 %v1101, 8388608
      %v1103 = vsub.s32 0, %v1102
      %v1104 = vadd.s32 %v1099, 1
      %vm1105 = vcmp.gt.s32.totalorder %v1104, 0
      %v1106 = vsel %vm1105, %v1104, 0
      %v1107 = vshrl.u32 %v1106, 5
      %v1108 = vand.u32 %v1106, 31
      %v1109 = vsub.s32 32, %v1108
      %v1110 = vshrl.u32 683565275, %v1109
      %v1111 = vshll.u32 683565275, %v1108
      %v1112 = vshrl.u32 2475754826, %v1109
      %v1113 = vor.u32 %v1111, %v1112
      %v1114 = vshll.u32 2475754826, %v1108
      %v1115 = vshrl.u32 2131351028, %v1109
      %v1116 = vor.u32 %v1114, %v1115
      %v1117 = vshll.u32 2131351028, %v1108
      %v1118 = vshrl.u32 2102212464, %v1109
      %v1119 = vor.u32 %v1117, %v1118
      %v1120 = vshll.u32 2102212464, %v1108
      %v1121 = vshrl.u32 920167782, %v1109
      %v1122 = vor.u32 %v1120, %v1121
      %v1123 = vshll.u32 920167782, %v1108
      %v1124 = vshrl.u32 1326507024, %v1109
      %v1125 = vor.u32 %v1123, %v1124
      %vm1126 = vcmp.lt.s32.totalorder %v1107, 1
      %vm1127 = vcmp.lt.s32.totalorder %v1107, 2
      %vm1128 = vcmp.lt.s32.totalorder %v1107, 3
      %vm1129 = vcmp.lt.s32.totalorder %v1107, 4
      %v1130 = vsel %vm1126, %v1110, %v1113
      %v1131 = vsel %vm1129, %v1119, 2102212464
      %v1132 = vsel %vm1128, %v1116, %v1131
      %v1133 = vsel %vm1127, %v1130, %v1132
      %v1134 = vsel %vm1126, %v1113, %v1116
      %v1135 = vsel %vm1129, %v1122, 920167782
      %v1136 = vsel %vm1128, %v1119, %v1135
      %v1137 = vsel %vm1127, %v1134, %v1136
      %v1138 = vsel %vm1126, %v1116, %v1119
      %v1139 = vsel %vm1129, %v1125, 1326507024
      %v1140 = vsel %vm1128, %v1122, %v1139
      %v1141 = vsel %vm1127, %v1138, %v1140
      %v1142 = vshll.u32 %v1102, 8
      %v1143 = vmul.u32.u64.compose %v1142, %v1141
      %v1144 = vextract.low.u32 %v1143
      %v1145 = vextract.high.u32 %v1143
      %v1146 = vmul.u32.u64.compose %v1142, %v1137
      %v1147 = vextract.low.u32 %v1146
      %v1148 = vextract.high.u32 %v1146
      %v1149 = vmul.u32 %v1142, %v1133
      %v1150 = vadd.s32 %v1145, %v1147
      %vm1151 = vc.u32 %v1145, %v1147
      %v1152 = vadd.s32 %v1148, 1
      %v1153 = vsel %vm1151, %v1152, %v1148
      %v1154 = vadd.s32 %v1149, %v1153
      %v1155 = vadd.s32 %v1154, 536870912
      %v1156 = vshrl.u32 %v1155, 30
      %v1157 = vshll.u32 %v1156, 30
      %v1158 = vsub.s32 %v1154, %v1157
      %vm1159 = vcmp.lt.s32.totalorder %v1158, 0
      %v1160 = vsub.s32 0, %v1158
      %v1161 = vsel %vm1159, %v1160, %v1158
      %v1162 = vclz %v1161
      %v1163 = vsub.s32 %v1162, 2
      %vm1164 = vcmp.gt.s32.totalorder 0, %v1163
      %v1165 = vsel %vm1164, 0, %v1163
      %v1166 = vsub.s32 32, %v1165
      %v1167 = vshll.u32 %v1158, %v1165
      %v1168 = vshrl.u32 %v1150, %v1166
      %v1169 = vor.u32 %v1167, %v1168
      %v1170 = vsub.s32 4294967266, %v1165
      %v1171 = vadd.s32 %v1170, 127
      %v1172 = vshll.u32 %v1171, 23
      %v1173 = vor.u32 4788187, %v1172
      %v1174 = vand.u32 2147483647, %v1173
      %v1176 = vcvt.s32.f32 %v1169
      %v1177 = vmul.f32 %v1176, %v1174
      %v1178 = vxor.u32 %v1177, 2147483648
      %v1179 = vsel %vm1096, %v1178, %v1177
      %v1180 = vsub.s32 4, %v1156
      %v1181 = vsel %vm1096, %v1180, %v1156
      %v1182 = vsel %vm1095, %v959, %v1179
      %v1183 = vsel %vm1095, 0, %v1181
      %v1184 = vcosq.f32.pop %v1182
      %v1185 = vsinq.f32.pop %v1182
      %vm1186 = vweird.f32 %v959
      %v1187 = vadd.s32 %v1183, 3
      %v1188 = vand.u32 %v1187, 3
      %vm1189 = vcmp.lt.s32.totalorder %v1188, 2
      %vm1190 = vcmp.eq.s32.totalorder %v1188, 0
      %v1191 = vxor.u32 %v1185, 2147483648
      %v1192 = vsel %vm1190, %v1184, %v1191
      %vm1193 = vcmp.eq.s32.totalorder %v1188, 2
      %v1194 = vxor.u32 %v1184, 2147483648
      %v1195 = vsel %vm1193, %v1194, %v1185
      %v1196 = vsel %vm1189, %v1192, %v1195
      %v1197 = vsel %vm1186, nan, %v1196
      %v1198 = vand.u32 2147483647, %v960
      %vm1199 = vcmp.le.f32.partialorder %v1198, 0.7853982
      %vm1200 = vcmp.lt.s32.totalorder %v960, 0
      %v1201 = vand.u32 %v960, 2139095040
      %v1202 = vshrl.u32 %v1201, 23
      %v1203 = vsub.s32 %v1202, 127
      %v1204 = vand.u32 2147483647, %v960
      %v1205 = vand.u32 %v1204, 8388607
      %v1206 = vor.u32 %v1205, 8388608
      %v1207 = vsub.s32 0, %v1206
      %v1208 = vadd.s32 %v1203, 1
      %vm1209 = vcmp.gt.s32.totalorder %v1208, 0
      %v1210 = vsel %vm1209, %v1208, 0
      %v1211 = vshrl.u32 %v1210, 5
      %v1212 = vand.u32 %v1210, 31
      %v1213 = vsub.s32 32, %v1212
      %v1214 = vshrl.u32 683565275, %v1213
      %v1215 = vshll.u32 683565275, %v1212
      %v1216 = vshrl.u32 2475754826, %v1213
      %v1217 = vor.u32 %v1215, %v1216
      %v1218 = vshll.u32 2475754826, %v1212
      %v1219 = vshrl.u32 2131351028, %v1213
      %v1220 = vor.u32 %v1218, %v1219
      %v1221 = vshll.u32 2131351028, %v1212
      %v1222 = vshrl.u32 2102212464, %v1213
      %v1223 = vor.u32 %v1221, %v1222
      %v1224 = vshll.u32 2102212464, %v1212
      %v1225 = vshrl.u32 920167782, %v1213
      %v1226 = vor.u32 %v1224, %v1225
      %v1227 = vshll.u32 920167782, %v1212
      %v1228 = vshrl.u32 1326507024, %v1213
      %v1229 = vor.u32 %v1227, %v1228
      %vm1230 = vcmp.lt.s32.totalorder %v1211, 1
      %vm1231 = vcmp.lt.s32.totalorder %v1211, 2
      %vm1232 = vcmp.lt.s32.totalorder %v1211, 3
      %vm1233 = vcmp.lt.s32.totalorder %v1211, 4
      %v1234 = vsel %vm1230, %v1214, %v1217
      %v1235 = vsel %vm1233, %v1223, 2102212464
      %v1236 = vsel %vm1232, %v1220, %v1235
      %v1237 = vsel %vm1231, %v1234, %v1236
      %v1238 = vsel %vm1230, %v1217, %v1220
      %v1239 = vsel %vm1233, %v1226, 920167782
      %v1240 = vsel %vm1232, %v1223, %v1239
      %v1241 = vsel %vm1231, %v1238, %v1240
      %v1242 = vsel %vm1230, %v1220, %v1223
      %v1243 = vsel %vm1233, %v1229, 1326507024
      %v1244 = vsel %vm1232, %v1226, %v1243
      %v1245 = vsel %vm1231, %v1242, %v1244
      %v1246 = vshll.u32 %v1206, 8
      %v1247 = vmul.u32.u64.compose %v1246, %v1245
      %v1248 = vextract.low.u32 %v1247
      %v1249 = vextract.high.u32 %v1247
      %v1250 = vmul.u32.u64.compose %v1246, %v1241
      %v1251 = vextract.low.u32 %v1250
      %v1252 = vextract.high.u32 %v1250
      %v1253 = vmul.u32 %v1246, %v1237
      %v1254 = vadd.s32 %v1249, %v1251
      %vm1255 = vc.u32 %v1249, %v1251
      %v1256 = vadd.s32 %v1252, 1
      %v1257 = vsel %vm1255, %v1256, %v1252
      %v1258 = vadd.s32 %v1253, %v1257
      %v1259 = vadd.s32 %v1258, 536870912
      %v1260 = vshrl.u32 %v1259, 30
      %v1261 = vshll.u32 %v1260, 30
      %v1262 = vsub.s32 %v1258, %v1261
      %vm1263 = vcmp.lt.s32.totalorder %v1262, 0
      %v1264 = vsub.s32 0, %v1262
      %v1265 = vsel %vm1263, %v1264, %v1262
      %v1266 = vclz %v1265
      %v1267 = vsub.s32 %v1266, 2
      %vm1268 = vcmp.gt.s32.totalorder 0, %v1267
      %v1269 = vsel %vm1268, 0, %v1267
      %v1270 = vsub.s32 32, %v1269
      %v1271 = vshll.u32 %v1262, %v1269
      %v1272 = vshrl.u32 %v1254, %v1270
      %v1273 = vor.u32 %v1271, %v1272
      %v1274 = vsub.s32 4294967266, %v1269
      %v1275 = vadd.s32 %v1274, 127
      %v1276 = vshll.u32 %v1275, 23
      %v1277 = vor.u32 4788187, %v1276
      %v1278 = vand.u32 2147483647, %v1277
      %v1280 = vcvt.s32.f32 %v1273
      %v1281 = vmul.f32 %v1280, %v1278
      %v1282 = vxor.u32 %v1281, 2147483648
      %v1283 = vsel %vm1200, %v1282, %v1281
      %v1284 = vsub.s32 4, %v1260
      %v1285 = vsel %vm1200, %v1284, %v1260
      %v1286 = vsel %vm1199, %v960, %v1283
      %v1287 = vsel %vm1199, 0, %v1285
      %v1288 = vcosq.f32.pop %v1286
      %v1289 = vsinq.f32.pop %v1286
      %vm1290 = vweird.f32 %v960
      %v1291 = vadd.s32 %v1287, 3
      %v1292 = vand.u32 %v1291, 3
      %vm1293 = vcmp.lt.s32.totalorder %v1292, 2
      %vm1294 = vcmp.eq.s32.totalorder %v1292, 0
      %v1295 = vxor.u32 %v1289, 2147483648
      %v1296 = vsel %vm1294, %v1288, %v1295
      %vm1297 = vcmp.eq.s32.totalorder %v1292, 2
      %v1298 = vxor.u32 %v1288, 2147483648
      %v1299 = vsel %vm1297, %v1298, %v1289
      %v1300 = vsel %vm1293, %v1296, %v1299
      %v1301 = vsel %vm1290, nan, %v1300
      %v1302 = vand.u32 2147483647, %v961
      %vm1303 = vcmp.le.f32.partialorder %v1302, 0.7853982
      %vm1304 = vcmp.lt.s32.totalorder %v961, 0
      %v1305 = vand.u32 %v961, 2139095040
      %v1306 = vshrl.u32 %v1305, 23
      %v1307 = vsub.s32 %v1306, 127
      %v1308 = vand.u32 2147483647, %v961
      %v1309 = vand.u32 %v1308, 8388607
      %v1310 = vor.u32 %v1309, 8388608
      %v1311 = vsub.s32 0, %v1310
      %v1312 = vadd.s32 %v1307, 1
      %vm1313 = vcmp.gt.s32.totalorder %v1312, 0
      %v1314 = vsel %vm1313, %v1312, 0
      %v1315 = vshrl.u32 %v1314, 5
      %v1316 = vand.u32 %v1314, 31
      %v1317 = vsub.s32 32, %v1316
      %v1318 = vshrl.u32 683565275, %v1317
      %v1319 = vshll.u32 683565275, %v1316
      %v1320 = vshrl.u32 2475754826, %v1317
      %v1321 = vor.u32 %v1319, %v1320
      %v1322 = vshll.u32 2475754826, %v1316
      %v1323 = vshrl.u32 2131351028, %v1317
      %v1324 = vor.u32 %v1322, %v1323
      %v1325 = vshll.u32 2131351028, %v1316
      %v1326 = vshrl.u32 2102212464, %v1317
      %v1327 = vor.u32 %v1325, %v1326
      %v1328 = vshll.u32 2102212464, %v1316
      %v1329 = vshrl.u32 920167782, %v1317
      %v1330 = vor.u32 %v1328, %v1329
      %v1331 = vshll.u32 920167782, %v1316
      %v1332 = vshrl.u32 1326507024, %v1317
      %v1333 = vor.u32 %v1331, %v1332
      %vm1334 = vcmp.lt.s32.totalorder %v1315, 1
      %vm1335 = vcmp.lt.s32.totalorder %v1315, 2
      %vm1336 = vcmp.lt.s32.totalorder %v1315, 3
      %vm1337 = vcmp.lt.s32.totalorder %v1315, 4
      %v1338 = vsel %vm1334, %v1318, %v1321
      %v1339 = vsel %vm1337, %v1327, 2102212464
      %v1340 = vsel %vm1336, %v1324, %v1339
      %v1341 = vsel %vm1335, %v1338, %v1340
      %v1342 = vsel %vm1334, %v1321, %v1324
      %v1343 = vsel %vm1337, %v1330, 920167782
      %v1344 = vsel %vm1336, %v1327, %v1343
      %v1345 = vsel %vm1335, %v1342, %v1344
      %v1346 = vsel %vm1334, %v1324, %v1327
      %v1347 = vsel %vm1337, %v1333, 1326507024
      %v1348 = vsel %vm1336, %v1330, %v1347
      %v1349 = vsel %vm1335, %v1346, %v1348
      %v1350 = vshll.u32 %v1310, 8
      %v1351 = vmul.u32.u64.compose %v1350, %v1349
      %v1352 = vextract.low.u32 %v1351
      %v1353 = vextract.high.u32 %v1351
      %v1354 = vmul.u32.u64.compose %v1350, %v1345
      %v1355 = vextract.low.u32 %v1354
      %v1356 = vextract.high.u32 %v1354
      %v1357 = vmul.u32 %v1350, %v1341
      %v1358 = vadd.s32 %v1353, %v1355
      %vm1359 = vc.u32 %v1353, %v1355
      %v1360 = vadd.s32 %v1356, 1
      %v1361 = vsel %vm1359, %v1360, %v1356
      %v1362 = vadd.s32 %v1357, %v1361
      %v1363 = vadd.s32 %v1362, 536870912
      %v1364 = vshrl.u32 %v1363, 30
      %v1365 = vshll.u32 %v1364, 30
      %v1366 = vsub.s32 %v1362, %v1365
      %vm1367 = vcmp.lt.s32.totalorder %v1366, 0
      %v1368 = vsub.s32 0, %v1366
      %v1369 = vsel %vm1367, %v1368, %v1366
      %v1370 = vclz %v1369
      %v1371 = vsub.s32 %v1370, 2
      %vm1372 = vcmp.gt.s32.totalorder 0, %v1371
      %v1373 = vsel %vm1372, 0, %v1371
      %v1374 = vsub.s32 32, %v1373
      %v1375 = vshll.u32 %v1366, %v1373
      %v1376 = vshrl.u32 %v1358, %v1374
      %v1377 = vor.u32 %v1375, %v1376
      %v1378 = vsub.s32 4294967266, %v1373
      %v1379 = vadd.s32 %v1378, 127
      %v1380 = vshll.u32 %v1379, 23
      %v1381 = vor.u32 4788187, %v1380
      %v1382 = vand.u32 2147483647, %v1381
      %v1384 = vcvt.s32.f32 %v1377
      %v1385 = vmul.f32 %v1384, %v1382
      %v1386 = vxor.u32 %v1385, 2147483648
      %v1387 = vsel %vm1304, %v1386, %v1385
      %v1388 = vsub.s32 4, %v1364
      %v1389 = vsel %vm1304, %v1388, %v1364
      %v1390 = vsel %vm1303, %v961, %v1387
      %v1391 = vsel %vm1303, 0, %v1389
      %v1392 = vcosq.f32.pop %v1390
      %v1393 = vsinq.f32.pop %v1390
      %vm1394 = vweird.f32 %v961
      %v1395 = vadd.s32 %v1391, 3
      %v1396 = vand.u32 %v1395, 3
      %vm1397 = vcmp.lt.s32.totalorder %v1396, 2
      %vm1398 = vcmp.eq.s32.totalorder %v1396, 0
      %v1399 = vxor.u32 %v1393, 2147483648
      %v1400 = vsel %vm1398, %v1392, %v1399
      %vm1401 = vcmp.eq.s32.totalorder %v1396, 2
      %v1402 = vxor.u32 %v1392, 2147483648
      %v1403 = vsel %vm1401, %v1402, %v1393
      %v1404 = vsel %vm1397, %v1400, %v1403
      %v1405 = vsel %vm1394, nan, %v1404
      %v1406 = vand.u32 2147483647, %v962
      %vm1407 = vcmp.le.f32.partialorder %v1406, 0.7853982
      %vm1408 = vcmp.lt.s32.totalorder %v962, 0
      %v1409 = vand.u32 %v962, 2139095040
      %v1410 = vshrl.u32 %v1409, 23
      %v1411 = vsub.s32 %v1410, 127
      %v1412 = vand.u32 2147483647, %v962
      %v1413 = vand.u32 %v1412, 8388607
      %v1414 = vor.u32 %v1413, 8388608
      %v1415 = vsub.s32 0, %v1414
      %v1416 = vadd.s32 %v1411, 1
      %vm1417 = vcmp.gt.s32.totalorder %v1416, 0
      %v1418 = vsel %vm1417, %v1416, 0
      %v1419 = vshrl.u32 %v1418, 5
      %v1420 = vand.u32 %v1418, 31
      %v1421 = vsub.s32 32, %v1420
      %v1422 = vshrl.u32 683565275, %v1421
      %v1423 = vshll.u32 683565275, %v1420
      %v1424 = vshrl.u32 2475754826, %v1421
      %v1425 = vor.u32 %v1423, %v1424
      %v1426 = vshll.u32 2475754826, %v1420
      %v1427 = vshrl.u32 2131351028, %v1421
      %v1428 = vor.u32 %v1426, %v1427
      %v1429 = vshll.u32 2131351028, %v1420
      %v1430 = vshrl.u32 2102212464, %v1421
      %v1431 = vor.u32 %v1429, %v1430
      %v1432 = vshll.u32 2102212464, %v1420
      %v1433 = vshrl.u32 920167782, %v1421
      %v1434 = vor.u32 %v1432, %v1433
      %v1435 = vshll.u32 920167782, %v1420
      %v1436 = vshrl.u32 1326507024, %v1421
      %v1437 = vor.u32 %v1435, %v1436
      %vm1438 = vcmp.lt.s32.totalorder %v1419, 1
      %vm1439 = vcmp.lt.s32.totalorder %v1419, 2
      %vm1440 = vcmp.lt.s32.totalorder %v1419, 3
      %vm1441 = vcmp.lt.s32.totalorder %v1419, 4
      %v1442 = vsel %vm1438, %v1422, %v1425
      %v1443 = vsel %vm1441, %v1431, 2102212464
      %v1444 = vsel %vm1440, %v1428, %v1443
      %v1445 = vsel %vm1439, %v1442, %v1444
      %v1446 = vsel %vm1438, %v1425, %v1428
      %v1447 = vsel %vm1441, %v1434, 920167782
      %v1448 = vsel %vm1440, %v1431, %v1447
      %v1449 = vsel %vm1439, %v1446, %v1448
      %v1450 = vsel %vm1438, %v1428, %v1431
      %v1451 = vsel %vm1441, %v1437, 1326507024
      %v1452 = vsel %vm1440, %v1434, %v1451
      %v1453 = vsel %vm1439, %v1450, %v1452
      %v1454 = vshll.u32 %v1414, 8
      %v1455 = vmul.u32.u64.compose %v1454, %v1453
      %v1456 = vextract.low.u32 %v1455
      %v1457 = vextract.high.u32 %v1455
      %v1458 = vmul.u32.u64.compose %v1454, %v1449
      %v1459 = vextract.low.u32 %v1458
      %v1460 = vextract.high.u32 %v1458
      %v1461 = vmul.u32 %v1454, %v1445
      %v1462 = vadd.s32 %v1457, %v1459
      %vm1463 = vc.u32 %v1457, %v1459
      %v1464 = vadd.s32 %v1460, 1
      %v1465 = vsel %vm1463, %v1464, %v1460
      %v1466 = vadd.s32 %v1461, %v1465
      %v1467 = vadd.s32 %v1466, 536870912
      %v1468 = vshrl.u32 %v1467, 30
      %v1469 = vshll.u32 %v1468, 30
      %v1470 = vsub.s32 %v1466, %v1469
      %vm1471 = vcmp.lt.s32.totalorder %v1470, 0
      %v1472 = vsub.s32 0, %v1470
      %v1473 = vsel %vm1471, %v1472, %v1470
      %v1474 = vclz %v1473
      %v1475 = vsub.s32 %v1474, 2
      %vm1476 = vcmp.gt.s32.totalorder 0, %v1475
      %v1477 = vsel %vm1476, 0, %v1475
      %v1478 = vsub.s32 32, %v1477
      %v1479 = vshll.u32 %v1470, %v1477
      %v1480 = vshrl.u32 %v1462, %v1478
      %v1481 = vor.u32 %v1479, %v1480
      %v1482 = vsub.s32 4294967266, %v1477
      %v1483 = vadd.s32 %v1482, 127
      %v1484 = vshll.u32 %v1483, 23
      %v1485 = vor.u32 4788187, %v1484
      %v1486 = vand.u32 2147483647, %v1485
      %v1488 = vcvt.s32.f32 %v1481
      %v1489 = vmul.f32 %v1488, %v1486
      %v1490 = vxor.u32 %v1489, 2147483648
      %v1491 = vsel %vm1408, %v1490, %v1489
      %v1492 = vsub.s32 4, %v1468
      %v1493 = vsel %vm1408, %v1492, %v1468
      %v1494 = vsel %vm1407, %v962, %v1491
      %v1495 = vsel %vm1407, 0, %v1493
      %v1496 = vcosq.f32.pop %v1494
      %v1497 = vsinq.f32.pop %v1494
      %vm1498 = vweird.f32 %v962
      %v1499 = vadd.s32 %v1495, 3
      %v1500 = vand.u32 %v1499, 3
      %vm1501 = vcmp.lt.s32.totalorder %v1500, 2
      %vm1502 = vcmp.eq.s32.totalorder %v1500, 0
      %v1503 = vxor.u32 %v1497, 2147483648
      %v1504 = vsel %vm1502, %v1496, %v1503
      %vm1505 = vcmp.eq.s32.totalorder %v1500, 2
      %v1506 = vxor.u32 %v1496, 2147483648
      %v1507 = vsel %vm1505, %v1506, %v1497
      %v1508 = vsel %vm1501, %v1504, %v1507
      %v1509 = vsel %vm1498, nan, %v1508
      %v1510 = vand.u32 2147483647, %v963
      %vm1511 = vcmp.le.f32.partialorder %v1510, 0.7853982
      %vm1512 = vcmp.lt.s32.totalorder %v963, 0
      %v1513 = vand.u32 %v963, 2139095040
      %v1514 = vshrl.u32 %v1513, 23
      %v1515 = vsub.s32 %v1514, 127
      %v1516 = vand.u32 2147483647, %v963
      %v1517 = vand.u32 %v1516, 8388607
      %v1518 = vor.u32 %v1517, 8388608
      %v1519 = vsub.s32 0, %v1518
      %v1520 = vadd.s32 %v1515, 1
      %vm1521 = vcmp.gt.s32.totalorder %v1520, 0
      %v1522 = vsel %vm1521, %v1520, 0
      %v1523 = vshrl.u32 %v1522, 5
      %v1524 = vand.u32 %v1522, 31
      %v1525 = vsub.s32 32, %v1524
      %v1526 = vshrl.u32 683565275, %v1525
      %v1527 = vshll.u32 683565275, %v1524
      %v1528 = vshrl.u32 2475754826, %v1525
      %v1529 = vor.u32 %v1527, %v1528
      %v1530 = vshll.u32 2475754826, %v1524
      %v1531 = vshrl.u32 2131351028, %v1525
      %v1532 = vor.u32 %v1530, %v1531
      %v1533 = vshll.u32 2131351028, %v1524
      %v1534 = vshrl.u32 2102212464, %v1525
      %v1535 = vor.u32 %v1533, %v1534
      %v1536 = vshll.u32 2102212464, %v1524
      %v1537 = vshrl.u32 920167782, %v1525
      %v1538 = vor.u32 %v1536, %v1537
      %v1539 = vshll.u32 920167782, %v1524
      %v1540 = vshrl.u32 1326507024, %v1525
      %v1541 = vor.u32 %v1539, %v1540
      %vm1542 = vcmp.lt.s32.totalorder %v1523, 1
      %vm1543 = vcmp.lt.s32.totalorder %v1523, 2
      %vm1544 = vcmp.lt.s32.totalorder %v1523, 3
      %vm1545 = vcmp.lt.s32.totalorder %v1523, 4
      %v1546 = vsel %vm1542, %v1526, %v1529
      %v1547 = vsel %vm1545, %v1535, 2102212464
      %v1548 = vsel %vm1544, %v1532, %v1547
      %v1549 = vsel %vm1543, %v1546, %v1548
      %v1550 = vsel %vm1542, %v1529, %v1532
      %v1551 = vsel %vm1545, %v1538, 920167782
      %v1552 = vsel %vm1544, %v1535, %v1551
      %v1553 = vsel %vm1543, %v1550, %v1552
      %v1554 = vsel %vm1542, %v1532, %v1535
      %v1555 = vsel %vm1545, %v1541, 1326507024
      %v1556 = vsel %vm1544, %v1538, %v1555
      %v1557 = vsel %vm1543, %v1554, %v1556
      %v1558 = vshll.u32 %v1518, 8
      %v1559 = vmul.u32.u64.compose %v1558, %v1557
      %v1560 = vextract.low.u32 %v1559
      %v1561 = vextract.high.u32 %v1559
      %v1562 = vmul.u32.u64.compose %v1558, %v1553
      %v1563 = vextract.low.u32 %v1562
      %v1564 = vextract.high.u32 %v1562
      %v1565 = vmul.u32 %v1558, %v1549
      %v1566 = vadd.s32 %v1561, %v1563
      %vm1567 = vc.u32 %v1561, %v1563
      %v1568 = vadd.s32 %v1564, 1
      %v1569 = vsel %vm1567, %v1568, %v1564
      %v1570 = vadd.s32 %v1565, %v1569
      %v1571 = vadd.s32 %v1570, 536870912
      %v1572 = vshrl.u32 %v1571, 30
      %v1573 = vshll.u32 %v1572, 30
      %v1574 = vsub.s32 %v1570, %v1573
      %vm1575 = vcmp.lt.s32.totalorder %v1574, 0
      %v1576 = vsub.s32 0, %v1574
      %v1577 = vsel %vm1575, %v1576, %v1574
      %v1578 = vclz %v1577
      %v1579 = vsub.s32 %v1578, 2
      %vm1580 = vcmp.gt.s32.totalorder 0, %v1579
      %v1581 = vsel %vm1580, 0, %v1579
      %v1582 = vsub.s32 32, %v1581
      %v1583 = vshll.u32 %v1574, %v1581
      %v1584 = vshrl.u32 %v1566, %v1582
      %v1585 = vor.u32 %v1583, %v1584
      %v1586 = vsub.s32 4294967266, %v1581
      %v1587 = vadd.s32 %v1586, 127
      %v1588 = vshll.u32 %v1587, 23
      %v1589 = vor.u32 4788187, %v1588
      %v1590 = vand.u32 2147483647, %v1589
      %v1592 = vcvt.s32.f32 %v1585
      %v1593 = vmul.f32 %v1592, %v1590
      %v1594 = vxor.u32 %v1593, 2147483648
      %v1595 = vsel %vm1512, %v1594, %v1593
      %v1596 = vsub.s32 4, %v1572
      %v1597 = vsel %vm1512, %v1596, %v1572
      %v1598 = vsel %vm1511, %v963, %v1595
      %v1599 = vsel %vm1511, 0, %v1597
      %v1600 = vcosq.f32.pop %v1598
      %v1601 = vsinq.f32.pop %v1598
      %vm1602 = vweird.f32 %v963
      %v1603 = vadd.s32 %v1599, 3
      %v1604 = vand.u32 %v1603, 3
      %vm1605 = vcmp.lt.s32.totalorder %v1604, 2
      %vm1606 = vcmp.eq.s32.totalorder %v1604, 0
      %v1607 = vxor.u32 %v1601, 2147483648
      %v1608 = vsel %vm1606, %v1600, %v1607
      %vm1609 = vcmp.eq.s32.totalorder %v1604, 2
      %v1610 = vxor.u32 %v1600, 2147483648
      %v1611 = vsel %vm1609, %v1610, %v1601
      %v1612 = vsel %vm1605, %v1608, %v1611
      %v1613 = vsel %vm1602, nan, %v1612
      %v1614 = vand.u32 2147483647, %v964
      %vm1615 = vcmp.le.f32.partialorder %v1614, 0.7853982
      %vm1616 = vcmp.lt.s32.totalorder %v964, 0
      %v1617 = vand.u32 %v964, 2139095040
      %v1618 = vshrl.u32 %v1617, 23
      %v1619 = vsub.s32 %v1618, 127
      %v1620 = vand.u32 2147483647, %v964
      %v1621 = vand.u32 %v1620, 8388607
      %v1622 = vor.u32 %v1621, 8388608
      %v1623 = vsub.s32 0, %v1622
      %v1624 = vadd.s32 %v1619, 1
      %vm1625 = vcmp.gt.s32.totalorder %v1624, 0
      %v1626 = vsel %vm1625, %v1624, 0
      %v1627 = vshrl.u32 %v1626, 5
      %v1628 = vand.u32 %v1626, 31
      %v1629 = vsub.s32 32, %v1628
      %v1630 = vshrl.u32 683565275, %v1629
      %v1631 = vshll.u32 683565275, %v1628
      %v1632 = vshrl.u32 2475754826, %v1629
      %v1633 = vor.u32 %v1631, %v1632
      %v1634 = vshll.u32 2475754826, %v1628
      %v1635 = vshrl.u32 2131351028, %v1629
      %v1636 = vor.u32 %v1634, %v1635
      %v1637 = vshll.u32 2131351028, %v1628
      %v1638 = vshrl.u32 2102212464, %v1629
      %v1639 = vor.u32 %v1637, %v1638
      %v1640 = vshll.u32 2102212464, %v1628
      %v1641 = vshrl.u32 920167782, %v1629
      %v1642 = vor.u32 %v1640, %v1641
      %v1643 = vshll.u32 920167782, %v1628
      %v1644 = vshrl.u32 1326507024, %v1629
      %v1645 = vor.u32 %v1643, %v1644
      %vm1646 = vcmp.lt.s32.totalorder %v1627, 1
      %vm1647 = vcmp.lt.s32.totalorder %v1627, 2
      %vm1648 = vcmp.lt.s32.totalorder %v1627, 3
      %vm1649 = vcmp.lt.s32.totalorder %v1627, 4
      %v1650 = vsel %vm1646, %v1630, %v1633
      %v1651 = vsel %vm1649, %v1639, 2102212464
      %v1652 = vsel %vm1648, %v1636, %v1651
      %v1653 = vsel %vm1647, %v1650, %v1652
      %v1654 = vsel %vm1646, %v1633, %v1636
      %v1655 = vsel %vm1649, %v1642, 920167782
      %v1656 = vsel %vm1648, %v1639, %v1655
      %v1657 = vsel %vm1647, %v1654, %v1656
      %v1658 = vsel %vm1646, %v1636, %v1639
      %v1659 = vsel %vm1649, %v1645, 1326507024
      %v1660 = vsel %vm1648, %v1642, %v1659
      %v1661 = vsel %vm1647, %v1658, %v1660
      %v1662 = vshll.u32 %v1622, 8
      %v1663 = vmul.u32.u64.compose %v1662, %v1661
      %v1664 = vextract.low.u32 %v1663
      %v1665 = vextract.high.u32 %v1663
      %v1666 = vmul.u32.u64.compose %v1662, %v1657
      %v1667 = vextract.low.u32 %v1666
      %v1668 = vextract.high.u32 %v1666
      %v1669 = vmul.u32 %v1662, %v1653
      %v1670 = vadd.s32 %v1665, %v1667
      %vm1671 = vc.u32 %v1665, %v1667
      %v1672 = vadd.s32 %v1668, 1
      %v1673 = vsel %vm1671, %v1672, %v1668
      %v1674 = vadd.s32 %v1669, %v1673
      %v1675 = vadd.s32 %v1674, 536870912
      %v1676 = vshrl.u32 %v1675, 30
      %v1677 = vshll.u32 %v1676, 30
      %v1678 = vsub.s32 %v1674, %v1677
      %vm1679 = vcmp.lt.s32.totalorder %v1678, 0
      %v1680 = vsub.s32 0, %v1678
      %v1681 = vsel %vm1679, %v1680, %v1678
      %v1682 = vclz %v1681
      %v1683 = vsub.s32 %v1682, 2
      %vm1684 = vcmp.gt.s32.totalorder 0, %v1683
      %v1685 = vsel %vm1684, 0, %v1683
      %v1686 = vsub.s32 32, %v1685
      %v1687 = vshll.u32 %v1678, %v1685
      %v1688 = vshrl.u32 %v1670, %v1686
      %v1689 = vor.u32 %v1687, %v1688
      %v1690 = vsub.s32 4294967266, %v1685
      %v1691 = vadd.s32 %v1690, 127
      %v1692 = vshll.u32 %v1691, 23
      %v1693 = vor.u32 4788187, %v1692
      %v1694 = vand.u32 2147483647, %v1693
      %v1696 = vcvt.s32.f32 %v1689
      %v1697 = vmul.f32 %v1696, %v1694
      %v1698 = vxor.u32 %v1697, 2147483648
      %v1699 = vsel %vm1616, %v1698, %v1697
      %v1700 = vsub.s32 4, %v1676
      %v1701 = vsel %vm1616, %v1700, %v1676
      %v1702 = vsel %vm1615, %v964, %v1699
      %v1703 = vsel %vm1615, 0, %v1701
      %v1704 = vcosq.f32.pop %v1702
      %v1705 = vsinq.f32.pop %v1702
      %vm1706 = vweird.f32 %v964
      %v1707 = vadd.s32 %v1703, 3
      %v1708 = vand.u32 %v1707, 3
      %vm1709 = vcmp.lt.s32.totalorder %v1708, 2
      %vm1710 = vcmp.eq.s32.totalorder %v1708, 0
      %v1711 = vxor.u32 %v1705, 2147483648
      %v1712 = vsel %vm1710, %v1704, %v1711
      %vm1713 = vcmp.eq.s32.totalorder %v1708, 2
      %v1714 = vxor.u32 %v1704, 2147483648
      %v1715 = vsel %vm1713, %v1714, %v1705
      %v1716 = vsel %vm1709, %v1712, %v1715
      %v1717 = vsel %vm1706, nan, %v1716
      %v1718 = vand.u32 2147483647, %v965
      %vm1719 = vcmp.le.f32.partialorder %v1718, 0.7853982
      %vm1720 = vcmp.lt.s32.totalorder %v965, 0
      %v1721 = vand.u32 %v965, 2139095040
      %v1722 = vshrl.u32 %v1721, 23
      %v1723 = vsub.s32 %v1722, 127
      %v1724 = vand.u32 2147483647, %v965
      %v1725 = vand.u32 %v1724, 8388607
      %v1726 = vor.u32 %v1725, 8388608
      %v1727 = vsub.s32 0, %v1726
      %v1728 = vadd.s32 %v1723, 1
      %vm1729 = vcmp.gt.s32.totalorder %v1728, 0
      %v1730 = vsel %vm1729, %v1728, 0
      %v1731 = vshrl.u32 %v1730, 5
      %v1732 = vand.u32 %v1730, 31
      %v1733 = vsub.s32 32, %v1732
      %v1734 = vshrl.u32 683565275, %v1733
      %v1735 = vshll.u32 683565275, %v1732
      %v1736 = vshrl.u32 2475754826, %v1733
      %v1737 = vor.u32 %v1735, %v1736
      %v1738 = vshll.u32 2475754826, %v1732
      %v1739 = vshrl.u32 2131351028, %v1733
      %v1740 = vor.u32 %v1738, %v1739
      %v1741 = vshll.u32 2131351028, %v1732
      %v1742 = vshrl.u32 2102212464, %v1733
      %v1743 = vor.u32 %v1741, %v1742
      %v1744 = vshll.u32 2102212464, %v1732
      %v1745 = vshrl.u32 920167782, %v1733
      %v1746 = vor.u32 %v1744, %v1745
      %v1747 = vshll.u32 920167782, %v1732
      %v1748 = vshrl.u32 1326507024, %v1733
      %v1749 = vor.u32 %v1747, %v1748
      %vm1750 = vcmp.lt.s32.totalorder %v1731, 1
      %vm1751 = vcmp.lt.s32.totalorder %v1731, 2
      %vm1752 = vcmp.lt.s32.totalorder %v1731, 3
      %vm1753 = vcmp.lt.s32.totalorder %v1731, 4
      %v1754 = vsel %vm1750, %v1734, %v1737
      %v1755 = vsel %vm1753, %v1743, 2102212464
      %v1756 = vsel %vm1752, %v1740, %v1755
      %v1757 = vsel %vm1751, %v1754, %v1756
      %v1758 = vsel %vm1750, %v1737, %v1740
      %v1759 = vsel %vm1753, %v1746, 920167782
      %v1760 = vsel %vm1752, %v1743, %v1759
      %v1761 = vsel %vm1751, %v1758, %v1760
      %v1762 = vsel %vm1750, %v1740, %v1743
      %v1763 = vsel %vm1753, %v1749, 1326507024
      %v1764 = vsel %vm1752, %v1746, %v1763
      %v1765 = vsel %vm1751, %v1762, %v1764
      %v1766 = vshll.u32 %v1726, 8
      %v1767 = vmul.u32.u64.compose %v1766, %v1765
      %v1768 = vextract.low.u32 %v1767
      %v1769 = vextract.high.u32 %v1767
      %v1770 = vmul.u32.u64.compose %v1766, %v1761
      %v1771 = vextract.low.u32 %v1770
      %v1772 = vextract.high.u32 %v1770
      %v1773 = vmul.u32 %v1766, %v1757
      %v1774 = vadd.s32 %v1769, %v1771
      %vm1775 = vc.u32 %v1769, %v1771
      %v1776 = vadd.s32 %v1772, 1
      %v1777 = vsel %vm1775, %v1776, %v1772
      %v1778 = vadd.s32 %v1773, %v1777
      %v1779 = vadd.s32 %v1778, 536870912
      %v1780 = vshrl.u32 %v1779, 30
      %v1781 = vshll.u32 %v1780, 30
      %v1782 = vsub.s32 %v1778, %v1781
      %vm1783 = vcmp.lt.s32.totalorder %v1782, 0
      %v1784 = vsub.s32 0, %v1782
      %v1785 = vsel %vm1783, %v1784, %v1782
      %v1786 = vclz %v1785
      %v1787 = vsub.s32 %v1786, 2
      %vm1788 = vcmp.gt.s32.totalorder 0, %v1787
      %v1789 = vsel %vm1788, 0, %v1787
      %v1790 = vsub.s32 32, %v1789
      %v1791 = vshll.u32 %v1782, %v1789
      %v1792 = vshrl.u32 %v1774, %v1790
      %v1793 = vor.u32 %v1791, %v1792
      %v1794 = vsub.s32 4294967266, %v1789
      %v1795 = vadd.s32 %v1794, 127
      %v1796 = vshll.u32 %v1795, 23
      %v1797 = vor.u32 4788187, %v1796
      %v1798 = vand.u32 2147483647, %v1797
      %v1800 = vcvt.s32.f32 %v1793
      %v1801 = vmul.f32 %v1800, %v1798
      %v1802 = vxor.u32 %v1801, 2147483648
      %v1803 = vsel %vm1720, %v1802, %v1801
      %v1804 = vsub.s32 4, %v1780
      %v1805 = vsel %vm1720, %v1804, %v1780
      %v1806 = vsel %vm1719, %v965, %v1803
      %v1807 = vsel %vm1719, 0, %v1805
      %v1808 = vcosq.f32.pop %v1806
      %v1809 = vsinq.f32.pop %v1806
      %vm1810 = vweird.f32 %v965
      %v1811 = vadd.s32 %v1807, 3
      %v1812 = vand.u32 %v1811, 3
      %vm1813 = vcmp.lt.s32.totalorder %v1812, 2
      %vm1814 = vcmp.eq.s32.totalorder %v1812, 0
      %v1815 = vxor.u32 %v1809, 2147483648
      %v1816 = vsel %vm1814, %v1808, %v1815
      %vm1817 = vcmp.eq.s32.totalorder %v1812, 2
      %v1818 = vxor.u32 %v1808, 2147483648
      %v1819 = vsel %vm1817, %v1818, %v1809
      %v1820 = vsel %vm1813, %v1816, %v1819
      %v1821 = vsel %vm1810, nan, %v1820
      %v1822 = vand.u32 2147483647, %v966
      %vm1823 = vcmp.le.f32.partialorder %v1822, 0.7853982
      %vm1824 = vcmp.lt.s32.totalorder %v966, 0
      %v1825 = vand.u32 %v966, 2139095040
      %v1826 = vshrl.u32 %v1825, 23
      %v1827 = vsub.s32 %v1826, 127
      %v1828 = vand.u32 2147483647, %v966
      %v1829 = vand.u32 %v1828, 8388607
      %v1830 = vor.u32 %v1829, 8388608
      %v1831 = vsub.s32 0, %v1830
      %v1832 = vadd.s32 %v1827, 1
      %vm1833 = vcmp.gt.s32.totalorder %v1832, 0
      %v1834 = vsel %vm1833, %v1832, 0
      %v1835 = vshrl.u32 %v1834, 5
      %v1836 = vand.u32 %v1834, 31
      %v1837 = vsub.s32 32, %v1836
      %v1838 = vshrl.u32 683565275, %v1837
      %v1839 = vshll.u32 683565275, %v1836
      %v1840 = vshrl.u32 2475754826, %v1837
      %v1841 = vor.u32 %v1839, %v1840
      %v1842 = vshll.u32 2475754826, %v1836
      %v1843 = vshrl.u32 2131351028, %v1837
      %v1844 = vor.u32 %v1842, %v1843
      %v1845 = vshll.u32 2131351028, %v1836
      %v1846 = vshrl.u32 2102212464, %v1837
      %v1847 = vor.u32 %v1845, %v1846
      %v1848 = vshll.u32 2102212464, %v1836
      %v1849 = vshrl.u32 920167782, %v1837
      %v1850 = vor.u32 %v1848, %v1849
      %v1851 = vshll.u32 920167782, %v1836
      %v1852 = vshrl.u32 1326507024, %v1837
      %v1853 = vor.u32 %v1851, %v1852
      %vm1854 = vcmp.lt.s32.totalorder %v1835, 1
      %vm1855 = vcmp.lt.s32.totalorder %v1835, 2
      %vm1856 = vcmp.lt.s32.totalorder %v1835, 3
      %vm1857 = vcmp.lt.s32.totalorder %v1835, 4
      %v1858 = vsel %vm1854, %v1838, %v1841
      %v1859 = vsel %vm1857, %v1847, 2102212464
      %v1860 = vsel %vm1856, %v1844, %v1859
      %v1861 = vsel %vm1855, %v1858, %v1860
      %v1862 = vsel %vm1854, %v1841, %v1844
      %v1863 = vsel %vm1857, %v1850, 920167782
      %v1864 = vsel %vm1856, %v1847, %v1863
      %v1865 = vsel %vm1855, %v1862, %v1864
      %v1866 = vsel %vm1854, %v1844, %v1847
      %v1867 = vsel %vm1857, %v1853, 1326507024
      %v1868 = vsel %vm1856, %v1850, %v1867
      %v1869 = vsel %vm1855, %v1866, %v1868
      %v1870 = vshll.u32 %v1830, 8
      %v1871 = vmul.u32.u64.compose %v1870, %v1869
      %v1872 = vextract.low.u32 %v1871
      %v1873 = vextract.high.u32 %v1871
      %v1874 = vmul.u32.u64.compose %v1870, %v1865
      %v1875 = vextract.low.u32 %v1874
      %v1876 = vextract.high.u32 %v1874
      %v1877 = vmul.u32 %v1870, %v1861
      %v1878 = vadd.s32 %v1873, %v1875
      %vm1879 = vc.u32 %v1873, %v1875
      %v1880 = vadd.s32 %v1876, 1
      %v1881 = vsel %vm1879, %v1880, %v1876
      %v1882 = vadd.s32 %v1877, %v1881
      %v1883 = vadd.s32 %v1882, 536870912
      %v1884 = vshrl.u32 %v1883, 30
      %v1885 = vshll.u32 %v1884, 30
      %v1886 = vsub.s32 %v1882, %v1885
      %vm1887 = vcmp.lt.s32.totalorder %v1886, 0
      %v1888 = vsub.s32 0, %v1886
      %v1889 = vsel %vm1887, %v1888, %v1886
      %v1890 = vclz %v1889
      %v1891 = vsub.s32 %v1890, 2
      %vm1892 = vcmp.gt.s32.totalorder 0, %v1891
      %v1893 = vsel %vm1892, 0, %v1891
      %v1894 = vsub.s32 32, %v1893
      %v1895 = vshll.u32 %v1886, %v1893
      %v1896 = vshrl.u32 %v1878, %v1894
      %v1897 = vor.u32 %v1895, %v1896
      %v1898 = vsub.s32 4294967266, %v1893
      %v1899 = vadd.s32 %v1898, 127
      %v1900 = vshll.u32 %v1899, 23
      %v1901 = vor.u32 4788187, %v1900
      %v1902 = vand.u32 2147483647, %v1901
      %v1904 = vcvt.s32.f32 %v1897
      %v1905 = vmul.f32 %v1904, %v1902
      %v1906 = vxor.u32 %v1905, 2147483648
      %v1907 = vsel %vm1824, %v1906, %v1905
      %v1908 = vsub.s32 4, %v1884
      %v1909 = vsel %vm1824, %v1908, %v1884
      %v1910 = vsel %vm1823, %v966, %v1907
      %v1911 = vsel %vm1823, 0, %v1909
      %v1912 = vcosq.f32.pop %v1910
      %v1913 = vsinq.f32.pop %v1910
      %vm1914 = vweird.f32 %v966
      %v1915 = vadd.s32 %v1911, 3
      %v1916 = vand.u32 %v1915, 3
      %vm1917 = vcmp.lt.s32.totalorder %v1916, 2
      %vm1918 = vcmp.eq.s32.totalorder %v1916, 0
      %v1919 = vxor.u32 %v1913, 2147483648
      %v1920 = vsel %vm1918, %v1912, %v1919
      %vm1921 = vcmp.eq.s32.totalorder %v1916, 2
      %v1922 = vxor.u32 %v1912, 2147483648
      %v1923 = vsel %vm1921, %v1922, %v1913
      %v1924 = vsel %vm1917, %v1920, %v1923
      %v1925 = vsel %vm1914, nan, %v1924
      %v1926 = vand.u32 2147483647, %v967
      %vm1927 = vcmp.le.f32.partialorder %v1926, 0.7853982
      %vm1928 = vcmp.lt.s32.totalorder %v967, 0
      %v1929 = vand.u32 %v967, 2139095040
      %v1930 = vshrl.u32 %v1929, 23
      %v1931 = vsub.s32 %v1930, 127
      %v1932 = vand.u32 2147483647, %v967
      %v1933 = vand.u32 %v1932, 8388607
      %v1934 = vor.u32 %v1933, 8388608
      %v1935 = vsub.s32 0, %v1934
      %v1936 = vadd.s32 %v1931, 1
      %vm1937 = vcmp.gt.s32.totalorder %v1936, 0
      %v1938 = vsel %vm1937, %v1936, 0
      %v1939 = vshrl.u32 %v1938, 5
      %v1940 = vand.u32 %v1938, 31
      %v1941 = vsub.s32 32, %v1940
      %v1942 = vshrl.u32 683565275, %v1941
      %v1943 = vshll.u32 683565275, %v1940
      %v1944 = vshrl.u32 2475754826, %v1941
      %v1945 = vor.u32 %v1943, %v1944
      %v1946 = vshll.u32 2475754826, %v1940
      %v1947 = vshrl.u32 2131351028, %v1941
      %v1948 = vor.u32 %v1946, %v1947
      %v1949 = vshll.u32 2131351028, %v1940
      %v1950 = vshrl.u32 2102212464, %v1941
      %v1951 = vor.u32 %v1949, %v1950
      %v1952 = vshll.u32 2102212464, %v1940
      %v1953 = vshrl.u32 920167782, %v1941
      %v1954 = vor.u32 %v1952, %v1953
      %v1955 = vshll.u32 920167782, %v1940
      %v1956 = vshrl.u32 1326507024, %v1941
      %v1957 = vor.u32 %v1955, %v1956
      %vm1958 = vcmp.lt.s32.totalorder %v1939, 1
      %vm1959 = vcmp.lt.s32.totalorder %v1939, 2
      %vm1960 = vcmp.lt.s32.totalorder %v1939, 3
      %vm1961 = vcmp.lt.s32.totalorder %v1939, 4
      %v1962 = vsel %vm1958, %v1942, %v1945
      %v1963 = vsel %vm1961, %v1951, 2102212464
      %v1964 = vsel %vm1960, %v1948, %v1963
      %v1965 = vsel %vm1959, %v1962, %v1964
      %v1966 = vsel %vm1958, %v1945, %v1948
      %v1967 = vsel %vm1961, %v1954, 920167782
      %v1968 = vsel %vm1960, %v1951, %v1967
      %v1969 = vsel %vm1959, %v1966, %v1968
      %v1970 = vsel %vm1958, %v1948, %v1951
      %v1971 = vsel %vm1961, %v1957, 1326507024
      %v1972 = vsel %vm1960, %v1954, %v1971
      %v1973 = vsel %vm1959, %v1970, %v1972
      %v1974 = vshll.u32 %v1934, 8
      %v1975 = vmul.u32.u64.compose %v1974, %v1973
      %v1976 = vextract.low.u32 %v1975
      %v1977 = vextract.high.u32 %v1975
      %v1978 = vmul.u32.u64.compose %v1974, %v1969
      %v1979 = vextract.low.u32 %v1978
      %v1980 = vextract.high.u32 %v1978
      %v1981 = vmul.u32 %v1974, %v1965
      %v1982 = vadd.s32 %v1977, %v1979
      %vm1983 = vc.u32 %v1977, %v1979
      %v1984 = vadd.s32 %v1980, 1
      %v1985 = vsel %vm1983, %v1984, %v1980
      %v1986 = vadd.s32 %v1981, %v1985
      %v1987 = vadd.s32 %v1986, 536870912
      %v1988 = vshrl.u32 %v1987, 30
      %v1989 = vshll.u32 %v1988, 30
      %v1990 = vsub.s32 %v1986, %v1989
      %vm1991 = vcmp.lt.s32.totalorder %v1990, 0
      %v1992 = vsub.s32 0, %v1990
      %v1993 = vsel %vm1991, %v1992, %v1990
      %v1994 = vclz %v1993
      %v1995 = vsub.s32 %v1994, 2
      %vm1996 = vcmp.gt.s32.totalorder 0, %v1995
      %v1997 = vsel %vm1996, 0, %v1995
      %v1998 = vsub.s32 32, %v1997
      %v1999 = vshll.u32 %v1990, %v1997
      %v2000 = vshrl.u32 %v1982, %v1998
      %v2001 = vor.u32 %v1999, %v2000
      %v2002 = vsub.s32 4294967266, %v1997
      %v2003 = vadd.s32 %v2002, 127
      %v2004 = vshll.u32 %v2003, 23
      %v2005 = vor.u32 4788187, %v2004
      %v2006 = vand.u32 2147483647, %v2005
      %v2008 = vcvt.s32.f32 %v2001
      %v2009 = vmul.f32 %v2008, %v2006
      %v2010 = vxor.u32 %v2009, 2147483648
      %v2011 = vsel %vm1928, %v2010, %v2009
      %v2012 = vsub.s32 4, %v1988
      %v2013 = vsel %vm1928, %v2012, %v1988
      %v2014 = vsel %vm1927, %v967, %v2011
      %v2015 = vsel %vm1927, 0, %v2013
      %v2016 = vcosq.f32.pop %v2014
      %v2017 = vsinq.f32.pop %v2014
      %vm2018 = vweird.f32 %v967
      %v2019 = vadd.s32 %v2015, 3
      %v2020 = vand.u32 %v2019, 3
      %vm2021 = vcmp.lt.s32.totalorder %v2020, 2
      %vm2022 = vcmp.eq.s32.totalorder %v2020, 0
      %v2023 = vxor.u32 %v2017, 2147483648
      %v2024 = vsel %vm2022, %v2016, %v2023
      %vm2025 = vcmp.eq.s32.totalorder %v2020, 2
      %v2026 = vxor.u32 %v2016, 2147483648
      %v2027 = vsel %vm2025, %v2026, %v2017
      %v2028 = vsel %vm2021, %v2024, %v2027
      %v2029 = vsel %vm2018, nan, %v2028
      %v2030 = vand.u32 2147483647, %v968
      %vm2031 = vcmp.le.f32.partialorder %v2030, 0.7853982
      %vm2032 = vcmp.lt.s32.totalorder %v968, 0
      %v2033 = vand.u32 %v968, 2139095040
      %v2034 = vshrl.u32 %v2033, 23
      %v2035 = vsub.s32 %v2034, 127
      %v2036 = vand.u32 2147483647, %v968
      %v2037 = vand.u32 %v2036, 8388607
      %v2038 = vor.u32 %v2037, 8388608
      %v2039 = vsub.s32 0, %v2038
      %v2040 = vadd.s32 %v2035, 1
      %vm2041 = vcmp.gt.s32.totalorder %v2040, 0
      %v2042 = vsel %vm2041, %v2040, 0
      %v2043 = vshrl.u32 %v2042, 5
      %v2044 = vand.u32 %v2042, 31
      %v2045 = vsub.s32 32, %v2044
      %v2046 = vshrl.u32 683565275, %v2045
      %v2047 = vshll.u32 683565275, %v2044
      %v2048 = vshrl.u32 2475754826, %v2045
      %v2049 = vor.u32 %v2047, %v2048
      %v2050 = vshll.u32 2475754826, %v2044
      %v2051 = vshrl.u32 2131351028, %v2045
      %v2052 = vor.u32 %v2050, %v2051
      %v2053 = vshll.u32 2131351028, %v2044
      %v2054 = vshrl.u32 2102212464, %v2045
      %v2055 = vor.u32 %v2053, %v2054
      %v2056 = vshll.u32 2102212464, %v2044
      %v2057 = vshrl.u32 920167782, %v2045
      %v2058 = vor.u32 %v2056, %v2057
      %v2059 = vshll.u32 920167782, %v2044
      %v2060 = vshrl.u32 1326507024, %v2045
      %v2061 = vor.u32 %v2059, %v2060
      %vm2062 = vcmp.lt.s32.totalorder %v2043, 1
      %vm2063 = vcmp.lt.s32.totalorder %v2043, 2
      %vm2064 = vcmp.lt.s32.totalorder %v2043, 3
      %vm2065 = vcmp.lt.s32.totalorder %v2043, 4
      %v2066 = vsel %vm2062, %v2046, %v2049
      %v2067 = vsel %vm2065, %v2055, 2102212464
      %v2068 = vsel %vm2064, %v2052, %v2067
      %v2069 = vsel %vm2063, %v2066, %v2068
      %v2070 = vsel %vm2062, %v2049, %v2052
      %v2071 = vsel %vm2065, %v2058, 920167782
      %v2072 = vsel %vm2064, %v2055, %v2071
      %v2073 = vsel %vm2063, %v2070, %v2072
      %v2074 = vsel %vm2062, %v2052, %v2055
      %v2075 = vsel %vm2065, %v2061, 1326507024
      %v2076 = vsel %vm2064, %v2058, %v2075
      %v2077 = vsel %vm2063, %v2074, %v2076
      %v2078 = vshll.u32 %v2038, 8
      %v2079 = vmul.u32.u64.compose %v2078, %v2077
      %v2080 = vextract.low.u32 %v2079
      %v2081 = vextract.high.u32 %v2079
      %v2082 = vmul.u32.u64.compose %v2078, %v2073
      %v2083 = vextract.low.u32 %v2082
      %v2084 = vextract.high.u32 %v2082
      %v2085 = vmul.u32 %v2078, %v2069
      %v2086 = vadd.s32 %v2081, %v2083
      %vm2087 = vc.u32 %v2081, %v2083
      %v2088 = vadd.s32 %v2084, 1
      %v2089 = vsel %vm2087, %v2088, %v2084
      %v2090 = vadd.s32 %v2085, %v2089
      %v2091 = vadd.s32 %v2090, 536870912
      %v2092 = vshrl.u32 %v2091, 30
      %v2093 = vshll.u32 %v2092, 30
      %v2094 = vsub.s32 %v2090, %v2093
      %vm2095 = vcmp.lt.s32.totalorder %v2094, 0
      %v2096 = vsub.s32 0, %v2094
      %v2097 = vsel %vm2095, %v2096, %v2094
      %v2098 = vclz %v2097
      %v2099 = vsub.s32 %v2098, 2
      %vm2100 = vcmp.gt.s32.totalorder 0, %v2099
      %v2101 = vsel %vm2100, 0, %v2099
      %v2102 = vsub.s32 32, %v2101
      %v2103 = vshll.u32 %v2094, %v2101
      %v2104 = vshrl.u32 %v2086, %v2102
      %v2105 = vor.u32 %v2103, %v2104
      %v2106 = vsub.s32 4294967266, %v2101
      %v2107 = vadd.s32 %v2106, 127
      %v2108 = vshll.u32 %v2107, 23
      %v2109 = vor.u32 4788187, %v2108
      %v2110 = vand.u32 2147483647, %v2109
      %v2112 = vcvt.s32.f32 %v2105
      %v2113 = vmul.f32 %v2112, %v2110
      %v2114 = vxor.u32 %v2113, 2147483648
      %v2115 = vsel %vm2032, %v2114, %v2113
      %v2116 = vsub.s32 4, %v2092
      %v2117 = vsel %vm2032, %v2116, %v2092
      %v2118 = vsel %vm2031, %v968, %v2115
      %v2119 = vsel %vm2031, 0, %v2117
      %v2120 = vcosq.f32.pop %v2118
      %v2121 = vsinq.f32.pop %v2118
      %vm2122 = vweird.f32 %v968
      %v2123 = vadd.s32 %v2119, 3
      %v2124 = vand.u32 %v2123, 3
      %vm2125 = vcmp.lt.s32.totalorder %v2124, 2
      %vm2126 = vcmp.eq.s32.totalorder %v2124, 0
      %v2127 = vxor.u32 %v2121, 2147483648
      %v2128 = vsel %vm2126, %v2120, %v2127
      %vm2129 = vcmp.eq.s32.totalorder %v2124, 2
      %v2130 = vxor.u32 %v2120, 2147483648
      %v2131 = vsel %vm2129, %v2130, %v2121
      %v2132 = vsel %vm2125, %v2128, %v2131
      %v2133 = vsel %vm2122, nan, %v2132
      %v2134 = vand.u32 2147483647, %v969
      %vm2135 = vcmp.le.f32.partialorder %v2134, 0.7853982
      %vm2136 = vcmp.lt.s32.totalorder %v969, 0
      %v2137 = vand.u32 %v969, 2139095040
      %v2138 = vshrl.u32 %v2137, 23
      %v2139 = vsub.s32 %v2138, 127
      %v2140 = vand.u32 2147483647, %v969
      %v2141 = vand.u32 %v2140, 8388607
      %v2142 = vor.u32 %v2141, 8388608
      %v2143 = vsub.s32 0, %v2142
      %v2144 = vadd.s32 %v2139, 1
      %vm2145 = vcmp.gt.s32.totalorder %v2144, 0
      %v2146 = vsel %vm2145, %v2144, 0
      %v2147 = vshrl.u32 %v2146, 5
      %v2148 = vand.u32 %v2146, 31
      %v2149 = vsub.s32 32, %v2148
      %v2150 = vshrl.u32 683565275, %v2149
      %v2151 = vshll.u32 683565275, %v2148
      %v2152 = vshrl.u32 2475754826, %v2149
      %v2153 = vor.u32 %v2151, %v2152
      %v2154 = vshll.u32 2475754826, %v2148
      %v2155 = vshrl.u32 2131351028, %v2149
      %v2156 = vor.u32 %v2154, %v2155
      %v2157 = vshll.u32 2131351028, %v2148
      %v2158 = vshrl.u32 2102212464, %v2149
      %v2159 = vor.u32 %v2157, %v2158
      %v2160 = vshll.u32 2102212464, %v2148
      %v2161 = vshrl.u32 920167782, %v2149
      %v2162 = vor.u32 %v2160, %v2161
      %v2163 = vshll.u32 920167782, %v2148
      %v2164 = vshrl.u32 1326507024, %v2149
      %v2165 = vor.u32 %v2163, %v2164
      %vm2166 = vcmp.lt.s32.totalorder %v2147, 1
      %vm2167 = vcmp.lt.s32.totalorder %v2147, 2
      %vm2168 = vcmp.lt.s32.totalorder %v2147, 3
      %vm2169 = vcmp.lt.s32.totalorder %v2147, 4
      %v2170 = vsel %vm2166, %v2150, %v2153
      %v2171 = vsel %vm2169, %v2159, 2102212464
      %v2172 = vsel %vm2168, %v2156, %v2171
      %v2173 = vsel %vm2167, %v2170, %v2172
      %v2174 = vsel %vm2166, %v2153, %v2156
      %v2175 = vsel %vm2169, %v2162, 920167782
      %v2176 = vsel %vm2168, %v2159, %v2175
      %v2177 = vsel %vm2167, %v2174, %v2176
      %v2178 = vsel %vm2166, %v2156, %v2159
      %v2179 = vsel %vm2169, %v2165, 1326507024
      %v2180 = vsel %vm2168, %v2162, %v2179
      %v2181 = vsel %vm2167, %v2178, %v2180
      %v2182 = vshll.u32 %v2142, 8
      %v2183 = vmul.u32.u64.compose %v2182, %v2181
      %v2184 = vextract.low.u32 %v2183
      %v2185 = vextract.high.u32 %v2183
      %v2186 = vmul.u32.u64.compose %v2182, %v2177
      %v2187 = vextract.low.u32 %v2186
      %v2188 = vextract.high.u32 %v2186
      %v2189 = vmul.u32 %v2182, %v2173
      %v2190 = vadd.s32 %v2185, %v2187
      %vm2191 = vc.u32 %v2185, %v2187
      %v2192 = vadd.s32 %v2188, 1
      %v2193 = vsel %vm2191, %v2192, %v2188
      %v2194 = vadd.s32 %v2189, %v2193
      %v2195 = vadd.s32 %v2194, 536870912
      %v2196 = vshrl.u32 %v2195, 30
      %v2197 = vshll.u32 %v2196, 30
      %v2198 = vsub.s32 %v2194, %v2197
      %vm2199 = vcmp.lt.s32.totalorder %v2198, 0
      %v2200 = vsub.s32 0, %v2198
      %v2201 = vsel %vm2199, %v2200, %v2198
      %v2202 = vclz %v2201
      %v2203 = vsub.s32 %v2202, 2
      %vm2204 = vcmp.gt.s32.totalorder 0, %v2203
      %v2205 = vsel %vm2204, 0, %v2203
      %v2206 = vsub.s32 32, %v2205
      %v2207 = vshll.u32 %v2198, %v2205
      %v2208 = vshrl.u32 %v2190, %v2206
      %v2209 = vor.u32 %v2207, %v2208
      %v2210 = vsub.s32 4294967266, %v2205
      %v2211 = vadd.s32 %v2210, 127
      %v2212 = vshll.u32 %v2211, 23
      %v2213 = vor.u32 4788187, %v2212
      %v2214 = vand.u32 2147483647, %v2213
      %v2216 = vcvt.s32.f32 %v2209
      %v2217 = vmul.f32 %v2216, %v2214
      %v2218 = vxor.u32 %v2217, 2147483648
      %v2219 = vsel %vm2136, %v2218, %v2217
      %v2220 = vsub.s32 4, %v2196
      %v2221 = vsel %vm2136, %v2220, %v2196
      %v2222 = vsel %vm2135, %v969, %v2219
      %v2223 = vsel %vm2135, 0, %v2221
      %v2224 = vcosq.f32.pop %v2222
      %v2225 = vsinq.f32.pop %v2222
      %vm2226 = vweird.f32 %v969
      %v2227 = vadd.s32 %v2223, 3
      %v2228 = vand.u32 %v2227, 3
      %vm2229 = vcmp.lt.s32.totalorder %v2228, 2
      %vm2230 = vcmp.eq.s32.totalorder %v2228, 0
      %v2231 = vxor.u32 %v2225, 2147483648
      %v2232 = vsel %vm2230, %v2224, %v2231
      %vm2233 = vcmp.eq.s32.totalorder %v2228, 2
      %v2234 = vxor.u32 %v2224, 2147483648
      %v2235 = vsel %vm2233, %v2234, %v2225
      %v2236 = vsel %vm2229, %v2232, %v2235
      %v2237 = vsel %vm2226, nan, %v2236
      %v2238 = vand.u32 2147483647, %v970
      %vm2239 = vcmp.le.f32.partialorder %v2238, 0.7853982
      %vm2240 = vcmp.lt.s32.totalorder %v970, 0
      %v2241 = vand.u32 %v970, 2139095040
      %v2242 = vshrl.u32 %v2241, 23
      %v2243 = vsub.s32 %v2242, 127
      %v2244 = vand.u32 2147483647, %v970
      %v2245 = vand.u32 %v2244, 8388607
      %v2246 = vor.u32 %v2245, 8388608
      %v2247 = vsub.s32 0, %v2246
      %v2248 = vadd.s32 %v2243, 1
      %vm2249 = vcmp.gt.s32.totalorder %v2248, 0
      %v2250 = vsel %vm2249, %v2248, 0
      %v2251 = vshrl.u32 %v2250, 5
      %v2252 = vand.u32 %v2250, 31
      %v2253 = vsub.s32 32, %v2252
      %v2254 = vshrl.u32 683565275, %v2253
      %v2255 = vshll.u32 683565275, %v2252
      %v2256 = vshrl.u32 2475754826, %v2253
      %v2257 = vor.u32 %v2255, %v2256
      %v2258 = vshll.u32 2475754826, %v2252
      %v2259 = vshrl.u32 2131351028, %v2253
      %v2260 = vor.u32 %v2258, %v2259
      %v2261 = vshll.u32 2131351028, %v2252
      %v2262 = vshrl.u32 2102212464, %v2253
      %v2263 = vor.u32 %v2261, %v2262
      %v2264 = vshll.u32 2102212464, %v2252
      %v2265 = vshrl.u32 920167782, %v2253
      %v2266 = vor.u32 %v2264, %v2265
      %v2267 = vshll.u32 920167782, %v2252
      %v2268 = vshrl.u32 1326507024, %v2253
      %v2269 = vor.u32 %v2267, %v2268
      %vm2270 = vcmp.lt.s32.totalorder %v2251, 1
      %vm2271 = vcmp.lt.s32.totalorder %v2251, 2
      %vm2272 = vcmp.lt.s32.totalorder %v2251, 3
      %vm2273 = vcmp.lt.s32.totalorder %v2251, 4
      %v2274 = vsel %vm2270, %v2254, %v2257
      %v2275 = vsel %vm2273, %v2263, 2102212464
      %v2276 = vsel %vm2272, %v2260, %v2275
      %v2277 = vsel %vm2271, %v2274, %v2276
      %v2278 = vsel %vm2270, %v2257, %v2260
      %v2279 = vsel %vm2273, %v2266, 920167782
      %v2280 = vsel %vm2272, %v2263, %v2279
      %v2281 = vsel %vm2271, %v2278, %v2280
      %v2282 = vsel %vm2270, %v2260, %v2263
      %v2283 = vsel %vm2273, %v2269, 1326507024
      %v2284 = vsel %vm2272, %v2266, %v2283
      %v2285 = vsel %vm2271, %v2282, %v2284
      %v2286 = vshll.u32 %v2246, 8
      %v2287 = vmul.u32.u64.compose %v2286, %v2285
      %v2288 = vextract.low.u32 %v2287
      %v2289 = vextract.high.u32 %v2287
      %v2290 = vmul.u32.u64.compose %v2286, %v2281
      %v2291 = vextract.low.u32 %v2290
      %v2292 = vextract.high.u32 %v2290
      %v2293 = vmul.u32 %v2286, %v2277
      %v2294 = vadd.s32 %v2289, %v2291
      %vm2295 = vc.u32 %v2289, %v2291
      %v2296 = vadd.s32 %v2292, 1
      %v2297 = vsel %vm2295, %v2296, %v2292
      %v2298 = vadd.s32 %v2293, %v2297
      %v2299 = vadd.s32 %v2298, 536870912
      %v2300 = vshrl.u32 %v2299, 30
      %v2301 = vshll.u32 %v2300, 30
      %v2302 = vsub.s32 %v2298, %v2301
      %vm2303 = vcmp.lt.s32.totalorder %v2302, 0
      %v2304 = vsub.s32 0, %v2302
      %v2305 = vsel %vm2303, %v2304, %v2302
      %v2306 = vclz %v2305
      %v2307 = vsub.s32 %v2306, 2
      %vm2308 = vcmp.gt.s32.totalorder 0, %v2307
      %v2309 = vsel %vm2308, 0, %v2307
      %v2310 = vsub.s32 32, %v2309
      %v2311 = vshll.u32 %v2302, %v2309
      %v2312 = vshrl.u32 %v2294, %v2310
      %v2313 = vor.u32 %v2311, %v2312
      %v2314 = vsub.s32 4294967266, %v2309
      %v2315 = vadd.s32 %v2314, 127
      %v2316 = vshll.u32 %v2315, 23
      %v2317 = vor.u32 4788187, %v2316
      %v2318 = vand.u32 2147483647, %v2317
      %v2320 = vcvt.s32.f32 %v2313
      %v2321 = vmul.f32 %v2320, %v2318
      %v2322 = vxor.u32 %v2321, 2147483648
      %v2323 = vsel %vm2240, %v2322, %v2321
      %v2324 = vsub.s32 4, %v2300
      %v2325 = vsel %vm2240, %v2324, %v2300
      %v2326 = vsel %vm2239, %v970, %v2323
      %v2327 = vsel %vm2239, 0, %v2325
      %v2328 = vcosq.f32.pop %v2326
      %v2329 = vsinq.f32.pop %v2326
      %vm2330 = vweird.f32 %v970
      %v2331 = vadd.s32 %v2327, 3
      %v2332 = vand.u32 %v2331, 3
      %vm2333 = vcmp.lt.s32.totalorder %v2332, 2
      %vm2334 = vcmp.eq.s32.totalorder %v2332, 0
      %v2335 = vxor.u32 %v2329, 2147483648
      %v2336 = vsel %vm2334, %v2328, %v2335
      %vm2337 = vcmp.eq.s32.totalorder %v2332, 2
      %v2338 = vxor.u32 %v2328, 2147483648
      %v2339 = vsel %vm2337, %v2338, %v2329
      %v2340 = vsel %vm2333, %v2336, %v2339
      %v2341 = vsel %vm2330, nan, %v2340
      %v2342 = vand.u32 2147483647, %v971
      %vm2343 = vcmp.le.f32.partialorder %v2342, 0.7853982
      %vm2344 = vcmp.lt.s32.totalorder %v971, 0
      %v2345 = vand.u32 %v971, 2139095040
      %v2346 = vshrl.u32 %v2345, 23
      %v2347 = vsub.s32 %v2346, 127
      %v2348 = vand.u32 2147483647, %v971
      %v2349 = vand.u32 %v2348, 8388607
      %v2350 = vor.u32 %v2349, 8388608
      %v2351 = vsub.s32 0, %v2350
      %v2352 = vadd.s32 %v2347, 1
      %vm2353 = vcmp.gt.s32.totalorder %v2352, 0
      %v2354 = vsel %vm2353, %v2352, 0
      %v2355 = vshrl.u32 %v2354, 5
      %v2356 = vand.u32 %v2354, 31
      %v2357 = vsub.s32 32, %v2356
      %v2358 = vshrl.u32 683565275, %v2357
      %v2359 = vshll.u32 683565275, %v2356
      %v2360 = vshrl.u32 2475754826, %v2357
      %v2361 = vor.u32 %v2359, %v2360
      %v2362 = vshll.u32 2475754826, %v2356
      %v2363 = vshrl.u32 2131351028, %v2357
      %v2364 = vor.u32 %v2362, %v2363
      %v2365 = vshll.u32 2131351028, %v2356
      %v2366 = vshrl.u32 2102212464, %v2357
      %v2367 = vor.u32 %v2365, %v2366
      %v2368 = vshll.u32 2102212464, %v2356
      %v2369 = vshrl.u32 920167782, %v2357
      %v2370 = vor.u32 %v2368, %v2369
      %v2371 = vshll.u32 920167782, %v2356
      %v2372 = vshrl.u32 1326507024, %v2357
      %v2373 = vor.u32 %v2371, %v2372
      %vm2374 = vcmp.lt.s32.totalorder %v2355, 1
      %vm2375 = vcmp.lt.s32.totalorder %v2355, 2
      %vm2376 = vcmp.lt.s32.totalorder %v2355, 3
      %vm2377 = vcmp.lt.s32.totalorder %v2355, 4
      %v2378 = vsel %vm2374, %v2358, %v2361
      %v2379 = vsel %vm2377, %v2367, 2102212464
      %v2380 = vsel %vm2376, %v2364, %v2379
      %v2381 = vsel %vm2375, %v2378, %v2380
      %v2382 = vsel %vm2374, %v2361, %v2364
      %v2383 = vsel %vm2377, %v2370, 920167782
      %v2384 = vsel %vm2376, %v2367, %v2383
      %v2385 = vsel %vm2375, %v2382, %v2384
      %v2386 = vsel %vm2374, %v2364, %v2367
      %v2387 = vsel %vm2377, %v2373, 1326507024
      %v2388 = vsel %vm2376, %v2370, %v2387
      %v2389 = vsel %vm2375, %v2386, %v2388
      %v2390 = vshll.u32 %v2350, 8
      %v2391 = vmul.u32.u64.compose %v2390, %v2389
      %v2392 = vextract.low.u32 %v2391
      %v2393 = vextract.high.u32 %v2391
      %v2394 = vmul.u32.u64.compose %v2390, %v2385
      %v2395 = vextract.low.u32 %v2394
      %v2396 = vextract.high.u32 %v2394
      %v2397 = vmul.u32 %v2390, %v2381
      %v2398 = vadd.s32 %v2393, %v2395
      %vm2399 = vc.u32 %v2393, %v2395
      %v2400 = vadd.s32 %v2396, 1
      %v2401 = vsel %vm2399, %v2400, %v2396
      %v2402 = vadd.s32 %v2397, %v2401
      %v2403 = vadd.s32 %v2402, 536870912
      %v2404 = vshrl.u32 %v2403, 30
      %v2405 = vshll.u32 %v2404, 30
      %v2406 = vsub.s32 %v2402, %v2405
      %vm2407 = vcmp.lt.s32.totalorder %v2406, 0
      %v2408 = vsub.s32 0, %v2406
      %v2409 = vsel %vm2407, %v2408, %v2406
      %v2410 = vclz %v2409
      %v2411 = vsub.s32 %v2410, 2
      %vm2412 = vcmp.gt.s32.totalorder 0, %v2411
      %v2413 = vsel %vm2412, 0, %v2411
      %v2414 = vsub.s32 32, %v2413
      %v2415 = vshll.u32 %v2406, %v2413
      %v2416 = vshrl.u32 %v2398, %v2414
      %v2417 = vor.u32 %v2415, %v2416
      %v2418 = vsub.s32 4294967266, %v2413
      %v2419 = vadd.s32 %v2418, 127
      %v2420 = vshll.u32 %v2419, 23
      %v2421 = vor.u32 4788187, %v2420
      %v2422 = vand.u32 2147483647, %v2421
      %v2424 = vcvt.s32.f32 %v2417
      %v2425 = vmul.f32 %v2424, %v2422
      %v2426 = vxor.u32 %v2425, 2147483648
      %v2427 = vsel %vm2344, %v2426, %v2425
      %v2428 = vsub.s32 4, %v2404
      %v2429 = vsel %vm2344, %v2428, %v2404
      %v2430 = vsel %vm2343, %v971, %v2427
      %v2431 = vsel %vm2343, 0, %v2429
      %v2432 = vcosq.f32.pop %v2430
      %v2433 = vsinq.f32.pop %v2430
      %vm2434 = vweird.f32 %v971
      %v2435 = vadd.s32 %v2431, 3
      %v2436 = vand.u32 %v2435, 3
      %vm2437 = vcmp.lt.s32.totalorder %v2436, 2
      %vm2438 = vcmp.eq.s32.totalorder %v2436, 0
      %v2439 = vxor.u32 %v2433, 2147483648
      %v2440 = vsel %vm2438, %v2432, %v2439
      %vm2441 = vcmp.eq.s32.totalorder %v2436, 2
      %v2442 = vxor.u32 %v2432, 2147483648
      %v2443 = vsel %vm2441, %v2442, %v2433
      %v2444 = vsel %vm2437, %v2440, %v2443
      %v2445 = vsel %vm2434, nan, %v2444
      %v2446 = vand.u32 2147483647, %v972
      %vm2447 = vcmp.le.f32.partialorder %v2446, 0.7853982
      %vm2448 = vcmp.lt.s32.totalorder %v972, 0
      %v2449 = vand.u32 %v972, 2139095040
      %v2450 = vshrl.u32 %v2449, 23
      %v2451 = vsub.s32 %v2450, 127
      %v2452 = vand.u32 2147483647, %v972
      %v2453 = vand.u32 %v2452, 8388607
      %v2454 = vor.u32 %v2453, 8388608
      %v2455 = vsub.s32 0, %v2454
      %v2456 = vadd.s32 %v2451, 1
      %vm2457 = vcmp.gt.s32.totalorder %v2456, 0
      %v2458 = vsel %vm2457, %v2456, 0
      %v2459 = vshrl.u32 %v2458, 5
      %v2460 = vand.u32 %v2458, 31
      %v2461 = vsub.s32 32, %v2460
      %v2462 = vshrl.u32 683565275, %v2461
      %v2463 = vshll.u32 683565275, %v2460
      %v2464 = vshrl.u32 2475754826, %v2461
      %v2465 = vor.u32 %v2463, %v2464
      %v2466 = vshll.u32 2475754826, %v2460
      %v2467 = vshrl.u32 2131351028, %v2461
      %v2468 = vor.u32 %v2466, %v2467
      %v2469 = vshll.u32 2131351028, %v2460
      %v2470 = vshrl.u32 2102212464, %v2461
      %v2471 = vor.u32 %v2469, %v2470
      %v2472 = vshll.u32 2102212464, %v2460
      %v2473 = vshrl.u32 920167782, %v2461
      %v2474 = vor.u32 %v2472, %v2473
      %v2475 = vshll.u32 920167782, %v2460
      %v2476 = vshrl.u32 1326507024, %v2461
      %v2477 = vor.u32 %v2475, %v2476
      %vm2478 = vcmp.lt.s32.totalorder %v2459, 1
      %vm2479 = vcmp.lt.s32.totalorder %v2459, 2
      %vm2480 = vcmp.lt.s32.totalorder %v2459, 3
      %vm2481 = vcmp.lt.s32.totalorder %v2459, 4
      %v2482 = vsel %vm2478, %v2462, %v2465
      %v2483 = vsel %vm2481, %v2471, 2102212464
      %v2484 = vsel %vm2480, %v2468, %v2483
      %v2485 = vsel %vm2479, %v2482, %v2484
      %v2486 = vsel %vm2478, %v2465, %v2468
      %v2487 = vsel %vm2481, %v2474, 920167782
      %v2488 = vsel %vm2480, %v2471, %v2487
      %v2489 = vsel %vm2479, %v2486, %v2488
      %v2490 = vsel %vm2478, %v2468, %v2471
      %v2491 = vsel %vm2481, %v2477, 1326507024
      %v2492 = vsel %vm2480, %v2474, %v2491
      %v2493 = vsel %vm2479, %v2490, %v2492
      %v2494 = vshll.u32 %v2454, 8
      %v2495 = vmul.u32.u64.compose %v2494, %v2493
      %v2496 = vextract.low.u32 %v2495
      %v2497 = vextract.high.u32 %v2495
      %v2498 = vmul.u32.u64.compose %v2494, %v2489
      %v2499 = vextract.low.u32 %v2498
      %v2500 = vextract.high.u32 %v2498
      %v2501 = vmul.u32 %v2494, %v2485
      %v2502 = vadd.s32 %v2497, %v2499
      %vm2503 = vc.u32 %v2497, %v2499
      %v2504 = vadd.s32 %v2500, 1
      %v2505 = vsel %vm2503, %v2504, %v2500
      %v2506 = vadd.s32 %v2501, %v2505
      %v2507 = vadd.s32 %v2506, 536870912
      %v2508 = vshrl.u32 %v2507, 30
      %v2509 = vshll.u32 %v2508, 30
      %v2510 = vsub.s32 %v2506, %v2509
      %vm2511 = vcmp.lt.s32.totalorder %v2510, 0
      %v2512 = vsub.s32 0, %v2510
      %v2513 = vsel %vm2511, %v2512, %v2510
      %v2514 = vclz %v2513
      %v2515 = vsub.s32 %v2514, 2
      %vm2516 = vcmp.gt.s32.totalorder 0, %v2515
      %v2517 = vsel %vm2516, 0, %v2515
      %v2518 = vsub.s32 32, %v2517
      %v2519 = vshll.u32 %v2510, %v2517
      %v2520 = vshrl.u32 %v2502, %v2518
      %v2521 = vor.u32 %v2519, %v2520
      %v2522 = vsub.s32 4294967266, %v2517
      %v2523 = vadd.s32 %v2522, 127
      %v2524 = vshll.u32 %v2523, 23
      %v2525 = vor.u32 4788187, %v2524
      %v2526 = vand.u32 2147483647, %v2525
      %v2528 = vcvt.s32.f32 %v2521
      %v2529 = vmul.f32 %v2528, %v2526
      %v2530 = vxor.u32 %v2529, 2147483648
      %v2531 = vsel %vm2448, %v2530, %v2529
      %v2532 = vsub.s32 4, %v2508
      %v2533 = vsel %vm2448, %v2532, %v2508
      %v2534 = vsel %vm2447, %v972, %v2531
      %v2535 = vsel %vm2447, 0, %v2533
      %v2536 = vcosq.f32.pop %v2534
      %v2537 = vsinq.f32.pop %v2534
      %vm2538 = vweird.f32 %v972
      %v2539 = vadd.s32 %v2535, 3
      %v2540 = vand.u32 %v2539, 3
      %vm2541 = vcmp.lt.s32.totalorder %v2540, 2
      %vm2542 = vcmp.eq.s32.totalorder %v2540, 0
      %v2543 = vxor.u32 %v2537, 2147483648
      %v2544 = vsel %vm2542, %v2536, %v2543
      %vm2545 = vcmp.eq.s32.totalorder %v2540, 2
      %v2546 = vxor.u32 %v2536, 2147483648
      %v2547 = vsel %vm2545, %v2546, %v2537
      %v2548 = vsel %vm2541, %v2544, %v2547
      %v2549 = vsel %vm2538, nan, %v2548
      %v2550 = vand.u32 2147483647, %v973
      %vm2551 = vcmp.le.f32.partialorder %v2550, 0.7853982
      %vm2552 = vcmp.lt.s32.totalorder %v973, 0
      %v2553 = vand.u32 %v973, 2139095040
      %v2554 = vshrl.u32 %v2553, 23
      %v2555 = vsub.s32 %v2554, 127
      %v2556 = vand.u32 2147483647, %v973
      %v2557 = vand.u32 %v2556, 8388607
      %v2558 = vor.u32 %v2557, 8388608
      %v2559 = vsub.s32 0, %v2558
      %v2560 = vadd.s32 %v2555, 1
      %vm2561 = vcmp.gt.s32.totalorder %v2560, 0
      %v2562 = vsel %vm2561, %v2560, 0
      %v2563 = vshrl.u32 %v2562, 5
      %v2564 = vand.u32 %v2562, 31
      %v2565 = vsub.s32 32, %v2564
      %v2566 = vshrl.u32 683565275, %v2565
      %v2567 = vshll.u32 683565275, %v2564
      %v2568 = vshrl.u32 2475754826, %v2565
      %v2569 = vor.u32 %v2567, %v2568
      %v2570 = vshll.u32 2475754826, %v2564
      %v2571 = vshrl.u32 2131351028, %v2565
      %v2572 = vor.u32 %v2570, %v2571
      %v2573 = vshll.u32 2131351028, %v2564
      %v2574 = vshrl.u32 2102212464, %v2565
      %v2575 = vor.u32 %v2573, %v2574
      %v2576 = vshll.u32 2102212464, %v2564
      %v2577 = vshrl.u32 920167782, %v2565
      %v2578 = vor.u32 %v2576, %v2577
      %v2579 = vshll.u32 920167782, %v2564
      %v2580 = vshrl.u32 1326507024, %v2565
      %v2581 = vor.u32 %v2579, %v2580
      %vm2582 = vcmp.lt.s32.totalorder %v2563, 1
      %vm2583 = vcmp.lt.s32.totalorder %v2563, 2
      %vm2584 = vcmp.lt.s32.totalorder %v2563, 3
      %vm2585 = vcmp.lt.s32.totalorder %v2563, 4
      %v2586 = vsel %vm2582, %v2566, %v2569
      %v2587 = vsel %vm2585, %v2575, 2102212464
      %v2588 = vsel %vm2584, %v2572, %v2587
      %v2589 = vsel %vm2583, %v2586, %v2588
      %v2590 = vsel %vm2582, %v2569, %v2572
      %v2591 = vsel %vm2585, %v2578, 920167782
      %v2592 = vsel %vm2584, %v2575, %v2591
      %v2593 = vsel %vm2583, %v2590, %v2592
      %v2594 = vsel %vm2582, %v2572, %v2575
      %v2595 = vsel %vm2585, %v2581, 1326507024
      %v2596 = vsel %vm2584, %v2578, %v2595
      %v2597 = vsel %vm2583, %v2594, %v2596
      %v2598 = vshll.u32 %v2558, 8
      %v2599 = vmul.u32.u64.compose %v2598, %v2597
      %v2600 = vextract.low.u32 %v2599
      %v2601 = vextract.high.u32 %v2599
      %v2602 = vmul.u32.u64.compose %v2598, %v2593
      %v2603 = vextract.low.u32 %v2602
      %v2604 = vextract.high.u32 %v2602
      %v2605 = vmul.u32 %v2598, %v2589
      %v2606 = vadd.s32 %v2601, %v2603
      %vm2607 = vc.u32 %v2601, %v2603
      %v2608 = vadd.s32 %v2604, 1
      %v2609 = vsel %vm2607, %v2608, %v2604
      %v2610 = vadd.s32 %v2605, %v2609
      %v2611 = vadd.s32 %v2610, 536870912
      %v2612 = vshrl.u32 %v2611, 30
      %v2613 = vshll.u32 %v2612, 30
      %v2614 = vsub.s32 %v2610, %v2613
      %vm2615 = vcmp.lt.s32.totalorder %v2614, 0
      %v2616 = vsub.s32 0, %v2614
      %v2617 = vsel %vm2615, %v2616, %v2614
      %v2618 = vclz %v2617
      %v2619 = vsub.s32 %v2618, 2
      %vm2620 = vcmp.gt.s32.totalorder 0, %v2619
      %v2621 = vsel %vm2620, 0, %v2619
      %v2622 = vsub.s32 32, %v2621
      %v2623 = vshll.u32 %v2614, %v2621
      %v2624 = vshrl.u32 %v2606, %v2622
      %v2625 = vor.u32 %v2623, %v2624
      %v2626 = vsub.s32 4294967266, %v2621
      %v2627 = vadd.s32 %v2626, 127
      %v2628 = vshll.u32 %v2627, 23
      %v2629 = vor.u32 4788187, %v2628
      %v2630 = vand.u32 2147483647, %v2629
      %v2632 = vcvt.s32.f32 %v2625
      %v2633 = vmul.f32 %v2632, %v2630
      %v2634 = vxor.u32 %v2633, 2147483648
      %v2635 = vsel %vm2552, %v2634, %v2633
      %v2636 = vsub.s32 4, %v2612
      %v2637 = vsel %vm2552, %v2636, %v2612
      %v2638 = vsel %vm2551, %v973, %v2635
      %v2639 = vsel %vm2551, 0, %v2637
      %v2640 = vcosq.f32.pop %v2638
      %v2641 = vsinq.f32.pop %v2638
      %vm2642 = vweird.f32 %v973
      %v2643 = vadd.s32 %v2639, 3
      %v2644 = vand.u32 %v2643, 3
      %vm2645 = vcmp.lt.s32.totalorder %v2644, 2
      %vm2646 = vcmp.eq.s32.totalorder %v2644, 0
      %v2647 = vxor.u32 %v2641, 2147483648
      %v2648 = vsel %vm2646, %v2640, %v2647
      %vm2649 = vcmp.eq.s32.totalorder %v2644, 2
      %v2650 = vxor.u32 %v2640, 2147483648
      %v2651 = vsel %vm2649, %v2650, %v2641
      %v2652 = vsel %vm2645, %v2648, %v2651
      %v2653 = vsel %vm2642, nan, %v2652
      %v2654 = vand.u32 2147483647, %v974
      %vm2655 = vcmp.le.f32.partialorder %v2654, 0.7853982
      %vm2656 = vcmp.lt.s32.totalorder %v974, 0
      %v2657 = vand.u32 %v974, 2139095040
      %v2658 = vshrl.u32 %v2657, 23
      %v2659 = vsub.s32 %v2658, 127
      %v2660 = vand.u32 2147483647, %v974
      %v2661 = vand.u32 %v2660, 8388607
      %v2662 = vor.u32 %v2661, 8388608
      %v2663 = vsub.s32 0, %v2662
      %v2664 = vadd.s32 %v2659, 1
      %vm2665 = vcmp.gt.s32.totalorder %v2664, 0
      %v2666 = vsel %vm2665, %v2664, 0
      %v2667 = vshrl.u32 %v2666, 5
      %v2668 = vand.u32 %v2666, 31
      %v2669 = vsub.s32 32, %v2668
      %v2670 = vshrl.u32 683565275, %v2669
      %v2671 = vshll.u32 683565275, %v2668
      %v2672 = vshrl.u32 2475754826, %v2669
      %v2673 = vor.u32 %v2671, %v2672
      %v2674 = vshll.u32 2475754826, %v2668
      %v2675 = vshrl.u32 2131351028, %v2669
      %v2676 = vor.u32 %v2674, %v2675
      %v2677 = vshll.u32 2131351028, %v2668
      %v2678 = vshrl.u32 2102212464, %v2669
      %v2679 = vor.u32 %v2677, %v2678
      %v2680 = vshll.u32 2102212464, %v2668
      %v2681 = vshrl.u32 920167782, %v2669
      %v2682 = vor.u32 %v2680, %v2681
      %v2683 = vshll.u32 920167782, %v2668
      %v2684 = vshrl.u32 1326507024, %v2669
      %v2685 = vor.u32 %v2683, %v2684
      %vm2686 = vcmp.lt.s32.totalorder %v2667, 1
      %vm2687 = vcmp.lt.s32.totalorder %v2667, 2
      %vm2688 = vcmp.lt.s32.totalorder %v2667, 3
      %vm2689 = vcmp.lt.s32.totalorder %v2667, 4
      %v2690 = vsel %vm2686, %v2670, %v2673
      %v2691 = vsel %vm2689, %v2679, 2102212464
      %v2692 = vsel %vm2688, %v2676, %v2691
      %v2693 = vsel %vm2687, %v2690, %v2692
      %v2694 = vsel %vm2686, %v2673, %v2676
      %v2695 = vsel %vm2689, %v2682, 920167782
      %v2696 = vsel %vm2688, %v2679, %v2695
      %v2697 = vsel %vm2687, %v2694, %v2696
      %v2698 = vsel %vm2686, %v2676, %v2679
      %v2699 = vsel %vm2689, %v2685, 1326507024
      %v2700 = vsel %vm2688, %v2682, %v2699
      %v2701 = vsel %vm2687, %v2698, %v2700
      %v2702 = vshll.u32 %v2662, 8
      %v2703 = vmul.u32.u64.compose %v2702, %v2701
      %v2704 = vextract.low.u32 %v2703
      %v2705 = vextract.high.u32 %v2703
      %v2706 = vmul.u32.u64.compose %v2702, %v2697
      %v2707 = vextract.low.u32 %v2706
      %v2708 = vextract.high.u32 %v2706
      %v2709 = vmul.u32 %v2702, %v2693
      %v2710 = vadd.s32 %v2705, %v2707
      %vm2711 = vc.u32 %v2705, %v2707
      %v2712 = vadd.s32 %v2708, 1
      %v2713 = vsel %vm2711, %v2712, %v2708
      %v2714 = vadd.s32 %v2709, %v2713
      %v2715 = vadd.s32 %v2714, 536870912
      %v2716 = vshrl.u32 %v2715, 30
      %v2717 = vshll.u32 %v2716, 30
      %v2718 = vsub.s32 %v2714, %v2717
      %vm2719 = vcmp.lt.s32.totalorder %v2718, 0
      %v2720 = vsub.s32 0, %v2718
      %v2721 = vsel %vm2719, %v2720, %v2718
      %v2722 = vclz %v2721
      %v2723 = vsub.s32 %v2722, 2
      %vm2724 = vcmp.gt.s32.totalorder 0, %v2723
      %v2725 = vsel %vm2724, 0, %v2723
      %v2726 = vsub.s32 32, %v2725
      %v2727 = vshll.u32 %v2718, %v2725
      %v2728 = vshrl.u32 %v2710, %v2726
      %v2729 = vor.u32 %v2727, %v2728
      %v2730 = vsub.s32 4294967266, %v2725
      %v2731 = vadd.s32 %v2730, 127
      %v2732 = vshll.u32 %v2731, 23
      %v2733 = vor.u32 4788187, %v2732
      %v2734 = vand.u32 2147483647, %v2733
      %v2736 = vcvt.s32.f32 %v2729
      %v2737 = vmul.f32 %v2736, %v2734
      %v2738 = vxor.u32 %v2737, 2147483648
      %v2739 = vsel %vm2656, %v2738, %v2737
      %v2740 = vsub.s32 4, %v2716
      %v2741 = vsel %vm2656, %v2740, %v2716
      %v2742 = vsel %vm2655, %v974, %v2739
      %v2743 = vsel %vm2655, 0, %v2741
      %v2744 = vcosq.f32.pop %v2742
      %v2745 = vsinq.f32.pop %v2742
      %vm2746 = vweird.f32 %v974
      %v2747 = vadd.s32 %v2743, 3
      %v2748 = vand.u32 %v2747, 3
      %vm2749 = vcmp.lt.s32.totalorder %v2748, 2
      %vm2750 = vcmp.eq.s32.totalorder %v2748, 0
      %v2751 = vxor.u32 %v2745, 2147483648
      %v2752 = vsel %vm2750, %v2744, %v2751
      %vm2753 = vcmp.eq.s32.totalorder %v2748, 2
      %v2754 = vxor.u32 %v2744, 2147483648
      %v2755 = vsel %vm2753, %v2754, %v2745
      %v2756 = vsel %vm2749, %v2752, %v2755
      %v2757 = vsel %vm2746, nan, %v2756
      %v2758 = vand.u32 2147483647, %v975
      %vm2759 = vcmp.le.f32.partialorder %v2758, 0.7853982
      %vm2760 = vcmp.lt.s32.totalorder %v975, 0
      %v2761 = vand.u32 %v975, 2139095040
      %v2762 = vshrl.u32 %v2761, 23
      %v2763 = vsub.s32 %v2762, 127
      %v2764 = vand.u32 2147483647, %v975
      %v2765 = vand.u32 %v2764, 8388607
      %v2766 = vor.u32 %v2765, 8388608
      %v2767 = vsub.s32 0, %v2766
      %v2768 = vadd.s32 %v2763, 1
      %vm2769 = vcmp.gt.s32.totalorder %v2768, 0
      %v2770 = vsel %vm2769, %v2768, 0
      %v2771 = vshrl.u32 %v2770, 5
      %v2772 = vand.u32 %v2770, 31
      %v2773 = vsub.s32 32, %v2772
      %v2774 = vshrl.u32 683565275, %v2773
      %v2775 = vshll.u32 683565275, %v2772
      %v2776 = vshrl.u32 2475754826, %v2773
      %v2777 = vor.u32 %v2775, %v2776
      %v2778 = vshll.u32 2475754826, %v2772
      %v2779 = vshrl.u32 2131351028, %v2773
      %v2780 = vor.u32 %v2778, %v2779
      %v2781 = vshll.u32 2131351028, %v2772
      %v2782 = vshrl.u32 2102212464, %v2773
      %v2783 = vor.u32 %v2781, %v2782
      %v2784 = vshll.u32 2102212464, %v2772
      %v2785 = vshrl.u32 920167782, %v2773
      %v2786 = vor.u32 %v2784, %v2785
      %v2787 = vshll.u32 920167782, %v2772
      %v2788 = vshrl.u32 1326507024, %v2773
      %v2789 = vor.u32 %v2787, %v2788
      %vm2790 = vcmp.lt.s32.totalorder %v2771, 1
      %vm2791 = vcmp.lt.s32.totalorder %v2771, 2
      %vm2792 = vcmp.lt.s32.totalorder %v2771, 3
      %vm2793 = vcmp.lt.s32.totalorder %v2771, 4
      %v2794 = vsel %vm2790, %v2774, %v2777
      %v2795 = vsel %vm2793, %v2783, 2102212464
      %v2796 = vsel %vm2792, %v2780, %v2795
      %v2797 = vsel %vm2791, %v2794, %v2796
      %v2798 = vsel %vm2790, %v2777, %v2780
      %v2799 = vsel %vm2793, %v2786, 920167782
      %v2800 = vsel %vm2792, %v2783, %v2799
      %v2801 = vsel %vm2791, %v2798, %v2800
      %v2802 = vsel %vm2790, %v2780, %v2783
      %v2803 = vsel %vm2793, %v2789, 1326507024
      %v2804 = vsel %vm2792, %v2786, %v2803
      %v2805 = vsel %vm2791, %v2802, %v2804
      %v2806 = vshll.u32 %v2766, 8
      %v2807 = vmul.u32.u64.compose %v2806, %v2805
      %v2808 = vextract.low.u32 %v2807
      %v2809 = vextract.high.u32 %v2807
      %v2810 = vmul.u32.u64.compose %v2806, %v2801
      %v2811 = vextract.low.u32 %v2810
      %v2812 = vextract.high.u32 %v2810
      %v2813 = vmul.u32 %v2806, %v2797
      %v2814 = vadd.s32 %v2809, %v2811
      %vm2815 = vc.u32 %v2809, %v2811
      %v2816 = vadd.s32 %v2812, 1
      %v2817 = vsel %vm2815, %v2816, %v2812
      %v2818 = vadd.s32 %v2813, %v2817
      %v2819 = vadd.s32 %v2818, 536870912
      %v2820 = vshrl.u32 %v2819, 30
      %v2821 = vshll.u32 %v2820, 30
      %v2822 = vsub.s32 %v2818, %v2821
      %vm2823 = vcmp.lt.s32.totalorder %v2822, 0
      %v2824 = vsub.s32 0, %v2822
      %v2825 = vsel %vm2823, %v2824, %v2822
      %v2826 = vclz %v2825
      %v2827 = vsub.s32 %v2826, 2
      %vm2828 = vcmp.gt.s32.totalorder 0, %v2827
      %v2829 = vsel %vm2828, 0, %v2827
      %v2830 = vsub.s32 32, %v2829
      %v2831 = vshll.u32 %v2822, %v2829
      %v2832 = vshrl.u32 %v2814, %v2830
      %v2833 = vor.u32 %v2831, %v2832
      %v2834 = vsub.s32 4294967266, %v2829
      %v2835 = vadd.s32 %v2834, 127
      %v2836 = vshll.u32 %v2835, 23
      %v2837 = vor.u32 4788187, %v2836
      %v2838 = vand.u32 2147483647, %v2837
      %v2840 = vcvt.s32.f32 %v2833
      %v2841 = vmul.f32 %v2840, %v2838
      %v2842 = vxor.u32 %v2841, 2147483648
      %v2843 = vsel %vm2760, %v2842, %v2841
      %v2844 = vsub.s32 4, %v2820
      %v2845 = vsel %vm2760, %v2844, %v2820
      %v2846 = vsel %vm2759, %v975, %v2843
      %v2847 = vsel %vm2759, 0, %v2845
      %v2848 = vcosq.f32.pop %v2846
      %v2849 = vsinq.f32.pop %v2846
      %vm2850 = vweird.f32 %v975
      %v2851 = vadd.s32 %v2847, 3
      %v2852 = vand.u32 %v2851, 3
      %vm2853 = vcmp.lt.s32.totalorder %v2852, 2
      %vm2854 = vcmp.eq.s32.totalorder %v2852, 0
      %v2855 = vxor.u32 %v2849, 2147483648
      %v2856 = vsel %vm2854, %v2848, %v2855
      %vm2857 = vcmp.eq.s32.totalorder %v2852, 2
      %v2858 = vxor.u32 %v2848, 2147483648
      %v2859 = vsel %vm2857, %v2858, %v2849
      %v2860 = vsel %vm2853, %v2856, %v2859
      %v2861 = vsel %vm2850, nan, %v2860
      %v2862 = vand.u32 2147483647, %v976
      %vm2863 = vcmp.le.f32.partialorder %v2862, 0.7853982
      %vm2864 = vcmp.lt.s32.totalorder %v976, 0
      %v2865 = vand.u32 %v976, 2139095040
      %v2866 = vshrl.u32 %v2865, 23
      %v2867 = vsub.s32 %v2866, 127
      %v2868 = vand.u32 2147483647, %v976
      %v2869 = vand.u32 %v2868, 8388607
      %v2870 = vor.u32 %v2869, 8388608
      %v2871 = vsub.s32 0, %v2870
      %v2872 = vadd.s32 %v2867, 1
      %vm2873 = vcmp.gt.s32.totalorder %v2872, 0
      %v2874 = vsel %vm2873, %v2872, 0
      %v2875 = vshrl.u32 %v2874, 5
      %v2876 = vand.u32 %v2874, 31
      %v2877 = vsub.s32 32, %v2876
      %v2878 = vshrl.u32 683565275, %v2877
      %v2879 = vshll.u32 683565275, %v2876
      %v2880 = vshrl.u32 2475754826, %v2877
      %v2881 = vor.u32 %v2879, %v2880
      %v2882 = vshll.u32 2475754826, %v2876
      %v2883 = vshrl.u32 2131351028, %v2877
      %v2884 = vor.u32 %v2882, %v2883
      %v2885 = vshll.u32 2131351028, %v2876
      %v2886 = vshrl.u32 2102212464, %v2877
      %v2887 = vor.u32 %v2885, %v2886
      %v2888 = vshll.u32 2102212464, %v2876
      %v2889 = vshrl.u32 920167782, %v2877
      %v2890 = vor.u32 %v2888, %v2889
      %v2891 = vshll.u32 920167782, %v2876
      %v2892 = vshrl.u32 1326507024, %v2877
      %v2893 = vor.u32 %v2891, %v2892
      %vm2894 = vcmp.lt.s32.totalorder %v2875, 1
      %vm2895 = vcmp.lt.s32.totalorder %v2875, 2
      %vm2896 = vcmp.lt.s32.totalorder %v2875, 3
      %vm2897 = vcmp.lt.s32.totalorder %v2875, 4
      %v2898 = vsel %vm2894, %v2878, %v2881
      %v2899 = vsel %vm2897, %v2887, 2102212464
      %v2900 = vsel %vm2896, %v2884, %v2899
      %v2901 = vsel %vm2895, %v2898, %v2900
      %v2902 = vsel %vm2894, %v2881, %v2884
      %v2903 = vsel %vm2897, %v2890, 920167782
      %v2904 = vsel %vm2896, %v2887, %v2903
      %v2905 = vsel %vm2895, %v2902, %v2904
      %v2906 = vsel %vm2894, %v2884, %v2887
      %v2907 = vsel %vm2897, %v2893, 1326507024
      %v2908 = vsel %vm2896, %v2890, %v2907
      %v2909 = vsel %vm2895, %v2906, %v2908
      %v2910 = vshll.u32 %v2870, 8
      %v2911 = vmul.u32.u64.compose %v2910, %v2909
      %v2912 = vextract.low.u32 %v2911
      %v2913 = vextract.high.u32 %v2911
      %v2914 = vmul.u32.u64.compose %v2910, %v2905
      %v2915 = vextract.low.u32 %v2914
      %v2916 = vextract.high.u32 %v2914
      %v2917 = vmul.u32 %v2910, %v2901
      %v2918 = vadd.s32 %v2913, %v2915
      %vm2919 = vc.u32 %v2913, %v2915
      %v2920 = vadd.s32 %v2916, 1
      %v2921 = vsel %vm2919, %v2920, %v2916
      %v2922 = vadd.s32 %v2917, %v2921
      %v2923 = vadd.s32 %v2922, 536870912
      %v2924 = vshrl.u32 %v2923, 30
      %v2925 = vshll.u32 %v2924, 30
      %v2926 = vsub.s32 %v2922, %v2925
      %vm2927 = vcmp.lt.s32.totalorder %v2926, 0
      %v2928 = vsub.s32 0, %v2926
      %v2929 = vsel %vm2927, %v2928, %v2926
      %v2930 = vclz %v2929
      %v2931 = vsub.s32 %v2930, 2
      %vm2932 = vcmp.gt.s32.totalorder 0, %v2931
      %v2933 = vsel %vm2932, 0, %v2931
      %v2934 = vsub.s32 32, %v2933
      %v2935 = vshll.u32 %v2926, %v2933
      %v2936 = vshrl.u32 %v2918, %v2934
      %v2937 = vor.u32 %v2935, %v2936
      %v2938 = vsub.s32 4294967266, %v2933
      %v2939 = vadd.s32 %v2938, 127
      %v2940 = vshll.u32 %v2939, 23
      %v2941 = vor.u32 4788187, %v2940
      %v2942 = vand.u32 2147483647, %v2941
      %v2944 = vcvt.s32.f32 %v2937
      %v2945 = vmul.f32 %v2944, %v2942
      %v2946 = vxor.u32 %v2945, 2147483648
      %v2947 = vsel %vm2864, %v2946, %v2945
      %v2948 = vsub.s32 4, %v2924
      %v2949 = vsel %vm2864, %v2948, %v2924
      %v2950 = vsel %vm2863, %v976, %v2947
      %v2951 = vsel %vm2863, 0, %v2949
      %v2952 = vcosq.f32.pop %v2950
      %v2953 = vsinq.f32.pop %v2950
      %vm2954 = vweird.f32 %v976
      %v2955 = vadd.s32 %v2951, 3
      %v2956 = vand.u32 %v2955, 3
      %vm2957 = vcmp.lt.s32.totalorder %v2956, 2
      %vm2958 = vcmp.eq.s32.totalorder %v2956, 0
      %v2959 = vxor.u32 %v2953, 2147483648
      %v2960 = vsel %vm2958, %v2952, %v2959
      %vm2961 = vcmp.eq.s32.totalorder %v2956, 2
      %v2962 = vxor.u32 %v2952, 2147483648
      %v2963 = vsel %vm2961, %v2962, %v2953
      %v2964 = vsel %vm2957, %v2960, %v2963
      %v2965 = vsel %vm2954, nan, %v2964
      %v2966 = vand.u32 2147483647, %v977
      %vm2967 = vcmp.le.f32.partialorder %v2966, 0.7853982
      %vm2968 = vcmp.lt.s32.totalorder %v977, 0
      %v2969 = vand.u32 %v977, 2139095040
      %v2970 = vshrl.u32 %v2969, 23
      %v2971 = vsub.s32 %v2970, 127
      %v2972 = vand.u32 2147483647, %v977
      %v2973 = vand.u32 %v2972, 8388607
      %v2974 = vor.u32 %v2973, 8388608
      %v2975 = vsub.s32 0, %v2974
      %v2976 = vadd.s32 %v2971, 1
      %vm2977 = vcmp.gt.s32.totalorder %v2976, 0
      %v2978 = vsel %vm2977, %v2976, 0
      %v2979 = vshrl.u32 %v2978, 5
      %v2980 = vand.u32 %v2978, 31
      %v2981 = vsub.s32 32, %v2980
      %v2982 = vshrl.u32 683565275, %v2981
      %v2983 = vshll.u32 683565275, %v2980
      %v2984 = vshrl.u32 2475754826, %v2981
      %v2985 = vor.u32 %v2983, %v2984
      %v2986 = vshll.u32 2475754826, %v2980
      %v2987 = vshrl.u32 2131351028, %v2981
      %v2988 = vor.u32 %v2986, %v2987
      %v2989 = vshll.u32 2131351028, %v2980
      %v2990 = vshrl.u32 2102212464, %v2981
      %v2991 = vor.u32 %v2989, %v2990
      %v2992 = vshll.u32 2102212464, %v2980
      %v2993 = vshrl.u32 920167782, %v2981
      %v2994 = vor.u32 %v2992, %v2993
      %v2995 = vshll.u32 920167782, %v2980
      %v2996 = vshrl.u32 1326507024, %v2981
      %v2997 = vor.u32 %v2995, %v2996
      %vm2998 = vcmp.lt.s32.totalorder %v2979, 1
      %vm2999 = vcmp.lt.s32.totalorder %v2979, 2
      %vm3000 = vcmp.lt.s32.totalorder %v2979, 3
      %vm3001 = vcmp.lt.s32.totalorder %v2979, 4
      %v3002 = vsel %vm2998, %v2982, %v2985
      %v3003 = vsel %vm3001, %v2991, 2102212464
      %v3004 = vsel %vm3000, %v2988, %v3003
      %v3005 = vsel %vm2999, %v3002, %v3004
      %v3006 = vsel %vm2998, %v2985, %v2988
      %v3007 = vsel %vm3001, %v2994, 920167782
      %v3008 = vsel %vm3000, %v2991, %v3007
      %v3009 = vsel %vm2999, %v3006, %v3008
      %v3010 = vsel %vm2998, %v2988, %v2991
      %v3011 = vsel %vm3001, %v2997, 1326507024
      %v3012 = vsel %vm3000, %v2994, %v3011
      %v3013 = vsel %vm2999, %v3010, %v3012
      %v3014 = vshll.u32 %v2974, 8
      %v3015 = vmul.u32.u64.compose %v3014, %v3013
      %v3016 = vextract.low.u32 %v3015
      %v3017 = vextract.high.u32 %v3015
      %v3018 = vmul.u32.u64.compose %v3014, %v3009
      %v3019 = vextract.low.u32 %v3018
      %v3020 = vextract.high.u32 %v3018
      %v3021 = vmul.u32 %v3014, %v3005
      %v3022 = vadd.s32 %v3017, %v3019
      %vm3023 = vc.u32 %v3017, %v3019
      %v3024 = vadd.s32 %v3020, 1
      %v3025 = vsel %vm3023, %v3024, %v3020
      %v3026 = vadd.s32 %v3021, %v3025
      %v3027 = vadd.s32 %v3026, 536870912
      %v3028 = vshrl.u32 %v3027, 30
      %v3029 = vshll.u32 %v3028, 30
      %v3030 = vsub.s32 %v3026, %v3029
      %vm3031 = vcmp.lt.s32.totalorder %v3030, 0
      %v3032 = vsub.s32 0, %v3030
      %v3033 = vsel %vm3031, %v3032, %v3030
      %v3034 = vclz %v3033
      %v3035 = vsub.s32 %v3034, 2
      %vm3036 = vcmp.gt.s32.totalorder 0, %v3035
      %v3037 = vsel %vm3036, 0, %v3035
      %v3038 = vsub.s32 32, %v3037
      %v3039 = vshll.u32 %v3030, %v3037
      %v3040 = vshrl.u32 %v3022, %v3038
      %v3041 = vor.u32 %v3039, %v3040
      %v3042 = vsub.s32 4294967266, %v3037
      %v3043 = vadd.s32 %v3042, 127
      %v3044 = vshll.u32 %v3043, 23
      %v3045 = vor.u32 4788187, %v3044
      %v3046 = vand.u32 2147483647, %v3045
      %v3048 = vcvt.s32.f32 %v3041
      %v3049 = vmul.f32 %v3048, %v3046
      %v3050 = vxor.u32 %v3049, 2147483648
      %v3051 = vsel %vm2968, %v3050, %v3049
      %v3052 = vsub.s32 4, %v3028
      %v3053 = vsel %vm2968, %v3052, %v3028
      %v3054 = vsel %vm2967, %v977, %v3051
      %v3055 = vsel %vm2967, 0, %v3053
      %v3056 = vcosq.f32.pop %v3054
      %v3057 = vsinq.f32.pop %v3054
      %vm3058 = vweird.f32 %v977
      %v3059 = vadd.s32 %v3055, 3
      %v3060 = vand.u32 %v3059, 3
      %vm3061 = vcmp.lt.s32.totalorder %v3060, 2
      %vm3062 = vcmp.eq.s32.totalorder %v3060, 0
      %v3063 = vxor.u32 %v3057, 2147483648
      %v3064 = vsel %vm3062, %v3056, %v3063
      %vm3065 = vcmp.eq.s32.totalorder %v3060, 2
      %v3066 = vxor.u32 %v3056, 2147483648
      %v3067 = vsel %vm3065, %v3066, %v3057
      %v3068 = vsel %vm3061, %v3064, %v3067
      %v3069 = vsel %vm3058, nan, %v3068
      %v3070 = vand.u32 2147483647, %v978
      %vm3071 = vcmp.le.f32.partialorder %v3070, 0.7853982
      %vm3072 = vcmp.lt.s32.totalorder %v978, 0
      %v3073 = vand.u32 %v978, 2139095040
      %v3074 = vshrl.u32 %v3073, 23
      %v3075 = vsub.s32 %v3074, 127
      %v3076 = vand.u32 2147483647, %v978
      %v3077 = vand.u32 %v3076, 8388607
      %v3078 = vor.u32 %v3077, 8388608
      %v3079 = vsub.s32 0, %v3078
      %v3080 = vadd.s32 %v3075, 1
      %vm3081 = vcmp.gt.s32.totalorder %v3080, 0
      %v3082 = vsel %vm3081, %v3080, 0
      %v3083 = vshrl.u32 %v3082, 5
      %v3084 = vand.u32 %v3082, 31
      %v3085 = vsub.s32 32, %v3084
      %v3086 = vshrl.u32 683565275, %v3085
      %v3087 = vshll.u32 683565275, %v3084
      %v3088 = vshrl.u32 2475754826, %v3085
      %v3089 = vor.u32 %v3087, %v3088
      %v3090 = vshll.u32 2475754826, %v3084
      %v3091 = vshrl.u32 2131351028, %v3085
      %v3092 = vor.u32 %v3090, %v3091
      %v3093 = vshll.u32 2131351028, %v3084
      %v3094 = vshrl.u32 2102212464, %v3085
      %v3095 = vor.u32 %v3093, %v3094
      %v3096 = vshll.u32 2102212464, %v3084
      %v3097 = vshrl.u32 920167782, %v3085
      %v3098 = vor.u32 %v3096, %v3097
      %v3099 = vshll.u32 920167782, %v3084
      %v3100 = vshrl.u32 1326507024, %v3085
      %v3101 = vor.u32 %v3099, %v3100
      %vm3102 = vcmp.lt.s32.totalorder %v3083, 1
      %vm3103 = vcmp.lt.s32.totalorder %v3083, 2
      %vm3104 = vcmp.lt.s32.totalorder %v3083, 3
      %vm3105 = vcmp.lt.s32.totalorder %v3083, 4
      %v3106 = vsel %vm3102, %v3086, %v3089
      %v3107 = vsel %vm3105, %v3095, 2102212464
      %v3108 = vsel %vm3104, %v3092, %v3107
      %v3109 = vsel %vm3103, %v3106, %v3108
      %v3110 = vsel %vm3102, %v3089, %v3092
      %v3111 = vsel %vm3105, %v3098, 920167782
      %v3112 = vsel %vm3104, %v3095, %v3111
      %v3113 = vsel %vm3103, %v3110, %v3112
      %v3114 = vsel %vm3102, %v3092, %v3095
      %v3115 = vsel %vm3105, %v3101, 1326507024
      %v3116 = vsel %vm3104, %v3098, %v3115
      %v3117 = vsel %vm3103, %v3114, %v3116
      %v3118 = vshll.u32 %v3078, 8
      %v3119 = vmul.u32.u64.compose %v3118, %v3117
      %v3120 = vextract.low.u32 %v3119
      %v3121 = vextract.high.u32 %v3119
      %v3122 = vmul.u32.u64.compose %v3118, %v3113
      %v3123 = vextract.low.u32 %v3122
      %v3124 = vextract.high.u32 %v3122
      %v3125 = vmul.u32 %v3118, %v3109
      %v3126 = vadd.s32 %v3121, %v3123
      %vm3127 = vc.u32 %v3121, %v3123
      %v3128 = vadd.s32 %v3124, 1
      %v3129 = vsel %vm3127, %v3128, %v3124
      %v3130 = vadd.s32 %v3125, %v3129
      %v3131 = vadd.s32 %v3130, 536870912
      %v3132 = vshrl.u32 %v3131, 30
      %v3133 = vshll.u32 %v3132, 30
      %v3134 = vsub.s32 %v3130, %v3133
      %vm3135 = vcmp.lt.s32.totalorder %v3134, 0
      %v3136 = vsub.s32 0, %v3134
      %v3137 = vsel %vm3135, %v3136, %v3134
      %v3138 = vclz %v3137
      %v3139 = vsub.s32 %v3138, 2
      %vm3140 = vcmp.gt.s32.totalorder 0, %v3139
      %v3141 = vsel %vm3140, 0, %v3139
      %v3142 = vsub.s32 32, %v3141
      %v3143 = vshll.u32 %v3134, %v3141
      %v3144 = vshrl.u32 %v3126, %v3142
      %v3145 = vor.u32 %v3143, %v3144
      %v3146 = vsub.s32 4294967266, %v3141
      %v3147 = vadd.s32 %v3146, 127
      %v3148 = vshll.u32 %v3147, 23
      %v3149 = vor.u32 4788187, %v3148
      %v3150 = vand.u32 2147483647, %v3149
      %v3152 = vcvt.s32.f32 %v3145
      %v3153 = vmul.f32 %v3152, %v3150
      %v3154 = vxor.u32 %v3153, 2147483648
      %v3155 = vsel %vm3072, %v3154, %v3153
      %v3156 = vsub.s32 4, %v3132
      %v3157 = vsel %vm3072, %v3156, %v3132
      %v3158 = vsel %vm3071, %v978, %v3155
      %v3159 = vsel %vm3071, 0, %v3157
      %v3160 = vcosq.f32.pop %v3158
      %v3161 = vsinq.f32.pop %v3158
      %vm3162 = vweird.f32 %v978
      %v3163 = vadd.s32 %v3159, 3
      %v3164 = vand.u32 %v3163, 3
      %vm3165 = vcmp.lt.s32.totalorder %v3164, 2
      %vm3166 = vcmp.eq.s32.totalorder %v3164, 0
      %v3167 = vxor.u32 %v3161, 2147483648
      %v3168 = vsel %vm3166, %v3160, %v3167
      %vm3169 = vcmp.eq.s32.totalorder %v3164, 2
      %v3170 = vxor.u32 %v3160, 2147483648
      %v3171 = vsel %vm3169, %v3170, %v3161
      %v3172 = vsel %vm3165, %v3168, %v3171
      %v3173 = vsel %vm3162, nan, %v3172
      %v3174 = vand.u32 2147483647, %v979
      %vm3175 = vcmp.le.f32.partialorder %v3174, 0.7853982
      %vm3176 = vcmp.lt.s32.totalorder %v979, 0
      %v3177 = vand.u32 %v979, 2139095040
      %v3178 = vshrl.u32 %v3177, 23
      %v3179 = vsub.s32 %v3178, 127
      %v3180 = vand.u32 2147483647, %v979
      %v3181 = vand.u32 %v3180, 8388607
      %v3182 = vor.u32 %v3181, 8388608
      %v3183 = vsub.s32 0, %v3182
      %v3184 = vadd.s32 %v3179, 1
      %vm3185 = vcmp.gt.s32.totalorder %v3184, 0
      %v3186 = vsel %vm3185, %v3184, 0
      %v3187 = vshrl.u32 %v3186, 5
      %v3188 = vand.u32 %v3186, 31
      %v3189 = vsub.s32 32, %v3188
      %v3190 = vshrl.u32 683565275, %v3189
      %v3191 = vshll.u32 683565275, %v3188
      %v3192 = vshrl.u32 2475754826, %v3189
      %v3193 = vor.u32 %v3191, %v3192
      %v3194 = vshll.u32 2475754826, %v3188
      %v3195 = vshrl.u32 2131351028, %v3189
      %v3196 = vor.u32 %v3194, %v3195
      %v3197 = vshll.u32 2131351028, %v3188
      %v3198 = vshrl.u32 2102212464, %v3189
      %v3199 = vor.u32 %v3197, %v3198
      %v3200 = vshll.u32 2102212464, %v3188
      %v3201 = vshrl.u32 920167782, %v3189
      %v3202 = vor.u32 %v3200, %v3201
      %v3203 = vshll.u32 920167782, %v3188
      %v3204 = vshrl.u32 1326507024, %v3189
      %v3205 = vor.u32 %v3203, %v3204
      %vm3206 = vcmp.lt.s32.totalorder %v3187, 1
      %vm3207 = vcmp.lt.s32.totalorder %v3187, 2
      %vm3208 = vcmp.lt.s32.totalorder %v3187, 3
      %vm3209 = vcmp.lt.s32.totalorder %v3187, 4
      %v3210 = vsel %vm3206, %v3190, %v3193
      %v3211 = vsel %vm3209, %v3199, 2102212464
      %v3212 = vsel %vm3208, %v3196, %v3211
      %v3213 = vsel %vm3207, %v3210, %v3212
      %v3214 = vsel %vm3206, %v3193, %v3196
      %v3215 = vsel %vm3209, %v3202, 920167782
      %v3216 = vsel %vm3208, %v3199, %v3215
      %v3217 = vsel %vm3207, %v3214, %v3216
      %v3218 = vsel %vm3206, %v3196, %v3199
      %v3219 = vsel %vm3209, %v3205, 1326507024
      %v3220 = vsel %vm3208, %v3202, %v3219
      %v3221 = vsel %vm3207, %v3218, %v3220
      %v3222 = vshll.u32 %v3182, 8
      %v3223 = vmul.u32.u64.compose %v3222, %v3221
      %v3224 = vextract.low.u32 %v3223
      %v3225 = vextract.high.u32 %v3223
      %v3226 = vmul.u32.u64.compose %v3222, %v3217
      %v3227 = vextract.low.u32 %v3226
      %v3228 = vextract.high.u32 %v3226
      %v3229 = vmul.u32 %v3222, %v3213
      %v3230 = vadd.s32 %v3225, %v3227
      %vm3231 = vc.u32 %v3225, %v3227
      %v3232 = vadd.s32 %v3228, 1
      %v3233 = vsel %vm3231, %v3232, %v3228
      %v3234 = vadd.s32 %v3229, %v3233
      %v3235 = vadd.s32 %v3234, 536870912
      %v3236 = vshrl.u32 %v3235, 30
      %v3237 = vshll.u32 %v3236, 30
      %v3238 = vsub.s32 %v3234, %v3237
      %vm3239 = vcmp.lt.s32.totalorder %v3238, 0
      %v3240 = vsub.s32 0, %v3238
      %v3241 = vsel %vm3239, %v3240, %v3238
      %v3242 = vclz %v3241
      %v3243 = vsub.s32 %v3242, 2
      %vm3244 = vcmp.gt.s32.totalorder 0, %v3243
      %v3245 = vsel %vm3244, 0, %v3243
      %v3246 = vsub.s32 32, %v3245
      %v3247 = vshll.u32 %v3238, %v3245
      %v3248 = vshrl.u32 %v3230, %v3246
      %v3249 = vor.u32 %v3247, %v3248
      %v3250 = vsub.s32 4294967266, %v3245
      %v3251 = vadd.s32 %v3250, 127
      %v3252 = vshll.u32 %v3251, 23
      %v3253 = vor.u32 4788187, %v3252
      %v3254 = vand.u32 2147483647, %v3253
      %v3256 = vcvt.s32.f32 %v3249
      %v3257 = vmul.f32 %v3256, %v3254
      %v3258 = vxor.u32 %v3257, 2147483648
      %v3259 = vsel %vm3176, %v3258, %v3257
      %v3260 = vsub.s32 4, %v3236
      %v3261 = vsel %vm3176, %v3260, %v3236
      %v3262 = vsel %vm3175, %v979, %v3259
      %v3263 = vsel %vm3175, 0, %v3261
      %v3264 = vcosq.f32.pop %v3262
      %v3265 = vsinq.f32.pop %v3262
      %vm3266 = vweird.f32 %v979
      %v3267 = vadd.s32 %v3263, 3
      %v3268 = vand.u32 %v3267, 3
      %vm3269 = vcmp.lt.s32.totalorder %v3268, 2
      %vm3270 = vcmp.eq.s32.totalorder %v3268, 0
      %v3271 = vxor.u32 %v3265, 2147483648
      %v3272 = vsel %vm3270, %v3264, %v3271
      %vm3273 = vcmp.eq.s32.totalorder %v3268, 2
      %v3274 = vxor.u32 %v3264, 2147483648
      %v3275 = vsel %vm3273, %v3274, %v3265
      %v3276 = vsel %vm3269, %v3272, %v3275
      %v3277 = vsel %vm3266, nan, %v3276
      %v3278 = vand.u32 2147483647, %v980
      %vm3279 = vcmp.le.f32.partialorder %v3278, 0.7853982
      %vm3280 = vcmp.lt.s32.totalorder %v980, 0
      %v3281 = vand.u32 %v980, 2139095040
      %v3282 = vshrl.u32 %v3281, 23
      %v3283 = vsub.s32 %v3282, 127
      %v3284 = vand.u32 2147483647, %v980
      %v3285 = vand.u32 %v3284, 8388607
      %v3286 = vor.u32 %v3285, 8388608
      %v3287 = vsub.s32 0, %v3286
      %v3288 = vadd.s32 %v3283, 1
      %vm3289 = vcmp.gt.s32.totalorder %v3288, 0
      %v3290 = vsel %vm3289, %v3288, 0
      %v3291 = vshrl.u32 %v3290, 5
      %v3292 = vand.u32 %v3290, 31
      %v3293 = vsub.s32 32, %v3292
      %v3294 = vshrl.u32 683565275, %v3293
      %v3295 = vshll.u32 683565275, %v3292
      %v3296 = vshrl.u32 2475754826, %v3293
      %v3297 = vor.u32 %v3295, %v3296
      %v3298 = vshll.u32 2475754826, %v3292
      %v3299 = vshrl.u32 2131351028, %v3293
      %v3300 = vor.u32 %v3298, %v3299
      %v3301 = vshll.u32 2131351028, %v3292
      %v3302 = vshrl.u32 2102212464, %v3293
      %v3303 = vor.u32 %v3301, %v3302
      %v3304 = vshll.u32 2102212464, %v3292
      %v3305 = vshrl.u32 920167782, %v3293
      %v3306 = vor.u32 %v3304, %v3305
      %v3307 = vshll.u32 920167782, %v3292
      %v3308 = vshrl.u32 1326507024, %v3293
      %v3309 = vor.u32 %v3307, %v3308
      %vm3310 = vcmp.lt.s32.totalorder %v3291, 1
      %vm3311 = vcmp.lt.s32.totalorder %v3291, 2
      %vm3312 = vcmp.lt.s32.totalorder %v3291, 3
      %vm3313 = vcmp.lt.s32.totalorder %v3291, 4
      %v3314 = vsel %vm3310, %v3294, %v3297
      %v3315 = vsel %vm3313, %v3303, 2102212464
      %v3316 = vsel %vm3312, %v3300, %v3315
      %v3317 = vsel %vm3311, %v3314, %v3316
      %v3318 = vsel %vm3310, %v3297, %v3300
      %v3319 = vsel %vm3313, %v3306, 920167782
      %v3320 = vsel %vm3312, %v3303, %v3319
      %v3321 = vsel %vm3311, %v3318, %v3320
      %v3322 = vsel %vm3310, %v3300, %v3303
      %v3323 = vsel %vm3313, %v3309, 1326507024
      %v3324 = vsel %vm3312, %v3306, %v3323
      %v3325 = vsel %vm3311, %v3322, %v3324
      %v3326 = vshll.u32 %v3286, 8
      %v3327 = vmul.u32.u64.compose %v3326, %v3325
      %v3328 = vextract.low.u32 %v3327
      %v3329 = vextract.high.u32 %v3327
      %v3330 = vmul.u32.u64.compose %v3326, %v3321
      %v3331 = vextract.low.u32 %v3330
      %v3332 = vextract.high.u32 %v3330
      %v3333 = vmul.u32 %v3326, %v3317
      %v3334 = vadd.s32 %v3329, %v3331
      %vm3335 = vc.u32 %v3329, %v3331
      %v3336 = vadd.s32 %v3332, 1
      %v3337 = vsel %vm3335, %v3336, %v3332
      %v3338 = vadd.s32 %v3333, %v3337
      %v3339 = vadd.s32 %v3338, 536870912
      %v3340 = vshrl.u32 %v3339, 30
      %v3341 = vshll.u32 %v3340, 30
      %v3342 = vsub.s32 %v3338, %v3341
      %vm3343 = vcmp.lt.s32.totalorder %v3342, 0
      %v3344 = vsub.s32 0, %v3342
      %v3345 = vsel %vm3343, %v3344, %v3342
      %v3346 = vclz %v3345
      %v3347 = vsub.s32 %v3346, 2
      %vm3348 = vcmp.gt.s32.totalorder 0, %v3347
      %v3349 = vsel %vm3348, 0, %v3347
      %v3350 = vsub.s32 32, %v3349
      %v3351 = vshll.u32 %v3342, %v3349
      %v3352 = vshrl.u32 %v3334, %v3350
      %v3353 = vor.u32 %v3351, %v3352
      %v3354 = vsub.s32 4294967266, %v3349
      %v3355 = vadd.s32 %v3354, 127
      %v3356 = vshll.u32 %v3355, 23
      %v3357 = vor.u32 4788187, %v3356
      %v3358 = vand.u32 2147483647, %v3357
      %v3360 = vcvt.s32.f32 %v3353
      %v3361 = vmul.f32 %v3360, %v3358
      %v3362 = vxor.u32 %v3361, 2147483648
      %v3363 = vsel %vm3280, %v3362, %v3361
      %v3364 = vsub.s32 4, %v3340
      %v3365 = vsel %vm3280, %v3364, %v3340
      %v3366 = vsel %vm3279, %v980, %v3363
      %v3367 = vsel %vm3279, 0, %v3365
      %v3368 = vcosq.f32.pop %v3366
      %v3369 = vsinq.f32.pop %v3366
      %vm3370 = vweird.f32 %v980
      %v3371 = vadd.s32 %v3367, 3
      %v3372 = vand.u32 %v3371, 3
      %vm3373 = vcmp.lt.s32.totalorder %v3372, 2
      %vm3374 = vcmp.eq.s32.totalorder %v3372, 0
      %v3375 = vxor.u32 %v3369, 2147483648
      %v3376 = vsel %vm3374, %v3368, %v3375
      %vm3377 = vcmp.eq.s32.totalorder %v3372, 2
      %v3378 = vxor.u32 %v3368, 2147483648
      %v3379 = vsel %vm3377, %v3378, %v3369
      %v3380 = vsel %vm3373, %v3376, %v3379
      %v3381 = vsel %vm3370, nan, %v3380
      %v3382 = vand.u32 2147483647, %v981
      %vm3383 = vcmp.le.f32.partialorder %v3382, 0.7853982
      %vm3384 = vcmp.lt.s32.totalorder %v981, 0
      %v3385 = vand.u32 %v981, 2139095040
      %v3386 = vshrl.u32 %v3385, 23
      %v3387 = vsub.s32 %v3386, 127
      %v3388 = vand.u32 2147483647, %v981
      %v3389 = vand.u32 %v3388, 8388607
      %v3390 = vor.u32 %v3389, 8388608
      %v3391 = vsub.s32 0, %v3390
      %v3392 = vadd.s32 %v3387, 1
      %vm3393 = vcmp.gt.s32.totalorder %v3392, 0
      %v3394 = vsel %vm3393, %v3392, 0
      %v3395 = vshrl.u32 %v3394, 5
      %v3396 = vand.u32 %v3394, 31
      %v3397 = vsub.s32 32, %v3396
      %v3398 = vshrl.u32 683565275, %v3397
      %v3399 = vshll.u32 683565275, %v3396
      %v3400 = vshrl.u32 2475754826, %v3397
      %v3401 = vor.u32 %v3399, %v3400
      %v3402 = vshll.u32 2475754826, %v3396
      %v3403 = vshrl.u32 2131351028, %v3397
      %v3404 = vor.u32 %v3402, %v3403
      %v3405 = vshll.u32 2131351028, %v3396
      %v3406 = vshrl.u32 2102212464, %v3397
      %v3407 = vor.u32 %v3405, %v3406
      %v3408 = vshll.u32 2102212464, %v3396
      %v3409 = vshrl.u32 920167782, %v3397
      %v3410 = vor.u32 %v3408, %v3409
      %v3411 = vshll.u32 920167782, %v3396
      %v3412 = vshrl.u32 1326507024, %v3397
      %v3413 = vor.u32 %v3411, %v3412
      %vm3414 = vcmp.lt.s32.totalorder %v3395, 1
      %vm3415 = vcmp.lt.s32.totalorder %v3395, 2
      %vm3416 = vcmp.lt.s32.totalorder %v3395, 3
      %vm3417 = vcmp.lt.s32.totalorder %v3395, 4
      %v3418 = vsel %vm3414, %v3398, %v3401
      %v3419 = vsel %vm3417, %v3407, 2102212464
      %v3420 = vsel %vm3416, %v3404, %v3419
      %v3421 = vsel %vm3415, %v3418, %v3420
      %v3422 = vsel %vm3414, %v3401, %v3404
      %v3423 = vsel %vm3417, %v3410, 920167782
      %v3424 = vsel %vm3416, %v3407, %v3423
      %v3425 = vsel %vm3415, %v3422, %v3424
      %v3426 = vsel %vm3414, %v3404, %v3407
      %v3427 = vsel %vm3417, %v3413, 1326507024
      %v3428 = vsel %vm3416, %v3410, %v3427
      %v3429 = vsel %vm3415, %v3426, %v3428
      %v3430 = vshll.u32 %v3390, 8
      %v3431 = vmul.u32.u64.compose %v3430, %v3429
      %v3432 = vextract.low.u32 %v3431
      %v3433 = vextract.high.u32 %v3431
      %v3434 = vmul.u32.u64.compose %v3430, %v3425
      %v3435 = vextract.low.u32 %v3434
      %v3436 = vextract.high.u32 %v3434
      %v3437 = vmul.u32 %v3430, %v3421
      %v3438 = vadd.s32 %v3433, %v3435
      %vm3439 = vc.u32 %v3433, %v3435
      %v3440 = vadd.s32 %v3436, 1
      %v3441 = vsel %vm3439, %v3440, %v3436
      %v3442 = vadd.s32 %v3437, %v3441
      %v3443 = vadd.s32 %v3442, 536870912
      %v3444 = vshrl.u32 %v3443, 30
      %v3445 = vshll.u32 %v3444, 30
      %v3446 = vsub.s32 %v3442, %v3445
      %vm3447 = vcmp.lt.s32.totalorder %v3446, 0
      %v3448 = vsub.s32 0, %v3446
      %v3449 = vsel %vm3447, %v3448, %v3446
      %v3450 = vclz %v3449
      %v3451 = vsub.s32 %v3450, 2
      %vm3452 = vcmp.gt.s32.totalorder 0, %v3451
      %v3453 = vsel %vm3452, 0, %v3451
      %v3454 = vsub.s32 32, %v3453
      %v3455 = vshll.u32 %v3446, %v3453
      %v3456 = vshrl.u32 %v3438, %v3454
      %v3457 = vor.u32 %v3455, %v3456
      %v3458 = vsub.s32 4294967266, %v3453
      %v3459 = vadd.s32 %v3458, 127
      %v3460 = vshll.u32 %v3459, 23
      %v3461 = vor.u32 4788187, %v3460
      %v3462 = vand.u32 2147483647, %v3461
      %v3464 = vcvt.s32.f32 %v3457
      %v3465 = vmul.f32 %v3464, %v3462
      %v3466 = vxor.u32 %v3465, 2147483648
      %v3467 = vsel %vm3384, %v3466, %v3465
      %v3468 = vsub.s32 4, %v3444
      %v3469 = vsel %vm3384, %v3468, %v3444
      %v3470 = vsel %vm3383, %v981, %v3467
      %v3471 = vsel %vm3383, 0, %v3469
      %v3472 = vcosq.f32.pop %v3470
      %v3473 = vsinq.f32.pop %v3470
      %vm3474 = vweird.f32 %v981
      %v3475 = vadd.s32 %v3471, 3
      %v3476 = vand.u32 %v3475, 3
      %vm3477 = vcmp.lt.s32.totalorder %v3476, 2
      %vm3478 = vcmp.eq.s32.totalorder %v3476, 0
      %v3479 = vxor.u32 %v3473, 2147483648
      %v3480 = vsel %vm3478, %v3472, %v3479
      %vm3481 = vcmp.eq.s32.totalorder %v3476, 2
      %v3482 = vxor.u32 %v3472, 2147483648
      %v3483 = vsel %vm3481, %v3482, %v3473
      %v3484 = vsel %vm3477, %v3480, %v3483
      %v3485 = vsel %vm3474, nan, %v3484
      %v3486 = vand.u32 2147483647, %v982
      %vm3487 = vcmp.le.f32.partialorder %v3486, 0.7853982
      %vm3488 = vcmp.lt.s32.totalorder %v982, 0
      %v3489 = vand.u32 %v982, 2139095040
      %v3490 = vshrl.u32 %v3489, 23
      %v3491 = vsub.s32 %v3490, 127
      %v3492 = vand.u32 2147483647, %v982
      %v3493 = vand.u32 %v3492, 8388607
      %v3494 = vor.u32 %v3493, 8388608
      %v3495 = vsub.s32 0, %v3494
      %v3496 = vadd.s32 %v3491, 1
      %vm3497 = vcmp.gt.s32.totalorder %v3496, 0
      %v3498 = vsel %vm3497, %v3496, 0
      %v3499 = vshrl.u32 %v3498, 5
      %v3500 = vand.u32 %v3498, 31
      %v3501 = vsub.s32 32, %v3500
      %v3502 = vshrl.u32 683565275, %v3501
      %v3503 = vshll.u32 683565275, %v3500
      %v3504 = vshrl.u32 2475754826, %v3501
      %v3505 = vor.u32 %v3503, %v3504
      %v3506 = vshll.u32 2475754826, %v3500
      %v3507 = vshrl.u32 2131351028, %v3501
      %v3508 = vor.u32 %v3506, %v3507
      %v3509 = vshll.u32 2131351028, %v3500
      %v3510 = vshrl.u32 2102212464, %v3501
      %v3511 = vor.u32 %v3509, %v3510
      %v3512 = vshll.u32 2102212464, %v3500
      %v3513 = vshrl.u32 920167782, %v3501
      %v3514 = vor.u32 %v3512, %v3513
      %v3515 = vshll.u32 920167782, %v3500
      %v3516 = vshrl.u32 1326507024, %v3501
      %v3517 = vor.u32 %v3515, %v3516
      %vm3518 = vcmp.lt.s32.totalorder %v3499, 1
      %vm3519 = vcmp.lt.s32.totalorder %v3499, 2
      %vm3520 = vcmp.lt.s32.totalorder %v3499, 3
      %vm3521 = vcmp.lt.s32.totalorder %v3499, 4
      %v3522 = vsel %vm3518, %v3502, %v3505
      %v3523 = vsel %vm3521, %v3511, 2102212464
      %v3524 = vsel %vm3520, %v3508, %v3523
      %v3525 = vsel %vm3519, %v3522, %v3524
      %v3526 = vsel %vm3518, %v3505, %v3508
      %v3527 = vsel %vm3521, %v3514, 920167782
      %v3528 = vsel %vm3520, %v3511, %v3527
      %v3529 = vsel %vm3519, %v3526, %v3528
      %v3530 = vsel %vm3518, %v3508, %v3511
      %v3531 = vsel %vm3521, %v3517, 1326507024
      %v3532 = vsel %vm3520, %v3514, %v3531
      %v3533 = vsel %vm3519, %v3530, %v3532
      %v3534 = vshll.u32 %v3494, 8
      %v3535 = vmul.u32.u64.compose %v3534, %v3533
      %v3536 = vextract.low.u32 %v3535
      %v3537 = vextract.high.u32 %v3535
      %v3538 = vmul.u32.u64.compose %v3534, %v3529
      %v3539 = vextract.low.u32 %v3538
      %v3540 = vextract.high.u32 %v3538
      %v3541 = vmul.u32 %v3534, %v3525
      %v3542 = vadd.s32 %v3537, %v3539
      %vm3543 = vc.u32 %v3537, %v3539
      %v3544 = vadd.s32 %v3540, 1
      %v3545 = vsel %vm3543, %v3544, %v3540
      %v3546 = vadd.s32 %v3541, %v3545
      %v3547 = vadd.s32 %v3546, 536870912
      %v3548 = vshrl.u32 %v3547, 30
      %v3549 = vshll.u32 %v3548, 30
      %v3550 = vsub.s32 %v3546, %v3549
      %vm3551 = vcmp.lt.s32.totalorder %v3550, 0
      %v3552 = vsub.s32 0, %v3550
      %v3553 = vsel %vm3551, %v3552, %v3550
      %v3554 = vclz %v3553
      %v3555 = vsub.s32 %v3554, 2
      %vm3556 = vcmp.gt.s32.totalorder 0, %v3555
      %v3557 = vsel %vm3556, 0, %v3555
      %v3558 = vsub.s32 32, %v3557
      %v3559 = vshll.u32 %v3550, %v3557
      %v3560 = vshrl.u32 %v3542, %v3558
      %v3561 = vor.u32 %v3559, %v3560
      %v3562 = vsub.s32 4294967266, %v3557
      %v3563 = vadd.s32 %v3562, 127
      %v3564 = vshll.u32 %v3563, 23
      %v3565 = vor.u32 4788187, %v3564
      %v3566 = vand.u32 2147483647, %v3565
      %v3568 = vcvt.s32.f32 %v3561
      %v3569 = vmul.f32 %v3568, %v3566
      %v3570 = vxor.u32 %v3569, 2147483648
      %v3571 = vsel %vm3488, %v3570, %v3569
      %v3572 = vsub.s32 4, %v3548
      %v3573 = vsel %vm3488, %v3572, %v3548
      %v3574 = vsel %vm3487, %v982, %v3571
      %v3575 = vsel %vm3487, 0, %v3573
      %v3576 = vcosq.f32.pop %v3574
      %v3577 = vsinq.f32.pop %v3574
      %vm3578 = vweird.f32 %v982
      %v3579 = vadd.s32 %v3575, 3
      %v3580 = vand.u32 %v3579, 3
      %vm3581 = vcmp.lt.s32.totalorder %v3580, 2
      %vm3582 = vcmp.eq.s32.totalorder %v3580, 0
      %v3583 = vxor.u32 %v3577, 2147483648
      %v3584 = vsel %vm3582, %v3576, %v3583
      %vm3585 = vcmp.eq.s32.totalorder %v3580, 2
      %v3586 = vxor.u32 %v3576, 2147483648
      %v3587 = vsel %vm3585, %v3586, %v3577
      %v3588 = vsel %vm3581, %v3584, %v3587
      %v3589 = vsel %vm3578, nan, %v3588
      %v3590 = vand.u32 2147483647, %v983
      %vm3591 = vcmp.le.f32.partialorder %v3590, 0.7853982
      %vm3592 = vcmp.lt.s32.totalorder %v983, 0
      %v3593 = vand.u32 %v983, 2139095040
      %v3594 = vshrl.u32 %v3593, 23
      %v3595 = vsub.s32 %v3594, 127
      %v3596 = vand.u32 2147483647, %v983
      %v3597 = vand.u32 %v3596, 8388607
      %v3598 = vor.u32 %v3597, 8388608
      %v3599 = vsub.s32 0, %v3598
      %v3600 = vadd.s32 %v3595, 1
      %vm3601 = vcmp.gt.s32.totalorder %v3600, 0
      %v3602 = vsel %vm3601, %v3600, 0
      %v3603 = vshrl.u32 %v3602, 5
      %v3604 = vand.u32 %v3602, 31
      %v3605 = vsub.s32 32, %v3604
      %v3606 = vshrl.u32 683565275, %v3605
      %v3607 = vshll.u32 683565275, %v3604
      %v3608 = vshrl.u32 2475754826, %v3605
      %v3609 = vor.u32 %v3607, %v3608
      %v3610 = vshll.u32 2475754826, %v3604
      %v3611 = vshrl.u32 2131351028, %v3605
      %v3612 = vor.u32 %v3610, %v3611
      %v3613 = vshll.u32 2131351028, %v3604
      %v3614 = vshrl.u32 2102212464, %v3605
      %v3615 = vor.u32 %v3613, %v3614
      %v3616 = vshll.u32 2102212464, %v3604
      %v3617 = vshrl.u32 920167782, %v3605
      %v3618 = vor.u32 %v3616, %v3617
      %v3619 = vshll.u32 920167782, %v3604
      %v3620 = vshrl.u32 1326507024, %v3605
      %v3621 = vor.u32 %v3619, %v3620
      %vm3622 = vcmp.lt.s32.totalorder %v3603, 1
      %vm3623 = vcmp.lt.s32.totalorder %v3603, 2
      %vm3624 = vcmp.lt.s32.totalorder %v3603, 3
      %vm3625 = vcmp.lt.s32.totalorder %v3603, 4
      %v3626 = vsel %vm3622, %v3606, %v3609
      %v3627 = vsel %vm3625, %v3615, 2102212464
      %v3628 = vsel %vm3624, %v3612, %v3627
      %v3629 = vsel %vm3623, %v3626, %v3628
      %v3630 = vsel %vm3622, %v3609, %v3612
      %v3631 = vsel %vm3625, %v3618, 920167782
      %v3632 = vsel %vm3624, %v3615, %v3631
      %v3633 = vsel %vm3623, %v3630, %v3632
      %v3634 = vsel %vm3622, %v3612, %v3615
      %v3635 = vsel %vm3625, %v3621, 1326507024
      %v3636 = vsel %vm3624, %v3618, %v3635
      %v3637 = vsel %vm3623, %v3634, %v3636
      %v3638 = vshll.u32 %v3598, 8
      %v3639 = vmul.u32.u64.compose %v3638, %v3637
      %v3640 = vextract.low.u32 %v3639
      %v3641 = vextract.high.u32 %v3639
      %v3642 = vmul.u32.u64.compose %v3638, %v3633
      %v3643 = vextract.low.u32 %v3642
      %v3644 = vextract.high.u32 %v3642
      %v3645 = vmul.u32 %v3638, %v3629
      %v3646 = vadd.s32 %v3641, %v3643
      %vm3647 = vc.u32 %v3641, %v3643
      %v3648 = vadd.s32 %v3644, 1
      %v3649 = vsel %vm3647, %v3648, %v3644
      %v3650 = vadd.s32 %v3645, %v3649
      %v3651 = vadd.s32 %v3650, 536870912
      %v3652 = vshrl.u32 %v3651, 30
      %v3653 = vshll.u32 %v3652, 30
      %v3654 = vsub.s32 %v3650, %v3653
      %vm3655 = vcmp.lt.s32.totalorder %v3654, 0
      %v3656 = vsub.s32 0, %v3654
      %v3657 = vsel %vm3655, %v3656, %v3654
      %v3658 = vclz %v3657
      %v3659 = vsub.s32 %v3658, 2
      %vm3660 = vcmp.gt.s32.totalorder 0, %v3659
      %v3661 = vsel %vm3660, 0, %v3659
      %v3662 = vsub.s32 32, %v3661
      %v3663 = vshll.u32 %v3654, %v3661
      %v3664 = vshrl.u32 %v3646, %v3662
      %v3665 = vor.u32 %v3663, %v3664
      %v3666 = vsub.s32 4294967266, %v3661
      %v3667 = vadd.s32 %v3666, 127
      %v3668 = vshll.u32 %v3667, 23
      %v3669 = vor.u32 4788187, %v3668
      %v3670 = vand.u32 2147483647, %v3669
      %v3672 = vcvt.s32.f32 %v3665
      %v3673 = vmul.f32 %v3672, %v3670
      %v3674 = vxor.u32 %v3673, 2147483648
      %v3675 = vsel %vm3592, %v3674, %v3673
      %v3676 = vsub.s32 4, %v3652
      %v3677 = vsel %vm3592, %v3676, %v3652
      %v3678 = vsel %vm3591, %v983, %v3675
      %v3679 = vsel %vm3591, 0, %v3677
      %v3680 = vcosq.f32.pop %v3678
      %v3681 = vsinq.f32.pop %v3678
      %vm3682 = vweird.f32 %v983
      %v3683 = vadd.s32 %v3679, 3
      %v3684 = vand.u32 %v3683, 3
      %vm3685 = vcmp.lt.s32.totalorder %v3684, 2
      %vm3686 = vcmp.eq.s32.totalorder %v3684, 0
      %v3687 = vxor.u32 %v3681, 2147483648
      %v3688 = vsel %vm3686, %v3680, %v3687
      %vm3689 = vcmp.eq.s32.totalorder %v3684, 2
      %v3690 = vxor.u32 %v3680, 2147483648
      %v3691 = vsel %vm3689, %v3690, %v3681
      %v3692 = vsel %vm3685, %v3688, %v3691
      %v3693 = vsel %vm3682, nan, %v3692
      %v3694 = vand.u32 2147483647, %v984
      %vm3695 = vcmp.le.f32.partialorder %v3694, 0.7853982
      %vm3696 = vcmp.lt.s32.totalorder %v984, 0
      %v3697 = vand.u32 %v984, 2139095040
      %v3698 = vshrl.u32 %v3697, 23
      %v3699 = vsub.s32 %v3698, 127
      %v3700 = vand.u32 2147483647, %v984
      %v3701 = vand.u32 %v3700, 8388607
      %v3702 = vor.u32 %v3701, 8388608
      %v3703 = vsub.s32 0, %v3702
      %v3704 = vadd.s32 %v3699, 1
      %vm3705 = vcmp.gt.s32.totalorder %v3704, 0
      %v3706 = vsel %vm3705, %v3704, 0
      %v3707 = vshrl.u32 %v3706, 5
      %v3708 = vand.u32 %v3706, 31
      %v3709 = vsub.s32 32, %v3708
      %v3710 = vshrl.u32 683565275, %v3709
      %v3711 = vshll.u32 683565275, %v3708
      %v3712 = vshrl.u32 2475754826, %v3709
      %v3713 = vor.u32 %v3711, %v3712
      %v3714 = vshll.u32 2475754826, %v3708
      %v3715 = vshrl.u32 2131351028, %v3709
      %v3716 = vor.u32 %v3714, %v3715
      %v3717 = vshll.u32 2131351028, %v3708
      %v3718 = vshrl.u32 2102212464, %v3709
      %v3719 = vor.u32 %v3717, %v3718
      %v3720 = vshll.u32 2102212464, %v3708
      %v3721 = vshrl.u32 920167782, %v3709
      %v3722 = vor.u32 %v3720, %v3721
      %v3723 = vshll.u32 920167782, %v3708
      %v3724 = vshrl.u32 1326507024, %v3709
      %v3725 = vor.u32 %v3723, %v3724
      %vm3726 = vcmp.lt.s32.totalorder %v3707, 1
      %vm3727 = vcmp.lt.s32.totalorder %v3707, 2
      %vm3728 = vcmp.lt.s32.totalorder %v3707, 3
      %vm3729 = vcmp.lt.s32.totalorder %v3707, 4
      %v3730 = vsel %vm3726, %v3710, %v3713
      %v3731 = vsel %vm3729, %v3719, 2102212464
      %v3732 = vsel %vm3728, %v3716, %v3731
      %v3733 = vsel %vm3727, %v3730, %v3732
      %v3734 = vsel %vm3726, %v3713, %v3716
      %v3735 = vsel %vm3729, %v3722, 920167782
      %v3736 = vsel %vm3728, %v3719, %v3735
      %v3737 = vsel %vm3727, %v3734, %v3736
      %v3738 = vsel %vm3726, %v3716, %v3719
      %v3739 = vsel %vm3729, %v3725, 1326507024
      %v3740 = vsel %vm3728, %v3722, %v3739
      %v3741 = vsel %vm3727, %v3738, %v3740
      %v3742 = vshll.u32 %v3702, 8
      %v3743 = vmul.u32.u64.compose %v3742, %v3741
      %v3744 = vextract.low.u32 %v3743
      %v3745 = vextract.high.u32 %v3743
      %v3746 = vmul.u32.u64.compose %v3742, %v3737
      %v3747 = vextract.low.u32 %v3746
      %v3748 = vextract.high.u32 %v3746
      %v3749 = vmul.u32 %v3742, %v3733
      %v3750 = vadd.s32 %v3745, %v3747
      %vm3751 = vc.u32 %v3745, %v3747
      %v3752 = vadd.s32 %v3748, 1
      %v3753 = vsel %vm3751, %v3752, %v3748
      %v3754 = vadd.s32 %v3749, %v3753
      %v3755 = vadd.s32 %v3754, 536870912
      %v3756 = vshrl.u32 %v3755, 30
      %v3757 = vshll.u32 %v3756, 30
      %v3758 = vsub.s32 %v3754, %v3757
      %vm3759 = vcmp.lt.s32.totalorder %v3758, 0
      %v3760 = vsub.s32 0, %v3758
      %v3761 = vsel %vm3759, %v3760, %v3758
      %v3762 = vclz %v3761
      %v3763 = vsub.s32 %v3762, 2
      %vm3764 = vcmp.gt.s32.totalorder 0, %v3763
      %v3765 = vsel %vm3764, 0, %v3763
      %v3766 = vsub.s32 32, %v3765
      %v3767 = vshll.u32 %v3758, %v3765
      %v3768 = vshrl.u32 %v3750, %v3766
      %v3769 = vor.u32 %v3767, %v3768
      %v3770 = vsub.s32 4294967266, %v3765
      %v3771 = vadd.s32 %v3770, 127
      %v3772 = vshll.u32 %v3771, 23
      %v3773 = vor.u32 4788187, %v3772
      %v3774 = vand.u32 2147483647, %v3773
      %v3776 = vcvt.s32.f32 %v3769
      %v3777 = vmul.f32 %v3776, %v3774
      %v3778 = vxor.u32 %v3777, 2147483648
      %v3779 = vsel %vm3696, %v3778, %v3777
      %v3780 = vsub.s32 4, %v3756
      %v3781 = vsel %vm3696, %v3780, %v3756
      %v3782 = vsel %vm3695, %v984, %v3779
      %v3783 = vsel %vm3695, 0, %v3781
      %v3784 = vcosq.f32.pop %v3782
      %v3785 = vsinq.f32.pop %v3782
      %vm3786 = vweird.f32 %v984
      %v3787 = vadd.s32 %v3783, 3
      %v3788 = vand.u32 %v3787, 3
      %vm3789 = vcmp.lt.s32.totalorder %v3788, 2
      %vm3790 = vcmp.eq.s32.totalorder %v3788, 0
      %v3791 = vxor.u32 %v3785, 2147483648
      %v3792 = vsel %vm3790, %v3784, %v3791
      %vm3793 = vcmp.eq.s32.totalorder %v3788, 2
      %v3794 = vxor.u32 %v3784, 2147483648
      %v3795 = vsel %vm3793, %v3794, %v3785
      %v3796 = vsel %vm3789, %v3792, %v3795
      %v3797 = vsel %vm3786, nan, %v3796
      %v3798 = vand.u32 2147483647, %v985
      %vm3799 = vcmp.le.f32.partialorder %v3798, 0.7853982
      %vm3800 = vcmp.lt.s32.totalorder %v985, 0
      %v3801 = vand.u32 %v985, 2139095040
      %v3802 = vshrl.u32 %v3801, 23
      %v3803 = vsub.s32 %v3802, 127
      %v3804 = vand.u32 2147483647, %v985
      %v3805 = vand.u32 %v3804, 8388607
      %v3806 = vor.u32 %v3805, 8388608
      %v3807 = vsub.s32 0, %v3806
      %v3808 = vadd.s32 %v3803, 1
      %vm3809 = vcmp.gt.s32.totalorder %v3808, 0
      %v3810 = vsel %vm3809, %v3808, 0
      %v3811 = vshrl.u32 %v3810, 5
      %v3812 = vand.u32 %v3810, 31
      %v3813 = vsub.s32 32, %v3812
      %v3814 = vshrl.u32 683565275, %v3813
      %v3815 = vshll.u32 683565275, %v3812
      %v3816 = vshrl.u32 2475754826, %v3813
      %v3817 = vor.u32 %v3815, %v3816
      %v3818 = vshll.u32 2475754826, %v3812
      %v3819 = vshrl.u32 2131351028, %v3813
      %v3820 = vor.u32 %v3818, %v3819
      %v3821 = vshll.u32 2131351028, %v3812
      %v3822 = vshrl.u32 2102212464, %v3813
      %v3823 = vor.u32 %v3821, %v3822
      %v3824 = vshll.u32 2102212464, %v3812
      %v3825 = vshrl.u32 920167782, %v3813
      %v3826 = vor.u32 %v3824, %v3825
      %v3827 = vshll.u32 920167782, %v3812
      %v3828 = vshrl.u32 1326507024, %v3813
      %v3829 = vor.u32 %v3827, %v3828
      %vm3830 = vcmp.lt.s32.totalorder %v3811, 1
      %vm3831 = vcmp.lt.s32.totalorder %v3811, 2
      %vm3832 = vcmp.lt.s32.totalorder %v3811, 3
      %vm3833 = vcmp.lt.s32.totalorder %v3811, 4
      %v3834 = vsel %vm3830, %v3814, %v3817
      %v3835 = vsel %vm3833, %v3823, 2102212464
      %v3836 = vsel %vm3832, %v3820, %v3835
      %v3837 = vsel %vm3831, %v3834, %v3836
      %v3838 = vsel %vm3830, %v3817, %v3820
      %v3839 = vsel %vm3833, %v3826, 920167782
      %v3840 = vsel %vm3832, %v3823, %v3839
      %v3841 = vsel %vm3831, %v3838, %v3840
      %v3842 = vsel %vm3830, %v3820, %v3823
      %v3843 = vsel %vm3833, %v3829, 1326507024
      %v3844 = vsel %vm3832, %v3826, %v3843
      %v3845 = vsel %vm3831, %v3842, %v3844
      %v3846 = vshll.u32 %v3806, 8
      %v3847 = vmul.u32.u64.compose %v3846, %v3845
      %v3848 = vextract.low.u32 %v3847
      %v3849 = vextract.high.u32 %v3847
      %v3850 = vmul.u32.u64.compose %v3846, %v3841
      %v3851 = vextract.low.u32 %v3850
      %v3852 = vextract.high.u32 %v3850
      %v3853 = vmul.u32 %v3846, %v3837
      %v3854 = vadd.s32 %v3849, %v3851
      %vm3855 = vc.u32 %v3849, %v3851
      %v3856 = vadd.s32 %v3852, 1
      %v3857 = vsel %vm3855, %v3856, %v3852
      %v3858 = vadd.s32 %v3853, %v3857
      %v3859 = vadd.s32 %v3858, 536870912
      %v3860 = vshrl.u32 %v3859, 30
      %v3861 = vshll.u32 %v3860, 30
      %v3862 = vsub.s32 %v3858, %v3861
      %vm3863 = vcmp.lt.s32.totalorder %v3862, 0
      %v3864 = vsub.s32 0, %v3862
      %v3865 = vsel %vm3863, %v3864, %v3862
      %v3866 = vclz %v3865
      %v3867 = vsub.s32 %v3866, 2
      %vm3868 = vcmp.gt.s32.totalorder 0, %v3867
      %v3869 = vsel %vm3868, 0, %v3867
      %v3870 = vsub.s32 32, %v3869
      %v3871 = vshll.u32 %v3862, %v3869
      %v3872 = vshrl.u32 %v3854, %v3870
      %v3873 = vor.u32 %v3871, %v3872
      %v3874 = vsub.s32 4294967266, %v3869
      %v3875 = vadd.s32 %v3874, 127
      %v3876 = vshll.u32 %v3875, 23
      %v3877 = vor.u32 4788187, %v3876
      %v3878 = vand.u32 2147483647, %v3877
      %v3880 = vcvt.s32.f32 %v3873
      %v3881 = vmul.f32 %v3880, %v3878
      %v3882 = vxor.u32 %v3881, 2147483648
      %v3883 = vsel %vm3800, %v3882, %v3881
      %v3884 = vsub.s32 4, %v3860
      %v3885 = vsel %vm3800, %v3884, %v3860
      %v3886 = vsel %vm3799, %v985, %v3883
      %v3887 = vsel %vm3799, 0, %v3885
      %v3888 = vcosq.f32.pop %v3886
      %v3889 = vsinq.f32.pop %v3886
      %vm3890 = vweird.f32 %v985
      %v3891 = vadd.s32 %v3887, 3
      %v3892 = vand.u32 %v3891, 3
      %vm3893 = vcmp.lt.s32.totalorder %v3892, 2
      %vm3894 = vcmp.eq.s32.totalorder %v3892, 0
      %v3895 = vxor.u32 %v3889, 2147483648
      %v3896 = vsel %vm3894, %v3888, %v3895
      %vm3897 = vcmp.eq.s32.totalorder %v3892, 2
      %v3898 = vxor.u32 %v3888, 2147483648
      %v3899 = vsel %vm3897, %v3898, %v3889
      %v3900 = vsel %vm3893, %v3896, %v3899
      %v3901 = vsel %vm3890, nan, %v3900
      %v3902 = vand.u32 2147483647, %v986
      %vm3903 = vcmp.le.f32.partialorder %v3902, 0.7853982
      %vm3904 = vcmp.lt.s32.totalorder %v986, 0
      %v3905 = vand.u32 %v986, 2139095040
      %v3906 = vshrl.u32 %v3905, 23
      %v3907 = vsub.s32 %v3906, 127
      %v3908 = vand.u32 2147483647, %v986
      %v3909 = vand.u32 %v3908, 8388607
      %v3910 = vor.u32 %v3909, 8388608
      %v3911 = vsub.s32 0, %v3910
      %v3912 = vadd.s32 %v3907, 1
      %vm3913 = vcmp.gt.s32.totalorder %v3912, 0
      %v3914 = vsel %vm3913, %v3912, 0
      %v3915 = vshrl.u32 %v3914, 5
      %v3916 = vand.u32 %v3914, 31
      %v3917 = vsub.s32 32, %v3916
      %v3918 = vshrl.u32 683565275, %v3917
      %v3919 = vshll.u32 683565275, %v3916
      %v3920 = vshrl.u32 2475754826, %v3917
      %v3921 = vor.u32 %v3919, %v3920
      %v3922 = vshll.u32 2475754826, %v3916
      %v3923 = vshrl.u32 2131351028, %v3917
      %v3924 = vor.u32 %v3922, %v3923
      %v3925 = vshll.u32 2131351028, %v3916
      %v3926 = vshrl.u32 2102212464, %v3917
      %v3927 = vor.u32 %v3925, %v3926
      %v3928 = vshll.u32 2102212464, %v3916
      %v3929 = vshrl.u32 920167782, %v3917
      %v3930 = vor.u32 %v3928, %v3929
      %v3931 = vshll.u32 920167782, %v3916
      %v3932 = vshrl.u32 1326507024, %v3917
      %v3933 = vor.u32 %v3931, %v3932
      %vm3934 = vcmp.lt.s32.totalorder %v3915, 1
      %vm3935 = vcmp.lt.s32.totalorder %v3915, 2
      %vm3936 = vcmp.lt.s32.totalorder %v3915, 3
      %vm3937 = vcmp.lt.s32.totalorder %v3915, 4
      %v3938 = vsel %vm3934, %v3918, %v3921
      %v3939 = vsel %vm3937, %v3927, 2102212464
      %v3940 = vsel %vm3936, %v3924, %v3939
      %v3941 = vsel %vm3935, %v3938, %v3940
      %v3942 = vsel %vm3934, %v3921, %v3924
      %v3943 = vsel %vm3937, %v3930, 920167782
      %v3944 = vsel %vm3936, %v3927, %v3943
      %v3945 = vsel %vm3935, %v3942, %v3944
      %v3946 = vsel %vm3934, %v3924, %v3927
      %v3947 = vsel %vm3937, %v3933, 1326507024
      %v3948 = vsel %vm3936, %v3930, %v3947
      %v3949 = vsel %vm3935, %v3946, %v3948
      %v3950 = vshll.u32 %v3910, 8
      %v3951 = vmul.u32.u64.compose %v3950, %v3949
      %v3952 = vextract.low.u32 %v3951
      %v3953 = vextract.high.u32 %v3951
      %v3954 = vmul.u32.u64.compose %v3950, %v3945
      %v3955 = vextract.low.u32 %v3954
      %v3956 = vextract.high.u32 %v3954
      %v3957 = vmul.u32 %v3950, %v3941
      %v3958 = vadd.s32 %v3953, %v3955
      %vm3959 = vc.u32 %v3953, %v3955
      %v3960 = vadd.s32 %v3956, 1
      %v3961 = vsel %vm3959, %v3960, %v3956
      %v3962 = vadd.s32 %v3957, %v3961
      %v3963 = vadd.s32 %v3962, 536870912
      %v3964 = vshrl.u32 %v3963, 30
      %v3965 = vshll.u32 %v3964, 30
      %v3966 = vsub.s32 %v3962, %v3965
      %vm3967 = vcmp.lt.s32.totalorder %v3966, 0
      %v3968 = vsub.s32 0, %v3966
      %v3969 = vsel %vm3967, %v3968, %v3966
      %v3970 = vclz %v3969
      %v3971 = vsub.s32 %v3970, 2
      %vm3972 = vcmp.gt.s32.totalorder 0, %v3971
      %v3973 = vsel %vm3972, 0, %v3971
      %v3974 = vsub.s32 32, %v3973
      %v3975 = vshll.u32 %v3966, %v3973
      %v3976 = vshrl.u32 %v3958, %v3974
      %v3977 = vor.u32 %v3975, %v3976
      %v3978 = vsub.s32 4294967266, %v3973
      %v3979 = vadd.s32 %v3978, 127
      %v3980 = vshll.u32 %v3979, 23
      %v3981 = vor.u32 4788187, %v3980
      %v3982 = vand.u32 2147483647, %v3981
      %v3984 = vcvt.s32.f32 %v3977
      %v3985 = vmul.f32 %v3984, %v3982
      %v3986 = vxor.u32 %v3985, 2147483648
      %v3987 = vsel %vm3904, %v3986, %v3985
      %v3988 = vsub.s32 4, %v3964
      %v3989 = vsel %vm3904, %v3988, %v3964
      %v3990 = vsel %vm3903, %v986, %v3987
      %v3991 = vsel %vm3903, 0, %v3989
      %v3992 = vcosq.f32.pop %v3990
      %v3993 = vsinq.f32.pop %v3990
      %vm3994 = vweird.f32 %v986
      %v3995 = vadd.s32 %v3991, 3
      %v3996 = vand.u32 %v3995, 3
      %vm3997 = vcmp.lt.s32.totalorder %v3996, 2
      %vm3998 = vcmp.eq.s32.totalorder %v3996, 0
      %v3999 = vxor.u32 %v3993, 2147483648
      %v4000 = vsel %vm3998, %v3992, %v3999
      %vm4001 = vcmp.eq.s32.totalorder %v3996, 2
      %v4002 = vxor.u32 %v3992, 2147483648
      %v4003 = vsel %vm4001, %v4002, %v3993
      %v4004 = vsel %vm3997, %v4000, %v4003
      %v4005 = vsel %vm3994, nan, %v4004
      %v4006 = vand.u32 2147483647, %v987
      %vm4007 = vcmp.le.f32.partialorder %v4006, 0.7853982
      %vm4008 = vcmp.lt.s32.totalorder %v987, 0
      %v4009 = vand.u32 %v987, 2139095040
      %v4010 = vshrl.u32 %v4009, 23
      %v4011 = vsub.s32 %v4010, 127
      %v4012 = vand.u32 2147483647, %v987
      %v4013 = vand.u32 %v4012, 8388607
      %v4014 = vor.u32 %v4013, 8388608
      %v4015 = vsub.s32 0, %v4014
      %v4016 = vadd.s32 %v4011, 1
      %vm4017 = vcmp.gt.s32.totalorder %v4016, 0
      %v4018 = vsel %vm4017, %v4016, 0
      %v4019 = vshrl.u32 %v4018, 5
      %v4020 = vand.u32 %v4018, 31
      %v4021 = vsub.s32 32, %v4020
      %v4022 = vshrl.u32 683565275, %v4021
      %v4023 = vshll.u32 683565275, %v4020
      %v4024 = vshrl.u32 2475754826, %v4021
      %v4025 = vor.u32 %v4023, %v4024
      %v4026 = vshll.u32 2475754826, %v4020
      %v4027 = vshrl.u32 2131351028, %v4021
      %v4028 = vor.u32 %v4026, %v4027
      %v4029 = vshll.u32 2131351028, %v4020
      %v4030 = vshrl.u32 2102212464, %v4021
      %v4031 = vor.u32 %v4029, %v4030
      %v4032 = vshll.u32 2102212464, %v4020
      %v4033 = vshrl.u32 920167782, %v4021
      %v4034 = vor.u32 %v4032, %v4033
      %v4035 = vshll.u32 920167782, %v4020
      %v4036 = vshrl.u32 1326507024, %v4021
      %v4037 = vor.u32 %v4035, %v4036
      %vm4038 = vcmp.lt.s32.totalorder %v4019, 1
      %vm4039 = vcmp.lt.s32.totalorder %v4019, 2
      %vm4040 = vcmp.lt.s32.totalorder %v4019, 3
      %vm4041 = vcmp.lt.s32.totalorder %v4019, 4
      %v4042 = vsel %vm4038, %v4022, %v4025
      %v4043 = vsel %vm4041, %v4031, 2102212464
      %v4044 = vsel %vm4040, %v4028, %v4043
      %v4045 = vsel %vm4039, %v4042, %v4044
      %v4046 = vsel %vm4038, %v4025, %v4028
      %v4047 = vsel %vm4041, %v4034, 920167782
      %v4048 = vsel %vm4040, %v4031, %v4047
      %v4049 = vsel %vm4039, %v4046, %v4048
      %v4050 = vsel %vm4038, %v4028, %v4031
      %v4051 = vsel %vm4041, %v4037, 1326507024
      %v4052 = vsel %vm4040, %v4034, %v4051
      %v4053 = vsel %vm4039, %v4050, %v4052
      %v4054 = vshll.u32 %v4014, 8
      %v4055 = vmul.u32.u64.compose %v4054, %v4053
      %v4056 = vextract.low.u32 %v4055
      %v4057 = vextract.high.u32 %v4055
      %v4058 = vmul.u32.u64.compose %v4054, %v4049
      %v4059 = vextract.low.u32 %v4058
      %v4060 = vextract.high.u32 %v4058
      %v4061 = vmul.u32 %v4054, %v4045
      %v4062 = vadd.s32 %v4057, %v4059
      %vm4063 = vc.u32 %v4057, %v4059
      %v4064 = vadd.s32 %v4060, 1
      %v4065 = vsel %vm4063, %v4064, %v4060
      %v4066 = vadd.s32 %v4061, %v4065
      %v4067 = vadd.s32 %v4066, 536870912
      %v4068 = vshrl.u32 %v4067, 30
      %v4069 = vshll.u32 %v4068, 30
      %v4070 = vsub.s32 %v4066, %v4069
      %vm4071 = vcmp.lt.s32.totalorder %v4070, 0
      %v4072 = vsub.s32 0, %v4070
      %v4073 = vsel %vm4071, %v4072, %v4070
      %v4074 = vclz %v4073
      %v4075 = vsub.s32 %v4074, 2
      %vm4076 = vcmp.gt.s32.totalorder 0, %v4075
      %v4077 = vsel %vm4076, 0, %v4075
      %v4078 = vsub.s32 32, %v4077
      %v4079 = vshll.u32 %v4070, %v4077
      %v4080 = vshrl.u32 %v4062, %v4078
      %v4081 = vor.u32 %v4079, %v4080
      %v4082 = vsub.s32 4294967266, %v4077
      %v4083 = vadd.s32 %v4082, 127
      %v4084 = vshll.u32 %v4083, 23
      %v4085 = vor.u32 4788187, %v4084
      %v4086 = vand.u32 2147483647, %v4085
      %v4088 = vcvt.s32.f32 %v4081
      %v4089 = vmul.f32 %v4088, %v4086
      %v4090 = vxor.u32 %v4089, 2147483648
      %v4091 = vsel %vm4008, %v4090, %v4089
      %v4092 = vsub.s32 4, %v4068
      %v4093 = vsel %vm4008, %v4092, %v4068
      %v4094 = vsel %vm4007, %v987, %v4091
      %v4095 = vsel %vm4007, 0, %v4093
      %v4096 = vcosq.f32.pop %v4094
      %v4097 = vsinq.f32.pop %v4094
      %vm4098 = vweird.f32 %v987
      %v4099 = vadd.s32 %v4095, 3
      %v4100 = vand.u32 %v4099, 3
      %vm4101 = vcmp.lt.s32.totalorder %v4100, 2
      %vm4102 = vcmp.eq.s32.totalorder %v4100, 0
      %v4103 = vxor.u32 %v4097, 2147483648
      %v4104 = vsel %vm4102, %v4096, %v4103
      %vm4105 = vcmp.eq.s32.totalorder %v4100, 2
      %v4106 = vxor.u32 %v4096, 2147483648
      %v4107 = vsel %vm4105, %v4106, %v4097
      %v4108 = vsel %vm4101, %v4104, %v4107
      %v4109 = vsel %vm4098, nan, %v4108
      %v4110 = vand.u32 2147483647, %v988
      %vm4111 = vcmp.le.f32.partialorder %v4110, 0.7853982
      %vm4112 = vcmp.lt.s32.totalorder %v988, 0
      %v4113 = vand.u32 %v988, 2139095040
      %v4114 = vshrl.u32 %v4113, 23
      %v4115 = vsub.s32 %v4114, 127
      %v4116 = vand.u32 2147483647, %v988
      %v4117 = vand.u32 %v4116, 8388607
      %v4118 = vor.u32 %v4117, 8388608
      %v4119 = vsub.s32 0, %v4118
      %v4120 = vadd.s32 %v4115, 1
      %vm4121 = vcmp.gt.s32.totalorder %v4120, 0
      %v4122 = vsel %vm4121, %v4120, 0
      %v4123 = vshrl.u32 %v4122, 5
      %v4124 = vand.u32 %v4122, 31
      %v4125 = vsub.s32 32, %v4124
      %v4126 = vshrl.u32 683565275, %v4125
      %v4127 = vshll.u32 683565275, %v4124
      %v4128 = vshrl.u32 2475754826, %v4125
      %v4129 = vor.u32 %v4127, %v4128
      %v4130 = vshll.u32 2475754826, %v4124
      %v4131 = vshrl.u32 2131351028, %v4125
      %v4132 = vor.u32 %v4130, %v4131
      %v4133 = vshll.u32 2131351028, %v4124
      %v4134 = vshrl.u32 2102212464, %v4125
      %v4135 = vor.u32 %v4133, %v4134
      %v4136 = vshll.u32 2102212464, %v4124
      %v4137 = vshrl.u32 920167782, %v4125
      %v4138 = vor.u32 %v4136, %v4137
      %v4139 = vshll.u32 920167782, %v4124
      %v4140 = vshrl.u32 1326507024, %v4125
      %v4141 = vor.u32 %v4139, %v4140
      %vm4142 = vcmp.lt.s32.totalorder %v4123, 1
      %vm4143 = vcmp.lt.s32.totalorder %v4123, 2
      %vm4144 = vcmp.lt.s32.totalorder %v4123, 3
      %vm4145 = vcmp.lt.s32.totalorder %v4123, 4
      %v4146 = vsel %vm4142, %v4126, %v4129
      %v4147 = vsel %vm4145, %v4135, 2102212464
      %v4148 = vsel %vm4144, %v4132, %v4147
      %v4149 = vsel %vm4143, %v4146, %v4148
      %v4150 = vsel %vm4142, %v4129, %v4132
      %v4151 = vsel %vm4145, %v4138, 920167782
      %v4152 = vsel %vm4144, %v4135, %v4151
      %v4153 = vsel %vm4143, %v4150, %v4152
      %v4154 = vsel %vm4142, %v4132, %v4135
      %v4155 = vsel %vm4145, %v4141, 1326507024
      %v4156 = vsel %vm4144, %v4138, %v4155
      %v4157 = vsel %vm4143, %v4154, %v4156
      %v4158 = vshll.u32 %v4118, 8
      %v4159 = vmul.u32.u64.compose %v4158, %v4157
      %v4160 = vextract.low.u32 %v4159
      %v4161 = vextract.high.u32 %v4159
      %v4162 = vmul.u32.u64.compose %v4158, %v4153
      %v4163 = vextract.low.u32 %v4162
      %v4164 = vextract.high.u32 %v4162
      %v4165 = vmul.u32 %v4158, %v4149
      %v4166 = vadd.s32 %v4161, %v4163
      %vm4167 = vc.u32 %v4161, %v4163
      %v4168 = vadd.s32 %v4164, 1
      %v4169 = vsel %vm4167, %v4168, %v4164
      %v4170 = vadd.s32 %v4165, %v4169
      %v4171 = vadd.s32 %v4170, 536870912
      %v4172 = vshrl.u32 %v4171, 30
      %v4173 = vshll.u32 %v4172, 30
      %v4174 = vsub.s32 %v4170, %v4173
      %vm4175 = vcmp.lt.s32.totalorder %v4174, 0
      %v4176 = vsub.s32 0, %v4174
      %v4177 = vsel %vm4175, %v4176, %v4174
      %v4178 = vclz %v4177
      %v4179 = vsub.s32 %v4178, 2
      %vm4180 = vcmp.gt.s32.totalorder 0, %v4179
      %v4181 = vsel %vm4180, 0, %v4179
      %v4182 = vsub.s32 32, %v4181
      %v4183 = vshll.u32 %v4174, %v4181
      %v4184 = vshrl.u32 %v4166, %v4182
      %v4185 = vor.u32 %v4183, %v4184
      %v4186 = vsub.s32 4294967266, %v4181
      %v4187 = vadd.s32 %v4186, 127
      %v4188 = vshll.u32 %v4187, 23
      %v4189 = vor.u32 4788187, %v4188
      %v4190 = vand.u32 2147483647, %v4189
      %v4192 = vcvt.s32.f32 %v4185
      %v4193 = vmul.f32 %v4192, %v4190
      %v4194 = vxor.u32 %v4193, 2147483648
      %v4195 = vsel %vm4112, %v4194, %v4193
      %v4196 = vsub.s32 4, %v4172
      %v4197 = vsel %vm4112, %v4196, %v4172
      %v4198 = vsel %vm4111, %v988, %v4195
      %v4199 = vsel %vm4111, 0, %v4197
      %v4200 = vcosq.f32.pop %v4198
      %v4201 = vsinq.f32.pop %v4198
      %vm4202 = vweird.f32 %v988
      %v4203 = vadd.s32 %v4199, 3
      %v4204 = vand.u32 %v4203, 3
      %vm4205 = vcmp.lt.s32.totalorder %v4204, 2
      %vm4206 = vcmp.eq.s32.totalorder %v4204, 0
      %v4207 = vxor.u32 %v4201, 2147483648
      %v4208 = vsel %vm4206, %v4200, %v4207
      %vm4209 = vcmp.eq.s32.totalorder %v4204, 2
      %v4210 = vxor.u32 %v4200, 2147483648
      %v4211 = vsel %vm4209, %v4210, %v4201
      %v4212 = vsel %vm4205, %v4208, %v4211
      %v4213 = vsel %vm4202, nan, %v4212
      %v4214 = vand.u32 2147483647, %v989
      %vm4215 = vcmp.le.f32.partialorder %v4214, 0.7853982
      %vm4216 = vcmp.lt.s32.totalorder %v989, 0
      %v4217 = vand.u32 %v989, 2139095040
      %v4218 = vshrl.u32 %v4217, 23
      %v4219 = vsub.s32 %v4218, 127
      %v4220 = vand.u32 2147483647, %v989
      %v4221 = vand.u32 %v4220, 8388607
      %v4222 = vor.u32 %v4221, 8388608
      %v4223 = vsub.s32 0, %v4222
      %v4224 = vadd.s32 %v4219, 1
      %vm4225 = vcmp.gt.s32.totalorder %v4224, 0
      %v4226 = vsel %vm4225, %v4224, 0
      %v4227 = vshrl.u32 %v4226, 5
      %v4228 = vand.u32 %v4226, 31
      %v4229 = vsub.s32 32, %v4228
      %v4230 = vshrl.u32 683565275, %v4229
      %v4231 = vshll.u32 683565275, %v4228
      %v4232 = vshrl.u32 2475754826, %v4229
      %v4233 = vor.u32 %v4231, %v4232
      %v4234 = vshll.u32 2475754826, %v4228
      %v4235 = vshrl.u32 2131351028, %v4229
      %v4236 = vor.u32 %v4234, %v4235
      %v4237 = vshll.u32 2131351028, %v4228
      %v4238 = vshrl.u32 2102212464, %v4229
      %v4239 = vor.u32 %v4237, %v4238
      %v4240 = vshll.u32 2102212464, %v4228
      %v4241 = vshrl.u32 920167782, %v4229
      %v4242 = vor.u32 %v4240, %v4241
      %v4243 = vshll.u32 920167782, %v4228
      %v4244 = vshrl.u32 1326507024, %v4229
      %v4245 = vor.u32 %v4243, %v4244
      %vm4246 = vcmp.lt.s32.totalorder %v4227, 1
      %vm4247 = vcmp.lt.s32.totalorder %v4227, 2
      %vm4248 = vcmp.lt.s32.totalorder %v4227, 3
      %vm4249 = vcmp.lt.s32.totalorder %v4227, 4
      %v4250 = vsel %vm4246, %v4230, %v4233
      %v4251 = vsel %vm4249, %v4239, 2102212464
      %v4252 = vsel %vm4248, %v4236, %v4251
      %v4253 = vsel %vm4247, %v4250, %v4252
      %v4254 = vsel %vm4246, %v4233, %v4236
      %v4255 = vsel %vm4249, %v4242, 920167782
      %v4256 = vsel %vm4248, %v4239, %v4255
      %v4257 = vsel %vm4247, %v4254, %v4256
      %v4258 = vsel %vm4246, %v4236, %v4239
      %v4259 = vsel %vm4249, %v4245, 1326507024
      %v4260 = vsel %vm4248, %v4242, %v4259
      %v4261 = vsel %vm4247, %v4258, %v4260
      %v4262 = vshll.u32 %v4222, 8
      %v4263 = vmul.u32.u64.compose %v4262, %v4261
      %v4264 = vextract.low.u32 %v4263
      %v4265 = vextract.high.u32 %v4263
      %v4266 = vmul.u32.u64.compose %v4262, %v4257
      %v4267 = vextract.low.u32 %v4266
      %v4268 = vextract.high.u32 %v4266
      %v4269 = vmul.u32 %v4262, %v4253
      %v4270 = vadd.s32 %v4265, %v4267
      %vm4271 = vc.u32 %v4265, %v4267
      %v4272 = vadd.s32 %v4268, 1
      %v4273 = vsel %vm4271, %v4272, %v4268
      %v4274 = vadd.s32 %v4269, %v4273
      %v4275 = vadd.s32 %v4274, 536870912
      %v4276 = vshrl.u32 %v4275, 30
      %v4277 = vshll.u32 %v4276, 30
      %v4278 = vsub.s32 %v4274, %v4277
      %vm4279 = vcmp.lt.s32.totalorder %v4278, 0
      %v4280 = vsub.s32 0, %v4278
      %v4281 = vsel %vm4279, %v4280, %v4278
      %v4282 = vclz %v4281
      %v4283 = vsub.s32 %v4282, 2
      %vm4284 = vcmp.gt.s32.totalorder 0, %v4283
      %v4285 = vsel %vm4284, 0, %v4283
      %v4286 = vsub.s32 32, %v4285
      %v4287 = vshll.u32 %v4278, %v4285
      %v4288 = vshrl.u32 %v4270, %v4286
      %v4289 = vor.u32 %v4287, %v4288
      %v4290 = vsub.s32 4294967266, %v4285
      %v4291 = vadd.s32 %v4290, 127
      %v4292 = vshll.u32 %v4291, 23
      %v4293 = vor.u32 4788187, %v4292
      %v4294 = vand.u32 2147483647, %v4293
      %v4296 = vcvt.s32.f32 %v4289
      %v4297 = vmul.f32 %v4296, %v4294
      %v4298 = vxor.u32 %v4297, 2147483648
      %v4299 = vsel %vm4216, %v4298, %v4297
      %v4300 = vsub.s32 4, %v4276
      %v4301 = vsel %vm4216, %v4300, %v4276
      %v4302 = vsel %vm4215, %v989, %v4299
      %v4303 = vsel %vm4215, 0, %v4301
      %v4304 = vcosq.f32.pop %v4302
      %v4305 = vsinq.f32.pop %v4302
      %vm4306 = vweird.f32 %v989
      %v4307 = vadd.s32 %v4303, 3
      %v4308 = vand.u32 %v4307, 3
      %vm4309 = vcmp.lt.s32.totalorder %v4308, 2
      %vm4310 = vcmp.eq.s32.totalorder %v4308, 0
      %v4311 = vxor.u32 %v4305, 2147483648
      %v4312 = vsel %vm4310, %v4304, %v4311
      %vm4313 = vcmp.eq.s32.totalorder %v4308, 2
      %v4314 = vxor.u32 %v4304, 2147483648
      %v4315 = vsel %vm4313, %v4314, %v4305
      %v4316 = vsel %vm4309, %v4312, %v4315
      %v4317 = vsel %vm4306, nan, %v4316
      %vm4318 = vcmask 146432
      %4319 = vst.msk [vmem:[%s118] sm:$0xff] %vm4318, %v1093
      %4320 = vst.msk [vmem:[%s118 + $0x8] sm:$0xff] %vm4318, %v1197
      %4321 = vst.msk [vmem:[%s118 + $0x10] sm:$0xff] %vm4318, %v1301
      %4322 = vst.msk [vmem:[%s118 + $0x18] sm:$0xff] %vm4318, %v1405
      %4323 = vst.msk [vmem:[%s118 + $0x20] sm:$0xff] %vm4318, %v1509
      %4324 = vst.msk [vmem:[%s118 + $0x28] sm:$0xff] %vm4318, %v1613
      %4325 = vst.msk [vmem:[%s118 + $0x30] sm:$0xff] %vm4318, %v1717
      %4326 = vst.msk [vmem:[%s118 + $0x38] sm:$0xff] %vm4318, %v1821
      %4327 = vst.msk [vmem:[%s118 + $0x40] sm:$0xff] %vm4318, %v1925
      %4328 = vst.msk [vmem:[%s118 + $0x48] sm:$0xff] %vm4318, %v2029
      %4329 = vst.msk [vmem:[%s118 + $0x50] sm:$0xff] %vm4318, %v2133
      %4330 = vst.msk [vmem:[%s118 + $0x58] sm:$0xff] %vm4318, %v2237
      %4331 = vst.msk [vmem:[%s118 + $0x60] sm:$0xff] %vm4318, %v2341
      %4332 = vst.msk [vmem:[%s118 + $0x68] sm:$0xff] %vm4318, %v2445
      %4333 = vst.msk [vmem:[%s118 + $0x70] sm:$0xff] %vm4318, %v2549
      %4334 = vst.msk [vmem:[%s118 + $0x78] sm:$0xff] %vm4318, %v2653
      %4335 = vst.msk [vmem:[%s118 + $0x80] sm:$0xff] %vm4318, %v2757
      %4336 = vst.msk [vmem:[%s118 + $0x88] sm:$0xff] %vm4318, %v2861
      %4337 = vst.msk [vmem:[%s118 + $0x90] sm:$0xff] %vm4318, %v2965
      %4338 = vst.msk [vmem:[%s118 + $0x98] sm:$0xff] %vm4318, %v3069
      %4339 = vst.msk [vmem:[%s118 + $0xa0] sm:$0xff] %vm4318, %v3173
      %4340 = vst.msk [vmem:[%s118 + $0xa8] sm:$0xff] %vm4318, %v3277
      %4341 = vst.msk [vmem:[%s118 + $0xb0] sm:$0xff] %vm4318, %v3381
      %4342 = vst.msk [vmem:[%s118 + $0xb8] sm:$0xff] %vm4318, %v3485
      %4343 = vst.msk [vmem:[%s118 + $0xc0] sm:$0xff] %vm4318, %v3589
      %4344 = vst.msk [vmem:[%s118 + $0xc8] sm:$0xff] %vm4318, %v3693
      %4345 = vst.msk [vmem:[%s118 + $0xd0] sm:$0xff] %vm4318, %v3797
      %4346 = vst.msk [vmem:[%s118 + $0xd8] sm:$0xff] %vm4318, %v3901
      %4347 = vst.msk [vmem:[%s118 + $0xe0] sm:$0xff] %vm4318, %v4005
      %4348 = vst.msk [vmem:[%s118 + $0xe8] sm:$0xff] %vm4318, %v4109
      %4349 = vst.msk [vmem:[%s118 + $0xf0] sm:$0xff] %vm4318, %v4213
      %4350 = vst.msk [vmem:[%s118 + $0xf8] sm:$0xff] %vm4318, %v4317
      %v4351 = vand.u32 2147483647, %v958
      %vm4352 = vcmp.le.f32.partialorder %v4351, 0.7853982
      %vm4353 = vcmp.lt.s32.totalorder %v958, 0
      %v4354 = vand.u32 %v958, 2139095040
      %v4355 = vshrl.u32 %v4354, 23
      %v4356 = vsub.s32 %v4355, 127
      %v4357 = vand.u32 2147483647, %v958
      %v4358 = vand.u32 %v4357, 8388607
      %v4359 = vor.u32 %v4358, 8388608
      %v4360 = vsub.s32 0, %v4359
      %v4361 = vadd.s32 %v4356, 1
      %vm4362 = vcmp.gt.s32.totalorder %v4361, 0
      %v4363 = vsel %vm4362, %v4361, 0
      %v4364 = vshrl.u32 %v4363, 5
      %v4365 = vand.u32 %v4363, 31
      %v4366 = vsub.s32 32, %v4365
      %v4367 = vshrl.u32 683565275, %v4366
      %v4368 = vshll.u32 683565275, %v4365
      %v4369 = vshrl.u32 2475754826, %v4366
      %v4370 = vor.u32 %v4368, %v4369
      %v4371 = vshll.u32 2475754826, %v4365
      %v4372 = vshrl.u32 2131351028, %v4366
      %v4373 = vor.u32 %v4371, %v4372
      %v4374 = vshll.u32 2131351028, %v4365
      %v4375 = vshrl.u32 2102212464, %v4366
      %v4376 = vor.u32 %v4374, %v4375
      %v4377 = vshll.u32 2102212464, %v4365
      %v4378 = vshrl.u32 920167782, %v4366
      %v4379 = vor.u32 %v4377, %v4378
      %v4380 = vshll.u32 920167782, %v4365
      %v4381 = vshrl.u32 1326507024, %v4366
      %v4382 = vor.u32 %v4380, %v4381
      %vm4383 = vcmp.lt.s32.totalorder %v4364, 1
      %vm4384 = vcmp.lt.s32.totalorder %v4364, 2
      %vm4385 = vcmp.lt.s32.totalorder %v4364, 3
      %vm4386 = vcmp.lt.s32.totalorder %v4364, 4
      %v4387 = vsel %vm4383, %v4367, %v4370
      %v4388 = vsel %vm4386, %v4376, 2102212464
      %v4389 = vsel %vm4385, %v4373, %v4388
      %v4390 = vsel %vm4384, %v4387, %v4389
      %v4391 = vsel %vm4383, %v4370, %v4373
      %v4392 = vsel %vm4386, %v4379, 920167782
      %v4393 = vsel %vm4385, %v4376, %v4392
      %v4394 = vsel %vm4384, %v4391, %v4393
      %v4395 = vsel %vm4383, %v4373, %v4376
      %v4396 = vsel %vm4386, %v4382, 1326507024
      %v4397 = vsel %vm4385, %v4379, %v4396
      %v4398 = vsel %vm4384, %v4395, %v4397
      %v4399 = vshll.u32 %v4359, 8
      %v4400 = vmul.u32.u64.compose %v4399, %v4398
      %v4401 = vextract.low.u32 %v4400
      %v4402 = vextract.high.u32 %v4400
      %v4403 = vmul.u32.u64.compose %v4399, %v4394
      %v4404 = vextract.low.u32 %v4403
      %v4405 = vextract.high.u32 %v4403
      %v4406 = vmul.u32 %v4399, %v4390
      %v4407 = vadd.s32 %v4402, %v4404
      %vm4408 = vc.u32 %v4402, %v4404
      %v4409 = vadd.s32 %v4405, 1
      %v4410 = vsel %vm4408, %v4409, %v4405
      %v4411 = vadd.s32 %v4406, %v4410
      %v4412 = vadd.s32 %v4411, 536870912
      %v4413 = vshrl.u32 %v4412, 30
      %v4414 = vshll.u32 %v4413, 30
      %v4415 = vsub.s32 %v4411, %v4414
      %vm4416 = vcmp.lt.s32.totalorder %v4415, 0
      %v4417 = vsub.s32 0, %v4415
      %v4418 = vsel %vm4416, %v4417, %v4415
      %v4419 = vclz %v4418
      %v4420 = vsub.s32 %v4419, 2
      %vm4421 = vcmp.gt.s32.totalorder 0, %v4420
      %v4422 = vsel %vm4421, 0, %v4420
      %v4423 = vsub.s32 32, %v4422
      %v4424 = vshll.u32 %v4415, %v4422
      %v4425 = vshrl.u32 %v4407, %v4423
      %v4426 = vor.u32 %v4424, %v4425
      %v4427 = vsub.s32 4294967266, %v4422
      %v4428 = vadd.s32 %v4427, 127
      %v4429 = vshll.u32 %v4428, 23
      %v4430 = vor.u32 4788187, %v4429
      %v4431 = vand.u32 2147483647, %v4430
      %v4433 = vcvt.s32.f32 %v4426
      %v4434 = vmul.f32 %v4433, %v4431
      %v4435 = vxor.u32 %v4434, 2147483648
      %v4436 = vsel %vm4353, %v4435, %v4434
      %v4437 = vsub.s32 4, %v4413
      %v4438 = vsel %vm4353, %v4437, %v4413
      %v4439 = vsel %vm4352, %v958, %v4436
      %v4440 = vsel %vm4352, 0, %v4438
      %v4441 = vcosq.f32.pop %v4439
      %v4442 = vsinq.f32.pop %v4439
      %vm4443 = vweird.f32 %v958
      %v4444 = vand.u32 %v4440, 3
      %vm4445 = vcmp.lt.s32.totalorder %v4444, 2
      %vm4446 = vcmp.eq.s32.totalorder %v4444, 0
      %v4447 = vxor.u32 %v4442, 2147483648
      %v4448 = vsel %vm4446, %v4441, %v4447
      %vm4449 = vcmp.eq.s32.totalorder %v4444, 2
      %v4450 = vxor.u32 %v4441, 2147483648
      %v4451 = vsel %vm4449, %v4450, %v4442
      %v4452 = vsel %vm4445, %v4448, %v4451
      %v4453 = vsel %vm4443, nan, %v4452
      %v4454 = vand.u32 2147483647, %v959
      %vm4455 = vcmp.le.f32.partialorder %v4454, 0.7853982
      %vm4456 = vcmp.lt.s32.totalorder %v959, 0
      %v4457 = vand.u32 %v959, 2139095040
      %v4458 = vshrl.u32 %v4457, 23
      %v4459 = vsub.s32 %v4458, 127
      %v4460 = vand.u32 2147483647, %v959
      %v4461 = vand.u32 %v4460, 8388607
      %v4462 = vor.u32 %v4461, 8388608
      %v4463 = vsub.s32 0, %v4462
      %v4464 = vadd.s32 %v4459, 1
      %vm4465 = vcmp.gt.s32.totalorder %v4464, 0
      %v4466 = vsel %vm4465, %v4464, 0
      %v4467 = vshrl.u32 %v4466, 5
      %v4468 = vand.u32 %v4466, 31
      %v4469 = vsub.s32 32, %v4468
      %v4470 = vshrl.u32 683565275, %v4469
      %v4471 = vshll.u32 683565275, %v4468
      %v4472 = vshrl.u32 2475754826, %v4469
      %v4473 = vor.u32 %v4471, %v4472
      %v4474 = vshll.u32 2475754826, %v4468
      %v4475 = vshrl.u32 2131351028, %v4469
      %v4476 = vor.u32 %v4474, %v4475
      %v4477 = vshll.u32 2131351028, %v4468
      %v4478 = vshrl.u32 2102212464, %v4469
      %v4479 = vor.u32 %v4477, %v4478
      %v4480 = vshll.u32 2102212464, %v4468
      %v4481 = vshrl.u32 920167782, %v4469
      %v4482 = vor.u32 %v4480, %v4481
      %v4483 = vshll.u32 920167782, %v4468
      %v4484 = vshrl.u32 1326507024, %v4469
      %v4485 = vor.u32 %v4483, %v4484
      %vm4486 = vcmp.lt.s32.totalorder %v4467, 1
      %vm4487 = vcmp.lt.s32.totalorder %v4467, 2
      %vm4488 = vcmp.lt.s32.totalorder %v4467, 3
      %vm4489 = vcmp.lt.s32.totalorder %v4467, 4
      %v4490 = vsel %vm4486, %v4470, %v4473
      %v4491 = vsel %vm4489, %v4479, 2102212464
      %v4492 = vsel %vm4488, %v4476, %v4491
      %v4493 = vsel %vm4487, %v4490, %v4492
      %v4494 = vsel %vm4486, %v4473, %v4476
      %v4495 = vsel %vm4489, %v4482, 920167782
      %v4496 = vsel %vm4488, %v4479, %v4495
      %v4497 = vsel %vm4487, %v4494, %v4496
      %v4498 = vsel %vm4486, %v4476, %v4479
      %v4499 = vsel %vm4489, %v4485, 1326507024
      %v4500 = vsel %vm4488, %v4482, %v4499
      %v4501 = vsel %vm4487, %v4498, %v4500
      %v4502 = vshll.u32 %v4462, 8
      %v4503 = vmul.u32.u64.compose %v4502, %v4501
      %v4504 = vextract.low.u32 %v4503
      %v4505 = vextract.high.u32 %v4503
      %v4506 = vmul.u32.u64.compose %v4502, %v4497
      %v4507 = vextract.low.u32 %v4506
      %v4508 = vextract.high.u32 %v4506
      %v4509 = vmul.u32 %v4502, %v4493
      %v4510 = vadd.s32 %v4505, %v4507
      %vm4511 = vc.u32 %v4505, %v4507
      %v4512 = vadd.s32 %v4508, 1
      %v4513 = vsel %vm4511, %v4512, %v4508
      %v4514 = vadd.s32 %v4509, %v4513
      %v4515 = vadd.s32 %v4514, 536870912
      %v4516 = vshrl.u32 %v4515, 30
      %v4517 = vshll.u32 %v4516, 30
      %v4518 = vsub.s32 %v4514, %v4517
      %vm4519 = vcmp.lt.s32.totalorder %v4518, 0
      %v4520 = vsub.s32 0, %v4518
      %v4521 = vsel %vm4519, %v4520, %v4518
      %v4522 = vclz %v4521
      %v4523 = vsub.s32 %v4522, 2
      %vm4524 = vcmp.gt.s32.totalorder 0, %v4523
      %v4525 = vsel %vm4524, 0, %v4523
      %v4526 = vsub.s32 32, %v4525
      %v4527 = vshll.u32 %v4518, %v4525
      %v4528 = vshrl.u32 %v4510, %v4526
      %v4529 = vor.u32 %v4527, %v4528
      %v4530 = vsub.s32 4294967266, %v4525
      %v4531 = vadd.s32 %v4530, 127
      %v4532 = vshll.u32 %v4531, 23
      %v4533 = vor.u32 4788187, %v4532
      %v4534 = vand.u32 2147483647, %v4533
      %v4536 = vcvt.s32.f32 %v4529
      %v4537 = vmul.f32 %v4536, %v4534
      %v4538 = vxor.u32 %v4537, 2147483648
      %v4539 = vsel %vm4456, %v4538, %v4537
      %v4540 = vsub.s32 4, %v4516
      %v4541 = vsel %vm4456, %v4540, %v4516
      %v4542 = vsel %vm4455, %v959, %v4539
      %v4543 = vsel %vm4455, 0, %v4541
      %v4544 = vcosq.f32.pop %v4542
      %v4545 = vsinq.f32.pop %v4542
      %vm4546 = vweird.f32 %v959
      %v4547 = vand.u32 %v4543, 3
      %vm4548 = vcmp.lt.s32.totalorder %v4547, 2
      %vm4549 = vcmp.eq.s32.totalorder %v4547, 0
      %v4550 = vxor.u32 %v4545, 2147483648
      %v4551 = vsel %vm4549, %v4544, %v4550
      %vm4552 = vcmp.eq.s32.totalorder %v4547, 2
      %v4553 = vxor.u32 %v4544, 2147483648
      %v4554 = vsel %vm4552, %v4553, %v4545
      %v4555 = vsel %vm4548, %v4551, %v4554
      %v4556 = vsel %vm4546, nan, %v4555
      %v4557 = vand.u32 2147483647, %v960
      %vm4558 = vcmp.le.f32.partialorder %v4557, 0.7853982
      %vm4559 = vcmp.lt.s32.totalorder %v960, 0
      %v4560 = vand.u32 %v960, 2139095040
      %v4561 = vshrl.u32 %v4560, 23
      %v4562 = vsub.s32 %v4561, 127
      %v4563 = vand.u32 2147483647, %v960
      %v4564 = vand.u32 %v4563, 8388607
      %v4565 = vor.u32 %v4564, 8388608
      %v4566 = vsub.s32 0, %v4565
      %v4567 = vadd.s32 %v4562, 1
      %vm4568 = vcmp.gt.s32.totalorder %v4567, 0
      %v4569 = vsel %vm4568, %v4567, 0
      %v4570 = vshrl.u32 %v4569, 5
      %v4571 = vand.u32 %v4569, 31
      %v4572 = vsub.s32 32, %v4571
      %v4573 = vshrl.u32 683565275, %v4572
      %v4574 = vshll.u32 683565275, %v4571
      %v4575 = vshrl.u32 2475754826, %v4572
      %v4576 = vor.u32 %v4574, %v4575
      %v4577 = vshll.u32 2475754826, %v4571
      %v4578 = vshrl.u32 2131351028, %v4572
      %v4579 = vor.u32 %v4577, %v4578
      %v4580 = vshll.u32 2131351028, %v4571
      %v4581 = vshrl.u32 2102212464, %v4572
      %v4582 = vor.u32 %v4580, %v4581
      %v4583 = vshll.u32 2102212464, %v4571
      %v4584 = vshrl.u32 920167782, %v4572
      %v4585 = vor.u32 %v4583, %v4584
      %v4586 = vshll.u32 920167782, %v4571
      %v4587 = vshrl.u32 1326507024, %v4572
      %v4588 = vor.u32 %v4586, %v4587
      %vm4589 = vcmp.lt.s32.totalorder %v4570, 1
      %vm4590 = vcmp.lt.s32.totalorder %v4570, 2
      %vm4591 = vcmp.lt.s32.totalorder %v4570, 3
      %vm4592 = vcmp.lt.s32.totalorder %v4570, 4
      %v4593 = vsel %vm4589, %v4573, %v4576
      %v4594 = vsel %vm4592, %v4582, 2102212464
      %v4595 = vsel %vm4591, %v4579, %v4594
      %v4596 = vsel %vm4590, %v4593, %v4595
      %v4597 = vsel %vm4589, %v4576, %v4579
      %v4598 = vsel %vm4592, %v4585, 920167782
      %v4599 = vsel %vm4591, %v4582, %v4598
      %v4600 = vsel %vm4590, %v4597, %v4599
      %v4601 = vsel %vm4589, %v4579, %v4582
      %v4602 = vsel %vm4592, %v4588, 1326507024
      %v4603 = vsel %vm4591, %v4585, %v4602
      %v4604 = vsel %vm4590, %v4601, %v4603
      %v4605 = vshll.u32 %v4565, 8
      %v4606 = vmul.u32.u64.compose %v4605, %v4604
      %v4607 = vextract.low.u32 %v4606
      %v4608 = vextract.high.u32 %v4606
      %v4609 = vmul.u32.u64.compose %v4605, %v4600
      %v4610 = vextract.low.u32 %v4609
      %v4611 = vextract.high.u32 %v4609
      %v4612 = vmul.u32 %v4605, %v4596
      %v4613 = vadd.s32 %v4608, %v4610
      %vm4614 = vc.u32 %v4608, %v4610
      %v4615 = vadd.s32 %v4611, 1
      %v4616 = vsel %vm4614, %v4615, %v4611
      %v4617 = vadd.s32 %v4612, %v4616
      %v4618 = vadd.s32 %v4617, 536870912
      %v4619 = vshrl.u32 %v4618, 30
      %v4620 = vshll.u32 %v4619, 30
      %v4621 = vsub.s32 %v4617, %v4620
      %vm4622 = vcmp.lt.s32.totalorder %v4621, 0
      %v4623 = vsub.s32 0, %v4621
      %v4624 = vsel %vm4622, %v4623, %v4621
      %v4625 = vclz %v4624
      %v4626 = vsub.s32 %v4625, 2
      %vm4627 = vcmp.gt.s32.totalorder 0, %v4626
      %v4628 = vsel %vm4627, 0, %v4626
      %v4629 = vsub.s32 32, %v4628
      %v4630 = vshll.u32 %v4621, %v4628
      %v4631 = vshrl.u32 %v4613, %v4629
      %v4632 = vor.u32 %v4630, %v4631
      %v4633 = vsub.s32 4294967266, %v4628
      %v4634 = vadd.s32 %v4633, 127
      %v4635 = vshll.u32 %v4634, 23
      %v4636 = vor.u32 4788187, %v4635
      %v4637 = vand.u32 2147483647, %v4636
      %v4639 = vcvt.s32.f32 %v4632
      %v4640 = vmul.f32 %v4639, %v4637
      %v4641 = vxor.u32 %v4640, 2147483648
      %v4642 = vsel %vm4559, %v4641, %v4640
      %v4643 = vsub.s32 4, %v4619
      %v4644 = vsel %vm4559, %v4643, %v4619
      %v4645 = vsel %vm4558, %v960, %v4642
      %v4646 = vsel %vm4558, 0, %v4644
      %v4647 = vcosq.f32.pop %v4645
      %v4648 = vsinq.f32.pop %v4645
      %vm4649 = vweird.f32 %v960
      %v4650 = vand.u32 %v4646, 3
      %vm4651 = vcmp.lt.s32.totalorder %v4650, 2
      %vm4652 = vcmp.eq.s32.totalorder %v4650, 0
      %v4653 = vxor.u32 %v4648, 2147483648
      %v4654 = vsel %vm4652, %v4647, %v4653
      %vm4655 = vcmp.eq.s32.totalorder %v4650, 2
      %v4656 = vxor.u32 %v4647, 2147483648
      %v4657 = vsel %vm4655, %v4656, %v4648
      %v4658 = vsel %vm4651, %v4654, %v4657
      %v4659 = vsel %vm4649, nan, %v4658
      %v4660 = vand.u32 2147483647, %v961
      %vm4661 = vcmp.le.f32.partialorder %v4660, 0.7853982
      %vm4662 = vcmp.lt.s32.totalorder %v961, 0
      %v4663 = vand.u32 %v961, 2139095040
      %v4664 = vshrl.u32 %v4663, 23
      %v4665 = vsub.s32 %v4664, 127
      %v4666 = vand.u32 2147483647, %v961
      %v4667 = vand.u32 %v4666, 8388607
      %v4668 = vor.u32 %v4667, 8388608
      %v4669 = vsub.s32 0, %v4668
      %v4670 = vadd.s32 %v4665, 1
      %vm4671 = vcmp.gt.s32.totalorder %v4670, 0
      %v4672 = vsel %vm4671, %v4670, 0
      %v4673 = vshrl.u32 %v4672, 5
      %v4674 = vand.u32 %v4672, 31
      %v4675 = vsub.s32 32, %v4674
      %v4676 = vshrl.u32 683565275, %v4675
      %v4677 = vshll.u32 683565275, %v4674
      %v4678 = vshrl.u32 2475754826, %v4675
      %v4679 = vor.u32 %v4677, %v4678
      %v4680 = vshll.u32 2475754826, %v4674
      %v4681 = vshrl.u32 2131351028, %v4675
      %v4682 = vor.u32 %v4680, %v4681
      %v4683 = vshll.u32 2131351028, %v4674
      %v4684 = vshrl.u32 2102212464, %v4675
      %v4685 = vor.u32 %v4683, %v4684
      %v4686 = vshll.u32 2102212464, %v4674
      %v4687 = vshrl.u32 920167782, %v4675
      %v4688 = vor.u32 %v4686, %v4687
      %v4689 = vshll.u32 920167782, %v4674
      %v4690 = vshrl.u32 1326507024, %v4675
      %v4691 = vor.u32 %v4689, %v4690
      %vm4692 = vcmp.lt.s32.totalorder %v4673, 1
      %vm4693 = vcmp.lt.s32.totalorder %v4673, 2
      %vm4694 = vcmp.lt.s32.totalorder %v4673, 3
      %vm4695 = vcmp.lt.s32.totalorder %v4673, 4
      %v4696 = vsel %vm4692, %v4676, %v4679
      %v4697 = vsel %vm4695, %v4685, 2102212464
      %v4698 = vsel %vm4694, %v4682, %v4697
      %v4699 = vsel %vm4693, %v4696, %v4698
      %v4700 = vsel %vm4692, %v4679, %v4682
      %v4701 = vsel %vm4695, %v4688, 920167782
      %v4702 = vsel %vm4694, %v4685, %v4701
      %v4703 = vsel %vm4693, %v4700, %v4702
      %v4704 = vsel %vm4692, %v4682, %v4685
      %v4705 = vsel %vm4695, %v4691, 1326507024
      %v4706 = vsel %vm4694, %v4688, %v4705
      %v4707 = vsel %vm4693, %v4704, %v4706
      %v4708 = vshll.u32 %v4668, 8
      %v4709 = vmul.u32.u64.compose %v4708, %v4707
      %v4710 = vextract.low.u32 %v4709
      %v4711 = vextract.high.u32 %v4709
      %v4712 = vmul.u32.u64.compose %v4708, %v4703
      %v4713 = vextract.low.u32 %v4712
      %v4714 = vextract.high.u32 %v4712
      %v4715 = vmul.u32 %v4708, %v4699
      %v4716 = vadd.s32 %v4711, %v4713
      %vm4717 = vc.u32 %v4711, %v4713
      %v4718 = vadd.s32 %v4714, 1
      %v4719 = vsel %vm4717, %v4718, %v4714
      %v4720 = vadd.s32 %v4715, %v4719
      %v4721 = vadd.s32 %v4720, 536870912
      %v4722 = vshrl.u32 %v4721, 30
      %v4723 = vshll.u32 %v4722, 30
      %v4724 = vsub.s32 %v4720, %v4723
      %vm4725 = vcmp.lt.s32.totalorder %v4724, 0
      %v4726 = vsub.s32 0, %v4724
      %v4727 = vsel %vm4725, %v4726, %v4724
      %v4728 = vclz %v4727
      %v4729 = vsub.s32 %v4728, 2
      %vm4730 = vcmp.gt.s32.totalorder 0, %v4729
      %v4731 = vsel %vm4730, 0, %v4729
      %v4732 = vsub.s32 32, %v4731
      %v4733 = vshll.u32 %v4724, %v4731
      %v4734 = vshrl.u32 %v4716, %v4732
      %v4735 = vor.u32 %v4733, %v4734
      %v4736 = vsub.s32 4294967266, %v4731
      %v4737 = vadd.s32 %v4736, 127
      %v4738 = vshll.u32 %v4737, 23
      %v4739 = vor.u32 4788187, %v4738
      %v4740 = vand.u32 2147483647, %v4739
      %v4742 = vcvt.s32.f32 %v4735
      %v4743 = vmul.f32 %v4742, %v4740
      %v4744 = vxor.u32 %v4743, 2147483648
      %v4745 = vsel %vm4662, %v4744, %v4743
      %v4746 = vsub.s32 4, %v4722
      %v4747 = vsel %vm4662, %v4746, %v4722
      %v4748 = vsel %vm4661, %v961, %v4745
      %v4749 = vsel %vm4661, 0, %v4747
      %v4750 = vcosq.f32.pop %v4748
      %v4751 = vsinq.f32.pop %v4748
      %vm4752 = vweird.f32 %v961
      %v4753 = vand.u32 %v4749, 3
      %vm4754 = vcmp.lt.s32.totalorder %v4753, 2
      %vm4755 = vcmp.eq.s32.totalorder %v4753, 0
      %v4756 = vxor.u32 %v4751, 2147483648
      %v4757 = vsel %vm4755, %v4750, %v4756
      %vm4758 = vcmp.eq.s32.totalorder %v4753, 2
      %v4759 = vxor.u32 %v4750, 2147483648
      %v4760 = vsel %vm4758, %v4759, %v4751
      %v4761 = vsel %vm4754, %v4757, %v4760
      %v4762 = vsel %vm4752, nan, %v4761
      %v4763 = vand.u32 2147483647, %v962
      %vm4764 = vcmp.le.f32.partialorder %v4763, 0.7853982
      %vm4765 = vcmp.lt.s32.totalorder %v962, 0
      %v4766 = vand.u32 %v962, 2139095040
      %v4767 = vshrl.u32 %v4766, 23
      %v4768 = vsub.s32 %v4767, 127
      %v4769 = vand.u32 2147483647, %v962
      %v4770 = vand.u32 %v4769, 8388607
      %v4771 = vor.u32 %v4770, 8388608
      %v4772 = vsub.s32 0, %v4771
      %v4773 = vadd.s32 %v4768, 1
      %vm4774 = vcmp.gt.s32.totalorder %v4773, 0
      %v4775 = vsel %vm4774, %v4773, 0
      %v4776 = vshrl.u32 %v4775, 5
      %v4777 = vand.u32 %v4775, 31
      %v4778 = vsub.s32 32, %v4777
      %v4779 = vshrl.u32 683565275, %v4778
      %v4780 = vshll.u32 683565275, %v4777
      %v4781 = vshrl.u32 2475754826, %v4778
      %v4782 = vor.u32 %v4780, %v4781
      %v4783 = vshll.u32 2475754826, %v4777
      %v4784 = vshrl.u32 2131351028, %v4778
      %v4785 = vor.u32 %v4783, %v4784
      %v4786 = vshll.u32 2131351028, %v4777
      %v4787 = vshrl.u32 2102212464, %v4778
      %v4788 = vor.u32 %v4786, %v4787
      %v4789 = vshll.u32 2102212464, %v4777
      %v4790 = vshrl.u32 920167782, %v4778
      %v4791 = vor.u32 %v4789, %v4790
      %v4792 = vshll.u32 920167782, %v4777
      %v4793 = vshrl.u32 1326507024, %v4778
      %v4794 = vor.u32 %v4792, %v4793
      %vm4795 = vcmp.lt.s32.totalorder %v4776, 1
      %vm4796 = vcmp.lt.s32.totalorder %v4776, 2
      %vm4797 = vcmp.lt.s32.totalorder %v4776, 3
      %vm4798 = vcmp.lt.s32.totalorder %v4776, 4
      %v4799 = vsel %vm4795, %v4779, %v4782
      %v4800 = vsel %vm4798, %v4788, 2102212464
      %v4801 = vsel %vm4797, %v4785, %v4800
      %v4802 = vsel %vm4796, %v4799, %v4801
      %v4803 = vsel %vm4795, %v4782, %v4785
      %v4804 = vsel %vm4798, %v4791, 920167782
      %v4805 = vsel %vm4797, %v4788, %v4804
      %v4806 = vsel %vm4796, %v4803, %v4805
      %v4807 = vsel %vm4795, %v4785, %v4788
      %v4808 = vsel %vm4798, %v4794, 1326507024
      %v4809 = vsel %vm4797, %v4791, %v4808
      %v4810 = vsel %vm4796, %v4807, %v4809
      %v4811 = vshll.u32 %v4771, 8
      %v4812 = vmul.u32.u64.compose %v4811, %v4810
      %v4813 = vextract.low.u32 %v4812
      %v4814 = vextract.high.u32 %v4812
      %v4815 = vmul.u32.u64.compose %v4811, %v4806
      %v4816 = vextract.low.u32 %v4815
      %v4817 = vextract.high.u32 %v4815
      %v4818 = vmul.u32 %v4811, %v4802
      %v4819 = vadd.s32 %v4814, %v4816
      %vm4820 = vc.u32 %v4814, %v4816
      %v4821 = vadd.s32 %v4817, 1
      %v4822 = vsel %vm4820, %v4821, %v4817
      %v4823 = vadd.s32 %v4818, %v4822
      %v4824 = vadd.s32 %v4823, 536870912
      %v4825 = vshrl.u32 %v4824, 30
      %v4826 = vshll.u32 %v4825, 30
      %v4827 = vsub.s32 %v4823, %v4826
      %vm4828 = vcmp.lt.s32.totalorder %v4827, 0
      %v4829 = vsub.s32 0, %v4827
      %v4830 = vsel %vm4828, %v4829, %v4827
      %v4831 = vclz %v4830
      %v4832 = vsub.s32 %v4831, 2
      %vm4833 = vcmp.gt.s32.totalorder 0, %v4832
      %v4834 = vsel %vm4833, 0, %v4832
      %v4835 = vsub.s32 32, %v4834
      %v4836 = vshll.u32 %v4827, %v4834
      %v4837 = vshrl.u32 %v4819, %v4835
      %v4838 = vor.u32 %v4836, %v4837
      %v4839 = vsub.s32 4294967266, %v4834
      %v4840 = vadd.s32 %v4839, 127
      %v4841 = vshll.u32 %v4840, 23
      %v4842 = vor.u32 4788187, %v4841
      %v4843 = vand.u32 2147483647, %v4842
      %v4845 = vcvt.s32.f32 %v4838
      %v4846 = vmul.f32 %v4845, %v4843
      %v4847 = vxor.u32 %v4846, 2147483648
      %v4848 = vsel %vm4765, %v4847, %v4846
      %v4849 = vsub.s32 4, %v4825
      %v4850 = vsel %vm4765, %v4849, %v4825
      %v4851 = vsel %vm4764, %v962, %v4848
      %v4852 = vsel %vm4764, 0, %v4850
      %v4853 = vcosq.f32.pop %v4851
      %v4854 = vsinq.f32.pop %v4851
      %vm4855 = vweird.f32 %v962
      %v4856 = vand.u32 %v4852, 3
      %vm4857 = vcmp.lt.s32.totalorder %v4856, 2
      %vm4858 = vcmp.eq.s32.totalorder %v4856, 0
      %v4859 = vxor.u32 %v4854, 2147483648
      %v4860 = vsel %vm4858, %v4853, %v4859
      %vm4861 = vcmp.eq.s32.totalorder %v4856, 2
      %v4862 = vxor.u32 %v4853, 2147483648
      %v4863 = vsel %vm4861, %v4862, %v4854
      %v4864 = vsel %vm4857, %v4860, %v4863
      %v4865 = vsel %vm4855, nan, %v4864
      %v4866 = vand.u32 2147483647, %v963
      %vm4867 = vcmp.le.f32.partialorder %v4866, 0.7853982
      %vm4868 = vcmp.lt.s32.totalorder %v963, 0
      %v4869 = vand.u32 %v963, 2139095040
      %v4870 = vshrl.u32 %v4869, 23
      %v4871 = vsub.s32 %v4870, 127
      %v4872 = vand.u32 2147483647, %v963
      %v4873 = vand.u32 %v4872, 8388607
      %v4874 = vor.u32 %v4873, 8388608
      %v4875 = vsub.s32 0, %v4874
      %v4876 = vadd.s32 %v4871, 1
      %vm4877 = vcmp.gt.s32.totalorder %v4876, 0
      %v4878 = vsel %vm4877, %v4876, 0
      %v4879 = vshrl.u32 %v4878, 5
      %v4880 = vand.u32 %v4878, 31
      %v4881 = vsub.s32 32, %v4880
      %v4882 = vshrl.u32 683565275, %v4881
      %v4883 = vshll.u32 683565275, %v4880
      %v4884 = vshrl.u32 2475754826, %v4881
      %v4885 = vor.u32 %v4883, %v4884
      %v4886 = vshll.u32 2475754826, %v4880
      %v4887 = vshrl.u32 2131351028, %v4881
      %v4888 = vor.u32 %v4886, %v4887
      %v4889 = vshll.u32 2131351028, %v4880
      %v4890 = vshrl.u32 2102212464, %v4881
      %v4891 = vor.u32 %v4889, %v4890
      %v4892 = vshll.u32 2102212464, %v4880
      %v4893 = vshrl.u32 920167782, %v4881
      %v4894 = vor.u32 %v4892, %v4893
      %v4895 = vshll.u32 920167782, %v4880
      %v4896 = vshrl.u32 1326507024, %v4881
      %v4897 = vor.u32 %v4895, %v4896
      %vm4898 = vcmp.lt.s32.totalorder %v4879, 1
      %vm4899 = vcmp.lt.s32.totalorder %v4879, 2
      %vm4900 = vcmp.lt.s32.totalorder %v4879, 3
      %vm4901 = vcmp.lt.s32.totalorder %v4879, 4
      %v4902 = vsel %vm4898, %v4882, %v4885
      %v4903 = vsel %vm4901, %v4891, 2102212464
      %v4904 = vsel %vm4900, %v4888, %v4903
      %v4905 = vsel %vm4899, %v4902, %v4904
      %v4906 = vsel %vm4898, %v4885, %v4888
      %v4907 = vsel %vm4901, %v4894, 920167782
      %v4908 = vsel %vm4900, %v4891, %v4907
      %v4909 = vsel %vm4899, %v4906, %v4908
      %v4910 = vsel %vm4898, %v4888, %v4891
      %v4911 = vsel %vm4901, %v4897, 1326507024
      %v4912 = vsel %vm4900, %v4894, %v4911
      %v4913 = vsel %vm4899, %v4910, %v4912
      %v4914 = vshll.u32 %v4874, 8
      %v4915 = vmul.u32.u64.compose %v4914, %v4913
      %v4916 = vextract.low.u32 %v4915
      %v4917 = vextract.high.u32 %v4915
      %v4918 = vmul.u32.u64.compose %v4914, %v4909
      %v4919 = vextract.low.u32 %v4918
      %v4920 = vextract.high.u32 %v4918
      %v4921 = vmul.u32 %v4914, %v4905
      %v4922 = vadd.s32 %v4917, %v4919
      %vm4923 = vc.u32 %v4917, %v4919
      %v4924 = vadd.s32 %v4920, 1
      %v4925 = vsel %vm4923, %v4924, %v4920
      %v4926 = vadd.s32 %v4921, %v4925
      %v4927 = vadd.s32 %v4926, 536870912
      %v4928 = vshrl.u32 %v4927, 30
      %v4929 = vshll.u32 %v4928, 30
      %v4930 = vsub.s32 %v4926, %v4929
      %vm4931 = vcmp.lt.s32.totalorder %v4930, 0
      %v4932 = vsub.s32 0, %v4930
      %v4933 = vsel %vm4931, %v4932, %v4930
      %v4934 = vclz %v4933
      %v4935 = vsub.s32 %v4934, 2
      %vm4936 = vcmp.gt.s32.totalorder 0, %v4935
      %v4937 = vsel %vm4936, 0, %v4935
      %v4938 = vsub.s32 32, %v4937
      %v4939 = vshll.u32 %v4930, %v4937
      %v4940 = vshrl.u32 %v4922, %v4938
      %v4941 = vor.u32 %v4939, %v4940
      %v4942 = vsub.s32 4294967266, %v4937
      %v4943 = vadd.s32 %v4942, 127
      %v4944 = vshll.u32 %v4943, 23
      %v4945 = vor.u32 4788187, %v4944
      %v4946 = vand.u32 2147483647, %v4945
      %v4948 = vcvt.s32.f32 %v4941
      %v4949 = vmul.f32 %v4948, %v4946
      %v4950 = vxor.u32 %v4949, 2147483648
      %v4951 = vsel %vm4868, %v4950, %v4949
      %v4952 = vsub.s32 4, %v4928
      %v4953 = vsel %vm4868, %v4952, %v4928
      %v4954 = vsel %vm4867, %v963, %v4951
      %v4955 = vsel %vm4867, 0, %v4953
      %v4956 = vcosq.f32.pop %v4954
      %v4957 = vsinq.f32.pop %v4954
      %vm4958 = vweird.f32 %v963
      %v4959 = vand.u32 %v4955, 3
      %vm4960 = vcmp.lt.s32.totalorder %v4959, 2
      %vm4961 = vcmp.eq.s32.totalorder %v4959, 0
      %v4962 = vxor.u32 %v4957, 2147483648
      %v4963 = vsel %vm4961, %v4956, %v4962
      %vm4964 = vcmp.eq.s32.totalorder %v4959, 2
      %v4965 = vxor.u32 %v4956, 2147483648
      %v4966 = vsel %vm4964, %v4965, %v4957
      %v4967 = vsel %vm4960, %v4963, %v4966
      %v4968 = vsel %vm4958, nan, %v4967
      %v4969 = vand.u32 2147483647, %v964
      %vm4970 = vcmp.le.f32.partialorder %v4969, 0.7853982
      %vm4971 = vcmp.lt.s32.totalorder %v964, 0
      %v4972 = vand.u32 %v964, 2139095040
      %v4973 = vshrl.u32 %v4972, 23
      %v4974 = vsub.s32 %v4973, 127
      %v4975 = vand.u32 2147483647, %v964
      %v4976 = vand.u32 %v4975, 8388607
      %v4977 = vor.u32 %v4976, 8388608
      %v4978 = vsub.s32 0, %v4977
      %v4979 = vadd.s32 %v4974, 1
      %vm4980 = vcmp.gt.s32.totalorder %v4979, 0
      %v4981 = vsel %vm4980, %v4979, 0
      %v4982 = vshrl.u32 %v4981, 5
      %v4983 = vand.u32 %v4981, 31
      %v4984 = vsub.s32 32, %v4983
      %v4985 = vshrl.u32 683565275, %v4984
      %v4986 = vshll.u32 683565275, %v4983
      %v4987 = vshrl.u32 2475754826, %v4984
      %v4988 = vor.u32 %v4986, %v4987
      %v4989 = vshll.u32 2475754826, %v4983
      %v4990 = vshrl.u32 2131351028, %v4984
      %v4991 = vor.u32 %v4989, %v4990
      %v4992 = vshll.u32 2131351028, %v4983
      %v4993 = vshrl.u32 2102212464, %v4984
      %v4994 = vor.u32 %v4992, %v4993
      %v4995 = vshll.u32 2102212464, %v4983
      %v4996 = vshrl.u32 920167782, %v4984
      %v4997 = vor.u32 %v4995, %v4996
      %v4998 = vshll.u32 920167782, %v4983
      %v4999 = vshrl.u32 1326507024, %v4984
      %v5000 = vor.u32 %v4998, %v4999
      %vm5001 = vcmp.lt.s32.totalorder %v4982, 1
      %vm5002 = vcmp.lt.s32.totalorder %v4982, 2
      %vm5003 = vcmp.lt.s32.totalorder %v4982, 3
      %vm5004 = vcmp.lt.s32.totalorder %v4982, 4
      %v5005 = vsel %vm5001, %v4985, %v4988
      %v5006 = vsel %vm5004, %v4994, 2102212464
      %v5007 = vsel %vm5003, %v4991, %v5006
      %v5008 = vsel %vm5002, %v5005, %v5007
      %v5009 = vsel %vm5001, %v4988, %v4991
      %v5010 = vsel %vm5004, %v4997, 920167782
      %v5011 = vsel %vm5003, %v4994, %v5010
      %v5012 = vsel %vm5002, %v5009, %v5011
      %v5013 = vsel %vm5001, %v4991, %v4994
      %v5014 = vsel %vm5004, %v5000, 1326507024
      %v5015 = vsel %vm5003, %v4997, %v5014
      %v5016 = vsel %vm5002, %v5013, %v5015
      %v5017 = vshll.u32 %v4977, 8
      %v5018 = vmul.u32.u64.compose %v5017, %v5016
      %v5019 = vextract.low.u32 %v5018
      %v5020 = vextract.high.u32 %v5018
      %v5021 = vmul.u32.u64.compose %v5017, %v5012
      %v5022 = vextract.low.u32 %v5021
      %v5023 = vextract.high.u32 %v5021
      %v5024 = vmul.u32 %v5017, %v5008
      %v5025 = vadd.s32 %v5020, %v5022
      %vm5026 = vc.u32 %v5020, %v5022
      %v5027 = vadd.s32 %v5023, 1
      %v5028 = vsel %vm5026, %v5027, %v5023
      %v5029 = vadd.s32 %v5024, %v5028
      %v5030 = vadd.s32 %v5029, 536870912
      %v5031 = vshrl.u32 %v5030, 30
      %v5032 = vshll.u32 %v5031, 30
      %v5033 = vsub.s32 %v5029, %v5032
      %vm5034 = vcmp.lt.s32.totalorder %v5033, 0
      %v5035 = vsub.s32 0, %v5033
      %v5036 = vsel %vm5034, %v5035, %v5033
      %v5037 = vclz %v5036
      %v5038 = vsub.s32 %v5037, 2
      %vm5039 = vcmp.gt.s32.totalorder 0, %v5038
      %v5040 = vsel %vm5039, 0, %v5038
      %v5041 = vsub.s32 32, %v5040
      %v5042 = vshll.u32 %v5033, %v5040
      %v5043 = vshrl.u32 %v5025, %v5041
      %v5044 = vor.u32 %v5042, %v5043
      %v5045 = vsub.s32 4294967266, %v5040
      %v5046 = vadd.s32 %v5045, 127
      %v5047 = vshll.u32 %v5046, 23
      %v5048 = vor.u32 4788187, %v5047
      %v5049 = vand.u32 2147483647, %v5048
      %v5051 = vcvt.s32.f32 %v5044
      %v5052 = vmul.f32 %v5051, %v5049
      %v5053 = vxor.u32 %v5052, 2147483648
      %v5054 = vsel %vm4971, %v5053, %v5052
      %v5055 = vsub.s32 4, %v5031
      %v5056 = vsel %vm4971, %v5055, %v5031
      %v5057 = vsel %vm4970, %v964, %v5054
      %v5058 = vsel %vm4970, 0, %v5056
      %v5059 = vcosq.f32.pop %v5057
      %v5060 = vsinq.f32.pop %v5057
      %vm5061 = vweird.f32 %v964
      %v5062 = vand.u32 %v5058, 3
      %vm5063 = vcmp.lt.s32.totalorder %v5062, 2
      %vm5064 = vcmp.eq.s32.totalorder %v5062, 0
      %v5065 = vxor.u32 %v5060, 2147483648
      %v5066 = vsel %vm5064, %v5059, %v5065
      %vm5067 = vcmp.eq.s32.totalorder %v5062, 2
      %v5068 = vxor.u32 %v5059, 2147483648
      %v5069 = vsel %vm5067, %v5068, %v5060
      %v5070 = vsel %vm5063, %v5066, %v5069
      %v5071 = vsel %vm5061, nan, %v5070
      %v5072 = vand.u32 2147483647, %v965
      %vm5073 = vcmp.le.f32.partialorder %v5072, 0.7853982
      %vm5074 = vcmp.lt.s32.totalorder %v965, 0
      %v5075 = vand.u32 %v965, 2139095040
      %v5076 = vshrl.u32 %v5075, 23
      %v5077 = vsub.s32 %v5076, 127
      %v5078 = vand.u32 2147483647, %v965
      %v5079 = vand.u32 %v5078, 8388607
      %v5080 = vor.u32 %v5079, 8388608
      %v5081 = vsub.s32 0, %v5080
      %v5082 = vadd.s32 %v5077, 1
      %vm5083 = vcmp.gt.s32.totalorder %v5082, 0
      %v5084 = vsel %vm5083, %v5082, 0
      %v5085 = vshrl.u32 %v5084, 5
      %v5086 = vand.u32 %v5084, 31
      %v5087 = vsub.s32 32, %v5086
      %v5088 = vshrl.u32 683565275, %v5087
      %v5089 = vshll.u32 683565275, %v5086
      %v5090 = vshrl.u32 2475754826, %v5087
      %v5091 = vor.u32 %v5089, %v5090
      %v5092 = vshll.u32 2475754826, %v5086
      %v5093 = vshrl.u32 2131351028, %v5087
      %v5094 = vor.u32 %v5092, %v5093
      %v5095 = vshll.u32 2131351028, %v5086
      %v5096 = vshrl.u32 2102212464, %v5087
      %v5097 = vor.u32 %v5095, %v5096
      %v5098 = vshll.u32 2102212464, %v5086
      %v5099 = vshrl.u32 920167782, %v5087
      %v5100 = vor.u32 %v5098, %v5099
      %v5101 = vshll.u32 920167782, %v5086
      %v5102 = vshrl.u32 1326507024, %v5087
      %v5103 = vor.u32 %v5101, %v5102
      %vm5104 = vcmp.lt.s32.totalorder %v5085, 1
      %vm5105 = vcmp.lt.s32.totalorder %v5085, 2
      %vm5106 = vcmp.lt.s32.totalorder %v5085, 3
      %vm5107 = vcmp.lt.s32.totalorder %v5085, 4
      %v5108 = vsel %vm5104, %v5088, %v5091
      %v5109 = vsel %vm5107, %v5097, 2102212464
      %v5110 = vsel %vm5106, %v5094, %v5109
      %v5111 = vsel %vm5105, %v5108, %v5110
      %v5112 = vsel %vm5104, %v5091, %v5094
      %v5113 = vsel %vm5107, %v5100, 920167782
      %v5114 = vsel %vm5106, %v5097, %v5113
      %v5115 = vsel %vm5105, %v5112, %v5114
      %v5116 = vsel %vm5104, %v5094, %v5097
      %v5117 = vsel %vm5107, %v5103, 1326507024
      %v5118 = vsel %vm5106, %v5100, %v5117
      %v5119 = vsel %vm5105, %v5116, %v5118
      %v5120 = vshll.u32 %v5080, 8
      %v5121 = vmul.u32.u64.compose %v5120, %v5119
      %v5122 = vextract.low.u32 %v5121
      %v5123 = vextract.high.u32 %v5121
      %v5124 = vmul.u32.u64.compose %v5120, %v5115
      %v5125 = vextract.low.u32 %v5124
      %v5126 = vextract.high.u32 %v5124
      %v5127 = vmul.u32 %v5120, %v5111
      %v5128 = vadd.s32 %v5123, %v5125
      %vm5129 = vc.u32 %v5123, %v5125
      %v5130 = vadd.s32 %v5126, 1
      %v5131 = vsel %vm5129, %v5130, %v5126
      %v5132 = vadd.s32 %v5127, %v5131
      %v5133 = vadd.s32 %v5132, 536870912
      %v5134 = vshrl.u32 %v5133, 30
      %v5135 = vshll.u32 %v5134, 30
      %v5136 = vsub.s32 %v5132, %v5135
      %vm5137 = vcmp.lt.s32.totalorder %v5136, 0
      %v5138 = vsub.s32 0, %v5136
      %v5139 = vsel %vm5137, %v5138, %v5136
      %v5140 = vclz %v5139
      %v5141 = vsub.s32 %v5140, 2
      %vm5142 = vcmp.gt.s32.totalorder 0, %v5141
      %v5143 = vsel %vm5142, 0, %v5141
      %v5144 = vsub.s32 32, %v5143
      %v5145 = vshll.u32 %v5136, %v5143
      %v5146 = vshrl.u32 %v5128, %v5144
      %v5147 = vor.u32 %v5145, %v5146
      %v5148 = vsub.s32 4294967266, %v5143
      %v5149 = vadd.s32 %v5148, 127
      %v5150 = vshll.u32 %v5149, 23
      %v5151 = vor.u32 4788187, %v5150
      %v5152 = vand.u32 2147483647, %v5151
      %v5154 = vcvt.s32.f32 %v5147
      %v5155 = vmul.f32 %v5154, %v5152
      %v5156 = vxor.u32 %v5155, 2147483648
      %v5157 = vsel %vm5074, %v5156, %v5155
      %v5158 = vsub.s32 4, %v5134
      %v5159 = vsel %vm5074, %v5158, %v5134
      %v5160 = vsel %vm5073, %v965, %v5157
      %v5161 = vsel %vm5073, 0, %v5159
      %v5162 = vcosq.f32.pop %v5160
      %v5163 = vsinq.f32.pop %v5160
      %vm5164 = vweird.f32 %v965
      %v5165 = vand.u32 %v5161, 3
      %vm5166 = vcmp.lt.s32.totalorder %v5165, 2
      %vm5167 = vcmp.eq.s32.totalorder %v5165, 0
      %v5168 = vxor.u32 %v5163, 2147483648
      %v5169 = vsel %vm5167, %v5162, %v5168
      %vm5170 = vcmp.eq.s32.totalorder %v5165, 2
      %v5171 = vxor.u32 %v5162, 2147483648
      %v5172 = vsel %vm5170, %v5171, %v5163
      %v5173 = vsel %vm5166, %v5169, %v5172
      %v5174 = vsel %vm5164, nan, %v5173
      %v5175 = vand.u32 2147483647, %v966
      %vm5176 = vcmp.le.f32.partialorder %v5175, 0.7853982
      %vm5177 = vcmp.lt.s32.totalorder %v966, 0
      %v5178 = vand.u32 %v966, 2139095040
      %v5179 = vshrl.u32 %v5178, 23
      %v5180 = vsub.s32 %v5179, 127
      %v5181 = vand.u32 2147483647, %v966
      %v5182 = vand.u32 %v5181, 8388607
      %v5183 = vor.u32 %v5182, 8388608
      %v5184 = vsub.s32 0, %v5183
      %v5185 = vadd.s32 %v5180, 1
      %vm5186 = vcmp.gt.s32.totalorder %v5185, 0
      %v5187 = vsel %vm5186, %v5185, 0
      %v5188 = vshrl.u32 %v5187, 5
      %v5189 = vand.u32 %v5187, 31
      %v5190 = vsub.s32 32, %v5189
      %v5191 = vshrl.u32 683565275, %v5190
      %v5192 = vshll.u32 683565275, %v5189
      %v5193 = vshrl.u32 2475754826, %v5190
      %v5194 = vor.u32 %v5192, %v5193
      %v5195 = vshll.u32 2475754826, %v5189
      %v5196 = vshrl.u32 2131351028, %v5190
      %v5197 = vor.u32 %v5195, %v5196
      %v5198 = vshll.u32 2131351028, %v5189
      %v5199 = vshrl.u32 2102212464, %v5190
      %v5200 = vor.u32 %v5198, %v5199
      %v5201 = vshll.u32 2102212464, %v5189
      %v5202 = vshrl.u32 920167782, %v5190
      %v5203 = vor.u32 %v5201, %v5202
      %v5204 = vshll.u32 920167782, %v5189
      %v5205 = vshrl.u32 1326507024, %v5190
      %v5206 = vor.u32 %v5204, %v5205
      %vm5207 = vcmp.lt.s32.totalorder %v5188, 1
      %vm5208 = vcmp.lt.s32.totalorder %v5188, 2
      %vm5209 = vcmp.lt.s32.totalorder %v5188, 3
      %vm5210 = vcmp.lt.s32.totalorder %v5188, 4
      %v5211 = vsel %vm5207, %v5191, %v5194
      %v5212 = vsel %vm5210, %v5200, 2102212464
      %v5213 = vsel %vm5209, %v5197, %v5212
      %v5214 = vsel %vm5208, %v5211, %v5213
      %v5215 = vsel %vm5207, %v5194, %v5197
      %v5216 = vsel %vm5210, %v5203, 920167782
      %v5217 = vsel %vm5209, %v5200, %v5216
      %v5218 = vsel %vm5208, %v5215, %v5217
      %v5219 = vsel %vm5207, %v5197, %v5200
      %v5220 = vsel %vm5210, %v5206, 1326507024
      %v5221 = vsel %vm5209, %v5203, %v5220
      %v5222 = vsel %vm5208, %v5219, %v5221
      %v5223 = vshll.u32 %v5183, 8
      %v5224 = vmul.u32.u64.compose %v5223, %v5222
      %v5225 = vextract.low.u32 %v5224
      %v5226 = vextract.high.u32 %v5224
      %v5227 = vmul.u32.u64.compose %v5223, %v5218
      %v5228 = vextract.low.u32 %v5227
      %v5229 = vextract.high.u32 %v5227
      %v5230 = vmul.u32 %v5223, %v5214
      %v5231 = vadd.s32 %v5226, %v5228
      %vm5232 = vc.u32 %v5226, %v5228
      %v5233 = vadd.s32 %v5229, 1
      %v5234 = vsel %vm5232, %v5233, %v5229
      %v5235 = vadd.s32 %v5230, %v5234
      %v5236 = vadd.s32 %v5235, 536870912
      %v5237 = vshrl.u32 %v5236, 30
      %v5238 = vshll.u32 %v5237, 30
      %v5239 = vsub.s32 %v5235, %v5238
      %vm5240 = vcmp.lt.s32.totalorder %v5239, 0
      %v5241 = vsub.s32 0, %v5239
      %v5242 = vsel %vm5240, %v5241, %v5239
      %v5243 = vclz %v5242
      %v5244 = vsub.s32 %v5243, 2
      %vm5245 = vcmp.gt.s32.totalorder 0, %v5244
      %v5246 = vsel %vm5245, 0, %v5244
      %v5247 = vsub.s32 32, %v5246
      %v5248 = vshll.u32 %v5239, %v5246
      %v5249 = vshrl.u32 %v5231, %v5247
      %v5250 = vor.u32 %v5248, %v5249
      %v5251 = vsub.s32 4294967266, %v5246
      %v5252 = vadd.s32 %v5251, 127
      %v5253 = vshll.u32 %v5252, 23
      %v5254 = vor.u32 4788187, %v5253
      %v5255 = vand.u32 2147483647, %v5254
      %v5257 = vcvt.s32.f32 %v5250
      %v5258 = vmul.f32 %v5257, %v5255
      %v5259 = vxor.u32 %v5258, 2147483648
      %v5260 = vsel %vm5177, %v5259, %v5258
      %v5261 = vsub.s32 4, %v5237
      %v5262 = vsel %vm5177, %v5261, %v5237
      %v5263 = vsel %vm5176, %v966, %v5260
      %v5264 = vsel %vm5176, 0, %v5262
      %v5265 = vcosq.f32.pop %v5263
      %v5266 = vsinq.f32.pop %v5263
      %vm5267 = vweird.f32 %v966
      %v5268 = vand.u32 %v5264, 3
      %vm5269 = vcmp.lt.s32.totalorder %v5268, 2
      %vm5270 = vcmp.eq.s32.totalorder %v5268, 0
      %v5271 = vxor.u32 %v5266, 2147483648
      %v5272 = vsel %vm5270, %v5265, %v5271
      %vm5273 = vcmp.eq.s32.totalorder %v5268, 2
      %v5274 = vxor.u32 %v5265, 2147483648
      %v5275 = vsel %vm5273, %v5274, %v5266
      %v5276 = vsel %vm5269, %v5272, %v5275
      %v5277 = vsel %vm5267, nan, %v5276
      %v5278 = vand.u32 2147483647, %v967
      %vm5279 = vcmp.le.f32.partialorder %v5278, 0.7853982
      %vm5280 = vcmp.lt.s32.totalorder %v967, 0
      %v5281 = vand.u32 %v967, 2139095040
      %v5282 = vshrl.u32 %v5281, 23
      %v5283 = vsub.s32 %v5282, 127
      %v5284 = vand.u32 2147483647, %v967
      %v5285 = vand.u32 %v5284, 8388607
      %v5286 = vor.u32 %v5285, 8388608
      %v5287 = vsub.s32 0, %v5286
      %v5288 = vadd.s32 %v5283, 1
      %vm5289 = vcmp.gt.s32.totalorder %v5288, 0
      %v5290 = vsel %vm5289, %v5288, 0
      %v5291 = vshrl.u32 %v5290, 5
      %v5292 = vand.u32 %v5290, 31
      %v5293 = vsub.s32 32, %v5292
      %v5294 = vshrl.u32 683565275, %v5293
      %v5295 = vshll.u32 683565275, %v5292
      %v5296 = vshrl.u32 2475754826, %v5293
      %v5297 = vor.u32 %v5295, %v5296
      %v5298 = vshll.u32 2475754826, %v5292
      %v5299 = vshrl.u32 2131351028, %v5293
      %v5300 = vor.u32 %v5298, %v5299
      %v5301 = vshll.u32 2131351028, %v5292
      %v5302 = vshrl.u32 2102212464, %v5293
      %v5303 = vor.u32 %v5301, %v5302
      %v5304 = vshll.u32 2102212464, %v5292
      %v5305 = vshrl.u32 920167782, %v5293
      %v5306 = vor.u32 %v5304, %v5305
      %v5307 = vshll.u32 920167782, %v5292
      %v5308 = vshrl.u32 1326507024, %v5293
      %v5309 = vor.u32 %v5307, %v5308
      %vm5310 = vcmp.lt.s32.totalorder %v5291, 1
      %vm5311 = vcmp.lt.s32.totalorder %v5291, 2
      %vm5312 = vcmp.lt.s32.totalorder %v5291, 3
      %vm5313 = vcmp.lt.s32.totalorder %v5291, 4
      %v5314 = vsel %vm5310, %v5294, %v5297
      %v5315 = vsel %vm5313, %v5303, 2102212464
      %v5316 = vsel %vm5312, %v5300, %v5315
      %v5317 = vsel %vm5311, %v5314, %v5316
      %v5318 = vsel %vm5310, %v5297, %v5300
      %v5319 = vsel %vm5313, %v5306, 920167782
      %v5320 = vsel %vm5312, %v5303, %v5319
      %v5321 = vsel %vm5311, %v5318, %v5320
      %v5322 = vsel %vm5310, %v5300, %v5303
      %v5323 = vsel %vm5313, %v5309, 1326507024
      %v5324 = vsel %vm5312, %v5306, %v5323
      %v5325 = vsel %vm5311, %v5322, %v5324
      %v5326 = vshll.u32 %v5286, 8
      %v5327 = vmul.u32.u64.compose %v5326, %v5325
      %v5328 = vextract.low.u32 %v5327
      %v5329 = vextract.high.u32 %v5327
      %v5330 = vmul.u32.u64.compose %v5326, %v5321
      %v5331 = vextract.low.u32 %v5330
      %v5332 = vextract.high.u32 %v5330
      %v5333 = vmul.u32 %v5326, %v5317
      %v5334 = vadd.s32 %v5329, %v5331
      %vm5335 = vc.u32 %v5329, %v5331
      %v5336 = vadd.s32 %v5332, 1
      %v5337 = vsel %vm5335, %v5336, %v5332
      %v5338 = vadd.s32 %v5333, %v5337
      %v5339 = vadd.s32 %v5338, 536870912
      %v5340 = vshrl.u32 %v5339, 30
      %v5341 = vshll.u32 %v5340, 30
      %v5342 = vsub.s32 %v5338, %v5341
      %vm5343 = vcmp.lt.s32.totalorder %v5342, 0
      %v5344 = vsub.s32 0, %v5342
      %v5345 = vsel %vm5343, %v5344, %v5342
      %v5346 = vclz %v5345
      %v5347 = vsub.s32 %v5346, 2
      %vm5348 = vcmp.gt.s32.totalorder 0, %v5347
      %v5349 = vsel %vm5348, 0, %v5347
      %v5350 = vsub.s32 32, %v5349
      %v5351 = vshll.u32 %v5342, %v5349
      %v5352 = vshrl.u32 %v5334, %v5350
      %v5353 = vor.u32 %v5351, %v5352
      %v5354 = vsub.s32 4294967266, %v5349
      %v5355 = vadd.s32 %v5354, 127
      %v5356 = vshll.u32 %v5355, 23
      %v5357 = vor.u32 4788187, %v5356
      %v5358 = vand.u32 2147483647, %v5357
      %v5360 = vcvt.s32.f32 %v5353
      %v5361 = vmul.f32 %v5360, %v5358
      %v5362 = vxor.u32 %v5361, 2147483648
      %v5363 = vsel %vm5280, %v5362, %v5361
      %v5364 = vsub.s32 4, %v5340
      %v5365 = vsel %vm5280, %v5364, %v5340
      %v5366 = vsel %vm5279, %v967, %v5363
      %v5367 = vsel %vm5279, 0, %v5365
      %v5368 = vcosq.f32.pop %v5366
      %v5369 = vsinq.f32.pop %v5366
      %vm5370 = vweird.f32 %v967
      %v5371 = vand.u32 %v5367, 3
      %vm5372 = vcmp.lt.s32.totalorder %v5371, 2
      %vm5373 = vcmp.eq.s32.totalorder %v5371, 0
      %v5374 = vxor.u32 %v5369, 2147483648
      %v5375 = vsel %vm5373, %v5368, %v5374
      %vm5376 = vcmp.eq.s32.totalorder %v5371, 2
      %v5377 = vxor.u32 %v5368, 2147483648
      %v5378 = vsel %vm5376, %v5377, %v5369
      %v5379 = vsel %vm5372, %v5375, %v5378
      %v5380 = vsel %vm5370, nan, %v5379
      %v5381 = vand.u32 2147483647, %v968
      %vm5382 = vcmp.le.f32.partialorder %v5381, 0.7853982
      %vm5383 = vcmp.lt.s32.totalorder %v968, 0
      %v5384 = vand.u32 %v968, 2139095040
      %v5385 = vshrl.u32 %v5384, 23
      %v5386 = vsub.s32 %v5385, 127
      %v5387 = vand.u32 2147483647, %v968
      %v5388 = vand.u32 %v5387, 8388607
      %v5389 = vor.u32 %v5388, 8388608
      %v5390 = vsub.s32 0, %v5389
      %v5391 = vadd.s32 %v5386, 1
      %vm5392 = vcmp.gt.s32.totalorder %v5391, 0
      %v5393 = vsel %vm5392, %v5391, 0
      %v5394 = vshrl.u32 %v5393, 5
      %v5395 = vand.u32 %v5393, 31
      %v5396 = vsub.s32 32, %v5395
      %v5397 = vshrl.u32 683565275, %v5396
      %v5398 = vshll.u32 683565275, %v5395
      %v5399 = vshrl.u32 2475754826, %v5396
      %v5400 = vor.u32 %v5398, %v5399
      %v5401 = vshll.u32 2475754826, %v5395
      %v5402 = vshrl.u32 2131351028, %v5396
      %v5403 = vor.u32 %v5401, %v5402
      %v5404 = vshll.u32 2131351028, %v5395
      %v5405 = vshrl.u32 2102212464, %v5396
      %v5406 = vor.u32 %v5404, %v5405
      %v5407 = vshll.u32 2102212464, %v5395
      %v5408 = vshrl.u32 920167782, %v5396
      %v5409 = vor.u32 %v5407, %v5408
      %v5410 = vshll.u32 920167782, %v5395
      %v5411 = vshrl.u32 1326507024, %v5396
      %v5412 = vor.u32 %v5410, %v5411
      %vm5413 = vcmp.lt.s32.totalorder %v5394, 1
      %vm5414 = vcmp.lt.s32.totalorder %v5394, 2
      %vm5415 = vcmp.lt.s32.totalorder %v5394, 3
      %vm5416 = vcmp.lt.s32.totalorder %v5394, 4
      %v5417 = vsel %vm5413, %v5397, %v5400
      %v5418 = vsel %vm5416, %v5406, 2102212464
      %v5419 = vsel %vm5415, %v5403, %v5418
      %v5420 = vsel %vm5414, %v5417, %v5419
      %v5421 = vsel %vm5413, %v5400, %v5403
      %v5422 = vsel %vm5416, %v5409, 920167782
      %v5423 = vsel %vm5415, %v5406, %v5422
      %v5424 = vsel %vm5414, %v5421, %v5423
      %v5425 = vsel %vm5413, %v5403, %v5406
      %v5426 = vsel %vm5416, %v5412, 1326507024
      %v5427 = vsel %vm5415, %v5409, %v5426
      %v5428 = vsel %vm5414, %v5425, %v5427
      %v5429 = vshll.u32 %v5389, 8
      %v5430 = vmul.u32.u64.compose %v5429, %v5428
      %v5431 = vextract.low.u32 %v5430
      %v5432 = vextract.high.u32 %v5430
      %v5433 = vmul.u32.u64.compose %v5429, %v5424
      %v5434 = vextract.low.u32 %v5433
      %v5435 = vextract.high.u32 %v5433
      %v5436 = vmul.u32 %v5429, %v5420
      %v5437 = vadd.s32 %v5432, %v5434
      %vm5438 = vc.u32 %v5432, %v5434
      %v5439 = vadd.s32 %v5435, 1
      %v5440 = vsel %vm5438, %v5439, %v5435
      %v5441 = vadd.s32 %v5436, %v5440
      %v5442 = vadd.s32 %v5441, 536870912
      %v5443 = vshrl.u32 %v5442, 30
      %v5444 = vshll.u32 %v5443, 30
      %v5445 = vsub.s32 %v5441, %v5444
      %vm5446 = vcmp.lt.s32.totalorder %v5445, 0
      %v5447 = vsub.s32 0, %v5445
      %v5448 = vsel %vm5446, %v5447, %v5445
      %v5449 = vclz %v5448
      %v5450 = vsub.s32 %v5449, 2
      %vm5451 = vcmp.gt.s32.totalorder 0, %v5450
      %v5452 = vsel %vm5451, 0, %v5450
      %v5453 = vsub.s32 32, %v5452
      %v5454 = vshll.u32 %v5445, %v5452
      %v5455 = vshrl.u32 %v5437, %v5453
      %v5456 = vor.u32 %v5454, %v5455
      %v5457 = vsub.s32 4294967266, %v5452
      %v5458 = vadd.s32 %v5457, 127
      %v5459 = vshll.u32 %v5458, 23
      %v5460 = vor.u32 4788187, %v5459
      %v5461 = vand.u32 2147483647, %v5460
      %v5463 = vcvt.s32.f32 %v5456
      %v5464 = vmul.f32 %v5463, %v5461
      %v5465 = vxor.u32 %v5464, 2147483648
      %v5466 = vsel %vm5383, %v5465, %v5464
      %v5467 = vsub.s32 4, %v5443
      %v5468 = vsel %vm5383, %v5467, %v5443
      %v5469 = vsel %vm5382, %v968, %v5466
      %v5470 = vsel %vm5382, 0, %v5468
      %v5471 = vcosq.f32.pop %v5469
      %v5472 = vsinq.f32.pop %v5469
      %vm5473 = vweird.f32 %v968
      %v5474 = vand.u32 %v5470, 3
      %vm5475 = vcmp.lt.s32.totalorder %v5474, 2
      %vm5476 = vcmp.eq.s32.totalorder %v5474, 0
      %v5477 = vxor.u32 %v5472, 2147483648
      %v5478 = vsel %vm5476, %v5471, %v5477
      %vm5479 = vcmp.eq.s32.totalorder %v5474, 2
      %v5480 = vxor.u32 %v5471, 2147483648
      %v5481 = vsel %vm5479, %v5480, %v5472
      %v5482 = vsel %vm5475, %v5478, %v5481
      %v5483 = vsel %vm5473, nan, %v5482
      %v5484 = vand.u32 2147483647, %v969
      %vm5485 = vcmp.le.f32.partialorder %v5484, 0.7853982
      %vm5486 = vcmp.lt.s32.totalorder %v969, 0
      %v5487 = vand.u32 %v969, 2139095040
      %v5488 = vshrl.u32 %v5487, 23
      %v5489 = vsub.s32 %v5488, 127
      %v5490 = vand.u32 2147483647, %v969
      %v5491 = vand.u32 %v5490, 8388607
      %v5492 = vor.u32 %v5491, 8388608
      %v5493 = vsub.s32 0, %v5492
      %v5494 = vadd.s32 %v5489, 1
      %vm5495 = vcmp.gt.s32.totalorder %v5494, 0
      %v5496 = vsel %vm5495, %v5494, 0
      %v5497 = vshrl.u32 %v5496, 5
      %v5498 = vand.u32 %v5496, 31
      %v5499 = vsub.s32 32, %v5498
      %v5500 = vshrl.u32 683565275, %v5499
      %v5501 = vshll.u32 683565275, %v5498
      %v5502 = vshrl.u32 2475754826, %v5499
      %v5503 = vor.u32 %v5501, %v5502
      %v5504 = vshll.u32 2475754826, %v5498
      %v5505 = vshrl.u32 2131351028, %v5499
      %v5506 = vor.u32 %v5504, %v5505
      %v5507 = vshll.u32 2131351028, %v5498
      %v5508 = vshrl.u32 2102212464, %v5499
      %v5509 = vor.u32 %v5507, %v5508
      %v5510 = vshll.u32 2102212464, %v5498
      %v5511 = vshrl.u32 920167782, %v5499
      %v5512 = vor.u32 %v5510, %v5511
      %v5513 = vshll.u32 920167782, %v5498
      %v5514 = vshrl.u32 1326507024, %v5499
      %v5515 = vor.u32 %v5513, %v5514
      %vm5516 = vcmp.lt.s32.totalorder %v5497, 1
      %vm5517 = vcmp.lt.s32.totalorder %v5497, 2
      %vm5518 = vcmp.lt.s32.totalorder %v5497, 3
      %vm5519 = vcmp.lt.s32.totalorder %v5497, 4
      %v5520 = vsel %vm5516, %v5500, %v5503
      %v5521 = vsel %vm5519, %v5509, 2102212464
      %v5522 = vsel %vm5518, %v5506, %v5521
      %v5523 = vsel %vm5517, %v5520, %v5522
      %v5524 = vsel %vm5516, %v5503, %v5506
      %v5525 = vsel %vm5519, %v5512, 920167782
      %v5526 = vsel %vm5518, %v5509, %v5525
      %v5527 = vsel %vm5517, %v5524, %v5526
      %v5528 = vsel %vm5516, %v5506, %v5509
      %v5529 = vsel %vm5519, %v5515, 1326507024
      %v5530 = vsel %vm5518, %v5512, %v5529
      %v5531 = vsel %vm5517, %v5528, %v5530
      %v5532 = vshll.u32 %v5492, 8
      %v5533 = vmul.u32.u64.compose %v5532, %v5531
      %v5534 = vextract.low.u32 %v5533
      %v5535 = vextract.high.u32 %v5533
      %v5536 = vmul.u32.u64.compose %v5532, %v5527
      %v5537 = vextract.low.u32 %v5536
      %v5538 = vextract.high.u32 %v5536
      %v5539 = vmul.u32 %v5532, %v5523
      %v5540 = vadd.s32 %v5535, %v5537
      %vm5541 = vc.u32 %v5535, %v5537
      %v5542 = vadd.s32 %v5538, 1
      %v5543 = vsel %vm5541, %v5542, %v5538
      %v5544 = vadd.s32 %v5539, %v5543
      %v5545 = vadd.s32 %v5544, 536870912
      %v5546 = vshrl.u32 %v5545, 30
      %v5547 = vshll.u32 %v5546, 30
      %v5548 = vsub.s32 %v5544, %v5547
      %vm5549 = vcmp.lt.s32.totalorder %v5548, 0
      %v5550 = vsub.s32 0, %v5548
      %v5551 = vsel %vm5549, %v5550, %v5548
      %v5552 = vclz %v5551
      %v5553 = vsub.s32 %v5552, 2
      %vm5554 = vcmp.gt.s32.totalorder 0, %v5553
      %v5555 = vsel %vm5554, 0, %v5553
      %v5556 = vsub.s32 32, %v5555
      %v5557 = vshll.u32 %v5548, %v5555
      %v5558 = vshrl.u32 %v5540, %v5556
      %v5559 = vor.u32 %v5557, %v5558
      %v5560 = vsub.s32 4294967266, %v5555
      %v5561 = vadd.s32 %v5560, 127
      %v5562 = vshll.u32 %v5561, 23
      %v5563 = vor.u32 4788187, %v5562
      %v5564 = vand.u32 2147483647, %v5563
      %v5566 = vcvt.s32.f32 %v5559
      %v5567 = vmul.f32 %v5566, %v5564
      %v5568 = vxor.u32 %v5567, 2147483648
      %v5569 = vsel %vm5486, %v5568, %v5567
      %v5570 = vsub.s32 4, %v5546
      %v5571 = vsel %vm5486, %v5570, %v5546
      %v5572 = vsel %vm5485, %v969, %v5569
      %v5573 = vsel %vm5485, 0, %v5571
      %v5574 = vcosq.f32.pop %v5572
      %v5575 = vsinq.f32.pop %v5572
      %vm5576 = vweird.f32 %v969
      %v5577 = vand.u32 %v5573, 3
      %vm5578 = vcmp.lt.s32.totalorder %v5577, 2
      %vm5579 = vcmp.eq.s32.totalorder %v5577, 0
      %v5580 = vxor.u32 %v5575, 2147483648
      %v5581 = vsel %vm5579, %v5574, %v5580
      %vm5582 = vcmp.eq.s32.totalorder %v5577, 2
      %v5583 = vxor.u32 %v5574, 2147483648
      %v5584 = vsel %vm5582, %v5583, %v5575
      %v5585 = vsel %vm5578, %v5581, %v5584
      %v5586 = vsel %vm5576, nan, %v5585
      %v5587 = vand.u32 2147483647, %v970
      %vm5588 = vcmp.le.f32.partialorder %v5587, 0.7853982
      %vm5589 = vcmp.lt.s32.totalorder %v970, 0
      %v5590 = vand.u32 %v970, 2139095040
      %v5591 = vshrl.u32 %v5590, 23
      %v5592 = vsub.s32 %v5591, 127
      %v5593 = vand.u32 2147483647, %v970
      %v5594 = vand.u32 %v5593, 8388607
      %v5595 = vor.u32 %v5594, 8388608
      %v5596 = vsub.s32 0, %v5595
      %v5597 = vadd.s32 %v5592, 1
      %vm5598 = vcmp.gt.s32.totalorder %v5597, 0
      %v5599 = vsel %vm5598, %v5597, 0
      %v5600 = vshrl.u32 %v5599, 5
      %v5601 = vand.u32 %v5599, 31
      %v5602 = vsub.s32 32, %v5601
      %v5603 = vshrl.u32 683565275, %v5602
      %v5604 = vshll.u32 683565275, %v5601
      %v5605 = vshrl.u32 2475754826, %v5602
      %v5606 = vor.u32 %v5604, %v5605
      %v5607 = vshll.u32 2475754826, %v5601
      %v5608 = vshrl.u32 2131351028, %v5602
      %v5609 = vor.u32 %v5607, %v5608
      %v5610 = vshll.u32 2131351028, %v5601
      %v5611 = vshrl.u32 2102212464, %v5602
      %v5612 = vor.u32 %v5610, %v5611
      %v5613 = vshll.u32 2102212464, %v5601
      %v5614 = vshrl.u32 920167782, %v5602
      %v5615 = vor.u32 %v5613, %v5614
      %v5616 = vshll.u32 920167782, %v5601
      %v5617 = vshrl.u32 1326507024, %v5602
      %v5618 = vor.u32 %v5616, %v5617
      %vm5619 = vcmp.lt.s32.totalorder %v5600, 1
      %vm5620 = vcmp.lt.s32.totalorder %v5600, 2
      %vm5621 = vcmp.lt.s32.totalorder %v5600, 3
      %vm5622 = vcmp.lt.s32.totalorder %v5600, 4
      %v5623 = vsel %vm5619, %v5603, %v5606
      %v5624 = vsel %vm5622, %v5612, 2102212464
      %v5625 = vsel %vm5621, %v5609, %v5624
      %v5626 = vsel %vm5620, %v5623, %v5625
      %v5627 = vsel %vm5619, %v5606, %v5609
      %v5628 = vsel %vm5622, %v5615, 920167782
      %v5629 = vsel %vm5621, %v5612, %v5628
      %v5630 = vsel %vm5620, %v5627, %v5629
      %v5631 = vsel %vm5619, %v5609, %v5612
      %v5632 = vsel %vm5622, %v5618, 1326507024
      %v5633 = vsel %vm5621, %v5615, %v5632
      %v5634 = vsel %vm5620, %v5631, %v5633
      %v5635 = vshll.u32 %v5595, 8
      %v5636 = vmul.u32.u64.compose %v5635, %v5634
      %v5637 = vextract.low.u32 %v5636
      %v5638 = vextract.high.u32 %v5636
      %v5639 = vmul.u32.u64.compose %v5635, %v5630
      %v5640 = vextract.low.u32 %v5639
      %v5641 = vextract.high.u32 %v5639
      %v5642 = vmul.u32 %v5635, %v5626
      %v5643 = vadd.s32 %v5638, %v5640
      %vm5644 = vc.u32 %v5638, %v5640
      %v5645 = vadd.s32 %v5641, 1
      %v5646 = vsel %vm5644, %v5645, %v5641
      %v5647 = vadd.s32 %v5642, %v5646
      %v5648 = vadd.s32 %v5647, 536870912
      %v5649 = vshrl.u32 %v5648, 30
      %v5650 = vshll.u32 %v5649, 30
      %v5651 = vsub.s32 %v5647, %v5650
      %vm5652 = vcmp.lt.s32.totalorder %v5651, 0
      %v5653 = vsub.s32 0, %v5651
      %v5654 = vsel %vm5652, %v5653, %v5651
      %v5655 = vclz %v5654
      %v5656 = vsub.s32 %v5655, 2
      %vm5657 = vcmp.gt.s32.totalorder 0, %v5656
      %v5658 = vsel %vm5657, 0, %v5656
      %v5659 = vsub.s32 32, %v5658
      %v5660 = vshll.u32 %v5651, %v5658
      %v5661 = vshrl.u32 %v5643, %v5659
      %v5662 = vor.u32 %v5660, %v5661
      %v5663 = vsub.s32 4294967266, %v5658
      %v5664 = vadd.s32 %v5663, 127
      %v5665 = vshll.u32 %v5664, 23
      %v5666 = vor.u32 4788187, %v5665
      %v5667 = vand.u32 2147483647, %v5666
      %v5669 = vcvt.s32.f32 %v5662
      %v5670 = vmul.f32 %v5669, %v5667
      %v5671 = vxor.u32 %v5670, 2147483648
      %v5672 = vsel %vm5589, %v5671, %v5670
      %v5673 = vsub.s32 4, %v5649
      %v5674 = vsel %vm5589, %v5673, %v5649
      %v5675 = vsel %vm5588, %v970, %v5672
      %v5676 = vsel %vm5588, 0, %v5674
      %v5677 = vcosq.f32.pop %v5675
      %v5678 = vsinq.f32.pop %v5675
      %vm5679 = vweird.f32 %v970
      %v5680 = vand.u32 %v5676, 3
      %vm5681 = vcmp.lt.s32.totalorder %v5680, 2
      %vm5682 = vcmp.eq.s32.totalorder %v5680, 0
      %v5683 = vxor.u32 %v5678, 2147483648
      %v5684 = vsel %vm5682, %v5677, %v5683
      %vm5685 = vcmp.eq.s32.totalorder %v5680, 2
      %v5686 = vxor.u32 %v5677, 2147483648
      %v5687 = vsel %vm5685, %v5686, %v5678
      %v5688 = vsel %vm5681, %v5684, %v5687
      %v5689 = vsel %vm5679, nan, %v5688
      %v5690 = vand.u32 2147483647, %v971
      %vm5691 = vcmp.le.f32.partialorder %v5690, 0.7853982
      %vm5692 = vcmp.lt.s32.totalorder %v971, 0
      %v5693 = vand.u32 %v971, 2139095040
      %v5694 = vshrl.u32 %v5693, 23
      %v5695 = vsub.s32 %v5694, 127
      %v5696 = vand.u32 2147483647, %v971
      %v5697 = vand.u32 %v5696, 8388607
      %v5698 = vor.u32 %v5697, 8388608
      %v5699 = vsub.s32 0, %v5698
      %v5700 = vadd.s32 %v5695, 1
      %vm5701 = vcmp.gt.s32.totalorder %v5700, 0
      %v5702 = vsel %vm5701, %v5700, 0
      %v5703 = vshrl.u32 %v5702, 5
      %v5704 = vand.u32 %v5702, 31
      %v5705 = vsub.s32 32, %v5704
      %v5706 = vshrl.u32 683565275, %v5705
      %v5707 = vshll.u32 683565275, %v5704
      %v5708 = vshrl.u32 2475754826, %v5705
      %v5709 = vor.u32 %v5707, %v5708
      %v5710 = vshll.u32 2475754826, %v5704
      %v5711 = vshrl.u32 2131351028, %v5705
      %v5712 = vor.u32 %v5710, %v5711
      %v5713 = vshll.u32 2131351028, %v5704
      %v5714 = vshrl.u32 2102212464, %v5705
      %v5715 = vor.u32 %v5713, %v5714
      %v5716 = vshll.u32 2102212464, %v5704
      %v5717 = vshrl.u32 920167782, %v5705
      %v5718 = vor.u32 %v5716, %v5717
      %v5719 = vshll.u32 920167782, %v5704
      %v5720 = vshrl.u32 1326507024, %v5705
      %v5721 = vor.u32 %v5719, %v5720
      %vm5722 = vcmp.lt.s32.totalorder %v5703, 1
      %vm5723 = vcmp.lt.s32.totalorder %v5703, 2
      %vm5724 = vcmp.lt.s32.totalorder %v5703, 3
      %vm5725 = vcmp.lt.s32.totalorder %v5703, 4
      %v5726 = vsel %vm5722, %v5706, %v5709
      %v5727 = vsel %vm5725, %v5715, 2102212464
      %v5728 = vsel %vm5724, %v5712, %v5727
      %v5729 = vsel %vm5723, %v5726, %v5728
      %v5730 = vsel %vm5722, %v5709, %v5712
      %v5731 = vsel %vm5725, %v5718, 920167782
      %v5732 = vsel %vm5724, %v5715, %v5731
      %v5733 = vsel %vm5723, %v5730, %v5732
      %v5734 = vsel %vm5722, %v5712, %v5715
      %v5735 = vsel %vm5725, %v5721, 1326507024
      %v5736 = vsel %vm5724, %v5718, %v5735
      %v5737 = vsel %vm5723, %v5734, %v5736
      %v5738 = vshll.u32 %v5698, 8
      %v5739 = vmul.u32.u64.compose %v5738, %v5737
      %v5740 = vextract.low.u32 %v5739
      %v5741 = vextract.high.u32 %v5739
      %v5742 = vmul.u32.u64.compose %v5738, %v5733
      %v5743 = vextract.low.u32 %v5742
      %v5744 = vextract.high.u32 %v5742
      %v5745 = vmul.u32 %v5738, %v5729
      %v5746 = vadd.s32 %v5741, %v5743
      %vm5747 = vc.u32 %v5741, %v5743
      %v5748 = vadd.s32 %v5744, 1
      %v5749 = vsel %vm5747, %v5748, %v5744
      %v5750 = vadd.s32 %v5745, %v5749
      %v5751 = vadd.s32 %v5750, 536870912
      %v5752 = vshrl.u32 %v5751, 30
      %v5753 = vshll.u32 %v5752, 30
      %v5754 = vsub.s32 %v5750, %v5753
      %vm5755 = vcmp.lt.s32.totalorder %v5754, 0
      %v5756 = vsub.s32 0, %v5754
      %v5757 = vsel %vm5755, %v5756, %v5754
      %v5758 = vclz %v5757
      %v5759 = vsub.s32 %v5758, 2
      %vm5760 = vcmp.gt.s32.totalorder 0, %v5759
      %v5761 = vsel %vm5760, 0, %v5759
      %v5762 = vsub.s32 32, %v5761
      %v5763 = vshll.u32 %v5754, %v5761
      %v5764 = vshrl.u32 %v5746, %v5762
      %v5765 = vor.u32 %v5763, %v5764
      %v5766 = vsub.s32 4294967266, %v5761
      %v5767 = vadd.s32 %v5766, 127
      %v5768 = vshll.u32 %v5767, 23
      %v5769 = vor.u32 4788187, %v5768
      %v5770 = vand.u32 2147483647, %v5769
      %v5772 = vcvt.s32.f32 %v5765
      %v5773 = vmul.f32 %v5772, %v5770
      %v5774 = vxor.u32 %v5773, 2147483648
      %v5775 = vsel %vm5692, %v5774, %v5773
      %v5776 = vsub.s32 4, %v5752
      %v5777 = vsel %vm5692, %v5776, %v5752
      %v5778 = vsel %vm5691, %v971, %v5775
      %v5779 = vsel %vm5691, 0, %v5777
      %v5780 = vcosq.f32.pop %v5778
      %v5781 = vsinq.f32.pop %v5778
      %vm5782 = vweird.f32 %v971
      %v5783 = vand.u32 %v5779, 3
      %vm5784 = vcmp.lt.s32.totalorder %v5783, 2
      %vm5785 = vcmp.eq.s32.totalorder %v5783, 0
      %v5786 = vxor.u32 %v5781, 2147483648
      %v5787 = vsel %vm5785, %v5780, %v5786
      %vm5788 = vcmp.eq.s32.totalorder %v5783, 2
      %v5789 = vxor.u32 %v5780, 2147483648
      %v5790 = vsel %vm5788, %v5789, %v5781
      %v5791 = vsel %vm5784, %v5787, %v5790
      %v5792 = vsel %vm5782, nan, %v5791
      %v5793 = vand.u32 2147483647, %v972
      %vm5794 = vcmp.le.f32.partialorder %v5793, 0.7853982
      %vm5795 = vcmp.lt.s32.totalorder %v972, 0
      %v5796 = vand.u32 %v972, 2139095040
      %v5797 = vshrl.u32 %v5796, 23
      %v5798 = vsub.s32 %v5797, 127
      %v5799 = vand.u32 2147483647, %v972
      %v5800 = vand.u32 %v5799, 8388607
      %v5801 = vor.u32 %v5800, 8388608
      %v5802 = vsub.s32 0, %v5801
      %v5803 = vadd.s32 %v5798, 1
      %vm5804 = vcmp.gt.s32.totalorder %v5803, 0
      %v5805 = vsel %vm5804, %v5803, 0
      %v5806 = vshrl.u32 %v5805, 5
      %v5807 = vand.u32 %v5805, 31
      %v5808 = vsub.s32 32, %v5807
      %v5809 = vshrl.u32 683565275, %v5808
      %v5810 = vshll.u32 683565275, %v5807
      %v5811 = vshrl.u32 2475754826, %v5808
      %v5812 = vor.u32 %v5810, %v5811
      %v5813 = vshll.u32 2475754826, %v5807
      %v5814 = vshrl.u32 2131351028, %v5808
      %v5815 = vor.u32 %v5813, %v5814
      %v5816 = vshll.u32 2131351028, %v5807
      %v5817 = vshrl.u32 2102212464, %v5808
      %v5818 = vor.u32 %v5816, %v5817
      %v5819 = vshll.u32 2102212464, %v5807
      %v5820 = vshrl.u32 920167782, %v5808
      %v5821 = vor.u32 %v5819, %v5820
      %v5822 = vshll.u32 920167782, %v5807
      %v5823 = vshrl.u32 1326507024, %v5808
      %v5824 = vor.u32 %v5822, %v5823
      %vm5825 = vcmp.lt.s32.totalorder %v5806, 1
      %vm5826 = vcmp.lt.s32.totalorder %v5806, 2
      %vm5827 = vcmp.lt.s32.totalorder %v5806, 3
      %vm5828 = vcmp.lt.s32.totalorder %v5806, 4
      %v5829 = vsel %vm5825, %v5809, %v5812
      %v5830 = vsel %vm5828, %v5818, 2102212464
      %v5831 = vsel %vm5827, %v5815, %v5830
      %v5832 = vsel %vm5826, %v5829, %v5831
      %v5833 = vsel %vm5825, %v5812, %v5815
      %v5834 = vsel %vm5828, %v5821, 920167782
      %v5835 = vsel %vm5827, %v5818, %v5834
      %v5836 = vsel %vm5826, %v5833, %v5835
      %v5837 = vsel %vm5825, %v5815, %v5818
      %v5838 = vsel %vm5828, %v5824, 1326507024
      %v5839 = vsel %vm5827, %v5821, %v5838
      %v5840 = vsel %vm5826, %v5837, %v5839
      %v5841 = vshll.u32 %v5801, 8
      %v5842 = vmul.u32.u64.compose %v5841, %v5840
      %v5843 = vextract.low.u32 %v5842
      %v5844 = vextract.high.u32 %v5842
      %v5845 = vmul.u32.u64.compose %v5841, %v5836
      %v5846 = vextract.low.u32 %v5845
      %v5847 = vextract.high.u32 %v5845
      %v5848 = vmul.u32 %v5841, %v5832
      %v5849 = vadd.s32 %v5844, %v5846
      %vm5850 = vc.u32 %v5844, %v5846
      %v5851 = vadd.s32 %v5847, 1
      %v5852 = vsel %vm5850, %v5851, %v5847
      %v5853 = vadd.s32 %v5848, %v5852
      %v5854 = vadd.s32 %v5853, 536870912
      %v5855 = vshrl.u32 %v5854, 30
      %v5856 = vshll.u32 %v5855, 30
      %v5857 = vsub.s32 %v5853, %v5856
      %vm5858 = vcmp.lt.s32.totalorder %v5857, 0
      %v5859 = vsub.s32 0, %v5857
      %v5860 = vsel %vm5858, %v5859, %v5857
      %v5861 = vclz %v5860
      %v5862 = vsub.s32 %v5861, 2
      %vm5863 = vcmp.gt.s32.totalorder 0, %v5862
      %v5864 = vsel %vm5863, 0, %v5862
      %v5865 = vsub.s32 32, %v5864
      %v5866 = vshll.u32 %v5857, %v5864
      %v5867 = vshrl.u32 %v5849, %v5865
      %v5868 = vor.u32 %v5866, %v5867
      %v5869 = vsub.s32 4294967266, %v5864
      %v5870 = vadd.s32 %v5869, 127
      %v5871 = vshll.u32 %v5870, 23
      %v5872 = vor.u32 4788187, %v5871
      %v5873 = vand.u32 2147483647, %v5872
      %v5875 = vcvt.s32.f32 %v5868
      %v5876 = vmul.f32 %v5875, %v5873
      %v5877 = vxor.u32 %v5876, 2147483648
      %v5878 = vsel %vm5795, %v5877, %v5876
      %v5879 = vsub.s32 4, %v5855
      %v5880 = vsel %vm5795, %v5879, %v5855
      %v5881 = vsel %vm5794, %v972, %v5878
      %v5882 = vsel %vm5794, 0, %v5880
      %v5883 = vcosq.f32.pop %v5881
      %v5884 = vsinq.f32.pop %v5881
      %vm5885 = vweird.f32 %v972
      %v5886 = vand.u32 %v5882, 3
      %vm5887 = vcmp.lt.s32.totalorder %v5886, 2
      %vm5888 = vcmp.eq.s32.totalorder %v5886, 0
      %v5889 = vxor.u32 %v5884, 2147483648
      %v5890 = vsel %vm5888, %v5883, %v5889
      %vm5891 = vcmp.eq.s32.totalorder %v5886, 2
      %v5892 = vxor.u32 %v5883, 2147483648
      %v5893 = vsel %vm5891, %v5892, %v5884
      %v5894 = vsel %vm5887, %v5890, %v5893
      %v5895 = vsel %vm5885, nan, %v5894
      %v5896 = vand.u32 2147483647, %v973
      %vm5897 = vcmp.le.f32.partialorder %v5896, 0.7853982
      %vm5898 = vcmp.lt.s32.totalorder %v973, 0
      %v5899 = vand.u32 %v973, 2139095040
      %v5900 = vshrl.u32 %v5899, 23
      %v5901 = vsub.s32 %v5900, 127
      %v5902 = vand.u32 2147483647, %v973
      %v5903 = vand.u32 %v5902, 8388607
      %v5904 = vor.u32 %v5903, 8388608
      %v5905 = vsub.s32 0, %v5904
      %v5906 = vadd.s32 %v5901, 1
      %vm5907 = vcmp.gt.s32.totalorder %v5906, 0
      %v5908 = vsel %vm5907, %v5906, 0
      %v5909 = vshrl.u32 %v5908, 5
      %v5910 = vand.u32 %v5908, 31
      %v5911 = vsub.s32 32, %v5910
      %v5912 = vshrl.u32 683565275, %v5911
      %v5913 = vshll.u32 683565275, %v5910
      %v5914 = vshrl.u32 2475754826, %v5911
      %v5915 = vor.u32 %v5913, %v5914
      %v5916 = vshll.u32 2475754826, %v5910
      %v5917 = vshrl.u32 2131351028, %v5911
      %v5918 = vor.u32 %v5916, %v5917
      %v5919 = vshll.u32 2131351028, %v5910
      %v5920 = vshrl.u32 2102212464, %v5911
      %v5921 = vor.u32 %v5919, %v5920
      %v5922 = vshll.u32 2102212464, %v5910
      %v5923 = vshrl.u32 920167782, %v5911
      %v5924 = vor.u32 %v5922, %v5923
      %v5925 = vshll.u32 920167782, %v5910
      %v5926 = vshrl.u32 1326507024, %v5911
      %v5927 = vor.u32 %v5925, %v5926
      %vm5928 = vcmp.lt.s32.totalorder %v5909, 1
      %vm5929 = vcmp.lt.s32.totalorder %v5909, 2
      %vm5930 = vcmp.lt.s32.totalorder %v5909, 3
      %vm5931 = vcmp.lt.s32.totalorder %v5909, 4
      %v5932 = vsel %vm5928, %v5912, %v5915
      %v5933 = vsel %vm5931, %v5921, 2102212464
      %v5934 = vsel %vm5930, %v5918, %v5933
      %v5935 = vsel %vm5929, %v5932, %v5934
      %v5936 = vsel %vm5928, %v5915, %v5918
      %v5937 = vsel %vm5931, %v5924, 920167782
      %v5938 = vsel %vm5930, %v5921, %v5937
      %v5939 = vsel %vm5929, %v5936, %v5938
      %v5940 = vsel %vm5928, %v5918, %v5921
      %v5941 = vsel %vm5931, %v5927, 1326507024
      %v5942 = vsel %vm5930, %v5924, %v5941
      %v5943 = vsel %vm5929, %v5940, %v5942
      %v5944 = vshll.u32 %v5904, 8
      %v5945 = vmul.u32.u64.compose %v5944, %v5943
      %v5946 = vextract.low.u32 %v5945
      %v5947 = vextract.high.u32 %v5945
      %v5948 = vmul.u32.u64.compose %v5944, %v5939
      %v5949 = vextract.low.u32 %v5948
      %v5950 = vextract.high.u32 %v5948
      %v5951 = vmul.u32 %v5944, %v5935
      %v5952 = vadd.s32 %v5947, %v5949
      %vm5953 = vc.u32 %v5947, %v5949
      %v5954 = vadd.s32 %v5950, 1
      %v5955 = vsel %vm5953, %v5954, %v5950
      %v5956 = vadd.s32 %v5951, %v5955
      %v5957 = vadd.s32 %v5956, 536870912
      %v5958 = vshrl.u32 %v5957, 30
      %v5959 = vshll.u32 %v5958, 30
      %v5960 = vsub.s32 %v5956, %v5959
      %vm5961 = vcmp.lt.s32.totalorder %v5960, 0
      %v5962 = vsub.s32 0, %v5960
      %v5963 = vsel %vm5961, %v5962, %v5960
      %v5964 = vclz %v5963
      %v5965 = vsub.s32 %v5964, 2
      %vm5966 = vcmp.gt.s32.totalorder 0, %v5965
      %v5967 = vsel %vm5966, 0, %v5965
      %v5968 = vsub.s32 32, %v5967
      %v5969 = vshll.u32 %v5960, %v5967
      %v5970 = vshrl.u32 %v5952, %v5968
      %v5971 = vor.u32 %v5969, %v5970
      %v5972 = vsub.s32 4294967266, %v5967
      %v5973 = vadd.s32 %v5972, 127
      %v5974 = vshll.u32 %v5973, 23
      %v5975 = vor.u32 4788187, %v5974
      %v5976 = vand.u32 2147483647, %v5975
      %v5978 = vcvt.s32.f32 %v5971
      %v5979 = vmul.f32 %v5978, %v5976
      %v5980 = vxor.u32 %v5979, 2147483648
      %v5981 = vsel %vm5898, %v5980, %v5979
      %v5982 = vsub.s32 4, %v5958
      %v5983 = vsel %vm5898, %v5982, %v5958
      %v5984 = vsel %vm5897, %v973, %v5981
      %v5985 = vsel %vm5897, 0, %v5983
      %v5986 = vcosq.f32.pop %v5984
      %v5987 = vsinq.f32.pop %v5984
      %vm5988 = vweird.f32 %v973
      %v5989 = vand.u32 %v5985, 3
      %vm5990 = vcmp.lt.s32.totalorder %v5989, 2
      %vm5991 = vcmp.eq.s32.totalorder %v5989, 0
      %v5992 = vxor.u32 %v5987, 2147483648
      %v5993 = vsel %vm5991, %v5986, %v5992
      %vm5994 = vcmp.eq.s32.totalorder %v5989, 2
      %v5995 = vxor.u32 %v5986, 2147483648
      %v5996 = vsel %vm5994, %v5995, %v5987
      %v5997 = vsel %vm5990, %v5993, %v5996
      %v5998 = vsel %vm5988, nan, %v5997
      %v5999 = vand.u32 2147483647, %v974
      %vm6000 = vcmp.le.f32.partialorder %v5999, 0.7853982
      %vm6001 = vcmp.lt.s32.totalorder %v974, 0
      %v6002 = vand.u32 %v974, 2139095040
      %v6003 = vshrl.u32 %v6002, 23
      %v6004 = vsub.s32 %v6003, 127
      %v6005 = vand.u32 2147483647, %v974
      %v6006 = vand.u32 %v6005, 8388607
      %v6007 = vor.u32 %v6006, 8388608
      %v6008 = vsub.s32 0, %v6007
      %v6009 = vadd.s32 %v6004, 1
      %vm6010 = vcmp.gt.s32.totalorder %v6009, 0
      %v6011 = vsel %vm6010, %v6009, 0
      %v6012 = vshrl.u32 %v6011, 5
      %v6013 = vand.u32 %v6011, 31
      %v6014 = vsub.s32 32, %v6013
      %v6015 = vshrl.u32 683565275, %v6014
      %v6016 = vshll.u32 683565275, %v6013
      %v6017 = vshrl.u32 2475754826, %v6014
      %v6018 = vor.u32 %v6016, %v6017
      %v6019 = vshll.u32 2475754826, %v6013
      %v6020 = vshrl.u32 2131351028, %v6014
      %v6021 = vor.u32 %v6019, %v6020
      %v6022 = vshll.u32 2131351028, %v6013
      %v6023 = vshrl.u32 2102212464, %v6014
      %v6024 = vor.u32 %v6022, %v6023
      %v6025 = vshll.u32 2102212464, %v6013
      %v6026 = vshrl.u32 920167782, %v6014
      %v6027 = vor.u32 %v6025, %v6026
      %v6028 = vshll.u32 920167782, %v6013
      %v6029 = vshrl.u32 1326507024, %v6014
      %v6030 = vor.u32 %v6028, %v6029
      %vm6031 = vcmp.lt.s32.totalorder %v6012, 1
      %vm6032 = vcmp.lt.s32.totalorder %v6012, 2
      %vm6033 = vcmp.lt.s32.totalorder %v6012, 3
      %vm6034 = vcmp.lt.s32.totalorder %v6012, 4
      %v6035 = vsel %vm6031, %v6015, %v6018
      %v6036 = vsel %vm6034, %v6024, 2102212464
      %v6037 = vsel %vm6033, %v6021, %v6036
      %v6038 = vsel %vm6032, %v6035, %v6037
      %v6039 = vsel %vm6031, %v6018, %v6021
      %v6040 = vsel %vm6034, %v6027, 920167782
      %v6041 = vsel %vm6033, %v6024, %v6040
      %v6042 = vsel %vm6032, %v6039, %v6041
      %v6043 = vsel %vm6031, %v6021, %v6024
      %v6044 = vsel %vm6034, %v6030, 1326507024
      %v6045 = vsel %vm6033, %v6027, %v6044
      %v6046 = vsel %vm6032, %v6043, %v6045
      %v6047 = vshll.u32 %v6007, 8
      %v6048 = vmul.u32.u64.compose %v6047, %v6046
      %v6049 = vextract.low.u32 %v6048
      %v6050 = vextract.high.u32 %v6048
      %v6051 = vmul.u32.u64.compose %v6047, %v6042
      %v6052 = vextract.low.u32 %v6051
      %v6053 = vextract.high.u32 %v6051
      %v6054 = vmul.u32 %v6047, %v6038
      %v6055 = vadd.s32 %v6050, %v6052
      %vm6056 = vc.u32 %v6050, %v6052
      %v6057 = vadd.s32 %v6053, 1
      %v6058 = vsel %vm6056, %v6057, %v6053
      %v6059 = vadd.s32 %v6054, %v6058
      %v6060 = vadd.s32 %v6059, 536870912
      %v6061 = vshrl.u32 %v6060, 30
      %v6062 = vshll.u32 %v6061, 30
      %v6063 = vsub.s32 %v6059, %v6062
      %vm6064 = vcmp.lt.s32.totalorder %v6063, 0
      %v6065 = vsub.s32 0, %v6063
      %v6066 = vsel %vm6064, %v6065, %v6063
      %v6067 = vclz %v6066
      %v6068 = vsub.s32 %v6067, 2
      %vm6069 = vcmp.gt.s32.totalorder 0, %v6068
      %v6070 = vsel %vm6069, 0, %v6068
      %v6071 = vsub.s32 32, %v6070
      %v6072 = vshll.u32 %v6063, %v6070
      %v6073 = vshrl.u32 %v6055, %v6071
      %v6074 = vor.u32 %v6072, %v6073
      %v6075 = vsub.s32 4294967266, %v6070
      %v6076 = vadd.s32 %v6075, 127
      %v6077 = vshll.u32 %v6076, 23
      %v6078 = vor.u32 4788187, %v6077
      %v6079 = vand.u32 2147483647, %v6078
      %v6081 = vcvt.s32.f32 %v6074
      %v6082 = vmul.f32 %v6081, %v6079
      %v6083 = vxor.u32 %v6082, 2147483648
      %v6084 = vsel %vm6001, %v6083, %v6082
      %v6085 = vsub.s32 4, %v6061
      %v6086 = vsel %vm6001, %v6085, %v6061
      %v6087 = vsel %vm6000, %v974, %v6084
      %v6088 = vsel %vm6000, 0, %v6086
      %v6089 = vcosq.f32.pop %v6087
      %v6090 = vsinq.f32.pop %v6087
      %vm6091 = vweird.f32 %v974
      %v6092 = vand.u32 %v6088, 3
      %vm6093 = vcmp.lt.s32.totalorder %v6092, 2
      %vm6094 = vcmp.eq.s32.totalorder %v6092, 0
      %v6095 = vxor.u32 %v6090, 2147483648
      %v6096 = vsel %vm6094, %v6089, %v6095
      %vm6097 = vcmp.eq.s32.totalorder %v6092, 2
      %v6098 = vxor.u32 %v6089, 2147483648
      %v6099 = vsel %vm6097, %v6098, %v6090
      %v6100 = vsel %vm6093, %v6096, %v6099
      %v6101 = vsel %vm6091, nan, %v6100
      %v6102 = vand.u32 2147483647, %v975
      %vm6103 = vcmp.le.f32.partialorder %v6102, 0.7853982
      %vm6104 = vcmp.lt.s32.totalorder %v975, 0
      %v6105 = vand.u32 %v975, 2139095040
      %v6106 = vshrl.u32 %v6105, 23
      %v6107 = vsub.s32 %v6106, 127
      %v6108 = vand.u32 2147483647, %v975
      %v6109 = vand.u32 %v6108, 8388607
      %v6110 = vor.u32 %v6109, 8388608
      %v6111 = vsub.s32 0, %v6110
      %v6112 = vadd.s32 %v6107, 1
      %vm6113 = vcmp.gt.s32.totalorder %v6112, 0
      %v6114 = vsel %vm6113, %v6112, 0
      %v6115 = vshrl.u32 %v6114, 5
      %v6116 = vand.u32 %v6114, 31
      %v6117 = vsub.s32 32, %v6116
      %v6118 = vshrl.u32 683565275, %v6117
      %v6119 = vshll.u32 683565275, %v6116
      %v6120 = vshrl.u32 2475754826, %v6117
      %v6121 = vor.u32 %v6119, %v6120
      %v6122 = vshll.u32 2475754826, %v6116
      %v6123 = vshrl.u32 2131351028, %v6117
      %v6124 = vor.u32 %v6122, %v6123
      %v6125 = vshll.u32 2131351028, %v6116
      %v6126 = vshrl.u32 2102212464, %v6117
      %v6127 = vor.u32 %v6125, %v6126
      %v6128 = vshll.u32 2102212464, %v6116
      %v6129 = vshrl.u32 920167782, %v6117
      %v6130 = vor.u32 %v6128, %v6129
      %v6131 = vshll.u32 920167782, %v6116
      %v6132 = vshrl.u32 1326507024, %v6117
      %v6133 = vor.u32 %v6131, %v6132
      %vm6134 = vcmp.lt.s32.totalorder %v6115, 1
      %vm6135 = vcmp.lt.s32.totalorder %v6115, 2
      %vm6136 = vcmp.lt.s32.totalorder %v6115, 3
      %vm6137 = vcmp.lt.s32.totalorder %v6115, 4
      %v6138 = vsel %vm6134, %v6118, %v6121
      %v6139 = vsel %vm6137, %v6127, 2102212464
      %v6140 = vsel %vm6136, %v6124, %v6139
      %v6141 = vsel %vm6135, %v6138, %v6140
      %v6142 = vsel %vm6134, %v6121, %v6124
      %v6143 = vsel %vm6137, %v6130, 920167782
      %v6144 = vsel %vm6136, %v6127, %v6143
      %v6145 = vsel %vm6135, %v6142, %v6144
      %v6146 = vsel %vm6134, %v6124, %v6127
      %v6147 = vsel %vm6137, %v6133, 1326507024
      %v6148 = vsel %vm6136, %v6130, %v6147
      %v6149 = vsel %vm6135, %v6146, %v6148
      %v6150 = vshll.u32 %v6110, 8
      %v6151 = vmul.u32.u64.compose %v6150, %v6149
      %v6152 = vextract.low.u32 %v6151
      %v6153 = vextract.high.u32 %v6151
      %v6154 = vmul.u32.u64.compose %v6150, %v6145
      %v6155 = vextract.low.u32 %v6154
      %v6156 = vextract.high.u32 %v6154
      %v6157 = vmul.u32 %v6150, %v6141
      %v6158 = vadd.s32 %v6153, %v6155
      %vm6159 = vc.u32 %v6153, %v6155
      %v6160 = vadd.s32 %v6156, 1
      %v6161 = vsel %vm6159, %v6160, %v6156
      %v6162 = vadd.s32 %v6157, %v6161
      %v6163 = vadd.s32 %v6162, 536870912
      %v6164 = vshrl.u32 %v6163, 30
      %v6165 = vshll.u32 %v6164, 30
      %v6166 = vsub.s32 %v6162, %v6165
      %vm6167 = vcmp.lt.s32.totalorder %v6166, 0
      %v6168 = vsub.s32 0, %v6166
      %v6169 = vsel %vm6167, %v6168, %v6166
      %v6170 = vclz %v6169
      %v6171 = vsub.s32 %v6170, 2
      %vm6172 = vcmp.gt.s32.totalorder 0, %v6171
      %v6173 = vsel %vm6172, 0, %v6171
      %v6174 = vsub.s32 32, %v6173
      %v6175 = vshll.u32 %v6166, %v6173
      %v6176 = vshrl.u32 %v6158, %v6174
      %v6177 = vor.u32 %v6175, %v6176
      %v6178 = vsub.s32 4294967266, %v6173
      %v6179 = vadd.s32 %v6178, 127
      %v6180 = vshll.u32 %v6179, 23
      %v6181 = vor.u32 4788187, %v6180
      %v6182 = vand.u32 2147483647, %v6181
      %v6184 = vcvt.s32.f32 %v6177
      %v6185 = vmul.f32 %v6184, %v6182
      %v6186 = vxor.u32 %v6185, 2147483648
      %v6187 = vsel %vm6104, %v6186, %v6185
      %v6188 = vsub.s32 4, %v6164
      %v6189 = vsel %vm6104, %v6188, %v6164
      %v6190 = vsel %vm6103, %v975, %v6187
      %v6191 = vsel %vm6103, 0, %v6189
      %v6192 = vcosq.f32.pop %v6190
      %v6193 = vsinq.f32.pop %v6190
      %vm6194 = vweird.f32 %v975
      %v6195 = vand.u32 %v6191, 3
      %vm6196 = vcmp.lt.s32.totalorder %v6195, 2
      %vm6197 = vcmp.eq.s32.totalorder %v6195, 0
      %v6198 = vxor.u32 %v6193, 2147483648
      %v6199 = vsel %vm6197, %v6192, %v6198
      %vm6200 = vcmp.eq.s32.totalorder %v6195, 2
      %v6201 = vxor.u32 %v6192, 2147483648
      %v6202 = vsel %vm6200, %v6201, %v6193
      %v6203 = vsel %vm6196, %v6199, %v6202
      %v6204 = vsel %vm6194, nan, %v6203
      %v6205 = vand.u32 2147483647, %v976
      %vm6206 = vcmp.le.f32.partialorder %v6205, 0.7853982
      %vm6207 = vcmp.lt.s32.totalorder %v976, 0
      %v6208 = vand.u32 %v976, 2139095040
      %v6209 = vshrl.u32 %v6208, 23
      %v6210 = vsub.s32 %v6209, 127
      %v6211 = vand.u32 2147483647, %v976
      %v6212 = vand.u32 %v6211, 8388607
      %v6213 = vor.u32 %v6212, 8388608
      %v6214 = vsub.s32 0, %v6213
      %v6215 = vadd.s32 %v6210, 1
      %vm6216 = vcmp.gt.s32.totalorder %v6215, 0
      %v6217 = vsel %vm6216, %v6215, 0
      %v6218 = vshrl.u32 %v6217, 5
      %v6219 = vand.u32 %v6217, 31
      %v6220 = vsub.s32 32, %v6219
      %v6221 = vshrl.u32 683565275, %v6220
      %v6222 = vshll.u32 683565275, %v6219
      %v6223 = vshrl.u32 2475754826, %v6220
      %v6224 = vor.u32 %v6222, %v6223
      %v6225 = vshll.u32 2475754826, %v6219
      %v6226 = vshrl.u32 2131351028, %v6220
      %v6227 = vor.u32 %v6225, %v6226
      %v6228 = vshll.u32 2131351028, %v6219
      %v6229 = vshrl.u32 2102212464, %v6220
      %v6230 = vor.u32 %v6228, %v6229
      %v6231 = vshll.u32 2102212464, %v6219
      %v6232 = vshrl.u32 920167782, %v6220
      %v6233 = vor.u32 %v6231, %v6232
      %v6234 = vshll.u32 920167782, %v6219
      %v6235 = vshrl.u32 1326507024, %v6220
      %v6236 = vor.u32 %v6234, %v6235
      %vm6237 = vcmp.lt.s32.totalorder %v6218, 1
      %vm6238 = vcmp.lt.s32.totalorder %v6218, 2
      %vm6239 = vcmp.lt.s32.totalorder %v6218, 3
      %vm6240 = vcmp.lt.s32.totalorder %v6218, 4
      %v6241 = vsel %vm6237, %v6221, %v6224
      %v6242 = vsel %vm6240, %v6230, 2102212464
      %v6243 = vsel %vm6239, %v6227, %v6242
      %v6244 = vsel %vm6238, %v6241, %v6243
      %v6245 = vsel %vm6237, %v6224, %v6227
      %v6246 = vsel %vm6240, %v6233, 920167782
      %v6247 = vsel %vm6239, %v6230, %v6246
      %v6248 = vsel %vm6238, %v6245, %v6247
      %v6249 = vsel %vm6237, %v6227, %v6230
      %v6250 = vsel %vm6240, %v6236, 1326507024
      %v6251 = vsel %vm6239, %v6233, %v6250
      %v6252 = vsel %vm6238, %v6249, %v6251
      %v6253 = vshll.u32 %v6213, 8
      %v6254 = vmul.u32.u64.compose %v6253, %v6252
      %v6255 = vextract.low.u32 %v6254
      %v6256 = vextract.high.u32 %v6254
      %v6257 = vmul.u32.u64.compose %v6253, %v6248
      %v6258 = vextract.low.u32 %v6257
      %v6259 = vextract.high.u32 %v6257
      %v6260 = vmul.u32 %v6253, %v6244
      %v6261 = vadd.s32 %v6256, %v6258
      %vm6262 = vc.u32 %v6256, %v6258
      %v6263 = vadd.s32 %v6259, 1
      %v6264 = vsel %vm6262, %v6263, %v6259
      %v6265 = vadd.s32 %v6260, %v6264
      %v6266 = vadd.s32 %v6265, 536870912
      %v6267 = vshrl.u32 %v6266, 30
      %v6268 = vshll.u32 %v6267, 30
      %v6269 = vsub.s32 %v6265, %v6268
      %vm6270 = vcmp.lt.s32.totalorder %v6269, 0
      %v6271 = vsub.s32 0, %v6269
      %v6272 = vsel %vm6270, %v6271, %v6269
      %v6273 = vclz %v6272
      %v6274 = vsub.s32 %v6273, 2
      %vm6275 = vcmp.gt.s32.totalorder 0, %v6274
      %v6276 = vsel %vm6275, 0, %v6274
      %v6277 = vsub.s32 32, %v6276
      %v6278 = vshll.u32 %v6269, %v6276
      %v6279 = vshrl.u32 %v6261, %v6277
      %v6280 = vor.u32 %v6278, %v6279
      %v6281 = vsub.s32 4294967266, %v6276
      %v6282 = vadd.s32 %v6281, 127
      %v6283 = vshll.u32 %v6282, 23
      %v6284 = vor.u32 4788187, %v6283
      %v6285 = vand.u32 2147483647, %v6284
      %v6287 = vcvt.s32.f32 %v6280
      %v6288 = vmul.f32 %v6287, %v6285
      %v6289 = vxor.u32 %v6288, 2147483648
      %v6290 = vsel %vm6207, %v6289, %v6288
      %v6291 = vsub.s32 4, %v6267
      %v6292 = vsel %vm6207, %v6291, %v6267
      %v6293 = vsel %vm6206, %v976, %v6290
      %v6294 = vsel %vm6206, 0, %v6292
      %v6295 = vcosq.f32.pop %v6293
      %v6296 = vsinq.f32.pop %v6293
      %vm6297 = vweird.f32 %v976
      %v6298 = vand.u32 %v6294, 3
      %vm6299 = vcmp.lt.s32.totalorder %v6298, 2
      %vm6300 = vcmp.eq.s32.totalorder %v6298, 0
      %v6301 = vxor.u32 %v6296, 2147483648
      %v6302 = vsel %vm6300, %v6295, %v6301
      %vm6303 = vcmp.eq.s32.totalorder %v6298, 2
      %v6304 = vxor.u32 %v6295, 2147483648
      %v6305 = vsel %vm6303, %v6304, %v6296
      %v6306 = vsel %vm6299, %v6302, %v6305
      %v6307 = vsel %vm6297, nan, %v6306
      %v6308 = vand.u32 2147483647, %v977
      %vm6309 = vcmp.le.f32.partialorder %v6308, 0.7853982
      %vm6310 = vcmp.lt.s32.totalorder %v977, 0
      %v6311 = vand.u32 %v977, 2139095040
      %v6312 = vshrl.u32 %v6311, 23
      %v6313 = vsub.s32 %v6312, 127
      %v6314 = vand.u32 2147483647, %v977
      %v6315 = vand.u32 %v6314, 8388607
      %v6316 = vor.u32 %v6315, 8388608
      %v6317 = vsub.s32 0, %v6316
      %v6318 = vadd.s32 %v6313, 1
      %vm6319 = vcmp.gt.s32.totalorder %v6318, 0
      %v6320 = vsel %vm6319, %v6318, 0
      %v6321 = vshrl.u32 %v6320, 5
      %v6322 = vand.u32 %v6320, 31
      %v6323 = vsub.s32 32, %v6322
      %v6324 = vshrl.u32 683565275, %v6323
      %v6325 = vshll.u32 683565275, %v6322
      %v6326 = vshrl.u32 2475754826, %v6323
      %v6327 = vor.u32 %v6325, %v6326
      %v6328 = vshll.u32 2475754826, %v6322
      %v6329 = vshrl.u32 2131351028, %v6323
      %v6330 = vor.u32 %v6328, %v6329
      %v6331 = vshll.u32 2131351028, %v6322
      %v6332 = vshrl.u32 2102212464, %v6323
      %v6333 = vor.u32 %v6331, %v6332
      %v6334 = vshll.u32 2102212464, %v6322
      %v6335 = vshrl.u32 920167782, %v6323
      %v6336 = vor.u32 %v6334, %v6335
      %v6337 = vshll.u32 920167782, %v6322
      %v6338 = vshrl.u32 1326507024, %v6323
      %v6339 = vor.u32 %v6337, %v6338
      %vm6340 = vcmp.lt.s32.totalorder %v6321, 1
      %vm6341 = vcmp.lt.s32.totalorder %v6321, 2
      %vm6342 = vcmp.lt.s32.totalorder %v6321, 3
      %vm6343 = vcmp.lt.s32.totalorder %v6321, 4
      %v6344 = vsel %vm6340, %v6324, %v6327
      %v6345 = vsel %vm6343, %v6333, 2102212464
      %v6346 = vsel %vm6342, %v6330, %v6345
      %v6347 = vsel %vm6341, %v6344, %v6346
      %v6348 = vsel %vm6340, %v6327, %v6330
      %v6349 = vsel %vm6343, %v6336, 920167782
      %v6350 = vsel %vm6342, %v6333, %v6349
      %v6351 = vsel %vm6341, %v6348, %v6350
      %v6352 = vsel %vm6340, %v6330, %v6333
      %v6353 = vsel %vm6343, %v6339, 1326507024
      %v6354 = vsel %vm6342, %v6336, %v6353
      %v6355 = vsel %vm6341, %v6352, %v6354
      %v6356 = vshll.u32 %v6316, 8
      %v6357 = vmul.u32.u64.compose %v6356, %v6355
      %v6358 = vextract.low.u32 %v6357
      %v6359 = vextract.high.u32 %v6357
      %v6360 = vmul.u32.u64.compose %v6356, %v6351
      %v6361 = vextract.low.u32 %v6360
      %v6362 = vextract.high.u32 %v6360
      %v6363 = vmul.u32 %v6356, %v6347
      %v6364 = vadd.s32 %v6359, %v6361
      %vm6365 = vc.u32 %v6359, %v6361
      %v6366 = vadd.s32 %v6362, 1
      %v6367 = vsel %vm6365, %v6366, %v6362
      %v6368 = vadd.s32 %v6363, %v6367
      %v6369 = vadd.s32 %v6368, 536870912
      %v6370 = vshrl.u32 %v6369, 30
      %v6371 = vshll.u32 %v6370, 30
      %v6372 = vsub.s32 %v6368, %v6371
      %vm6373 = vcmp.lt.s32.totalorder %v6372, 0
      %v6374 = vsub.s32 0, %v6372
      %v6375 = vsel %vm6373, %v6374, %v6372
      %v6376 = vclz %v6375
      %v6377 = vsub.s32 %v6376, 2
      %vm6378 = vcmp.gt.s32.totalorder 0, %v6377
      %v6379 = vsel %vm6378, 0, %v6377
      %v6380 = vsub.s32 32, %v6379
      %v6381 = vshll.u32 %v6372, %v6379
      %v6382 = vshrl.u32 %v6364, %v6380
      %v6383 = vor.u32 %v6381, %v6382
      %v6384 = vsub.s32 4294967266, %v6379
      %v6385 = vadd.s32 %v6384, 127
      %v6386 = vshll.u32 %v6385, 23
      %v6387 = vor.u32 4788187, %v6386
      %v6388 = vand.u32 2147483647, %v6387
      %v6390 = vcvt.s32.f32 %v6383
      %v6391 = vmul.f32 %v6390, %v6388
      %v6392 = vxor.u32 %v6391, 2147483648
      %v6393 = vsel %vm6310, %v6392, %v6391
      %v6394 = vsub.s32 4, %v6370
      %v6395 = vsel %vm6310, %v6394, %v6370
      %v6396 = vsel %vm6309, %v977, %v6393
      %v6397 = vsel %vm6309, 0, %v6395
      %v6398 = vcosq.f32.pop %v6396
      %v6399 = vsinq.f32.pop %v6396
      %vm6400 = vweird.f32 %v977
      %v6401 = vand.u32 %v6397, 3
      %vm6402 = vcmp.lt.s32.totalorder %v6401, 2
      %vm6403 = vcmp.eq.s32.totalorder %v6401, 0
      %v6404 = vxor.u32 %v6399, 2147483648
      %v6405 = vsel %vm6403, %v6398, %v6404
      %vm6406 = vcmp.eq.s32.totalorder %v6401, 2
      %v6407 = vxor.u32 %v6398, 2147483648
      %v6408 = vsel %vm6406, %v6407, %v6399
      %v6409 = vsel %vm6402, %v6405, %v6408
      %v6410 = vsel %vm6400, nan, %v6409
      %v6411 = vand.u32 2147483647, %v978
      %vm6412 = vcmp.le.f32.partialorder %v6411, 0.7853982
      %vm6413 = vcmp.lt.s32.totalorder %v978, 0
      %v6414 = vand.u32 %v978, 2139095040
      %v6415 = vshrl.u32 %v6414, 23
      %v6416 = vsub.s32 %v6415, 127
      %v6417 = vand.u32 2147483647, %v978
      %v6418 = vand.u32 %v6417, 8388607
      %v6419 = vor.u32 %v6418, 8388608
      %v6420 = vsub.s32 0, %v6419
      %v6421 = vadd.s32 %v6416, 1
      %vm6422 = vcmp.gt.s32.totalorder %v6421, 0
      %v6423 = vsel %vm6422, %v6421, 0
      %v6424 = vshrl.u32 %v6423, 5
      %v6425 = vand.u32 %v6423, 31
      %v6426 = vsub.s32 32, %v6425
      %v6427 = vshrl.u32 683565275, %v6426
      %v6428 = vshll.u32 683565275, %v6425
      %v6429 = vshrl.u32 2475754826, %v6426
      %v6430 = vor.u32 %v6428, %v6429
      %v6431 = vshll.u32 2475754826, %v6425
      %v6432 = vshrl.u32 2131351028, %v6426
      %v6433 = vor.u32 %v6431, %v6432
      %v6434 = vshll.u32 2131351028, %v6425
      %v6435 = vshrl.u32 2102212464, %v6426
      %v6436 = vor.u32 %v6434, %v6435
      %v6437 = vshll.u32 2102212464, %v6425
      %v6438 = vshrl.u32 920167782, %v6426
      %v6439 = vor.u32 %v6437, %v6438
      %v6440 = vshll.u32 920167782, %v6425
      %v6441 = vshrl.u32 1326507024, %v6426
      %v6442 = vor.u32 %v6440, %v6441
      %vm6443 = vcmp.lt.s32.totalorder %v6424, 1
      %vm6444 = vcmp.lt.s32.totalorder %v6424, 2
      %vm6445 = vcmp.lt.s32.totalorder %v6424, 3
      %vm6446 = vcmp.lt.s32.totalorder %v6424, 4
      %v6447 = vsel %vm6443, %v6427, %v6430
      %v6448 = vsel %vm6446, %v6436, 2102212464
      %v6449 = vsel %vm6445, %v6433, %v6448
      %v6450 = vsel %vm6444, %v6447, %v6449
      %v6451 = vsel %vm6443, %v6430, %v6433
      %v6452 = vsel %vm6446, %v6439, 920167782
      %v6453 = vsel %vm6445, %v6436, %v6452
      %v6454 = vsel %vm6444, %v6451, %v6453
      %v6455 = vsel %vm6443, %v6433, %v6436
      %v6456 = vsel %vm6446, %v6442, 1326507024
      %v6457 = vsel %vm6445, %v6439, %v6456
      %v6458 = vsel %vm6444, %v6455, %v6457
      %v6459 = vshll.u32 %v6419, 8
      %v6460 = vmul.u32.u64.compose %v6459, %v6458
      %v6461 = vextract.low.u32 %v6460
      %v6462 = vextract.high.u32 %v6460
      %v6463 = vmul.u32.u64.compose %v6459, %v6454
      %v6464 = vextract.low.u32 %v6463
      %v6465 = vextract.high.u32 %v6463
      %v6466 = vmul.u32 %v6459, %v6450
      %v6467 = vadd.s32 %v6462, %v6464
      %vm6468 = vc.u32 %v6462, %v6464
      %v6469 = vadd.s32 %v6465, 1
      %v6470 = vsel %vm6468, %v6469, %v6465
      %v6471 = vadd.s32 %v6466, %v6470
      %v6472 = vadd.s32 %v6471, 536870912
      %v6473 = vshrl.u32 %v6472, 30
      %v6474 = vshll.u32 %v6473, 30
      %v6475 = vsub.s32 %v6471, %v6474
      %vm6476 = vcmp.lt.s32.totalorder %v6475, 0
      %v6477 = vsub.s32 0, %v6475
      %v6478 = vsel %vm6476, %v6477, %v6475
      %v6479 = vclz %v6478
      %v6480 = vsub.s32 %v6479, 2
      %vm6481 = vcmp.gt.s32.totalorder 0, %v6480
      %v6482 = vsel %vm6481, 0, %v6480
      %v6483 = vsub.s32 32, %v6482
      %v6484 = vshll.u32 %v6475, %v6482
      %v6485 = vshrl.u32 %v6467, %v6483
      %v6486 = vor.u32 %v6484, %v6485
      %v6487 = vsub.s32 4294967266, %v6482
      %v6488 = vadd.s32 %v6487, 127
      %v6489 = vshll.u32 %v6488, 23
      %v6490 = vor.u32 4788187, %v6489
      %v6491 = vand.u32 2147483647, %v6490
      %v6493 = vcvt.s32.f32 %v6486
      %v6494 = vmul.f32 %v6493, %v6491
      %v6495 = vxor.u32 %v6494, 2147483648
      %v6496 = vsel %vm6413, %v6495, %v6494
      %v6497 = vsub.s32 4, %v6473
      %v6498 = vsel %vm6413, %v6497, %v6473
      %v6499 = vsel %vm6412, %v978, %v6496
      %v6500 = vsel %vm6412, 0, %v6498
      %v6501 = vcosq.f32.pop %v6499
      %v6502 = vsinq.f32.pop %v6499
      %vm6503 = vweird.f32 %v978
      %v6504 = vand.u32 %v6500, 3
      %vm6505 = vcmp.lt.s32.totalorder %v6504, 2
      %vm6506 = vcmp.eq.s32.totalorder %v6504, 0
      %v6507 = vxor.u32 %v6502, 2147483648
      %v6508 = vsel %vm6506, %v6501, %v6507
      %vm6509 = vcmp.eq.s32.totalorder %v6504, 2
      %v6510 = vxor.u32 %v6501, 2147483648
      %v6511 = vsel %vm6509, %v6510, %v6502
      %v6512 = vsel %vm6505, %v6508, %v6511
      %v6513 = vsel %vm6503, nan, %v6512
      %v6514 = vand.u32 2147483647, %v979
      %vm6515 = vcmp.le.f32.partialorder %v6514, 0.7853982
      %vm6516 = vcmp.lt.s32.totalorder %v979, 0
      %v6517 = vand.u32 %v979, 2139095040
      %v6518 = vshrl.u32 %v6517, 23
      %v6519 = vsub.s32 %v6518, 127
      %v6520 = vand.u32 2147483647, %v979
      %v6521 = vand.u32 %v6520, 8388607
      %v6522 = vor.u32 %v6521, 8388608
      %v6523 = vsub.s32 0, %v6522
      %v6524 = vadd.s32 %v6519, 1
      %vm6525 = vcmp.gt.s32.totalorder %v6524, 0
      %v6526 = vsel %vm6525, %v6524, 0
      %v6527 = vshrl.u32 %v6526, 5
      %v6528 = vand.u32 %v6526, 31
      %v6529 = vsub.s32 32, %v6528
      %v6530 = vshrl.u32 683565275, %v6529
      %v6531 = vshll.u32 683565275, %v6528
      %v6532 = vshrl.u32 2475754826, %v6529
      %v6533 = vor.u32 %v6531, %v6532
      %v6534 = vshll.u32 2475754826, %v6528
      %v6535 = vshrl.u32 2131351028, %v6529
      %v6536 = vor.u32 %v6534, %v6535
      %v6537 = vshll.u32 2131351028, %v6528
      %v6538 = vshrl.u32 2102212464, %v6529
      %v6539 = vor.u32 %v6537, %v6538
      %v6540 = vshll.u32 2102212464, %v6528
      %v6541 = vshrl.u32 920167782, %v6529
      %v6542 = vor.u32 %v6540, %v6541
      %v6543 = vshll.u32 920167782, %v6528
      %v6544 = vshrl.u32 1326507024, %v6529
      %v6545 = vor.u32 %v6543, %v6544
      %vm6546 = vcmp.lt.s32.totalorder %v6527, 1
      %vm6547 = vcmp.lt.s32.totalorder %v6527, 2
      %vm6548 = vcmp.lt.s32.totalorder %v6527, 3
      %vm6549 = vcmp.lt.s32.totalorder %v6527, 4
      %v6550 = vsel %vm6546, %v6530, %v6533
      %v6551 = vsel %vm6549, %v6539, 2102212464
      %v6552 = vsel %vm6548, %v6536, %v6551
      %v6553 = vsel %vm6547, %v6550, %v6552
      %v6554 = vsel %vm6546, %v6533, %v6536
      %v6555 = vsel %vm6549, %v6542, 920167782
      %v6556 = vsel %vm6548, %v6539, %v6555
      %v6557 = vsel %vm6547, %v6554, %v6556
      %v6558 = vsel %vm6546, %v6536, %v6539
      %v6559 = vsel %vm6549, %v6545, 1326507024
      %v6560 = vsel %vm6548, %v6542, %v6559
      %v6561 = vsel %vm6547, %v6558, %v6560
      %v6562 = vshll.u32 %v6522, 8
      %v6563 = vmul.u32.u64.compose %v6562, %v6561
      %v6564 = vextract.low.u32 %v6563
      %v6565 = vextract.high.u32 %v6563
      %v6566 = vmul.u32.u64.compose %v6562, %v6557
      %v6567 = vextract.low.u32 %v6566
      %v6568 = vextract.high.u32 %v6566
      %v6569 = vmul.u32 %v6562, %v6553
      %v6570 = vadd.s32 %v6565, %v6567
      %vm6571 = vc.u32 %v6565, %v6567
      %v6572 = vadd.s32 %v6568, 1
      %v6573 = vsel %vm6571, %v6572, %v6568
      %v6574 = vadd.s32 %v6569, %v6573
      %v6575 = vadd.s32 %v6574, 536870912
      %v6576 = vshrl.u32 %v6575, 30
      %v6577 = vshll.u32 %v6576, 30
      %v6578 = vsub.s32 %v6574, %v6577
      %vm6579 = vcmp.lt.s32.totalorder %v6578, 0
      %v6580 = vsub.s32 0, %v6578
      %v6581 = vsel %vm6579, %v6580, %v6578
      %v6582 = vclz %v6581
      %v6583 = vsub.s32 %v6582, 2
      %vm6584 = vcmp.gt.s32.totalorder 0, %v6583
      %v6585 = vsel %vm6584, 0, %v6583
      %v6586 = vsub.s32 32, %v6585
      %v6587 = vshll.u32 %v6578, %v6585
      %v6588 = vshrl.u32 %v6570, %v6586
      %v6589 = vor.u32 %v6587, %v6588
      %v6590 = vsub.s32 4294967266, %v6585
      %v6591 = vadd.s32 %v6590, 127
      %v6592 = vshll.u32 %v6591, 23
      %v6593 = vor.u32 4788187, %v6592
      %v6594 = vand.u32 2147483647, %v6593
      %v6596 = vcvt.s32.f32 %v6589
      %v6597 = vmul.f32 %v6596, %v6594
      %v6598 = vxor.u32 %v6597, 2147483648
      %v6599 = vsel %vm6516, %v6598, %v6597
      %v6600 = vsub.s32 4, %v6576
      %v6601 = vsel %vm6516, %v6600, %v6576
      %v6602 = vsel %vm6515, %v979, %v6599
      %v6603 = vsel %vm6515, 0, %v6601
      %v6604 = vcosq.f32.pop %v6602
      %v6605 = vsinq.f32.pop %v6602
      %vm6606 = vweird.f32 %v979
      %v6607 = vand.u32 %v6603, 3
      %vm6608 = vcmp.lt.s32.totalorder %v6607, 2
      %vm6609 = vcmp.eq.s32.totalorder %v6607, 0
      %v6610 = vxor.u32 %v6605, 2147483648
      %v6611 = vsel %vm6609, %v6604, %v6610
      %vm6612 = vcmp.eq.s32.totalorder %v6607, 2
      %v6613 = vxor.u32 %v6604, 2147483648
      %v6614 = vsel %vm6612, %v6613, %v6605
      %v6615 = vsel %vm6608, %v6611, %v6614
      %v6616 = vsel %vm6606, nan, %v6615
      %v6617 = vand.u32 2147483647, %v980
      %vm6618 = vcmp.le.f32.partialorder %v6617, 0.7853982
      %vm6619 = vcmp.lt.s32.totalorder %v980, 0
      %v6620 = vand.u32 %v980, 2139095040
      %v6621 = vshrl.u32 %v6620, 23
      %v6622 = vsub.s32 %v6621, 127
      %v6623 = vand.u32 2147483647, %v980
      %v6624 = vand.u32 %v6623, 8388607
      %v6625 = vor.u32 %v6624, 8388608
      %v6626 = vsub.s32 0, %v6625
      %v6627 = vadd.s32 %v6622, 1
      %vm6628 = vcmp.gt.s32.totalorder %v6627, 0
      %v6629 = vsel %vm6628, %v6627, 0
      %v6630 = vshrl.u32 %v6629, 5
      %v6631 = vand.u32 %v6629, 31
      %v6632 = vsub.s32 32, %v6631
      %v6633 = vshrl.u32 683565275, %v6632
      %v6634 = vshll.u32 683565275, %v6631
      %v6635 = vshrl.u32 2475754826, %v6632
      %v6636 = vor.u32 %v6634, %v6635
      %v6637 = vshll.u32 2475754826, %v6631
      %v6638 = vshrl.u32 2131351028, %v6632
      %v6639 = vor.u32 %v6637, %v6638
      %v6640 = vshll.u32 2131351028, %v6631
      %v6641 = vshrl.u32 2102212464, %v6632
      %v6642 = vor.u32 %v6640, %v6641
      %v6643 = vshll.u32 2102212464, %v6631
      %v6644 = vshrl.u32 920167782, %v6632
      %v6645 = vor.u32 %v6643, %v6644
      %v6646 = vshll.u32 920167782, %v6631
      %v6647 = vshrl.u32 1326507024, %v6632
      %v6648 = vor.u32 %v6646, %v6647
      %vm6649 = vcmp.lt.s32.totalorder %v6630, 1
      %vm6650 = vcmp.lt.s32.totalorder %v6630, 2
      %vm6651 = vcmp.lt.s32.totalorder %v6630, 3
      %vm6652 = vcmp.lt.s32.totalorder %v6630, 4
      %v6653 = vsel %vm6649, %v6633, %v6636
      %v6654 = vsel %vm6652, %v6642, 2102212464
      %v6655 = vsel %vm6651, %v6639, %v6654
      %v6656 = vsel %vm6650, %v6653, %v6655
      %v6657 = vsel %vm6649, %v6636, %v6639
      %v6658 = vsel %vm6652, %v6645, 920167782
      %v6659 = vsel %vm6651, %v6642, %v6658
      %v6660 = vsel %vm6650, %v6657, %v6659
      %v6661 = vsel %vm6649, %v6639, %v6642
      %v6662 = vsel %vm6652, %v6648, 1326507024
      %v6663 = vsel %vm6651, %v6645, %v6662
      %v6664 = vsel %vm6650, %v6661, %v6663
      %v6665 = vshll.u32 %v6625, 8
      %v6666 = vmul.u32.u64.compose %v6665, %v6664
      %v6667 = vextract.low.u32 %v6666
      %v6668 = vextract.high.u32 %v6666
      %v6669 = vmul.u32.u64.compose %v6665, %v6660
      %v6670 = vextract.low.u32 %v6669
      %v6671 = vextract.high.u32 %v6669
      %v6672 = vmul.u32 %v6665, %v6656
      %v6673 = vadd.s32 %v6668, %v6670
      %vm6674 = vc.u32 %v6668, %v6670
      %v6675 = vadd.s32 %v6671, 1
      %v6676 = vsel %vm6674, %v6675, %v6671
      %v6677 = vadd.s32 %v6672, %v6676
      %v6678 = vadd.s32 %v6677, 536870912
      %v6679 = vshrl.u32 %v6678, 30
      %v6680 = vshll.u32 %v6679, 30
      %v6681 = vsub.s32 %v6677, %v6680
      %vm6682 = vcmp.lt.s32.totalorder %v6681, 0
      %v6683 = vsub.s32 0, %v6681
      %v6684 = vsel %vm6682, %v6683, %v6681
      %v6685 = vclz %v6684
      %v6686 = vsub.s32 %v6685, 2
      %vm6687 = vcmp.gt.s32.totalorder 0, %v6686
      %v6688 = vsel %vm6687, 0, %v6686
      %v6689 = vsub.s32 32, %v6688
      %v6690 = vshll.u32 %v6681, %v6688
      %v6691 = vshrl.u32 %v6673, %v6689
      %v6692 = vor.u32 %v6690, %v6691
      %v6693 = vsub.s32 4294967266, %v6688
      %v6694 = vadd.s32 %v6693, 127
      %v6695 = vshll.u32 %v6694, 23
      %v6696 = vor.u32 4788187, %v6695
      %v6697 = vand.u32 2147483647, %v6696
      %v6699 = vcvt.s32.f32 %v6692
      %v6700 = vmul.f32 %v6699, %v6697
      %v6701 = vxor.u32 %v6700, 2147483648
      %v6702 = vsel %vm6619, %v6701, %v6700
      %v6703 = vsub.s32 4, %v6679
      %v6704 = vsel %vm6619, %v6703, %v6679
      %v6705 = vsel %vm6618, %v980, %v6702
      %v6706 = vsel %vm6618, 0, %v6704
      %v6707 = vcosq.f32.pop %v6705
      %v6708 = vsinq.f32.pop %v6705
      %vm6709 = vweird.f32 %v980
      %v6710 = vand.u32 %v6706, 3
      %vm6711 = vcmp.lt.s32.totalorder %v6710, 2
      %vm6712 = vcmp.eq.s32.totalorder %v6710, 0
      %v6713 = vxor.u32 %v6708, 2147483648
      %v6714 = vsel %vm6712, %v6707, %v6713
      %vm6715 = vcmp.eq.s32.totalorder %v6710, 2
      %v6716 = vxor.u32 %v6707, 2147483648
      %v6717 = vsel %vm6715, %v6716, %v6708
      %v6718 = vsel %vm6711, %v6714, %v6717
      %v6719 = vsel %vm6709, nan, %v6718
      %v6720 = vand.u32 2147483647, %v981
      %vm6721 = vcmp.le.f32.partialorder %v6720, 0.7853982
      %vm6722 = vcmp.lt.s32.totalorder %v981, 0
      %v6723 = vand.u32 %v981, 2139095040
      %v6724 = vshrl.u32 %v6723, 23
      %v6725 = vsub.s32 %v6724, 127
      %v6726 = vand.u32 2147483647, %v981
      %v6727 = vand.u32 %v6726, 8388607
      %v6728 = vor.u32 %v6727, 8388608
      %v6729 = vsub.s32 0, %v6728
      %v6730 = vadd.s32 %v6725, 1
      %vm6731 = vcmp.gt.s32.totalorder %v6730, 0
      %v6732 = vsel %vm6731, %v6730, 0
      %v6733 = vshrl.u32 %v6732, 5
      %v6734 = vand.u32 %v6732, 31
      %v6735 = vsub.s32 32, %v6734
      %v6736 = vshrl.u32 683565275, %v6735
      %v6737 = vshll.u32 683565275, %v6734
      %v6738 = vshrl.u32 2475754826, %v6735
      %v6739 = vor.u32 %v6737, %v6738
      %v6740 = vshll.u32 2475754826, %v6734
      %v6741 = vshrl.u32 2131351028, %v6735
      %v6742 = vor.u32 %v6740, %v6741
      %v6743 = vshll.u32 2131351028, %v6734
      %v6744 = vshrl.u32 2102212464, %v6735
      %v6745 = vor.u32 %v6743, %v6744
      %v6746 = vshll.u32 2102212464, %v6734
      %v6747 = vshrl.u32 920167782, %v6735
      %v6748 = vor.u32 %v6746, %v6747
      %v6749 = vshll.u32 920167782, %v6734
      %v6750 = vshrl.u32 1326507024, %v6735
      %v6751 = vor.u32 %v6749, %v6750
      %vm6752 = vcmp.lt.s32.totalorder %v6733, 1
      %vm6753 = vcmp.lt.s32.totalorder %v6733, 2
      %vm6754 = vcmp.lt.s32.totalorder %v6733, 3
      %vm6755 = vcmp.lt.s32.totalorder %v6733, 4
      %v6756 = vsel %vm6752, %v6736, %v6739
      %v6757 = vsel %vm6755, %v6745, 2102212464
      %v6758 = vsel %vm6754, %v6742, %v6757
      %v6759 = vsel %vm6753, %v6756, %v6758
      %v6760 = vsel %vm6752, %v6739, %v6742
      %v6761 = vsel %vm6755, %v6748, 920167782
      %v6762 = vsel %vm6754, %v6745, %v6761
      %v6763 = vsel %vm6753, %v6760, %v6762
      %v6764 = vsel %vm6752, %v6742, %v6745
      %v6765 = vsel %vm6755, %v6751, 1326507024
      %v6766 = vsel %vm6754, %v6748, %v6765
      %v6767 = vsel %vm6753, %v6764, %v6766
      %v6768 = vshll.u32 %v6728, 8
      %v6769 = vmul.u32.u64.compose %v6768, %v6767
      %v6770 = vextract.low.u32 %v6769
      %v6771 = vextract.high.u32 %v6769
      %v6772 = vmul.u32.u64.compose %v6768, %v6763
      %v6773 = vextract.low.u32 %v6772
      %v6774 = vextract.high.u32 %v6772
      %v6775 = vmul.u32 %v6768, %v6759
      %v6776 = vadd.s32 %v6771, %v6773
      %vm6777 = vc.u32 %v6771, %v6773
      %v6778 = vadd.s32 %v6774, 1
      %v6779 = vsel %vm6777, %v6778, %v6774
      %v6780 = vadd.s32 %v6775, %v6779
      %v6781 = vadd.s32 %v6780, 536870912
      %v6782 = vshrl.u32 %v6781, 30
      %v6783 = vshll.u32 %v6782, 30
      %v6784 = vsub.s32 %v6780, %v6783
      %vm6785 = vcmp.lt.s32.totalorder %v6784, 0
      %v6786 = vsub.s32 0, %v6784
      %v6787 = vsel %vm6785, %v6786, %v6784
      %v6788 = vclz %v6787
      %v6789 = vsub.s32 %v6788, 2
      %vm6790 = vcmp.gt.s32.totalorder 0, %v6789
      %v6791 = vsel %vm6790, 0, %v6789
      %v6792 = vsub.s32 32, %v6791
      %v6793 = vshll.u32 %v6784, %v6791
      %v6794 = vshrl.u32 %v6776, %v6792
      %v6795 = vor.u32 %v6793, %v6794
      %v6796 = vsub.s32 4294967266, %v6791
      %v6797 = vadd.s32 %v6796, 127
      %v6798 = vshll.u32 %v6797, 23
      %v6799 = vor.u32 4788187, %v6798
      %v6800 = vand.u32 2147483647, %v6799
      %v6802 = vcvt.s32.f32 %v6795
      %v6803 = vmul.f32 %v6802, %v6800
      %v6804 = vxor.u32 %v6803, 2147483648
      %v6805 = vsel %vm6722, %v6804, %v6803
      %v6806 = vsub.s32 4, %v6782
      %v6807 = vsel %vm6722, %v6806, %v6782
      %v6808 = vsel %vm6721, %v981, %v6805
      %v6809 = vsel %vm6721, 0, %v6807
      %v6810 = vcosq.f32.pop %v6808
      %v6811 = vsinq.f32.pop %v6808
      %vm6812 = vweird.f32 %v981
      %v6813 = vand.u32 %v6809, 3
      %vm6814 = vcmp.lt.s32.totalorder %v6813, 2
      %vm6815 = vcmp.eq.s32.totalorder %v6813, 0
      %v6816 = vxor.u32 %v6811, 2147483648
      %v6817 = vsel %vm6815, %v6810, %v6816
      %vm6818 = vcmp.eq.s32.totalorder %v6813, 2
      %v6819 = vxor.u32 %v6810, 2147483648
      %v6820 = vsel %vm6818, %v6819, %v6811
      %v6821 = vsel %vm6814, %v6817, %v6820
      %v6822 = vsel %vm6812, nan, %v6821
      %v6823 = vand.u32 2147483647, %v982
      %vm6824 = vcmp.le.f32.partialorder %v6823, 0.7853982
      %vm6825 = vcmp.lt.s32.totalorder %v982, 0
      %v6826 = vand.u32 %v982, 2139095040
      %v6827 = vshrl.u32 %v6826, 23
      %v6828 = vsub.s32 %v6827, 127
      %v6829 = vand.u32 2147483647, %v982
      %v6830 = vand.u32 %v6829, 8388607
      %v6831 = vor.u32 %v6830, 8388608
      %v6832 = vsub.s32 0, %v6831
      %v6833 = vadd.s32 %v6828, 1
      %vm6834 = vcmp.gt.s32.totalorder %v6833, 0
      %v6835 = vsel %vm6834, %v6833, 0
      %v6836 = vshrl.u32 %v6835, 5
      %v6837 = vand.u32 %v6835, 31
      %v6838 = vsub.s32 32, %v6837
      %v6839 = vshrl.u32 683565275, %v6838
      %v6840 = vshll.u32 683565275, %v6837
      %v6841 = vshrl.u32 2475754826, %v6838
      %v6842 = vor.u32 %v6840, %v6841
      %v6843 = vshll.u32 2475754826, %v6837
      %v6844 = vshrl.u32 2131351028, %v6838
      %v6845 = vor.u32 %v6843, %v6844
      %v6846 = vshll.u32 2131351028, %v6837
      %v6847 = vshrl.u32 2102212464, %v6838
      %v6848 = vor.u32 %v6846, %v6847
      %v6849 = vshll.u32 2102212464, %v6837
      %v6850 = vshrl.u32 920167782, %v6838
      %v6851 = vor.u32 %v6849, %v6850
      %v6852 = vshll.u32 920167782, %v6837
      %v6853 = vshrl.u32 1326507024, %v6838
      %v6854 = vor.u32 %v6852, %v6853
      %vm6855 = vcmp.lt.s32.totalorder %v6836, 1
      %vm6856 = vcmp.lt.s32.totalorder %v6836, 2
      %vm6857 = vcmp.lt.s32.totalorder %v6836, 3
      %vm6858 = vcmp.lt.s32.totalorder %v6836, 4
      %v6859 = vsel %vm6855, %v6839, %v6842
      %v6860 = vsel %vm6858, %v6848, 2102212464
      %v6861 = vsel %vm6857, %v6845, %v6860
      %v6862 = vsel %vm6856, %v6859, %v6861
      %v6863 = vsel %vm6855, %v6842, %v6845
      %v6864 = vsel %vm6858, %v6851, 920167782
      %v6865 = vsel %vm6857, %v6848, %v6864
      %v6866 = vsel %vm6856, %v6863, %v6865
      %v6867 = vsel %vm6855, %v6845, %v6848
      %v6868 = vsel %vm6858, %v6854, 1326507024
      %v6869 = vsel %vm6857, %v6851, %v6868
      %v6870 = vsel %vm6856, %v6867, %v6869
      %v6871 = vshll.u32 %v6831, 8
      %v6872 = vmul.u32.u64.compose %v6871, %v6870
      %v6873 = vextract.low.u32 %v6872
      %v6874 = vextract.high.u32 %v6872
      %v6875 = vmul.u32.u64.compose %v6871, %v6866
      %v6876 = vextract.low.u32 %v6875
      %v6877 = vextract.high.u32 %v6875
      %v6878 = vmul.u32 %v6871, %v6862
      %v6879 = vadd.s32 %v6874, %v6876
      %vm6880 = vc.u32 %v6874, %v6876
      %v6881 = vadd.s32 %v6877, 1
      %v6882 = vsel %vm6880, %v6881, %v6877
      %v6883 = vadd.s32 %v6878, %v6882
      %v6884 = vadd.s32 %v6883, 536870912
      %v6885 = vshrl.u32 %v6884, 30
      %v6886 = vshll.u32 %v6885, 30
      %v6887 = vsub.s32 %v6883, %v6886
      %vm6888 = vcmp.lt.s32.totalorder %v6887, 0
      %v6889 = vsub.s32 0, %v6887
      %v6890 = vsel %vm6888, %v6889, %v6887
      %v6891 = vclz %v6890
      %v6892 = vsub.s32 %v6891, 2
      %vm6893 = vcmp.gt.s32.totalorder 0, %v6892
      %v6894 = vsel %vm6893, 0, %v6892
      %v6895 = vsub.s32 32, %v6894
      %v6896 = vshll.u32 %v6887, %v6894
      %v6897 = vshrl.u32 %v6879, %v6895
      %v6898 = vor.u32 %v6896, %v6897
      %v6899 = vsub.s32 4294967266, %v6894
      %v6900 = vadd.s32 %v6899, 127
      %v6901 = vshll.u32 %v6900, 23
      %v6902 = vor.u32 4788187, %v6901
      %v6903 = vand.u32 2147483647, %v6902
      %v6905 = vcvt.s32.f32 %v6898
      %v6906 = vmul.f32 %v6905, %v6903
      %v6907 = vxor.u32 %v6906, 2147483648
      %v6908 = vsel %vm6825, %v6907, %v6906
      %v6909 = vsub.s32 4, %v6885
      %v6910 = vsel %vm6825, %v6909, %v6885
      %v6911 = vsel %vm6824, %v982, %v6908
      %v6912 = vsel %vm6824, 0, %v6910
      %v6913 = vcosq.f32.pop %v6911
      %v6914 = vsinq.f32.pop %v6911
      %vm6915 = vweird.f32 %v982
      %v6916 = vand.u32 %v6912, 3
      %vm6917 = vcmp.lt.s32.totalorder %v6916, 2
      %vm6918 = vcmp.eq.s32.totalorder %v6916, 0
      %v6919 = vxor.u32 %v6914, 2147483648
      %v6920 = vsel %vm6918, %v6913, %v6919
      %vm6921 = vcmp.eq.s32.totalorder %v6916, 2
      %v6922 = vxor.u32 %v6913, 2147483648
      %v6923 = vsel %vm6921, %v6922, %v6914
      %v6924 = vsel %vm6917, %v6920, %v6923
      %v6925 = vsel %vm6915, nan, %v6924
      %v6926 = vand.u32 2147483647, %v983
      %vm6927 = vcmp.le.f32.partialorder %v6926, 0.7853982
      %vm6928 = vcmp.lt.s32.totalorder %v983, 0
      %v6929 = vand.u32 %v983, 2139095040
      %v6930 = vshrl.u32 %v6929, 23
      %v6931 = vsub.s32 %v6930, 127
      %v6932 = vand.u32 2147483647, %v983
      %v6933 = vand.u32 %v6932, 8388607
      %v6934 = vor.u32 %v6933, 8388608
      %v6935 = vsub.s32 0, %v6934
      %v6936 = vadd.s32 %v6931, 1
      %vm6937 = vcmp.gt.s32.totalorder %v6936, 0
      %v6938 = vsel %vm6937, %v6936, 0
      %v6939 = vshrl.u32 %v6938, 5
      %v6940 = vand.u32 %v6938, 31
      %v6941 = vsub.s32 32, %v6940
      %v6942 = vshrl.u32 683565275, %v6941
      %v6943 = vshll.u32 683565275, %v6940
      %v6944 = vshrl.u32 2475754826, %v6941
      %v6945 = vor.u32 %v6943, %v6944
      %v6946 = vshll.u32 2475754826, %v6940
      %v6947 = vshrl.u32 2131351028, %v6941
      %v6948 = vor.u32 %v6946, %v6947
      %v6949 = vshll.u32 2131351028, %v6940
      %v6950 = vshrl.u32 2102212464, %v6941
      %v6951 = vor.u32 %v6949, %v6950
      %v6952 = vshll.u32 2102212464, %v6940
      %v6953 = vshrl.u32 920167782, %v6941
      %v6954 = vor.u32 %v6952, %v6953
      %v6955 = vshll.u32 920167782, %v6940
      %v6956 = vshrl.u32 1326507024, %v6941
      %v6957 = vor.u32 %v6955, %v6956
      %vm6958 = vcmp.lt.s32.totalorder %v6939, 1
      %vm6959 = vcmp.lt.s32.totalorder %v6939, 2
      %vm6960 = vcmp.lt.s32.totalorder %v6939, 3
      %vm6961 = vcmp.lt.s32.totalorder %v6939, 4
      %v6962 = vsel %vm6958, %v6942, %v6945
      %v6963 = vsel %vm6961, %v6951, 2102212464
      %v6964 = vsel %vm6960, %v6948, %v6963
      %v6965 = vsel %vm6959, %v6962, %v6964
      %v6966 = vsel %vm6958, %v6945, %v6948
      %v6967 = vsel %vm6961, %v6954, 920167782
      %v6968 = vsel %vm6960, %v6951, %v6967
      %v6969 = vsel %vm6959, %v6966, %v6968
      %v6970 = vsel %vm6958, %v6948, %v6951
      %v6971 = vsel %vm6961, %v6957, 1326507024
      %v6972 = vsel %vm6960, %v6954, %v6971
      %v6973 = vsel %vm6959, %v6970, %v6972
      %v6974 = vshll.u32 %v6934, 8
      %v6975 = vmul.u32.u64.compose %v6974, %v6973
      %v6976 = vextract.low.u32 %v6975
      %v6977 = vextract.high.u32 %v6975
      %v6978 = vmul.u32.u64.compose %v6974, %v6969
      %v6979 = vextract.low.u32 %v6978
      %v6980 = vextract.high.u32 %v6978
      %v6981 = vmul.u32 %v6974, %v6965
      %v6982 = vadd.s32 %v6977, %v6979
      %vm6983 = vc.u32 %v6977, %v6979
      %v6984 = vadd.s32 %v6980, 1
      %v6985 = vsel %vm6983, %v6984, %v6980
      %v6986 = vadd.s32 %v6981, %v6985
      %v6987 = vadd.s32 %v6986, 536870912
      %v6988 = vshrl.u32 %v6987, 30
      %v6989 = vshll.u32 %v6988, 30
      %v6990 = vsub.s32 %v6986, %v6989
      %vm6991 = vcmp.lt.s32.totalorder %v6990, 0
      %v6992 = vsub.s32 0, %v6990
      %v6993 = vsel %vm6991, %v6992, %v6990
      %v6994 = vclz %v6993
      %v6995 = vsub.s32 %v6994, 2
      %vm6996 = vcmp.gt.s32.totalorder 0, %v6995
      %v6997 = vsel %vm6996, 0, %v6995
      %v6998 = vsub.s32 32, %v6997
      %v6999 = vshll.u32 %v6990, %v6997
      %v7000 = vshrl.u32 %v6982, %v6998
      %v7001 = vor.u32 %v6999, %v7000
      %v7002 = vsub.s32 4294967266, %v6997
      %v7003 = vadd.s32 %v7002, 127
      %v7004 = vshll.u32 %v7003, 23
      %v7005 = vor.u32 4788187, %v7004
      %v7006 = vand.u32 2147483647, %v7005
      %v7008 = vcvt.s32.f32 %v7001
      %v7009 = vmul.f32 %v7008, %v7006
      %v7010 = vxor.u32 %v7009, 2147483648
      %v7011 = vsel %vm6928, %v7010, %v7009
      %v7012 = vsub.s32 4, %v6988
      %v7013 = vsel %vm6928, %v7012, %v6988
      %v7014 = vsel %vm6927, %v983, %v7011
      %v7015 = vsel %vm6927, 0, %v7013
      %v7016 = vcosq.f32.pop %v7014
      %v7017 = vsinq.f32.pop %v7014
      %vm7018 = vweird.f32 %v983
      %v7019 = vand.u32 %v7015, 3
      %vm7020 = vcmp.lt.s32.totalorder %v7019, 2
      %vm7021 = vcmp.eq.s32.totalorder %v7019, 0
      %v7022 = vxor.u32 %v7017, 2147483648
      %v7023 = vsel %vm7021, %v7016, %v7022
      %vm7024 = vcmp.eq.s32.totalorder %v7019, 2
      %v7025 = vxor.u32 %v7016, 2147483648
      %v7026 = vsel %vm7024, %v7025, %v7017
      %v7027 = vsel %vm7020, %v7023, %v7026
      %v7028 = vsel %vm7018, nan, %v7027
      %v7029 = vand.u32 2147483647, %v984
      %vm7030 = vcmp.le.f32.partialorder %v7029, 0.7853982
      %vm7031 = vcmp.lt.s32.totalorder %v984, 0
      %v7032 = vand.u32 %v984, 2139095040
      %v7033 = vshrl.u32 %v7032, 23
      %v7034 = vsub.s32 %v7033, 127
      %v7035 = vand.u32 2147483647, %v984
      %v7036 = vand.u32 %v7035, 8388607
      %v7037 = vor.u32 %v7036, 8388608
      %v7038 = vsub.s32 0, %v7037
      %v7039 = vadd.s32 %v7034, 1
      %vm7040 = vcmp.gt.s32.totalorder %v7039, 0
      %v7041 = vsel %vm7040, %v7039, 0
      %v7042 = vshrl.u32 %v7041, 5
      %v7043 = vand.u32 %v7041, 31
      %v7044 = vsub.s32 32, %v7043
      %v7045 = vshrl.u32 683565275, %v7044
      %v7046 = vshll.u32 683565275, %v7043
      %v7047 = vshrl.u32 2475754826, %v7044
      %v7048 = vor.u32 %v7046, %v7047
      %v7049 = vshll.u32 2475754826, %v7043
      %v7050 = vshrl.u32 2131351028, %v7044
      %v7051 = vor.u32 %v7049, %v7050
      %v7052 = vshll.u32 2131351028, %v7043
      %v7053 = vshrl.u32 2102212464, %v7044
      %v7054 = vor.u32 %v7052, %v7053
      %v7055 = vshll.u32 2102212464, %v7043
      %v7056 = vshrl.u32 920167782, %v7044
      %v7057 = vor.u32 %v7055, %v7056
      %v7058 = vshll.u32 920167782, %v7043
      %v7059 = vshrl.u32 1326507024, %v7044
      %v7060 = vor.u32 %v7058, %v7059
      %vm7061 = vcmp.lt.s32.totalorder %v7042, 1
      %vm7062 = vcmp.lt.s32.totalorder %v7042, 2
      %vm7063 = vcmp.lt.s32.totalorder %v7042, 3
      %vm7064 = vcmp.lt.s32.totalorder %v7042, 4
      %v7065 = vsel %vm7061, %v7045, %v7048
      %v7066 = vsel %vm7064, %v7054, 2102212464
      %v7067 = vsel %vm7063, %v7051, %v7066
      %v7068 = vsel %vm7062, %v7065, %v7067
      %v7069 = vsel %vm7061, %v7048, %v7051
      %v7070 = vsel %vm7064, %v7057, 920167782
      %v7071 = vsel %vm7063, %v7054, %v7070
      %v7072 = vsel %vm7062, %v7069, %v7071
      %v7073 = vsel %vm7061, %v7051, %v7054
      %v7074 = vsel %vm7064, %v7060, 1326507024
      %v7075 = vsel %vm7063, %v7057, %v7074
      %v7076 = vsel %vm7062, %v7073, %v7075
      %v7077 = vshll.u32 %v7037, 8
      %v7078 = vmul.u32.u64.compose %v7077, %v7076
      %v7079 = vextract.low.u32 %v7078
      %v7080 = vextract.high.u32 %v7078
      %v7081 = vmul.u32.u64.compose %v7077, %v7072
      %v7082 = vextract.low.u32 %v7081
      %v7083 = vextract.high.u32 %v7081
      %v7084 = vmul.u32 %v7077, %v7068
      %v7085 = vadd.s32 %v7080, %v7082
      %vm7086 = vc.u32 %v7080, %v7082
      %v7087 = vadd.s32 %v7083, 1
      %v7088 = vsel %vm7086, %v7087, %v7083
      %v7089 = vadd.s32 %v7084, %v7088
      %v7090 = vadd.s32 %v7089, 536870912
      %v7091 = vshrl.u32 %v7090, 30
      %v7092 = vshll.u32 %v7091, 30
      %v7093 = vsub.s32 %v7089, %v7092
      %vm7094 = vcmp.lt.s32.totalorder %v7093, 0
      %v7095 = vsub.s32 0, %v7093
      %v7096 = vsel %vm7094, %v7095, %v7093
      %v7097 = vclz %v7096
      %v7098 = vsub.s32 %v7097, 2
      %vm7099 = vcmp.gt.s32.totalorder 0, %v7098
      %v7100 = vsel %vm7099, 0, %v7098
      %v7101 = vsub.s32 32, %v7100
      %v7102 = vshll.u32 %v7093, %v7100
      %v7103 = vshrl.u32 %v7085, %v7101
      %v7104 = vor.u32 %v7102, %v7103
      %v7105 = vsub.s32 4294967266, %v7100
      %v7106 = vadd.s32 %v7105, 127
      %v7107 = vshll.u32 %v7106, 23
      %v7108 = vor.u32 4788187, %v7107
      %v7109 = vand.u32 2147483647, %v7108
      %v7111 = vcvt.s32.f32 %v7104
      %v7112 = vmul.f32 %v7111, %v7109
      %v7113 = vxor.u32 %v7112, 2147483648
      %v7114 = vsel %vm7031, %v7113, %v7112
      %v7115 = vsub.s32 4, %v7091
      %v7116 = vsel %vm7031, %v7115, %v7091
      %v7117 = vsel %vm7030, %v984, %v7114
      %v7118 = vsel %vm7030, 0, %v7116
      %v7119 = vcosq.f32.pop %v7117
      %v7120 = vsinq.f32.pop %v7117
      %vm7121 = vweird.f32 %v984
      %v7122 = vand.u32 %v7118, 3
      %vm7123 = vcmp.lt.s32.totalorder %v7122, 2
      %vm7124 = vcmp.eq.s32.totalorder %v7122, 0
      %v7125 = vxor.u32 %v7120, 2147483648
      %v7126 = vsel %vm7124, %v7119, %v7125
      %vm7127 = vcmp.eq.s32.totalorder %v7122, 2
      %v7128 = vxor.u32 %v7119, 2147483648
      %v7129 = vsel %vm7127, %v7128, %v7120
      %v7130 = vsel %vm7123, %v7126, %v7129
      %v7131 = vsel %vm7121, nan, %v7130
      %v7132 = vand.u32 2147483647, %v985
      %vm7133 = vcmp.le.f32.partialorder %v7132, 0.7853982
      %vm7134 = vcmp.lt.s32.totalorder %v985, 0
      %v7135 = vand.u32 %v985, 2139095040
      %v7136 = vshrl.u32 %v7135, 23
      %v7137 = vsub.s32 %v7136, 127
      %v7138 = vand.u32 2147483647, %v985
      %v7139 = vand.u32 %v7138, 8388607
      %v7140 = vor.u32 %v7139, 8388608
      %v7141 = vsub.s32 0, %v7140
      %v7142 = vadd.s32 %v7137, 1
      %vm7143 = vcmp.gt.s32.totalorder %v7142, 0
      %v7144 = vsel %vm7143, %v7142, 0
      %v7145 = vshrl.u32 %v7144, 5
      %v7146 = vand.u32 %v7144, 31
      %v7147 = vsub.s32 32, %v7146
      %v7148 = vshrl.u32 683565275, %v7147
      %v7149 = vshll.u32 683565275, %v7146
      %v7150 = vshrl.u32 2475754826, %v7147
      %v7151 = vor.u32 %v7149, %v7150
      %v7152 = vshll.u32 2475754826, %v7146
      %v7153 = vshrl.u32 2131351028, %v7147
      %v7154 = vor.u32 %v7152, %v7153
      %v7155 = vshll.u32 2131351028, %v7146
      %v7156 = vshrl.u32 2102212464, %v7147
      %v7157 = vor.u32 %v7155, %v7156
      %v7158 = vshll.u32 2102212464, %v7146
      %v7159 = vshrl.u32 920167782, %v7147
      %v7160 = vor.u32 %v7158, %v7159
      %v7161 = vshll.u32 920167782, %v7146
      %v7162 = vshrl.u32 1326507024, %v7147
      %v7163 = vor.u32 %v7161, %v7162
      %vm7164 = vcmp.lt.s32.totalorder %v7145, 1
      %vm7165 = vcmp.lt.s32.totalorder %v7145, 2
      %vm7166 = vcmp.lt.s32.totalorder %v7145, 3
      %vm7167 = vcmp.lt.s32.totalorder %v7145, 4
      %v7168 = vsel %vm7164, %v7148, %v7151
      %v7169 = vsel %vm7167, %v7157, 2102212464
      %v7170 = vsel %vm7166, %v7154, %v7169
      %v7171 = vsel %vm7165, %v7168, %v7170
      %v7172 = vsel %vm7164, %v7151, %v7154
      %v7173 = vsel %vm7167, %v7160, 920167782
      %v7174 = vsel %vm7166, %v7157, %v7173
      %v7175 = vsel %vm7165, %v7172, %v7174
      %v7176 = vsel %vm7164, %v7154, %v7157
      %v7177 = vsel %vm7167, %v7163, 1326507024
      %v7178 = vsel %vm7166, %v7160, %v7177
      %v7179 = vsel %vm7165, %v7176, %v7178
      %v7180 = vshll.u32 %v7140, 8
      %v7181 = vmul.u32.u64.compose %v7180, %v7179
      %v7182 = vextract.low.u32 %v7181
      %v7183 = vextract.high.u32 %v7181
      %v7184 = vmul.u32.u64.compose %v7180, %v7175
      %v7185 = vextract.low.u32 %v7184
      %v7186 = vextract.high.u32 %v7184
      %v7187 = vmul.u32 %v7180, %v7171
      %v7188 = vadd.s32 %v7183, %v7185
      %vm7189 = vc.u32 %v7183, %v7185
      %v7190 = vadd.s32 %v7186, 1
      %v7191 = vsel %vm7189, %v7190, %v7186
      %v7192 = vadd.s32 %v7187, %v7191
      %v7193 = vadd.s32 %v7192, 536870912
      %v7194 = vshrl.u32 %v7193, 30
      %v7195 = vshll.u32 %v7194, 30
      %v7196 = vsub.s32 %v7192, %v7195
      %vm7197 = vcmp.lt.s32.totalorder %v7196, 0
      %v7198 = vsub.s32 0, %v7196
      %v7199 = vsel %vm7197, %v7198, %v7196
      %v7200 = vclz %v7199
      %v7201 = vsub.s32 %v7200, 2
      %vm7202 = vcmp.gt.s32.totalorder 0, %v7201
      %v7203 = vsel %vm7202, 0, %v7201
      %v7204 = vsub.s32 32, %v7203
      %v7205 = vshll.u32 %v7196, %v7203
      %v7206 = vshrl.u32 %v7188, %v7204
      %v7207 = vor.u32 %v7205, %v7206
      %v7208 = vsub.s32 4294967266, %v7203
      %v7209 = vadd.s32 %v7208, 127
      %v7210 = vshll.u32 %v7209, 23
      %v7211 = vor.u32 4788187, %v7210
      %v7212 = vand.u32 2147483647, %v7211
      %v7214 = vcvt.s32.f32 %v7207
      %v7215 = vmul.f32 %v7214, %v7212
      %v7216 = vxor.u32 %v7215, 2147483648
      %v7217 = vsel %vm7134, %v7216, %v7215
      %v7218 = vsub.s32 4, %v7194
      %v7219 = vsel %vm7134, %v7218, %v7194
      %v7220 = vsel %vm7133, %v985, %v7217
      %v7221 = vsel %vm7133, 0, %v7219
      %v7222 = vcosq.f32.pop %v7220
      %v7223 = vsinq.f32.pop %v7220
      %vm7224 = vweird.f32 %v985
      %v7225 = vand.u32 %v7221, 3
      %vm7226 = vcmp.lt.s32.totalorder %v7225, 2
      %vm7227 = vcmp.eq.s32.totalorder %v7225, 0
      %v7228 = vxor.u32 %v7223, 2147483648
      %v7229 = vsel %vm7227, %v7222, %v7228
      %vm7230 = vcmp.eq.s32.totalorder %v7225, 2
      %v7231 = vxor.u32 %v7222, 2147483648
      %v7232 = vsel %vm7230, %v7231, %v7223
      %v7233 = vsel %vm7226, %v7229, %v7232
      %v7234 = vsel %vm7224, nan, %v7233
      %v7235 = vand.u32 2147483647, %v986
      %vm7236 = vcmp.le.f32.partialorder %v7235, 0.7853982
      %vm7237 = vcmp.lt.s32.totalorder %v986, 0
      %v7238 = vand.u32 %v986, 2139095040
      %v7239 = vshrl.u32 %v7238, 23
      %v7240 = vsub.s32 %v7239, 127
      %v7241 = vand.u32 2147483647, %v986
      %v7242 = vand.u32 %v7241, 8388607
      %v7243 = vor.u32 %v7242, 8388608
      %v7244 = vsub.s32 0, %v7243
      %v7245 = vadd.s32 %v7240, 1
      %vm7246 = vcmp.gt.s32.totalorder %v7245, 0
      %v7247 = vsel %vm7246, %v7245, 0
      %v7248 = vshrl.u32 %v7247, 5
      %v7249 = vand.u32 %v7247, 31
      %v7250 = vsub.s32 32, %v7249
      %v7251 = vshrl.u32 683565275, %v7250
      %v7252 = vshll.u32 683565275, %v7249
      %v7253 = vshrl.u32 2475754826, %v7250
      %v7254 = vor.u32 %v7252, %v7253
      %v7255 = vshll.u32 2475754826, %v7249
      %v7256 = vshrl.u32 2131351028, %v7250
      %v7257 = vor.u32 %v7255, %v7256
      %v7258 = vshll.u32 2131351028, %v7249
      %v7259 = vshrl.u32 2102212464, %v7250
      %v7260 = vor.u32 %v7258, %v7259
      %v7261 = vshll.u32 2102212464, %v7249
      %v7262 = vshrl.u32 920167782, %v7250
      %v7263 = vor.u32 %v7261, %v7262
      %v7264 = vshll.u32 920167782, %v7249
      %v7265 = vshrl.u32 1326507024, %v7250
      %v7266 = vor.u32 %v7264, %v7265
      %vm7267 = vcmp.lt.s32.totalorder %v7248, 1
      %vm7268 = vcmp.lt.s32.totalorder %v7248, 2
      %vm7269 = vcmp.lt.s32.totalorder %v7248, 3
      %vm7270 = vcmp.lt.s32.totalorder %v7248, 4
      %v7271 = vsel %vm7267, %v7251, %v7254
      %v7272 = vsel %vm7270, %v7260, 2102212464
      %v7273 = vsel %vm7269, %v7257, %v7272
      %v7274 = vsel %vm7268, %v7271, %v7273
      %v7275 = vsel %vm7267, %v7254, %v7257
      %v7276 = vsel %vm7270, %v7263, 920167782
      %v7277 = vsel %vm7269, %v7260, %v7276
      %v7278 = vsel %vm7268, %v7275, %v7277
      %v7279 = vsel %vm7267, %v7257, %v7260
      %v7280 = vsel %vm7270, %v7266, 1326507024
      %v7281 = vsel %vm7269, %v7263, %v7280
      %v7282 = vsel %vm7268, %v7279, %v7281
      %v7283 = vshll.u32 %v7243, 8
      %v7284 = vmul.u32.u64.compose %v7283, %v7282
      %v7285 = vextract.low.u32 %v7284
      %v7286 = vextract.high.u32 %v7284
      %v7287 = vmul.u32.u64.compose %v7283, %v7278
      %v7288 = vextract.low.u32 %v7287
      %v7289 = vextract.high.u32 %v7287
      %v7290 = vmul.u32 %v7283, %v7274
      %v7291 = vadd.s32 %v7286, %v7288
      %vm7292 = vc.u32 %v7286, %v7288
      %v7293 = vadd.s32 %v7289, 1
      %v7294 = vsel %vm7292, %v7293, %v7289
      %v7295 = vadd.s32 %v7290, %v7294
      %v7296 = vadd.s32 %v7295, 536870912
      %v7297 = vshrl.u32 %v7296, 30
      %v7298 = vshll.u32 %v7297, 30
      %v7299 = vsub.s32 %v7295, %v7298
      %vm7300 = vcmp.lt.s32.totalorder %v7299, 0
      %v7301 = vsub.s32 0, %v7299
      %v7302 = vsel %vm7300, %v7301, %v7299
      %v7303 = vclz %v7302
      %v7304 = vsub.s32 %v7303, 2
      %vm7305 = vcmp.gt.s32.totalorder 0, %v7304
      %v7306 = vsel %vm7305, 0, %v7304
      %v7307 = vsub.s32 32, %v7306
      %v7308 = vshll.u32 %v7299, %v7306
      %v7309 = vshrl.u32 %v7291, %v7307
      %v7310 = vor.u32 %v7308, %v7309
      %v7311 = vsub.s32 4294967266, %v7306
      %v7312 = vadd.s32 %v7311, 127
      %v7313 = vshll.u32 %v7312, 23
      %v7314 = vor.u32 4788187, %v7313
      %v7315 = vand.u32 2147483647, %v7314
      %v7317 = vcvt.s32.f32 %v7310
      %v7318 = vmul.f32 %v7317, %v7315
      %v7319 = vxor.u32 %v7318, 2147483648
      %v7320 = vsel %vm7237, %v7319, %v7318
      %v7321 = vsub.s32 4, %v7297
      %v7322 = vsel %vm7237, %v7321, %v7297
      %v7323 = vsel %vm7236, %v986, %v7320
      %v7324 = vsel %vm7236, 0, %v7322
      %v7325 = vcosq.f32.pop %v7323
      %v7326 = vsinq.f32.pop %v7323
      %vm7327 = vweird.f32 %v986
      %v7328 = vand.u32 %v7324, 3
      %vm7329 = vcmp.lt.s32.totalorder %v7328, 2
      %vm7330 = vcmp.eq.s32.totalorder %v7328, 0
      %v7331 = vxor.u32 %v7326, 2147483648
      %v7332 = vsel %vm7330, %v7325, %v7331
      %vm7333 = vcmp.eq.s32.totalorder %v7328, 2
      %v7334 = vxor.u32 %v7325, 2147483648
      %v7335 = vsel %vm7333, %v7334, %v7326
      %v7336 = vsel %vm7329, %v7332, %v7335
      %v7337 = vsel %vm7327, nan, %v7336
      %v7338 = vand.u32 2147483647, %v987
      %vm7339 = vcmp.le.f32.partialorder %v7338, 0.7853982
      %vm7340 = vcmp.lt.s32.totalorder %v987, 0
      %v7341 = vand.u32 %v987, 2139095040
      %v7342 = vshrl.u32 %v7341, 23
      %v7343 = vsub.s32 %v7342, 127
      %v7344 = vand.u32 2147483647, %v987
      %v7345 = vand.u32 %v7344, 8388607
      %v7346 = vor.u32 %v7345, 8388608
      %v7347 = vsub.s32 0, %v7346
      %v7348 = vadd.s32 %v7343, 1
      %vm7349 = vcmp.gt.s32.totalorder %v7348, 0
      %v7350 = vsel %vm7349, %v7348, 0
      %v7351 = vshrl.u32 %v7350, 5
      %v7352 = vand.u32 %v7350, 31
      %v7353 = vsub.s32 32, %v7352
      %v7354 = vshrl.u32 683565275, %v7353
      %v7355 = vshll.u32 683565275, %v7352
      %v7356 = vshrl.u32 2475754826, %v7353
      %v7357 = vor.u32 %v7355, %v7356
      %v7358 = vshll.u32 2475754826, %v7352
      %v7359 = vshrl.u32 2131351028, %v7353
      %v7360 = vor.u32 %v7358, %v7359
      %v7361 = vshll.u32 2131351028, %v7352
      %v7362 = vshrl.u32 2102212464, %v7353
      %v7363 = vor.u32 %v7361, %v7362
      %v7364 = vshll.u32 2102212464, %v7352
      %v7365 = vshrl.u32 920167782, %v7353
      %v7366 = vor.u32 %v7364, %v7365
      %v7367 = vshll.u32 920167782, %v7352
      %v7368 = vshrl.u32 1326507024, %v7353
      %v7369 = vor.u32 %v7367, %v7368
      %vm7370 = vcmp.lt.s32.totalorder %v7351, 1
      %vm7371 = vcmp.lt.s32.totalorder %v7351, 2
      %vm7372 = vcmp.lt.s32.totalorder %v7351, 3
      %vm7373 = vcmp.lt.s32.totalorder %v7351, 4
      %v7374 = vsel %vm7370, %v7354, %v7357
      %v7375 = vsel %vm7373, %v7363, 2102212464
      %v7376 = vsel %vm7372, %v7360, %v7375
      %v7377 = vsel %vm7371, %v7374, %v7376
      %v7378 = vsel %vm7370, %v7357, %v7360
      %v7379 = vsel %vm7373, %v7366, 920167782
      %v7380 = vsel %vm7372, %v7363, %v7379
      %v7381 = vsel %vm7371, %v7378, %v7380
      %v7382 = vsel %vm7370, %v7360, %v7363
      %v7383 = vsel %vm7373, %v7369, 1326507024
      %v7384 = vsel %vm7372, %v7366, %v7383
      %v7385 = vsel %vm7371, %v7382, %v7384
      %v7386 = vshll.u32 %v7346, 8
      %v7387 = vmul.u32.u64.compose %v7386, %v7385
      %v7388 = vextract.low.u32 %v7387
      %v7389 = vextract.high.u32 %v7387
      %v7390 = vmul.u32.u64.compose %v7386, %v7381
      %v7391 = vextract.low.u32 %v7390
      %v7392 = vextract.high.u32 %v7390
      %v7393 = vmul.u32 %v7386, %v7377
      %v7394 = vadd.s32 %v7389, %v7391
      %vm7395 = vc.u32 %v7389, %v7391
      %v7396 = vadd.s32 %v7392, 1
      %v7397 = vsel %vm7395, %v7396, %v7392
      %v7398 = vadd.s32 %v7393, %v7397
      %v7399 = vadd.s32 %v7398, 536870912
      %v7400 = vshrl.u32 %v7399, 30
      %v7401 = vshll.u32 %v7400, 30
      %v7402 = vsub.s32 %v7398, %v7401
      %vm7403 = vcmp.lt.s32.totalorder %v7402, 0
      %v7404 = vsub.s32 0, %v7402
      %v7405 = vsel %vm7403, %v7404, %v7402
      %v7406 = vclz %v7405
      %v7407 = vsub.s32 %v7406, 2
      %vm7408 = vcmp.gt.s32.totalorder 0, %v7407
      %v7409 = vsel %vm7408, 0, %v7407
      %v7410 = vsub.s32 32, %v7409
      %v7411 = vshll.u32 %v7402, %v7409
      %v7412 = vshrl.u32 %v7394, %v7410
      %v7413 = vor.u32 %v7411, %v7412
      %v7414 = vsub.s32 4294967266, %v7409
      %v7415 = vadd.s32 %v7414, 127
      %v7416 = vshll.u32 %v7415, 23
      %v7417 = vor.u32 4788187, %v7416
      %v7418 = vand.u32 2147483647, %v7417
      %v7420 = vcvt.s32.f32 %v7413
      %v7421 = vmul.f32 %v7420, %v7418
      %v7422 = vxor.u32 %v7421, 2147483648
      %v7423 = vsel %vm7340, %v7422, %v7421
      %v7424 = vsub.s32 4, %v7400
      %v7425 = vsel %vm7340, %v7424, %v7400
      %v7426 = vsel %vm7339, %v987, %v7423
      %v7427 = vsel %vm7339, 0, %v7425
      %v7428 = vcosq.f32.pop %v7426
      %v7429 = vsinq.f32.pop %v7426
      %vm7430 = vweird.f32 %v987
      %v7431 = vand.u32 %v7427, 3
      %vm7432 = vcmp.lt.s32.totalorder %v7431, 2
      %vm7433 = vcmp.eq.s32.totalorder %v7431, 0
      %v7434 = vxor.u32 %v7429, 2147483648
      %v7435 = vsel %vm7433, %v7428, %v7434
      %vm7436 = vcmp.eq.s32.totalorder %v7431, 2
      %v7437 = vxor.u32 %v7428, 2147483648
      %v7438 = vsel %vm7436, %v7437, %v7429
      %v7439 = vsel %vm7432, %v7435, %v7438
      %v7440 = vsel %vm7430, nan, %v7439
      %v7441 = vand.u32 2147483647, %v988
      %vm7442 = vcmp.le.f32.partialorder %v7441, 0.7853982
      %vm7443 = vcmp.lt.s32.totalorder %v988, 0
      %v7444 = vand.u32 %v988, 2139095040
      %v7445 = vshrl.u32 %v7444, 23
      %v7446 = vsub.s32 %v7445, 127
      %v7447 = vand.u32 2147483647, %v988
      %v7448 = vand.u32 %v7447, 8388607
      %v7449 = vor.u32 %v7448, 8388608
      %v7450 = vsub.s32 0, %v7449
      %v7451 = vadd.s32 %v7446, 1
      %vm7452 = vcmp.gt.s32.totalorder %v7451, 0
      %v7453 = vsel %vm7452, %v7451, 0
      %v7454 = vshrl.u32 %v7453, 5
      %v7455 = vand.u32 %v7453, 31
      %v7456 = vsub.s32 32, %v7455
      %v7457 = vshrl.u32 683565275, %v7456
      %v7458 = vshll.u32 683565275, %v7455
      %v7459 = vshrl.u32 2475754826, %v7456
      %v7460 = vor.u32 %v7458, %v7459
      %v7461 = vshll.u32 2475754826, %v7455
      %v7462 = vshrl.u32 2131351028, %v7456
      %v7463 = vor.u32 %v7461, %v7462
      %v7464 = vshll.u32 2131351028, %v7455
      %v7465 = vshrl.u32 2102212464, %v7456
      %v7466 = vor.u32 %v7464, %v7465
      %v7467 = vshll.u32 2102212464, %v7455
      %v7468 = vshrl.u32 920167782, %v7456
      %v7469 = vor.u32 %v7467, %v7468
      %v7470 = vshll.u32 920167782, %v7455
      %v7471 = vshrl.u32 1326507024, %v7456
      %v7472 = vor.u32 %v7470, %v7471
      %vm7473 = vcmp.lt.s32.totalorder %v7454, 1
      %vm7474 = vcmp.lt.s32.totalorder %v7454, 2
      %vm7475 = vcmp.lt.s32.totalorder %v7454, 3
      %vm7476 = vcmp.lt.s32.totalorder %v7454, 4
      %v7477 = vsel %vm7473, %v7457, %v7460
      %v7478 = vsel %vm7476, %v7466, 2102212464
      %v7479 = vsel %vm7475, %v7463, %v7478
      %v7480 = vsel %vm7474, %v7477, %v7479
      %v7481 = vsel %vm7473, %v7460, %v7463
      %v7482 = vsel %vm7476, %v7469, 920167782
      %v7483 = vsel %vm7475, %v7466, %v7482
      %v7484 = vsel %vm7474, %v7481, %v7483
      %v7485 = vsel %vm7473, %v7463, %v7466
      %v7486 = vsel %vm7476, %v7472, 1326507024
      %v7487 = vsel %vm7475, %v7469, %v7486
      %v7488 = vsel %vm7474, %v7485, %v7487
      %v7489 = vshll.u32 %v7449, 8
      %v7490 = vmul.u32.u64.compose %v7489, %v7488
      %v7491 = vextract.low.u32 %v7490
      %v7492 = vextract.high.u32 %v7490
      %v7493 = vmul.u32.u64.compose %v7489, %v7484
      %v7494 = vextract.low.u32 %v7493
      %v7495 = vextract.high.u32 %v7493
      %v7496 = vmul.u32 %v7489, %v7480
      %v7497 = vadd.s32 %v7492, %v7494
      %vm7498 = vc.u32 %v7492, %v7494
      %v7499 = vadd.s32 %v7495, 1
      %v7500 = vsel %vm7498, %v7499, %v7495
      %v7501 = vadd.s32 %v7496, %v7500
      %v7502 = vadd.s32 %v7501, 536870912
      %v7503 = vshrl.u32 %v7502, 30
      %v7504 = vshll.u32 %v7503, 30
      %v7505 = vsub.s32 %v7501, %v7504
      %vm7506 = vcmp.lt.s32.totalorder %v7505, 0
      %v7507 = vsub.s32 0, %v7505
      %v7508 = vsel %vm7506, %v7507, %v7505
      %v7509 = vclz %v7508
      %v7510 = vsub.s32 %v7509, 2
      %vm7511 = vcmp.gt.s32.totalorder 0, %v7510
      %v7512 = vsel %vm7511, 0, %v7510
      %v7513 = vsub.s32 32, %v7512
      %v7514 = vshll.u32 %v7505, %v7512
      %v7515 = vshrl.u32 %v7497, %v7513
      %v7516 = vor.u32 %v7514, %v7515
      %v7517 = vsub.s32 4294967266, %v7512
      %v7518 = vadd.s32 %v7517, 127
      %v7519 = vshll.u32 %v7518, 23
      %v7520 = vor.u32 4788187, %v7519
      %v7521 = vand.u32 2147483647, %v7520
      %v7523 = vcvt.s32.f32 %v7516
      %v7524 = vmul.f32 %v7523, %v7521
      %v7525 = vxor.u32 %v7524, 2147483648
      %v7526 = vsel %vm7443, %v7525, %v7524
      %v7527 = vsub.s32 4, %v7503
      %v7528 = vsel %vm7443, %v7527, %v7503
      %v7529 = vsel %vm7442, %v988, %v7526
      %v7530 = vsel %vm7442, 0, %v7528
      %v7531 = vcosq.f32.pop %v7529
      %v7532 = vsinq.f32.pop %v7529
      %vm7533 = vweird.f32 %v988
      %v7534 = vand.u32 %v7530, 3
      %vm7535 = vcmp.lt.s32.totalorder %v7534, 2
      %vm7536 = vcmp.eq.s32.totalorder %v7534, 0
      %v7537 = vxor.u32 %v7532, 2147483648
      %v7538 = vsel %vm7536, %v7531, %v7537
      %vm7539 = vcmp.eq.s32.totalorder %v7534, 2
      %v7540 = vxor.u32 %v7531, 2147483648
      %v7541 = vsel %vm7539, %v7540, %v7532
      %v7542 = vsel %vm7535, %v7538, %v7541
      %v7543 = vsel %vm7533, nan, %v7542
      %v7544 = vand.u32 2147483647, %v989
      %vm7545 = vcmp.le.f32.partialorder %v7544, 0.7853982
      %vm7546 = vcmp.lt.s32.totalorder %v989, 0
      %v7547 = vand.u32 %v989, 2139095040
      %v7548 = vshrl.u32 %v7547, 23
      %v7549 = vsub.s32 %v7548, 127
      %v7550 = vand.u32 2147483647, %v989
      %v7551 = vand.u32 %v7550, 8388607
      %v7552 = vor.u32 %v7551, 8388608
      %v7553 = vsub.s32 0, %v7552
      %v7554 = vadd.s32 %v7549, 1
      %vm7555 = vcmp.gt.s32.totalorder %v7554, 0
      %v7556 = vsel %vm7555, %v7554, 0
      %v7557 = vshrl.u32 %v7556, 5
      %v7558 = vand.u32 %v7556, 31
      %v7559 = vsub.s32 32, %v7558
      %v7560 = vshrl.u32 683565275, %v7559
      %v7561 = vshll.u32 683565275, %v7558
      %v7562 = vshrl.u32 2475754826, %v7559
      %v7563 = vor.u32 %v7561, %v7562
      %v7564 = vshll.u32 2475754826, %v7558
      %v7565 = vshrl.u32 2131351028, %v7559
      %v7566 = vor.u32 %v7564, %v7565
      %v7567 = vshll.u32 2131351028, %v7558
      %v7568 = vshrl.u32 2102212464, %v7559
      %v7569 = vor.u32 %v7567, %v7568
      %v7570 = vshll.u32 2102212464, %v7558
      %v7571 = vshrl.u32 920167782, %v7559
      %v7572 = vor.u32 %v7570, %v7571
      %v7573 = vshll.u32 920167782, %v7558
      %v7574 = vshrl.u32 1326507024, %v7559
      %v7575 = vor.u32 %v7573, %v7574
      %vm7576 = vcmp.lt.s32.totalorder %v7557, 1
      %vm7577 = vcmp.lt.s32.totalorder %v7557, 2
      %vm7578 = vcmp.lt.s32.totalorder %v7557, 3
      %vm7579 = vcmp.lt.s32.totalorder %v7557, 4
      %v7580 = vsel %vm7576, %v7560, %v7563
      %v7581 = vsel %vm7579, %v7569, 2102212464
      %v7582 = vsel %vm7578, %v7566, %v7581
      %v7583 = vsel %vm7577, %v7580, %v7582
      %v7584 = vsel %vm7576, %v7563, %v7566
      %v7585 = vsel %vm7579, %v7572, 920167782
      %v7586 = vsel %vm7578, %v7569, %v7585
      %v7587 = vsel %vm7577, %v7584, %v7586
      %v7588 = vsel %vm7576, %v7566, %v7569
      %v7589 = vsel %vm7579, %v7575, 1326507024
      %v7590 = vsel %vm7578, %v7572, %v7589
      %v7591 = vsel %vm7577, %v7588, %v7590
      %v7592 = vshll.u32 %v7552, 8
      %v7593 = vmul.u32.u64.compose %v7592, %v7591
      %v7594 = vextract.low.u32 %v7593
      %v7595 = vextract.high.u32 %v7593
      %v7596 = vmul.u32.u64.compose %v7592, %v7587
      %v7597 = vextract.low.u32 %v7596
      %v7598 = vextract.high.u32 %v7596
      %v7599 = vmul.u32 %v7592, %v7583
      %v7600 = vadd.s32 %v7595, %v7597
      %vm7601 = vc.u32 %v7595, %v7597
      %v7602 = vadd.s32 %v7598, 1
      %v7603 = vsel %vm7601, %v7602, %v7598
      %v7604 = vadd.s32 %v7599, %v7603
      %v7605 = vadd.s32 %v7604, 536870912
      %v7606 = vshrl.u32 %v7605, 30
      %v7607 = vshll.u32 %v7606, 30
      %v7608 = vsub.s32 %v7604, %v7607
      %vm7609 = vcmp.lt.s32.totalorder %v7608, 0
      %v7610 = vsub.s32 0, %v7608
      %v7611 = vsel %vm7609, %v7610, %v7608
      %v7612 = vclz %v7611
      %v7613 = vsub.s32 %v7612, 2
      %vm7614 = vcmp.gt.s32.totalorder 0, %v7613
      %v7615 = vsel %vm7614, 0, %v7613
      %v7616 = vsub.s32 32, %v7615
      %v7617 = vshll.u32 %v7608, %v7615
      %v7618 = vshrl.u32 %v7600, %v7616
      %v7619 = vor.u32 %v7617, %v7618
      %v7620 = vsub.s32 4294967266, %v7615
      %v7621 = vadd.s32 %v7620, 127
      %v7622 = vshll.u32 %v7621, 23
      %v7623 = vor.u32 4788187, %v7622
      %v7624 = vand.u32 2147483647, %v7623
      %v7626 = vcvt.s32.f32 %v7619
      %v7627 = vmul.f32 %v7626, %v7624
      %v7628 = vxor.u32 %v7627, 2147483648
      %v7629 = vsel %vm7546, %v7628, %v7627
      %v7630 = vsub.s32 4, %v7606
      %v7631 = vsel %vm7546, %v7630, %v7606
      %v7632 = vsel %vm7545, %v989, %v7629
      %v7633 = vsel %vm7545, 0, %v7631
      %v7634 = vcosq.f32.pop %v7632
      %v7635 = vsinq.f32.pop %v7632
      %vm7636 = vweird.f32 %v989
      %v7637 = vand.u32 %v7633, 3
      %vm7638 = vcmp.lt.s32.totalorder %v7637, 2
      %vm7639 = vcmp.eq.s32.totalorder %v7637, 0
      %v7640 = vxor.u32 %v7635, 2147483648
      %v7641 = vsel %vm7639, %v7634, %v7640
      %vm7642 = vcmp.eq.s32.totalorder %v7637, 2
      %v7643 = vxor.u32 %v7634, 2147483648
      %v7644 = vsel %vm7642, %v7643, %v7635
      %v7645 = vsel %vm7638, %v7641, %v7644
      %v7646 = vsel %vm7636, nan, %v7645
      %7679 = vrot.lane.b32.xlu0 %v4453, 18
      %v7680 = vpop.permute.xlu0 %7679
      %7681 = vrot.lane.b32.xlu0 %v4556, 18
      %v7682 = vpop.permute.xlu0 %7681
      %7683 = vrot.lane.b32.xlu0 %v4659, 18
      %v7684 = vpop.permute.xlu0 %7683
      %7685 = vrot.lane.b32.xlu0 %v4762, 18
      %v7686 = vpop.permute.xlu0 %7685
      %7687 = vrot.lane.b32.xlu0 %v4865, 18
      %v7688 = vpop.permute.xlu0 %7687
      %7689 = vrot.lane.b32.xlu0 %v4968, 18
      %v7690 = vpop.permute.xlu0 %7689
      %7691 = vrot.lane.b32.xlu0 %v5071, 18
      %v7692 = vpop.permute.xlu0 %7691
      %7693 = vrot.lane.b32.xlu0 %v5174, 18
      %v7694 = vpop.permute.xlu0 %7693
      %7695 = vrot.lane.b32.xlu0 %v5277, 18
      %v7696 = vpop.permute.xlu0 %7695
      %7697 = vrot.lane.b32.xlu0 %v5380, 18
      %v7698 = vpop.permute.xlu0 %7697
      %7699 = vrot.lane.b32.xlu0 %v5483, 18
      %v7700 = vpop.permute.xlu0 %7699
      %7701 = vrot.lane.b32.xlu0 %v5586, 18
      %v7702 = vpop.permute.xlu0 %7701
      %7703 = vrot.lane.b32.xlu0 %v5689, 18
      %v7704 = vpop.permute.xlu0 %7703
      %7705 = vrot.lane.b32.xlu0 %v5792, 18
      %v7706 = vpop.permute.xlu0 %7705
      %7707 = vrot.lane.b32.xlu0 %v5895, 18
      %v7708 = vpop.permute.xlu0 %7707
      %7709 = vrot.lane.b32.xlu0 %v5998, 18
      %v7710 = vpop.permute.xlu0 %7709
      %7711 = vrot.lane.b32.xlu0 %v6101, 18
      %v7712 = vpop.permute.xlu0 %7711
      %7713 = vrot.lane.b32.xlu0 %v6204, 18
      %v7714 = vpop.permute.xlu0 %7713
      %7715 = vrot.lane.b32.xlu0 %v6307, 18
      %v7716 = vpop.permute.xlu0 %7715
      %7717 = vrot.lane.b32.xlu0 %v6410, 18
      %v7718 = vpop.permute.xlu0 %7717
      %7719 = vrot.lane.b32.xlu0 %v6513, 18
      %v7720 = vpop.permute.xlu0 %7719
      %7721 = vrot.lane.b32.xlu0 %v6616, 18
      %v7722 = vpop.permute.xlu0 %7721
      %7723 = vrot.lane.b32.xlu0 %v6719, 18
      %v7724 = vpop.permute.xlu0 %7723
      %7725 = vrot.lane.b32.xlu0 %v6822, 18
      %v7726 = vpop.permute.xlu0 %7725
      %7727 = vrot.lane.b32.xlu0 %v6925, 18
      %v7728 = vpop.permute.xlu0 %7727
      %7729 = vrot.lane.b32.xlu0 %v7028, 18
      %v7730 = vpop.permute.xlu0 %7729
      %7731 = vrot.lane.b32.xlu0 %v7131, 18
      %v7732 = vpop.permute.xlu0 %7731
      %7733 = vrot.lane.b32.xlu0 %v7234, 18
      %v7734 = vpop.permute.xlu0 %7733
      %7735 = vrot.lane.b32.xlu0 %v7337, 18
      %v7736 = vpop.permute.xlu0 %7735
      %7737 = vrot.lane.b32.xlu0 %v7440, 18
      %v7738 = vpop.permute.xlu0 %7737
      %7739 = vrot.lane.b32.xlu0 %v7543, 18
      %v7740 = vpop.permute.xlu0 %7739
      %7741 = vrot.lane.b32.xlu0 %v7646, 18
      %v7742 = vpop.permute.xlu0 %7741
      %vm7775 = vcmask 294032
      %7776 = vst.msk [vmem:[%s118] sm:$0xff] %vm7775, %v7680
      %7777 = vst.msk [vmem:[%s118 + $0x8] sm:$0xff] %vm7775, %v7682
      %7778 = vst.msk [vmem:[%s118 + $0x10] sm:$0xff] %vm7775, %v7684
      %7779 = vst.msk [vmem:[%s118 + $0x18] sm:$0xff] %vm7775, %v7686
      %7780 = vst.msk [vmem:[%s118 + $0x20] sm:$0xff] %vm7775, %v7688
      %7781 = vst.msk [vmem:[%s118 + $0x28] sm:$0xff] %vm7775, %v7690
      %7782 = vst.msk [vmem:[%s118 + $0x30] sm:$0xff] %vm7775, %v7692
      %7783 = vst.msk [vmem:[%s118 + $0x38] sm:$0xff] %vm7775, %v7694
      %7784 = vst.msk [vmem:[%s118 + $0x40] sm:$0xff] %vm7775, %v7696
      %7785 = vst.msk [vmem:[%s118 + $0x48] sm:$0xff] %vm7775, %v7698
      %7786 = vst.msk [vmem:[%s118 + $0x50] sm:$0xff] %vm7775, %v7700
      %7787 = vst.msk [vmem:[%s118 + $0x58] sm:$0xff] %vm7775, %v7702
      %7788 = vst.msk [vmem:[%s118 + $0x60] sm:$0xff] %vm7775, %v7704
      %7789 = vst.msk [vmem:[%s118 + $0x68] sm:$0xff] %vm7775, %v7706
      %7790 = vst.msk [vmem:[%s118 + $0x70] sm:$0xff] %vm7775, %v7708
      %7791 = vst.msk [vmem:[%s118 + $0x78] sm:$0xff] %vm7775, %v7710
      %7792 = vst.msk [vmem:[%s118 + $0x80] sm:$0xff] %vm7775, %v7712
      %7793 = vst.msk [vmem:[%s118 + $0x88] sm:$0xff] %vm7775, %v7714
      %7794 = vst.msk [vmem:[%s118 + $0x90] sm:$0xff] %vm7775, %v7716
      %7795 = vst.msk [vmem:[%s118 + $0x98] sm:$0xff] %vm7775, %v7718
      %7796 = vst.msk [vmem:[%s118 + $0xa0] sm:$0xff] %vm7775, %v7720
      %7797 = vst.msk [vmem:[%s118 + $0xa8] sm:$0xff] %vm7775, %v7722
      %7798 = vst.msk [vmem:[%s118 + $0xb0] sm:$0xff] %vm7775, %v7724
      %7799 = vst.msk [vmem:[%s118 + $0xb8] sm:$0xff] %vm7775, %v7726
      %7800 = vst.msk [vmem:[%s118 + $0xc0] sm:$0xff] %vm7775, %v7728
      %7801 = vst.msk [vmem:[%s118 + $0xc8] sm:$0xff] %vm7775, %v7730
      %7802 = vst.msk [vmem:[%s118 + $0xd0] sm:$0xff] %vm7775, %v7732
      %7803 = vst.msk [vmem:[%s118 + $0xd8] sm:$0xff] %vm7775, %v7734
      %7804 = vst.msk [vmem:[%s118 + $0xe0] sm:$0xff] %vm7775, %v7736
      %7805 = vst.msk [vmem:[%s118 + $0xe8] sm:$0xff] %vm7775, %v7738
      %7806 = vst.msk [vmem:[%s118 + $0xf0] sm:$0xff] %vm7775, %v7740
      %7807 = vst.msk [vmem:[%s118 + $0xf8] sm:$0xff] %vm7775, %v7742
      %7808 = vrot.lane.b32.xlu0 %v120, 36
      %v7809 = vpop.permute.xlu0 %7808
      %7810 = vrot.lane.b32.xlu0 %v121, 36
      %v7811 = vpop.permute.xlu0 %7810
      %7812 = vrot.lane.b32.xlu0 %v122, 36
      %v7813 = vpop.permute.xlu0 %7812
      %7814 = vrot.lane.b32.xlu0 %v123, 36
      %v7815 = vpop.permute.xlu0 %7814
      %7816 = vrot.lane.b32.xlu0 %v124, 36
      %v7817 = vpop.permute.xlu0 %7816
      %7818 = vrot.lane.b32.xlu0 %v125, 36
      %v7819 = vpop.permute.xlu0 %7818
      %7820 = vrot.lane.b32.xlu0 %v126, 36
      %v7821 = vpop.permute.xlu0 %7820
      %7822 = vrot.lane.b32.xlu0 %v127, 36
      %v7823 = vpop.permute.xlu0 %7822
      %7824 = vrot.lane.b32.xlu0 %v128, 36
      %v7825 = vpop.permute.xlu0 %7824
      %7826 = vrot.lane.b32.xlu0 %v129, 36
      %v7827 = vpop.permute.xlu0 %7826
      %7828 = vrot.lane.b32.xlu0 %v130, 36
      %v7829 = vpop.permute.xlu0 %7828
      %7830 = vrot.lane.b32.xlu0 %v131, 36
      %v7831 = vpop.permute.xlu0 %7830
      %7832 = vrot.lane.b32.xlu0 %v132, 36
      %v7833 = vpop.permute.xlu0 %7832
      %7834 = vrot.lane.b32.xlu0 %v133, 36
      %v7835 = vpop.permute.xlu0 %7834
      %7836 = vrot.lane.b32.xlu0 %v134, 36
      %v7837 = vpop.permute.xlu0 %7836
      %7838 = vrot.lane.b32.xlu0 %v135, 36
      %v7839 = vpop.permute.xlu0 %7838
      %7840 = vrot.lane.b32.xlu0 %v136, 36
      %v7841 = vpop.permute.xlu0 %7840
      %7842 = vrot.lane.b32.xlu0 %v137, 36
      %v7843 = vpop.permute.xlu0 %7842
      %7844 = vrot.lane.b32.xlu0 %v138, 36
      %v7845 = vpop.permute.xlu0 %7844
      %7846 = vrot.lane.b32.xlu0 %v139, 36
      %v7847 = vpop.permute.xlu0 %7846
      %7848 = vrot.lane.b32.xlu0 %v140, 36
      %v7849 = vpop.permute.xlu0 %7848
      %7850 = vrot.lane.b32.xlu0 %v141, 36
      %v7851 = vpop.permute.xlu0 %7850
      %7852 = vrot.lane.b32.xlu0 %v142, 36
      %v7853 = vpop.permute.xlu0 %7852
      %7854 = vrot.lane.b32.xlu0 %v143, 36
      %v7855 = vpop.permute.xlu0 %7854
      %7856 = vrot.lane.b32.xlu0 %v144, 36
      %v7857 = vpop.permute.xlu0 %7856
      %7858 = vrot.lane.b32.xlu0 %v145, 36
      %v7859 = vpop.permute.xlu0 %7858
      %7860 = vrot.lane.b32.xlu0 %v146, 36
      %v7861 = vpop.permute.xlu0 %7860
      %7862 = vrot.lane.b32.xlu0 %v147, 36
      %v7863 = vpop.permute.xlu0 %7862
      %7864 = vrot.lane.b32.xlu0 %v148, 36
      %v7865 = vpop.permute.xlu0 %7864
      %7866 = vrot.lane.b32.xlu0 %v149, 36
      %v7867 = vpop.permute.xlu0 %7866
      %7868 = vrot.lane.b32.xlu0 %v150, 36
      %v7869 = vpop.permute.xlu0 %7868
      %7870 = vrot.lane.b32.xlu0 %v151, 36
      %v7871 = vpop.permute.xlu0 %7870
      %vm7904 = vcmask 318752
      %7905 = vst.msk [vmem:[%s118] sm:$0xff] %vm7904, %v7809
      %7906 = vst.msk [vmem:[%s118 + $0x8] sm:$0xff] %vm7904, %v7811
      %7907 = vst.msk [vmem:[%s118 + $0x10] sm:$0xff] %vm7904, %v7813
      %7908 = vst.msk [vmem:[%s118 + $0x18] sm:$0xff] %vm7904, %v7815
      %7909 = vst.msk [vmem:[%s118 + $0x20] sm:$0xff] %vm7904, %v7817
      %7910 = vst.msk [vmem:[%s118 + $0x28] sm:$0xff] %vm7904, %v7819
      %7911 = vst.msk [vmem:[%s118 + $0x30] sm:$0xff] %vm7904, %v7821
      %7912 = vst.msk [vmem:[%s118 + $0x38] sm:$0xff] %vm7904, %v7823
      %7913 = vst.msk [vmem:[%s118 + $0x40] sm:$0xff] %vm7904, %v7825
      %7914 = vst.msk [vmem:[%s118 + $0x48] sm:$0xff] %vm7904, %v7827
      %7915 = vst.msk [vmem:[%s118 + $0x50] sm:$0xff] %vm7904, %v7829
      %7916 = vst.msk [vmem:[%s118 + $0x58] sm:$0xff] %vm7904, %v7831
      %7917 = vst.msk [vmem:[%s118 + $0x60] sm:$0xff] %vm7904, %v7833
      %7918 = vst.msk [vmem:[%s118 + $0x68] sm:$0xff] %vm7904, %v7835
      %7919 = vst.msk [vmem:[%s118 + $0x70] sm:$0xff] %vm7904, %v7837
      %7920 = vst.msk [vmem:[%s118 + $0x78] sm:$0xff] %vm7904, %v7839
      %7921 = vst.msk [vmem:[%s118 + $0x80] sm:$0xff] %vm7904, %v7841
      %7922 = vst.msk [vmem:[%s118 + $0x88] sm:$0xff] %vm7904, %v7843
      %7923 = vst.msk [vmem:[%s118 + $0x90] sm:$0xff] %vm7904, %v7845
      %7924 = vst.msk [vmem:[%s118 + $0x98] sm:$0xff] %vm7904, %v7847
      %7925 = vst.msk [vmem:[%s118 + $0xa0] sm:$0xff] %vm7904, %v7849
      %7926 = vst.msk [vmem:[%s118 + $0xa8] sm:$0xff] %vm7904, %v7851
      %7927 = vst.msk [vmem:[%s118 + $0xb0] sm:$0xff] %vm7904, %v7853
      %7928 = vst.msk [vmem:[%s118 + $0xb8] sm:$0xff] %vm7904, %v7855
      %7929 = vst.msk [vmem:[%s118 + $0xc0] sm:$0xff] %vm7904, %v7857
      %7930 = vst.msk [vmem:[%s118 + $0xc8] sm:$0xff] %vm7904, %v7859
      %7931 = vst.msk [vmem:[%s118 + $0xd0] sm:$0xff] %vm7904, %v7861
      %7932 = vst.msk [vmem:[%s118 + $0xd8] sm:$0xff] %vm7904, %v7863
      %7933 = vst.msk [vmem:[%s118 + $0xe0] sm:$0xff] %vm7904, %v7865
      %7934 = vst.msk [vmem:[%s118 + $0xe8] sm:$0xff] %vm7904, %v7867
      %7935 = vst.msk [vmem:[%s118 + $0xf0] sm:$0xff] %vm7904, %v7869
      %7936 = vst.msk [vmem:[%s118 + $0xf8] sm:$0xff] %vm7904, %v7871
      %s7937 = smul.u32 32, %s12
      %p7938 = scmp.lt.s32.totalorder %s7937, 127
      %s7939 = scalar_select %p7938, %s7937, 127
      %s7940 = smul.addr %s7939, 8
      %s7941 = scalar_lea.vmem %s1, %s7940
      // Predicated region
      $region25: #{positional_embedding.1} parent=23 // pred_check
        %p7942 = pneg %p56
      $region26: #{positional_embedding.1} parent=23 // pred_check_branch
        %7944 = sbr.rel (%p7942) target = $region28
      $region27: #{positional_embedding.1} parent=23 // pred_region
        %s7945 = smul.u32 32, %s12
      $region28: #{positional_embedding.1} parent=23 // pred_fallthru
        _
    $region24: #{positional_embedding.1} parent=5 // pred_fallthru
      _
    %p7946 = scmp.le.s32.totalorder 2, %s7
    // Predicated region
    $region29: #{positional_embedding.1} parent=5 // pred_check
      %p7947 = pneg %p7946
    $region30: #{positional_embedding.1} parent=5 // pred_check_branch
      %7949 = sbr.rel (%p7947) target = $region32
    $region31: #{positional_embedding.1} parent=5 // pred_region
      %s7950 = ssub.s32 %s7, 2
      // Predicated region
      $region33: #{positional_embedding.1} parent=31 // pred_check
        %p7951 = pneg %p62
      $region34: #{positional_embedding.1} parent=31 // pred_check_branch
        %7953 = sbr.rel (%p7951) target = $region36
      $region35: #{positional_embedding.1} parent=31 // pred_region
        %s7954 = smul.u32 32, %s13
        %p7955 = scmp.lt.s32.totalorder %s7954, 127
        %s7956 = scalar_select %p7955, %s7954, 127
        %s7957 = smul.addr %s7956, 8
        %s7958 = scalar_lea.vmem %s1, %s7957
      $region36: #{positional_embedding.1} parent=31 // pred_fallthru
        _
    $region32: #{positional_embedding.1} parent=5 // pred_fallthru
      _
  $region6: #{positional_embedding.1} parent=0 // loop_footer
    %s11 = sadd.s32 1, %s7
  $region7: #{positional_embedding.1} parent=0 // loop_footer_branch
    %6 = sbr.rel target = $region3
  $region8: #{positional_embedding.1} parent=0 // loop_exit
    _

</llo_original>
